<compile_context>
chip_gen: v7x
topology: tpu7x:2x2x1
jax: 0.10.0
libtpu: 0.0.40
codegen_flags: <defaults>
</compile_context>

<pallas_src>
import functools

import jax
import jax.numpy as jnp
from jax import lax
from jax.experimental import pallas as pl
from jax.experimental.pallas import tpu as pltpu


# ------------------------------ Pallas kernel ------------------------------ #

def _stage_kernel(x_ref, c1a_ref, c1b_ref, c1c_ref, b1_ref,
                  c2a_ref, c2b_ref, c2c_ref, b2_ref, *rest,
                  proj, deinterleave):
    """ResidualBlock (stride=1) + ConvTranspose2d(k=2, s=2), one batch element.

    Activations are (H, W*C) lane-dense matrices.  c?{a,b,c} are the ky=0,1,2
    band matrices of the 3x3 convs (BN scale folded), b? the lane-tiled BN
    shifts.  Output block is (1, 2, H, W*2*Cup): sub-pixel row parity dy is a
    separate axis, the (dx, channel) interleave is already folded into the
    ConvT band columns, so both stores are wide unmasked lane-dense writes.
    """
    if proj:
        scw_ref, scb_ref, u0_ref, u1_ref, bu_ref, out_ref = rest
    else:
        u0_ref, u1_ref, bu_ref, out_ref = rest
    f32 = jnp.float32

    # ---- assemble the (H, W*Cin) lane-dense input image -------------------
    if deinterleave:
        # x_ref is the previous stage's packed output (1, 2, H/2, W*Cin):
        # packed row (dy, h) is row 2*h + dy of this stage's input.  Two tiny
        # exact permutation matmuls do the row interleave in-kernel (MXU has
        # slack), avoiding a wrapper transpose + HBM round trip.
        hh = x_ref.shape[2]
        ri = lax.broadcasted_iota(jnp.int32, (2 * hh, hh), 0)
        ci = lax.broadcasted_iota(jnp.int32, (2 * hh, hh), 1)
        p0 = jnp.where(ri == 2 * ci, 1.0, 0.0).astype(f32)
        p1 = jnp.where(ri == 2 * ci + 1, 1.0, 0.0).astype(f32)
        x2 = (jnp.dot(p0, x_ref[0, 0, :, :], preferred_element_type=f32)
              + jnp.dot(p1, x_ref[0, 1, :, :], preferred_element_type=f32))
    else:
        x2 = x_ref[0, :, :]
    H = x2.shape[0]

    # Row-shift matrices (+-1 row with zero fill), exact 0/1 entries.
    ri = lax.broadcasted_iota(jnp.int32, (H, H), 0)
    ci = lax.broadcasted_iota(jnp.int32, (H, H), 1)
    sd = jnp.where(ri == ci + 1, 1.0, 0.0).astype(f32)   # (sd@a)[h] = a[h-1]
    su = jnp.where(ri == ci - 1, 1.0, 0.0).astype(f32)   # (su@a)[h] = a[h+1]

    def conv3(a, wa_ref, wb_ref, wc_ref, bias_ref):
        # out[h] = a[h-1] @ band_ky0 + a[h] @ band_ky1 + a[h+1] @ band_ky2
        ad = jnp.dot(sd, a, preferred_element_type=f32)
        au = jnp.dot(su, a, preferred_element_type=f32)
        y = jnp.dot(ad, wa_ref[...], preferred_element_type=f32)
        y = y + jnp.dot(a, wb_ref[...], preferred_element_type=f32)
        y = y + jnp.dot(au, wc_ref[...], preferred_element_type=f32)
        return y + bias_ref[...]

    # conv1 (BN1 scale folded) -> shift -> relu
    h1 = jnp.maximum(conv3(x2, c1a_ref, c1b_ref, c1c_ref, b1_ref), 0.0)
    # conv2 (BN2 scale folded) -> shift
    h2 = conv3(h1, c2a_ref, c2b_ref, c2c_ref, b2_ref)
    # shortcut: 1x1 conv + BN (scale folded) when projecting, else identity
    if proj:
        s = jnp.dot(x2, scw_ref[...], preferred_element_type=f32) + scb_ref[...]
    else:
        s = x2
    r = jnp.maximum(h2 + s, 0.0)                        # (H, W*Cmid)

    # ConvTranspose2d(k=2, s=2): one block-diagonal matmul per row parity dy.
    out_ref[0, 0, :, :] = (jnp.dot(r, u0_ref[...], preferred_element_type=f32)
                           + bu_ref[...])
    out_ref[0, 1, :, :] = (jnp.dot(r, u1_ref[...], preferred_element_type=f32)
                           + bu_ref[...])


# ------------------------- band-matrix construction ------------------------- #

def _conv3x3_bands(w_hwio, scale, W):
    """3x3 conv (BN scale folded) as three banded matrices, one per ky.

    band_ky[(w+kx-1)*Cin + ci, w*Cout + co] = scale[co] * w[ky, kx, ci, co],
    with out-of-range width taps simply absent (== zero padding along W).
    """
    w = w_hwio * scale.reshape(1, 1, 1, -1)              # fold BN scale
    bands = []
    for ky in range(3):
        b = jnp.zeros((W * w.shape[2], W * w.shape[3]), jnp.float32)
        for kx in range(3):
            shift = jnp.eye(W, W, k=1 - kx, dtype=jnp.float32)
            b = b + jnp.kron(shift, w[ky, kx])
        bands.append(b)
    return bands


def _block_diag(W, m):
    """kron(I_W, m): per-pixel channel mixing in the (H, W*C) lane layout."""
    return jnp.kron(jnp.eye(W, dtype=jnp.float32), m)


def _tile_bias(b, reps):
    return jnp.tile(b.reshape(1, -1), (1, reps))


# ------------------------------ JAX wrappers ------------------------------- #

def _decoder_stage(x_packed, H, W, block_p, up_w, up_b, *, deinterleave):
    """One fused stage: ResidualBlock -> ConvTranspose2d (2x upsample).

    x_packed: (N, H, W*Cin) for the first stage, or the previous stage's
    packed output (N, 2, H//2, W*Cin) when deinterleave=True.
    Returns (N, 2, H, W*2*Cup) -- logical image (2H, 2W, Cup) with the row
    parity on axis 1 and the (2w+dx)*Cup + c interleave already in the lanes.
    """
    N = x_packed.shape[0]
    Cmid = block_p["w1"].shape[3]
    Cup = up_w.shape[3]
    proj = "ws" in block_p

    c1 = _conv3x3_bands(block_p["w1"], block_p["s1"], W)
    c2 = _conv3x3_bands(block_p["w2"], block_p["s2"], W)
    b1 = _tile_bias(block_p["b1"], W)
    b2 = _tile_bias(block_p["b2"], W)
    # ConvT weight (dy, dx, Cin, Cout) -> per-dy (Cin, 2*Cout) with column
    # index dx*Cout + co, then block-diagonal over W.
    u0 = _block_diag(W, jnp.transpose(up_w[0], (1, 0, 2)).reshape(Cmid, 2 * Cup))
    u1 = _block_diag(W, jnp.transpose(up_w[1], (1, 0, 2)).reshape(Cmid, 2 * Cup))
    bu = _tile_bias(up_b, 2 * W)

    args = [x_packed, c1[0], c1[1], c1[2], b1, c2[0], c2[1], c2[2], b2]
    if proj:
        args += [_block_diag(W, block_p["ws"] * block_p["ss"]),
                 _tile_bias(block_p["bs"], W)]
    args += [u0, u1, bu]

    ndim = x_packed.ndim
    x_spec = pl.BlockSpec((1,) + x_packed.shape[1:],
                          lambda n: (n,) + (0,) * (ndim - 1))
    # TODO(synk): weight blocks have constant index maps; single-buffer them
    #             (pl.Buffered) once VMEM gets tight on v7x at production C.
    in_specs = [x_spec] + [pl.BlockSpec(a.shape, lambda n: (0, 0))
                           for a in args[1:]]

    kernel = functools.partial(_stage_kernel, proj=proj,
                               deinterleave=deinterleave)
    out = pl.pallas_call(
        kernel,
        grid=(N,),
        out_shape=jax.ShapeDtypeStruct((N, 2, H, W * 2 * Cup), jnp.float32),
        in_specs=in_specs,
        out_specs=pl.BlockSpec((1, 2, H, W * 2 * Cup),
                               lambda n: (n, 0, 0, 0)),
        compiler_params=pltpu.CompilerParams(
            dimension_semantics=("parallel",),
            vmem_limit_bytes=48 * 1024 * 1024),
    )(*args)
    return out


def unet_decoder_forward(x_nchw, params):
    N, C0, H, W = x_nchw.shape
    # NCHW -> lane-dense (N, H, W*C0)
    x = jnp.transpose(x_nchw, (0, 2, 3, 1)).reshape(N, H, W * C0)

    y1 = _decoder_stage(x, H, W, params["block1"],
                        params["up1_w"], params["up1_b"], deinterleave=False)
    # y1: (N, 2, H, 2W*C1) -- consumed packed by stage 2 (no HBM round trip).
    y2 = _decoder_stage(y1, 2 * H, 2 * W, params["block2"],
                        params["up2_w"], params["up2_b"], deinterleave=True)

    # Final packed (N, 2, 2H, 2W*2*C2) -> NCHW (N, C2, 4H, 4W).
    C2 = params["up2_w"].shape[3]
    y = y2.reshape(N, 2, 2 * H, 2 * W, 2, C2)            # (n, dy, h, w, dx, c)
    y = jnp.transpose(y, (0, 5, 2, 1, 3, 4)).reshape(N, C2, 4 * H, 4 * W)
    return y


# --------------------------- parameter construction ------------------------- #

def _bn_fold(key, c):
    k1, k2, k3, k4 = jax.random.split(key, 4)
    gamma = jax.random.uniform(k1, (c,), minval=0.5, maxval=1.5)
    beta = 0.1 * jax.random.normal(k2, (c,))
    mean = 0.1 * jax.random.normal(k3, (c,))
    var = jax.random.uniform(k4, (c,), minval=0.5, maxval=1.5)
    scale = gamma / jnp.sqrt(var + 1e-5)
    shift = beta - mean * scale
    return (scale.reshape(1, c).astype(jnp.float32),
            shift.reshape(1, c).astype(jnp.float32))


def _conv3x3_w(key, cin, cout):
    w = 0.1 * jax.random.normal(key, (cout, cin, 3, 3), jnp.float32)  # torch OIHW
    return jnp.transpose(w, (2, 3, 1, 0))                             # -> HWIO


def _conv1x1_w(key, cin, cout):
    w = 0.1 * jax.random.normal(key, (cout, cin, 1, 1), jnp.float32)
    return jnp.transpose(w, (2, 3, 1, 0)).reshape(cin, cout)


def _convt_w(key, cin, cout):
    w = 0.1 * jax.random.normal(key, (cin, cout, 2, 2), jnp.float32)  # torch IOHW
    return jnp.transpose(w, (2, 3, 0, 1))                             # -> (2,2,Cin,Cout)


def _resblock_params(keys, cin, cout):
    k1, k2, k3, k4, k5, k6 = keys
    p = {"w1": _conv3x3_w(k1, cin, cout),
         "w2": _conv3x3_w(k3, cout, cout)}
    p["s1"], p["b1"] = _bn_fold(k2, cout)
    p["s2"], p["b2"] = _bn_fold(k4, cout)
    if cin != cout:   # PyTorch: projection shortcut iff shapes differ
        p["ws"] = _conv1x1_w(k5, cin, cout)
        p["ss"], p["bs"] = _bn_fold(k6, cout)
    return p


def init_params(key, feats):
    c0, c1, c2 = feats
    ks = jax.random.split(key, 6)
    return {
        "block1": _resblock_params(jax.random.split(ks[0], 6), c0, c1),
        "up1_w": _convt_w(ks[1], c1, c1),
        "up1_b": 0.1 * jax.random.normal(ks[2], (1, c1), jnp.float32),
        "block2": _resblock_params(jax.random.split(ks[3], 6), c1, c2),
        "up2_w": _convt_w(ks[4], c2, c2),
        "up2_b": 0.1 * jax.random.normal(ks[5], (1, c2), jnp.float32),
    }


# ------------------------------ pure-JAX reference -------------------------- #

def _ref_resblock(x, p):
    def conv(v, w):
        return lax.conv_general_dilated(
            v, w, (1, 1), "SAME", dimension_numbers=("NHWC", "HWIO", "NHWC"))
    c = p["s1"].shape[-1]
    h1 = jnp.maximum(conv(x, p["w1"]) * p["s1"].reshape(1, 1, 1, c)
                     + p["b1"].reshape(1, 1, 1, c), 0.0)
    h2 = conv(h1, p["w2"]) * p["s2"].reshape(1, 1, 1, c) + p["b2"].reshape(1, 1, 1, c)
    if "ws" in p:
        sc = (jnp.einsum("nhwc,cd->nhwd", x, p["ws"]) * p["ss"].reshape(1, 1, 1, c)
              + p["bs"].reshape(1, 1, 1, c))
    else:
        sc = x
    return jnp.maximum(h2 + sc, 0.0)


def _ref_convt(x, w, b):
    y = jnp.einsum("nhwc,uvcd->nhuwvd", x, w) + b.reshape(1, 1, 1, 1, 1, -1)
    N, H, _, W, _, C = y.shape
    return y.reshape(N, 2 * H, 2 * W, C)


def ref_forward(x_nchw, params):
    x = jnp.transpose(x_nchw, (0, 2, 3, 1))
    x = _ref_resblock(x, params["block1"])
    x = _ref_convt(x, params["up1_w"], params["up1_b"])
    x = _ref_resblock(x, params["block2"])
    x = _ref_convt(x, params["up2_w"], params["up2_b"])
    return jnp.transpose(x, (0, 3, 1, 2))


# ----------------------------------- main ----------------------------------- #

if __name__ == "__main__":
    feats = (4, 8, 16)                 # UNetDecoder(feats), len(feats) == 3
    key = jax.random.PRNGKey(0)
    kx, kp = jax.random.split(key)
    x_nchw = jax.random.normal(kx, (2, feats[0], 16, 16), jnp.float32)
    params = init_params(kp, feats)

    out = jax.jit(unet_decoder_forward)(x_nchw, params)
    out = jax.block_until_ready(out)

    assert out.shape == (2, feats[2], 64, 64), out.shape
    ref = ref_forward(x_nchw, params)
    err = float(jnp.max(jnp.abs(out - ref)))
    assert jnp.allclose(out, ref, rtol=1e-3, atol=1e-3), f"max abs err {err}"
    print("KERNEL_OK")
</pallas_src>

<mosaic_0001>
module attributes {stable_mosaic.version = 11 : i64} {
  func.func @_stage_kernel(%arg0: i32, %arg1: memref<1x16x64xf32, #tpu.memory_space<vmem>>, %arg2: memref<64x128xf32, #tpu.memory_space<vmem>>, %arg3: memref<64x128xf32, #tpu.memory_space<vmem>>, %arg4: memref<64x128xf32, #tpu.memory_space<vmem>>, %arg5: memref<1x128xf32, #tpu.memory_space<vmem>>, %arg6: memref<128x128xf32, #tpu.memory_space<vmem>>, %arg7: memref<128x128xf32, #tpu.memory_space<vmem>>, %arg8: memref<128x128xf32, #tpu.memory_space<vmem>>, %arg9: memref<1x128xf32, #tpu.memory_space<vmem>>, %arg10: memref<64x128xf32, #tpu.memory_space<vmem>>, %arg11: memref<1x128xf32, #tpu.memory_space<vmem>>, %arg12: memref<128x256xf32, #tpu.memory_space<vmem>>, %arg13: memref<128x256xf32, #tpu.memory_space<vmem>>, %arg14: memref<1x256xf32, #tpu.memory_space<vmem>>, %arg15: memref<1x2x16x256xf32, #tpu.memory_space<vmem>>) attributes {dimension_semantics = [#tpu.dimension_semantics<parallel>], iteration_bounds = array<i64: 2>, scalar_prefetch = 0 : i64, scratch_operands = 0 : i64, tpu.core_type = #tpu.core_type<tc>, window_params = [{transform_indices = @transform_0, window_bounds = array<i64: 1, 16, 64>}, {pipeline_mode = #tpu.pipeline_mode<synchronous>, transform_indices = @transform_1, window_bounds = array<i64: 64, 128>}, {pipeline_mode = #tpu.pipeline_mode<synchronous>, transform_indices = @transform_2, window_bounds = array<i64: 64, 128>}, {pipeline_mode = #tpu.pipeline_mode<synchronous>, transform_indices = @transform_3, window_bounds = array<i64: 64, 128>}, {pipeline_mode = #tpu.pipeline_mode<synchronous>, transform_indices = @transform_4, window_bounds = array<i64: 1, 128>}, {pipeline_mode = #tpu.pipeline_mode<synchronous>, transform_indices = @transform_5, window_bounds = array<i64: 128, 128>}, {pipeline_mode = #tpu.pipeline_mode<synchronous>, transform_indices = @transform_6, window_bounds = array<i64: 128, 128>}, {pipeline_mode = #tpu.pipeline_mode<synchronous>, transform_indices = @transform_7, window_bounds = array<i64: 128, 128>}, {pipeline_mode = #tpu.pipeline_mode<synchronous>, transform_indices = @transform_8, window_bounds = array<i64: 1, 128>}, {pipeline_mode = #tpu.pipeline_mode<synchronous>, transform_indices = @transform_9, window_bounds = array<i64: 64, 128>}, {pipeline_mode = #tpu.pipeline_mode<synchronous>, transform_indices = @transform_10, window_bounds = array<i64: 1, 128>}, {pipeline_mode = #tpu.pipeline_mode<synchronous>, transform_indices = @transform_11, window_bounds = array<i64: 128, 256>}, {pipeline_mode = #tpu.pipeline_mode<synchronous>, transform_indices = @transform_12, window_bounds = array<i64: 128, 256>}, {pipeline_mode = #tpu.pipeline_mode<synchronous>, transform_indices = @transform_13, window_bounds = array<i64: 1, 256>}, {transform_indices = @transform_14, window_bounds = array<i64: 1, 2, 16, 256>}]} {
    %c0 = arith.constant 0 : index
    %c0_0 = arith.constant 0 : index
    %c0_1 = arith.constant 0 : index
    %0 = vector.load %arg1[%c0, %c0_0, %c0_1] : memref<1x16x64xf32, #tpu.memory_space<vmem>>, vector<1x16x64xf32>
    %1 = vector.shape_cast %0 : vector<1x16x64xf32> to vector<16x64xf32>
    %2 = tpu.iota {dimensions = array<i32: 0>} : vector<16x16xi32>
    %3 = tpu.iota {dimensions = array<i32: 1>} : vector<16x16xi32>
    %c1_i32 = arith.constant 1 : i32
    %4 = vector.broadcast %c1_i32 : i32 to vector<16x16xi32>
    %5 = arith.addi %3, %4 : vector<16x16xi32>
    %6 = arith.cmpi eq, %2, %5 : vector<16x16xi32>
    %cst = arith.constant 1.000000e+00 : f32
    %cst_2 = arith.constant 0.000000e+00 : f32
    %7 = vector.broadcast %cst : f32 to vector<16x16xf32>
    %8 = vector.broadcast %cst_2 : f32 to vector<16x16xf32>
    %9 = arith.select %6, %7, %8 : vector<16x16xi1>, vector<16x16xf32>
    %c1_i32_3 = arith.constant 1 : i32
    %10 = vector.broadcast %c1_i32_3 : i32 to vector<16x16xi32>
    %11 = arith.subi %3, %10 : vector<16x16xi32>
    %12 = arith.cmpi eq, %2, %11 : vector<16x16xi32>
    %cst_4 = arith.constant 1.000000e+00 : f32
    %cst_5 = arith.constant 0.000000e+00 : f32
    %13 = vector.broadcast %cst_4 : f32 to vector<16x16xf32>
    %14 = vector.broadcast %cst_5 : f32 to vector<16x16xf32>
    %15 = arith.select %12, %13, %14 : vector<16x16xi1>, vector<16x16xf32>
    %cst_6 = arith.constant dense<0.000000e+00> : vector<16x64xf32>
    %16 = tpu.matmul %9, %1, %cst_6 {dimension_numbers = #tpu.dot_dimension_numbers<[1], [0], [0], [1], [0, 0, 1, 1], [], []>} : vector<16x16xf32>, vector<16x64xf32>, vector<16x64xf32> -> vector<16x64xf32>
    %cst_7 = arith.constant dense<0.000000e+00> : vector<16x64xf32>
    %17 = tpu.matmul %15, %1, %cst_7 {dimension_numbers = #tpu.dot_dimension_numbers<[1], [0], [0], [1], [0, 0, 1, 1], [], []>} : vector<16x16xf32>, vector<16x64xf32>, vector<16x64xf32> -> vector<16x64xf32>
    %c0_8 = arith.constant 0 : index
    %c0_9 = arith.constant 0 : index
    %18 = vector.load %arg2[%c0_8, %c0_9] : memref<64x128xf32, #tpu.memory_space<vmem>>, vector<64x128xf32>
    %cst_10 = arith.constant dense<0.000000e+00> : vector<16x128xf32>
    %19 = tpu.matmul %16, %18, %cst_10 {dimension_numbers = #tpu.dot_dimension_numbers<[1], [0], [0], [1], [0, 0, 1, 1], [], []>} : vector<16x64xf32>, vector<64x128xf32>, vector<16x128xf32> -> vector<16x128xf32>
    %c0_11 = arith.constant 0 : index
    %c0_12 = arith.constant 0 : index
    %20 = vector.load %arg3[%c0_11, %c0_12] : memref<64x128xf32, #tpu.memory_space<vmem>>, vector<64x128xf32>
    %cst_13 = arith.constant dense<0.000000e+00> : vector<16x128xf32>
    %21 = tpu.matmul %1, %20, %cst_13 {dimension_numbers = #tpu.dot_dimension_numbers<[1], [0], [0], [1], [0, 0, 1, 1], [], []>} : vector<16x64xf32>, vector<64x128xf32>, vector<16x128xf32> -> vector<16x128xf32>
    %22 = arith.addf %19, %21 : vector<16x128xf32>
    %c0_14 = arith.constant 0 : index
    %c0_15 = arith.constant 0 : index
    %23 = vector.load %arg4[%c0_14, %c0_15] : memref<64x128xf32, #tpu.memory_space<vmem>>, vector<64x128xf32>
    %cst_16 = arith.constant dense<0.000000e+00> : vector<16x128xf32>
    %24 = tpu.matmul %17, %23, %cst_16 {dimension_numbers = #tpu.dot_dimension_numbers<[1], [0], [0], [1], [0, 0, 1, 1], [], []>} : vector<16x64xf32>, vector<64x128xf32>, vector<16x128xf32> -> vector<16x128xf32>
    %25 = arith.addf %22, %24 : vector<16x128xf32>
    %c0_17 = arith.constant 0 : index
    %c0_18 = arith.constant 0 : index
    %26 = vector.load %arg5[%c0_17, %c0_18] : memref<1x128xf32, #tpu.memory_space<vmem>>, vector<1x128xf32>
    %27 = vector.broadcast %26 : vector<1x128xf32> to vector<16x128xf32>
    %28 = arith.addf %25, %27 : vector<16x128xf32>
    %cst_19 = arith.constant 0.000000e+00 : f32
    %29 = vector.broadcast %cst_19 : f32 to vector<16x128xf32>
    %30 = arith.maximumf %28, %29 : vector<16x128xf32>
    %cst_20 = arith.constant dense<0.000000e+00> : vector<16x128xf32>
    %31 = tpu.matmul %9, %30, %cst_20 {dimension_numbers = #tpu.dot_dimension_numbers<[1], [0], [0], [1], [0, 0, 1, 1], [], []>} : vector<16x16xf32>, vector<16x128xf32>, vector<16x128xf32> -> vector<16x128xf32>
    %cst_21 = arith.constant dense<0.000000e+00> : vector<16x128xf32>
    %32 = tpu.matmul %15, %30, %cst_21 {dimension_numbers = #tpu.dot_dimension_numbers<[1], [0], [0], [1], [0, 0, 1, 1], [], []>} : vector<16x16xf32>, vector<16x128xf32>, vector<16x128xf32> -> vector<16x128xf32>
    %c0_22 = arith.constant 0 : index
    %c0_23 = arith.constant 0 : index
    %33 = vector.load %arg6[%c0_22, %c0_23] : memref<128x128xf32, #tpu.memory_space<vmem>>, vector<128x128xf32>
    %cst_24 = arith.constant dense<0.000000e+00> : vector<16x128xf32>
    %34 = tpu.matmul %31, %33, %cst_24 {dimension_numbers = #tpu.dot_dimension_numbers<[1], [0], [0], [1], [0, 0, 1, 1], [], []>} : vector<16x128xf32>, vector<128x128xf32>, vector<16x128xf32> -> vector<16x128xf32>
    %c0_25 = arith.constant 0 : index
    %c0_26 = arith.constant 0 : index
    %35 = vector.load %arg7[%c0_25, %c0_26] : memref<128x128xf32, #tpu.memory_space<vmem>>, vector<128x128xf32>
    %cst_27 = arith.constant dense<0.000000e+00> : vector<16x128xf32>
    %36 = tpu.matmul %30, %35, %cst_27 {dimension_numbers = #tpu.dot_dimension_numbers<[1], [0], [0], [1], [0, 0, 1, 1], [], []>} : vector<16x128xf32>, vector<128x128xf32>, vector<16x128xf32> -> vector<16x128xf32>
    %37 = arith.addf %34, %36 : vector<16x128xf32>
    %c0_28 = arith.constant 0 : index
    %c0_29 = arith.constant 0 : index
    %38 = vector.load %arg8[%c0_28, %c0_29] : memref<128x128xf32, #tpu.memory_space<vmem>>, vector<128x128xf32>
    %cst_30 = arith.constant dense<0.000000e+00> : vector<16x128xf32>
    %39 = tpu.matmul %32, %38, %cst_30 {dimension_numbers = #tpu.dot_dimension_numbers<[1], [0], [0], [1], [0, 0, 1, 1], [], []>} : vector<16x128xf32>, vector<128x128xf32>, vector<16x128xf32> -> vector<16x128xf32>
    %40 = arith.addf %37, %39 : vector<16x128xf32>
    %c0_31 = arith.constant 0 : index
    %c0_32 = arith.constant 0 : index
    %41 = vector.load %arg9[%c0_31, %c0_32] : memref<1x128xf32, #tpu.memory_space<vmem>>, vector<1x128xf32>
    %42 = vector.broadcast %41 : vector<1x128xf32> to vector<16x128xf32>
    %43 = arith.addf %40, %42 : vector<16x128xf32>
    %c0_33 = arith.constant 0 : index
    %c0_34 = arith.constant 0 : index
    %44 = vector.load %arg10[%c0_33, %c0_34] : memref<64x128xf32, #tpu.memory_space<vmem>>, vector<64x128xf32>
    %cst_35 = arith.constant dense<0.000000e+00> : vector<16x128xf32>
    %45 = tpu.matmul %1, %44, %cst_35 {dimension_numbers = #tpu.dot_dimension_numbers<[1], [0], [0], [1], [0, 0, 1, 1], [], []>} : vector<16x64xf32>, vector<64x128xf32>, vector<16x128xf32> -> vector<16x128xf32>
    %c0_36 = arith.constant 0 : index
    %c0_37 = arith.constant 0 : index
    %46 = vector.load %arg11[%c0_36, %c0_37] : memref<1x128xf32, #tpu.memory_space<vmem>>, vector<1x128xf32>
    %47 = vector.broadcast %46 : vector<1x128xf32> to vector<16x128xf32>
    %48 = arith.addf %45, %47 : vector<16x128xf32>
    %49 = arith.addf %43, %48 : vector<16x128xf32>
    %cst_38 = arith.constant 0.000000e+00 : f32
    %50 = vector.broadcast %cst_38 : f32 to vector<16x128xf32>
    %51 = arith.maximumf %49, %50 : vector<16x128xf32>
    %c0_39 = arith.constant 0 : index
    %c0_40 = arith.constant 0 : index
    %52 = vector.load %arg12[%c0_39, %c0_40] : memref<128x256xf32, #tpu.memory_space<vmem>>, vector<128x256xf32>
    %cst_41 = arith.constant dense<0.000000e+00> : vector<16x256xf32>
    %53 = tpu.matmul %51, %52, %cst_41 {dimension_numbers = #tpu.dot_dimension_numbers<[1], [0], [0], [1], [0, 0, 1, 1], [], []>} : vector<16x128xf32>, vector<128x256xf32>, vector<16x256xf32> -> vector<16x256xf32>
    %c0_42 = arith.constant 0 : index
    %c0_43 = arith.constant 0 : index
    %54 = vector.load %arg14[%c0_42, %c0_43] : memref<1x256xf32, #tpu.memory_space<vmem>>, vector<1x256xf32>
    %55 = vector.broadcast %54 : vector<1x256xf32> to vector<16x256xf32>
    %56 = arith.addf %53, %55 : vector<16x256xf32>
    %c0_44 = arith.constant 0 : index
    %c0_45 = arith.constant 0 : index
    %c0_46 = arith.constant 0 : index
    %c0_47 = arith.constant 0 : index
    %57 = vector.load %arg15[%c0_44, %c0_45, %c0_46, %c0_47] : memref<1x2x16x256xf32, #tpu.memory_space<vmem>>, vector<1x1x16x256xf32>
    %58 = vector.shape_cast %57 : vector<1x1x16x256xf32> to vector<16x256xf32>
    %59 = vector.shape_cast %56 : vector<16x256xf32> to vector<1x1x16x256xf32>
    tpu.vector_store %arg15[%c0_44, %c0_45, %c0_46, %c0_47], %59 {strides = array<i32>} : memref<1x2x16x256xf32, #tpu.memory_space<vmem>>, vector<1x1x16x256xf32>,
    %c0_48 = arith.constant 0 : index
    %c0_49 = arith.constant 0 : index
    %60 = vector.load %arg13[%c0_48, %c0_49] : memref<128x256xf32, #tpu.memory_space<vmem>>, vector<128x256xf32>
    %cst_50 = arith.constant dense<0.000000e+00> : vector<16x256xf32>
    %61 = tpu.matmul %51, %60, %cst_50 {dimension_numbers = #tpu.dot_dimension_numbers<[1], [0], [0], [1], [0, 0, 1, 1], [], []>} : vector<16x128xf32>, vector<128x256xf32>, vector<16x256xf32> -> vector<16x256xf32>
    %c0_51 = arith.constant 0 : index
    %c0_52 = arith.constant 0 : index
    %62 = vector.load %arg14[%c0_51, %c0_52] : memref<1x256xf32, #tpu.memory_space<vmem>>, vector<1x256xf32>
    %63 = vector.broadcast %62 : vector<1x256xf32> to vector<16x256xf32>
    %64 = arith.addf %61, %63 : vector<16x256xf32>
    %c0_53 = arith.constant 0 : index
    %c1 = arith.constant 1 : index
    %c0_54 = arith.constant 0 : index
    %c0_55 = arith.constant 0 : index
    %65 = vector.load %arg15[%c0_53, %c1, %c0_54, %c0_55] : memref<1x2x16x256xf32, #tpu.memory_space<vmem>>, vector<1x1x16x256xf32>
    %66 = vector.shape_cast %65 : vector<1x1x16x256xf32> to vector<16x256xf32>
    %67 = vector.shape_cast %64 : vector<16x256xf32> to vector<1x1x16x256xf32>
    tpu.vector_store %arg15[%c0_53, %c1, %c0_54, %c0_55], %67 {strides = array<i32>} : memref<1x2x16x256xf32, #tpu.memory_space<vmem>>, vector<1x1x16x256xf32>,
    return
  }
  func.func @transform_0(%arg0: i32) -> (i32, i32, i32) {
    %c0_i32 = arith.constant 0 : i32
    %c0_i32_0 = arith.constant 0 : i32
    %c0_i32_1 = arith.constant 0 : i32
    return %arg0, %c0_i32, %c0_i32_0 : i32, i32, i32
  }
  func.func @transform_1(%arg0: i32) -> (i32, i32) {
    %c0_i32 = arith.constant 0 : i32
    %c0_i32_0 = arith.constant 0 : i32
    %c0_i32_1 = arith.constant 0 : i32
    return %c0_i32, %c0_i32_0 : i32, i32
  }
  func.func @transform_2(%arg0: i32) -> (i32, i32) {
    %c0_i32 = arith.constant 0 : i32
    %c0_i32_0 = arith.constant 0 : i32
    %c0_i32_1 = arith.constant 0 : i32
    return %c0_i32, %c0_i32_0 : i32, i32
  }
  func.func @transform_3(%arg0: i32) -> (i32, i32) {
    %c0_i32 = arith.constant 0 : i32
    %c0_i32_0 = arith.constant 0 : i32
    %c0_i32_1 = arith.constant 0 : i32
    return %c0_i32, %c0_i32_0 : i32, i32
  }
  func.func @transform_4(%arg0: i32) -> (i32, i32) {
    %c0_i32 = arith.constant 0 : i32
    %c0_i32_0 = arith.constant 0 : i32
    %c0_i32_1 = arith.constant 0 : i32
    return %c0_i32, %c0_i32_0 : i32, i32
  }
  func.func @transform_5(%arg0: i32) -> (i32, i32) {
    %c0_i32 = arith.constant 0 : i32
    %c0_i32_0 = arith.constant 0 : i32
    %c0_i32_1 = arith.constant 0 : i32
    return %c0_i32, %c0_i32_0 : i32, i32
  }
  func.func @transform_6(%arg0: i32) -> (i32, i32) {
    %c0_i32 = arith.constant 0 : i32
    %c0_i32_0 = arith.constant 0 : i32
    %c0_i32_1 = arith.constant 0 : i32
    return %c0_i32, %c0_i32_0 : i32, i32
  }
  func.func @transform_7(%arg0: i32) -> (i32, i32) {
    %c0_i32 = arith.constant 0 : i32
    %c0_i32_0 = arith.constant 0 : i32
    %c0_i32_1 = arith.constant 0 : i32
    return %c0_i32, %c0_i32_0 : i32, i32
  }
  func.func @transform_8(%arg0: i32) -> (i32, i32) {
    %c0_i32 = arith.constant 0 : i32
    %c0_i32_0 = arith.constant 0 : i32
    %c0_i32_1 = arith.constant 0 : i32
    return %c0_i32, %c0_i32_0 : i32, i32
  }
  func.func @transform_9(%arg0: i32) -> (i32, i32) {
    %c0_i32 = arith.constant 0 : i32
    %c0_i32_0 = arith.constant 0 : i32
    %c0_i32_1 = arith.constant 0 : i32
    return %c0_i32, %c0_i32_0 : i32, i32
  }
  func.func @transform_10(%arg0: i32) -> (i32, i32) {
    %c0_i32 = arith.constant 0 : i32
    %c0_i32_0 = arith.constant 0 : i32
    %c0_i32_1 = arith.constant 0 : i32
    return %c0_i32, %c0_i32_0 : i32, i32
  }
  func.func @transform_11(%arg0: i32) -> (i32, i32) {
    %c0_i32 = arith.constant 0 : i32
    %c0_i32_0 = arith.constant 0 : i32
    %c0_i32_1 = arith.constant 0 : i32
    return %c0_i32, %c0_i32_0 : i32, i32
  }
  func.func @transform_12(%arg0: i32) -> (i32, i32) {
    %c0_i32 = arith.constant 0 : i32
    %c0_i32_0 = arith.constant 0 : i32
    %c0_i32_1 = arith.constant 0 : i32
    return %c0_i32, %c0_i32_0 : i32, i32
  }
  func.func @transform_13(%arg0: i32) -> (i32, i32) {
    %c0_i32 = arith.constant 0 : i32
    %c0_i32_0 = arith.constant 0 : i32
    %c0_i32_1 = arith.constant 0 : i32
    return %c0_i32, %c0_i32_0 : i32, i32
  }
  func.func @transform_14(%arg0: i32) -> (i32, i32, i32, i32) {
    %c0_i32 = arith.constant 0 : i32
    %c0_i32_0 = arith.constant 0 : i32
    %c0_i32_1 = arith.constant 0 : i32
    %c0_i32_2 = arith.constant 0 : i32
    return %arg0, %c0_i32, %c0_i32_0, %c0_i32_1 : i32, i32, i32, i32
  }
}

module attributes {stable_mosaic.version = 11 : i64} {
  func.func @_stage_kernel(%arg0: i32, %arg1: memref<1x2x16x256xf32, #tpu.memory_space<vmem>>, %arg2: memref<256x512xf32, #tpu.memory_space<vmem>>, %arg3: memref<256x512xf32, #tpu.memory_space<vmem>>, %arg4: memref<256x512xf32, #tpu.memory_space<vmem>>, %arg5: memref<1x512xf32, #tpu.memory_space<vmem>>, %arg6: memref<512x512xf32, #tpu.memory_space<vmem>>, %arg7: memref<512x512xf32, #tpu.memory_space<vmem>>, %arg8: memref<512x512xf32, #tpu.memory_space<vmem>>, %arg9: memref<1x512xf32, #tpu.memory_space<vmem>>, %arg10: memref<256x512xf32, #tpu.memory_space<vmem>>, %arg11: memref<1x512xf32, #tpu.memory_space<vmem>>, %arg12: memref<512x1024xf32, #tpu.memory_space<vmem>>, %arg13: memref<512x1024xf32, #tpu.memory_space<vmem>>, %arg14: memref<1x1024xf32, #tpu.memory_space<vmem>>, %arg15: memref<1x2x32x1024xf32, #tpu.memory_space<vmem>>) attributes {dimension_semantics = [#tpu.dimension_semantics<parallel>], iteration_bounds = array<i64: 2>, scalar_prefetch = 0 : i64, scratch_operands = 0 : i64, tpu.core_type = #tpu.core_type<tc>, window_params = [{transform_indices = @transform_0, window_bounds = array<i64: 1, 2, 16, 256>}, {pipeline_mode = #tpu.pipeline_mode<synchronous>, transform_indices = @transform_1, window_bounds = array<i64: 256, 512>}, {pipeline_mode = #tpu.pipeline_mode<synchronous>, transform_indices = @transform_2, window_bounds = array<i64: 256, 512>}, {pipeline_mode = #tpu.pipeline_mode<synchronous>, transform_indices = @transform_3, window_bounds = array<i64: 256, 512>}, {pipeline_mode = #tpu.pipeline_mode<synchronous>, transform_indices = @transform_4, window_bounds = array<i64: 1, 512>}, {pipeline_mode = #tpu.pipeline_mode<synchronous>, transform_indices = @transform_5, window_bounds = array<i64: 512, 512>}, {pipeline_mode = #tpu.pipeline_mode<synchronous>, transform_indices = @transform_6, window_bounds = array<i64: 512, 512>}, {pipeline_mode = #tpu.pipeline_mode<synchronous>, transform_indices = @transform_7, window_bounds = array<i64: 512, 512>}, {pipeline_mode = #tpu.pipeline_mode<synchronous>, transform_indices = @transform_8, window_bounds = array<i64: 1, 512>}, {pipeline_mode = #tpu.pipeline_mode<synchronous>, transform_indices = @transform_9, window_bounds = array<i64: 256, 512>}, {pipeline_mode = #tpu.pipeline_mode<synchronous>, transform_indices = @transform_10, window_bounds = array<i64: 1, 512>}, {pipeline_mode = #tpu.pipeline_mode<synchronous>, transform_indices = @transform_11, window_bounds = array<i64: 512, 1024>}, {pipeline_mode = #tpu.pipeline_mode<synchronous>, transform_indices = @transform_12, window_bounds = array<i64: 512, 1024>}, {pipeline_mode = #tpu.pipeline_mode<synchronous>, transform_indices = @transform_13, window_bounds = array<i64: 1, 1024>}, {transform_indices = @transform_14, window_bounds = array<i64: 1, 2, 32, 1024>}]} {
    %0 = tpu.iota {dimensions = array<i32: 0>} : vector<32x16xi32>
    %1 = tpu.iota {dimensions = array<i32: 1>} : vector<32x16xi32>
    %c2_i32 = arith.constant 2 : i32
    %2 = vector.broadcast %c2_i32 : i32 to vector<32x16xi32>
    %3 = arith.muli %2, %1 : vector<32x16xi32>
    %4 = arith.cmpi eq, %0, %3 : vector<32x16xi32>
    %cst = arith.constant 1.000000e+00 : f32
    %cst_0 = arith.constant 0.000000e+00 : f32
    %5 = vector.broadcast %cst : f32 to vector<32x16xf32>
    %6 = vector.broadcast %cst_0 : f32 to vector<32x16xf32>
    %7 = arith.select %4, %5, %6 : vector<32x16xi1>, vector<32x16xf32>
    %c2_i32_1 = arith.constant 2 : i32
    %8 = vector.broadcast %c2_i32_1 : i32 to vector<32x16xi32>
    %9 = arith.muli %8, %1 : vector<32x16xi32>
    %c1_i32 = arith.constant 1 : i32
    %10 = vector.broadcast %c1_i32 : i32 to vector<32x16xi32>
    %11 = arith.addi %9, %10 : vector<32x16xi32>
    %12 = arith.cmpi eq, %0, %11 : vector<32x16xi32>
    %cst_2 = arith.constant 1.000000e+00 : f32
    %cst_3 = arith.constant 0.000000e+00 : f32
    %13 = vector.broadcast %cst_2 : f32 to vector<32x16xf32>
    %14 = vector.broadcast %cst_3 : f32 to vector<32x16xf32>
    %15 = arith.select %12, %13, %14 : vector<32x16xi1>, vector<32x16xf32>
    %c0 = arith.constant 0 : index
    %c0_4 = arith.constant 0 : index
    %c0_5 = arith.constant 0 : index
    %c0_6 = arith.constant 0 : index
    %16 = vector.load %arg1[%c0, %c0_4, %c0_5, %c0_6] : memref<1x2x16x256xf32, #tpu.memory_space<vmem>>, vector<1x1x16x256xf32>
    %17 = vector.shape_cast %16 : vector<1x1x16x256xf32> to vector<16x256xf32>
    %cst_7 = arith.constant dense<0.000000e+00> : vector<32x256xf32>
    %18 = tpu.matmul %7, %17, %cst_7 {dimension_numbers = #tpu.dot_dimension_numbers<[1], [0], [0], [1], [0, 0, 1, 1], [], []>} : vector<32x16xf32>, vector<16x256xf32>, vector<32x256xf32> -> vector<32x256xf32>
    %c0_8 = arith.constant 0 : index
    %c1 = arith.constant 1 : index
    %c0_9 = arith.constant 0 : index
    %c0_10 = arith.constant 0 : index
    %19 = vector.load %arg1[%c0_8, %c1, %c0_9, %c0_10] : memref<1x2x16x256xf32, #tpu.memory_space<vmem>>, vector<1x1x16x256xf32>
    %20 = vector.shape_cast %19 : vector<1x1x16x256xf32> to vector<16x256xf32>
    %cst_11 = arith.constant dense<0.000000e+00> : vector<32x256xf32>
    %21 = tpu.matmul %15, %20, %cst_11 {dimension_numbers = #tpu.dot_dimension_numbers<[1], [0], [0], [1], [0, 0, 1, 1], [], []>} : vector<32x16xf32>, vector<16x256xf32>, vector<32x256xf32> -> vector<32x256xf32>
    %22 = arith.addf %18, %21 : vector<32x256xf32>
    %23 = tpu.iota {dimensions = array<i32: 0>} : vector<32x32xi32>
    %24 = tpu.iota {dimensions = array<i32: 1>} : vector<32x32xi32>
    %c1_i32_12 = arith.constant 1 : i32
    %25 = vector.broadcast %c1_i32_12 : i32 to vector<32x32xi32>
    %26 = arith.addi %24, %25 : vector<32x32xi32>
    %27 = arith.cmpi eq, %23, %26 : vector<32x32xi32>
    %cst_13 = arith.constant 1.000000e+00 : f32
    %cst_14 = arith.constant 0.000000e+00 : f32
    %28 = vector.broadcast %cst_13 : f32 to vector<32x32xf32>
    %29 = vector.broadcast %cst_14 : f32 to vector<32x32xf32>
    %30 = arith.select %27, %28, %29 : vector<32x32xi1>, vector<32x32xf32>
    %c1_i32_15 = arith.constant 1 : i32
    %31 = vector.broadcast %c1_i32_15 : i32 to vector<32x32xi32>
    %32 = arith.subi %24, %31 : vector<32x32xi32>
    %33 = arith.cmpi eq, %23, %32 : vector<32x32xi32>
    %cst_16 = arith.constant 1.000000e+00 : f32
    %cst_17 = arith.constant 0.000000e+00 : f32
    %34 = vector.broadcast %cst_16 : f32 to vector<32x32xf32>
    %35 = vector.broadcast %cst_17 : f32 to vector<32x32xf32>
    %36 = arith.select %33, %34, %35 : vector<32x32xi1>, vector<32x32xf32>
    %cst_18 = arith.constant dense<0.000000e+00> : vector<32x256xf32>
    %37 = tpu.matmul %30, %22, %cst_18 {dimension_numbers = #tpu.dot_dimension_numbers<[1], [0], [0], [1], [0, 0, 1, 1], [], []>} : vector<32x32xf32>, vector<32x256xf32>, vector<32x256xf32> -> vector<32x256xf32>
    %cst_19 = arith.constant dense<0.000000e+00> : vector<32x256xf32>
    %38 = tpu.matmul %36, %22, %cst_19 {dimension_numbers = #tpu.dot_dimension_numbers<[1], [0], [0], [1], [0, 0, 1, 1], [], []>} : vector<32x32xf32>, vector<32x256xf32>, vector<32x256xf32> -> vector<32x256xf32>
    %c0_20 = arith.constant 0 : index
    %c0_21 = arith.constant 0 : index
    %39 = vector.load %arg2[%c0_20, %c0_21] : memref<256x512xf32, #tpu.memory_space<vmem>>, vector<256x512xf32>
    %cst_22 = arith.constant dense<0.000000e+00> : vector<32x512xf32>
    %40 = tpu.matmul %37, %39, %cst_22 {dimension_numbers = #tpu.dot_dimension_numbers<[1], [0], [0], [1], [0, 0, 1, 1], [], []>} : vector<32x256xf32>, vector<256x512xf32>, vector<32x512xf32> -> vector<32x512xf32>
    %c0_23 = arith.constant 0 : index
    %c0_24 = arith.constant 0 : index
    %41 = vector.load %arg3[%c0_23, %c0_24] : memref<256x512xf32, #tpu.memory_space<vmem>>, vector<256x512xf32>
    %cst_25 = arith.constant dense<0.000000e+00> : vector<32x512xf32>
    %42 = tpu.matmul %22, %41, %cst_25 {dimension_numbers = #tpu.dot_dimension_numbers<[1], [0], [0], [1], [0, 0, 1, 1], [], []>} : vector<32x256xf32>, vector<256x512xf32>, vector<32x512xf32> -> vector<32x512xf32>
    %43 = arith.addf %40, %42 : vector<32x512xf32>
    %c0_26 = arith.constant 0 : index
    %c0_27 = arith.constant 0 : index
    %44 = vector.load %arg4[%c0_26, %c0_27] : memref<256x512xf32, #tpu.memory_space<vmem>>, vector<256x512xf32>
    %cst_28 = arith.constant dense<0.000000e+00> : vector<32x512xf32>
    %45 = tpu.matmul %38, %44, %cst_28 {dimension_numbers = #tpu.dot_dimension_numbers<[1], [0], [0], [1], [0, 0, 1, 1], [], []>} : vector<32x256xf32>, vector<256x512xf32>, vector<32x512xf32> -> vector<32x512xf32>
    %46 = arith.addf %43, %45 : vector<32x512xf32>
    %c0_29 = arith.constant 0 : index
    %c0_30 = arith.constant 0 : index
    %47 = vector.load %arg5[%c0_29, %c0_30] : memref<1x512xf32, #tpu.memory_space<vmem>>, vector<1x512xf32>
    %48 = vector.broadcast %47 : vector<1x512xf32> to vector<32x512xf32>
    %49 = arith.addf %46, %48 : vector<32x512xf32>
    %cst_31 = arith.constant 0.000000e+00 : f32
    %50 = vector.broadcast %cst_31 : f32 to vector<32x512xf32>
    %51 = arith.maximumf %49, %50 : vector<32x512xf32>
    %cst_32 = arith.constant dense<0.000000e+00> : vector<32x512xf32>
    %52 = tpu.matmul %30, %51, %cst_32 {dimension_numbers = #tpu.dot_dimension_numbers<[1], [0], [0], [1], [0, 0, 1, 1], [], []>} : vector<32x32xf32>, vector<32x512xf32>, vector<32x512xf32> -> vector<32x512xf32>
    %cst_33 = arith.constant dense<0.000000e+00> : vector<32x512xf32>
    %53 = tpu.matmul %36, %51, %cst_33 {dimension_numbers = #tpu.dot_dimension_numbers<[1], [0], [0], [1], [0, 0, 1, 1], [], []>} : vector<32x32xf32>, vector<32x512xf32>, vector<32x512xf32> -> vector<32x512xf32>
    %c0_34 = arith.constant 0 : index
    %c0_35 = arith.constant 0 : index
    %54 = vector.load %arg6[%c0_34, %c0_35] : memref<512x512xf32, #tpu.memory_space<vmem>>, vector<512x512xf32>
    %cst_36 = arith.constant dense<0.000000e+00> : vector<32x512xf32>
    %55 = tpu.matmul %52, %54, %cst_36 {dimension_numbers = #tpu.dot_dimension_numbers<[1], [0], [0], [1], [0, 0, 1, 1], [], []>} : vector<32x512xf32>, vector<512x512xf32>, vector<32x512xf32> -> vector<32x512xf32>
    %c0_37 = arith.constant 0 : index
    %c0_38 = arith.constant 0 : index
    %56 = vector.load %arg7[%c0_37, %c0_38] : memref<512x512xf32, #tpu.memory_space<vmem>>, vector<512x512xf32>
    %cst_39 = arith.constant dense<0.000000e+00> : vector<32x512xf32>
    %57 = tpu.matmul %51, %56, %cst_39 {dimension_numbers = #tpu.dot_dimension_numbers<[1], [0], [0], [1], [0, 0, 1, 1], [], []>} : vector<32x512xf32>, vector<512x512xf32>, vector<32x512xf32> -> vector<32x512xf32>
    %58 = arith.addf %55, %57 : vector<32x512xf32>
    %c0_40 = arith.constant 0 : index
    %c0_41 = arith.constant 0 : index
    %59 = vector.load %arg8[%c0_40, %c0_41] : memref<512x512xf32, #tpu.memory_space<vmem>>, vector<512x512xf32>
    %cst_42 = arith.constant dense<0.000000e+00> : vector<32x512xf32>
    %60 = tpu.matmul %53, %59, %cst_42 {dimension_numbers = #tpu.dot_dimension_numbers<[1], [0], [0], [1], [0, 0, 1, 1], [], []>} : vector<32x512xf32>, vector<512x512xf32>, vector<32x512xf32> -> vector<32x512xf32>
    %61 = arith.addf %58, %60 : vector<32x512xf32>
    %c0_43 = arith.constant 0 : index
    %c0_44 = arith.constant 0 : index
    %62 = vector.load %arg9[%c0_43, %c0_44] : memref<1x512xf32, #tpu.memory_space<vmem>>, vector<1x512xf32>
    %63 = vector.broadcast %62 : vector<1x512xf32> to vector<32x512xf32>
    %64 = arith.addf %61, %63 : vector<32x512xf32>
    %c0_45 = arith.constant 0 : index
    %c0_46 = arith.constant 0 : index
    %65 = vector.load %arg10[%c0_45, %c0_46] : memref<256x512xf32, #tpu.memory_space<vmem>>, vector<256x512xf32>
    %cst_47 = arith.constant dense<0.000000e+00> : vector<32x512xf32>
    %66 = tpu.matmul %22, %65, %cst_47 {dimension_numbers = #tpu.dot_dimension_numbers<[1], [0], [0], [1], [0, 0, 1, 1], [], []>} : vector<32x256xf32>, vector<256x512xf32>, vector<32x512xf32> -> vector<32x512xf32>
    %c0_48 = arith.constant 0 : index
    %c0_49 = arith.constant 0 : index
    %67 = vector.load %arg11[%c0_48, %c0_49] : memref<1x512xf32, #tpu.memory_space<vmem>>, vector<1x512xf32>
    %68 = vector.broadcast %67 : vector<1x512xf32> to vector<32x512xf32>
    %69 = arith.addf %66, %68 : vector<32x512xf32>
    %70 = arith.addf %64, %69 : vector<32x512xf32>
    %cst_50 = arith.constant 0.000000e+00 : f32
    %71 = vector.broadcast %cst_50 : f32 to vector<32x512xf32>
    %72 = arith.maximumf %70, %71 : vector<32x512xf32>
    %c0_51 = arith.constant 0 : index
    %c0_52 = arith.constant 0 : index
    %73 = vector.load %arg12[%c0_51, %c0_52] : memref<512x1024xf32, #tpu.memory_space<vmem>>, vector<512x1024xf32>
    %cst_53 = arith.constant dense<0.000000e+00> : vector<32x1024xf32>
    %74 = tpu.matmul %72, %73, %cst_53 {dimension_numbers = #tpu.dot_dimension_numbers<[1], [0], [0], [1], [0, 0, 1, 1], [], []>} : vector<32x512xf32>, vector<512x1024xf32>, vector<32x1024xf32> -> vector<32x1024xf32>
    %c0_54 = arith.constant 0 : index
    %c0_55 = arith.constant 0 : index
    %75 = vector.load %arg14[%c0_54, %c0_55] : memref<1x1024xf32, #tpu.memory_space<vmem>>, vector<1x1024xf32>
    %76 = vector.broadcast %75 : vector<1x1024xf32> to vector<32x1024xf32>
    %77 = arith.addf %74, %76 : vector<32x1024xf32>
    %c0_56 = arith.constant 0 : index
    %c0_57 = arith.constant 0 : index
    %c0_58 = arith.constant 0 : index
    %c0_59 = arith.constant 0 : index
    %78 = vector.load %arg15[%c0_56, %c0_57, %c0_58, %c0_59] : memref<1x2x32x1024xf32, #tpu.memory_space<vmem>>, vector<1x1x32x1024xf32>
    %79 = vector.shape_cast %78 : vector<1x1x32x1024xf32> to vector<32x1024xf32>
    %80 = vector.shape_cast %77 : vector<32x1024xf32> to vector<1x1x32x1024xf32>
    tpu.vector_store %arg15[%c0_56, %c0_57, %c0_58, %c0_59], %80 {strides = array<i32>} : memref<1x2x32x1024xf32, #tpu.memory_space<vmem>>, vector<1x1x32x1024xf32>,
    %c0_60 = arith.constant 0 : index
    %c0_61 = arith.constant 0 : index
    %81 = vector.load %arg13[%c0_60, %c0_61] : memref<512x1024xf32, #tpu.memory_space<vmem>>, vector<512x1024xf32>
    %cst_62 = arith.constant dense<0.000000e+00> : vector<32x1024xf32>
    %82 = tpu.matmul %72, %81, %cst_62 {dimension_numbers = #tpu.dot_dimension_numbers<[1], [0], [0], [1], [0, 0, 1, 1], [], []>} : vector<32x512xf32>, vector<512x1024xf32>, vector<32x1024xf32> -> vector<32x1024xf32>
    %c0_63 = arith.constant 0 : index
    %c0_64 = arith.constant 0 : index
    %83 = vector.load %arg14[%c0_63, %c0_64] : memref<1x1024xf32, #tpu.memory_space<vmem>>, vector<1x1024xf32>
    %84 = vector.broadcast %83 : vector<1x1024xf32> to vector<32x1024xf32>
    %85 = arith.addf %82, %84 : vector<32x1024xf32>
    %c0_65 = arith.constant 0 : index
    %c1_66 = arith.constant 1 : index
    %c0_67 = arith.constant 0 : index
    %c0_68 = arith.constant 0 : index
    %86 = vector.load %arg15[%c0_65, %c1_66, %c0_67, %c0_68] : memref<1x2x32x1024xf32, #tpu.memory_space<vmem>>, vector<1x1x32x1024xf32>
    %87 = vector.shape_cast %86 : vector<1x1x32x1024xf32> to vector<32x1024xf32>
    %88 = vector.shape_cast %85 : vector<32x1024xf32> to vector<1x1x32x1024xf32>
    tpu.vector_store %arg15[%c0_65, %c1_66, %c0_67, %c0_68], %88 {strides = array<i32>} : memref<1x2x32x1024xf32, #tpu.memory_space<vmem>>, vector<1x1x32x1024xf32>,
    return
  }
  func.func @transform_0(%arg0: i32) -> (i32, i32, i32, i32) {
    %c0_i32 = arith.constant 0 : i32
    %c0_i32_0 = arith.constant 0 : i32
    %c0_i32_1 = arith.constant 0 : i32
    %c0_i32_2 = arith.constant 0 : i32
    return %arg0, %c0_i32, %c0_i32_0, %c0_i32_1 : i32, i32, i32, i32
  }
  func.func @transform_1(%arg0: i32) -> (i32, i32) {
    %c0_i32 = arith.constant 0 : i32
    %c0_i32_0 = arith.constant 0 : i32
    %c0_i32_1 = arith.constant 0 : i32
    return %c0_i32, %c0_i32_0 : i32, i32
  }
  func.func @transform_2(%arg0: i32) -> (i32, i32) {
    %c0_i32 = arith.constant 0 : i32
    %c0_i32_0 = arith.constant 0 : i32
    %c0_i32_1 = arith.constant 0 : i32
    return %c0_i32, %c0_i32_0 : i32, i32
  }
  func.func @transform_3(%arg0: i32) -> (i32, i32) {
    %c0_i32 = arith.constant 0 : i32
    %c0_i32_0 = arith.constant 0 : i32
    %c0_i32_1 = arith.constant 0 : i32
    return %c0_i32, %c0_i32_0 : i32, i32
  }
  func.func @transform_4(%arg0: i32) -> (i32, i32) {
    %c0_i32 = arith.constant 0 : i32
    %c0_i32_0 = arith.constant 0 : i32
    %c0_i32_1 = arith.constant 0 : i32
    return %c0_i32, %c0_i32_0 : i32, i32
  }
  func.func @transform_5(%arg0: i32) -> (i32, i32) {
    %c0_i32 = arith.constant 0 : i32
    %c0_i32_0 = arith.constant 0 : i32
    %c0_i32_1 = arith.constant 0 : i32
    return %c0_i32, %c0_i32_0 : i32, i32
  }
  func.func @transform_6(%arg0: i32) -> (i32, i32) {
    %c0_i32 = arith.constant 0 : i32
    %c0_i32_0 = arith.constant 0 : i32
    %c0_i32_1 = arith.constant 0 : i32
    return %c0_i32, %c0_i32_0 : i32, i32
  }
  func.func @transform_7(%arg0: i32) -> (i32, i32) {
    %c0_i32 = arith.constant 0 : i32
    %c0_i32_0 = arith.constant 0 : i32
    %c0_i32_1 = arith.constant 0 : i32
    return %c0_i32, %c0_i32_0 : i32, i32
  }
  func.func @transform_8(%arg0: i32) -> (i32, i32) {
    %c0_i32 = arith.constant 0 : i32
    %c0_i32_0 = arith.constant 0 : i32
    %c0_i32_1 = arith.constant 0 : i32
    return %c0_i32, %c0_i32_0 : i32, i32
  }
  func.func @transform_9(%arg0: i32) -> (i32, i32) {
    %c0_i32 = arith.constant 0 : i32
    %c0_i32_0 = arith.constant 0 : i32
    %c0_i32_1 = arith.constant 0 : i32
    return %c0_i32, %c0_i32_0 : i32, i32
  }
  func.func @transform_10(%arg0: i32) -> (i32, i32) {
    %c0_i32 = arith.constant 0 : i32
    %c0_i32_0 = arith.constant 0 : i32
    %c0_i32_1 = arith.constant 0 : i32
    return %c0_i32, %c0_i32_0 : i32, i32
  }
  func.func @transform_11(%arg0: i32) -> (i32, i32) {
    %c0_i32 = arith.constant 0 : i32
    %c0_i32_0 = arith.constant 0 : i32
    %c0_i32_1 = arith.constant 0 : i32
    return %c0_i32, %c0_i32_0 : i32, i32
  }
  func.func @transform_12(%arg0: i32) -> (i32, i32) {
    %c0_i32 = arith.constant 0 : i32
    %c0_i32_0 = arith.constant 0 : i32
    %c0_i32_1 = arith.constant 0 : i32
    return %c0_i32, %c0_i32_0 : i32, i32
  }
  func.func @transform_13(%arg0: i32) -> (i32, i32) {
    %c0_i32 = arith.constant 0 : i32
    %c0_i32_0 = arith.constant 0 : i32
    %c0_i32_1 = arith.constant 0 : i32
    return %c0_i32, %c0_i32_0 : i32, i32
  }
  func.func @transform_14(%arg0: i32) -> (i32, i32, i32, i32) {
    %c0_i32 = arith.constant 0 : i32
    %c0_i32_0 = arith.constant 0 : i32
    %c0_i32_1 = arith.constant 0 : i32
    %c0_i32_2 = arith.constant 0 : i32
    return %arg0, %c0_i32, %c0_i32_0, %c0_i32_1 : i32, i32, i32, i32
  }
}

</mosaic_0001>

<llo_original>
// kernel: mul.203
$region0: #{mul.203}
  %s0 = inlined_call_operand.vmem [shape: f32[8,2,8], index: 0, kind: input, shape index: {}]
  %s1 = inlined_call_operand.vmem [shape: f32[8,16], index: 1, kind: output, shape index: {}]
  $region1: #{mul.203} parent=0
    #allocation0 [shape = 'u8[32768]{0}', space=vmem, size = 0x8000, scoped, tag = 'scoped mem for input reshape']
    %s3 = sshllo.u32 0, 2
    %s4 = smul.addr 2, 7
    %s5 = scalar_lea.vmem %s0, %s4
    %v6 = vld [vmem:[%s5] sm:%s3]
    %s7 = scalar_lea.vmem [#allocation0], 56
    %8 = vst [vmem:[%s7] sm:%s3] %v6
    %s9 = smul.addr 2, 6
    %s10 = scalar_lea.vmem %s0, %s9
    %v11 = vld [vmem:[%s10] sm:%s3]
    %s12 = scalar_lea.vmem [#allocation0], 48
    %13 = vst [vmem:[%s12] sm:%s3] %v11
    %s14 = smul.addr 2, 5
    %s15 = scalar_lea.vmem %s0, %s14
    %v16 = vld [vmem:[%s15] sm:%s3]
    %s17 = scalar_lea.vmem [#allocation0], 40
    %18 = vst [vmem:[%s17] sm:%s3] %v16
    %s19 = smul.addr 2, 4
    %s20 = scalar_lea.vmem %s0, %s19
    %v21 = vld [vmem:[%s20] sm:%s3]
    %s22 = scalar_lea.vmem [#allocation0], 32
    %23 = vst [vmem:[%s22] sm:%s3] %v21
    %s24 = smul.addr 2, 3
    %s25 = scalar_lea.vmem %s0, %s24
    %v26 = vld [vmem:[%s25] sm:%s3]
    %s27 = scalar_lea.vmem [#allocation0], 24
    %28 = vst [vmem:[%s27] sm:%s3] %v26
    %s29 = smul.addr 2, 2
    %s30 = scalar_lea.vmem %s0, %s29
    %v31 = vld [vmem:[%s30] sm:%s3]
    %s32 = scalar_lea.vmem [#allocation0], 16
    %33 = vst [vmem:[%s32] sm:%s3] %v31
    %s34 = scalar_lea.vmem %s0, 2
    %v35 = vld [vmem:[%s34] sm:%s3]
    %s36 = scalar_lea.vmem [#allocation0], 8
    %37 = vst [vmem:[%s36] sm:%s3] %v35
    %v38 = vld [vmem:[%s0] sm:%s3]
    %39 = vst [vmem:[#allocation0] sm:%s3] %v38
    %v40 = vld [vmem:[#allocation0] ss:$8 sm:$0xf]
    %v41 = vld [vmem:[#allocation0] ss:$8 sm:$0xf0]
    %vm42 = vcmask 1047556
    %v43 = vsel %vm42, %v41, %v40
    %vm44 = vcmask 64512
    %45 = vst.msk [vmem:[%s1] sm:$0xff] %vm44, %v43
    %s46 = scalar_lea.vmem [#allocation0], 1
    %v47 = vld [vmem:[%s46] ss:$8 sm:$0xf]
    %s48 = scalar_lea.vmem [#allocation0], 1
    %v49 = vld [vmem:[%s48] ss:$8 sm:$0xf0]
    %vm50 = vcmask 1047556
    %v51 = vsel %vm50, %v49, %v47
    %52 = vrot.lane.b32.xlu0 %v51, 8
    %v53 = vpop.permute.xlu0 %52
    %vm54 = vcmask 130112
    %55 = vst.msk [vmem:[%s1] sm:$0xff] %vm54, %v53

// kernel: unet_decoder_forward.2
$region0: #{unet_decoder_forward.2}
  #allocation0 [shape = 'u32[]', space=smem, size = 0x4, offset = 0x4, fixed_abs, tag = 'smem constant byte address 0x4 - core index']
  #allocation1 [shape = 'u32[144,128]{1,0:T(1,128)}', space=vmem, size = 0x12000, scoped, tag = 'internal scratch']
  %s0 = inlined_call_operand.vmem [shape: f32[2,16,64], index: 0, kind: input, shape index: {}]
  %s1 = inlined_call_operand.vmem [shape: f32[64,128], index: 1, kind: input, shape index: {}]
  %s2 = inlined_call_operand.vmem [shape: f32[64,128], index: 2, kind: input, shape index: {}]
  %s3 = inlined_call_operand.vmem [shape: f32[64,128], index: 3, kind: input, shape index: {}]
  %s4 = inlined_call_operand.vmem [shape: f32[1,128], index: 4, kind: input, shape index: {}]
  %s5 = inlined_call_operand.vmem [shape: f32[128,128], index: 5, kind: input, shape index: {}]
  %s6 = inlined_call_operand.vmem [shape: f32[128,128], index: 6, kind: input, shape index: {}]
  %s7 = inlined_call_operand.vmem [shape: f32[128,128], index: 7, kind: input, shape index: {}]
  %s8 = inlined_call_operand.vmem [shape: f32[1,128], index: 8, kind: input, shape index: {}]
  %s9 = inlined_call_operand.vmem [shape: f32[64,128], index: 9, kind: input, shape index: {}]
  %s10 = inlined_call_operand.vmem [shape: f32[1,128], index: 10, kind: input, shape index: {}]
  %s11 = inlined_call_operand.vmem [shape: f32[128,256], index: 11, kind: input, shape index: {}]
  %s12 = inlined_call_operand.vmem [shape: f32[128,256], index: 12, kind: input, shape index: {}]
  %s13 = inlined_call_operand.vmem [shape: f32[1,256], index: 13, kind: input, shape index: {}]
  %s14 = inlined_call_operand.vmem [shape: f32[2,2,16,256], index: 14, kind: output, shape index: {}]
  %s15 = sld [smem:[#allocation0]]
  $region89: #{unet_decoder_forward.2} parent=0
    _
  %s17 = ssub.s32 1, %s15
  %s18 = scalar_select 0, %s17, %s15
  loop: start=0, step=1, limit=4
  $region2: #{unet_decoder_forward.2} parent=0 // loop_pre_header
    _
  $region3: #{unet_decoder_forward.2} parent=0 // loop_header
    %s20 = sphi 0, %s24
    %p21 = scmp.ge.s32.totalorder %s20, 4
    %s30 = sphi 0, %s32
    %s33 = sphi 0, %s30
    %s34 = sphi 0, %s33
    %s50 = sphi 0, %s34
    %s54 = sphi 0, %s54
    %s56 = sphi 0, %s54
    %s57 = sphi 0, %s56
    %s71 = sphi 0, %s57
    %s75 = sphi 0, %s75
    %s77 = sphi 0, %s75
    %s78 = sphi 0, %s77
    %s92 = sphi 0, %s78
    %s96 = sphi 0, %s96
    %s98 = sphi 0, %s96
    %s99 = sphi 0, %s98
    %s113 = sphi 0, %s99
    %s117 = sphi 0, %s117
    %s119 = sphi 0, %s117
    %s120 = sphi 0, %s119
    %s134 = sphi 0, %s120
    %s138 = sphi 0, %s138
    %s140 = sphi 0, %s138
    %s141 = sphi 0, %s140
    %s155 = sphi 0, %s141
    %s159 = sphi 0, %s159
    %s161 = sphi 0, %s159
    %s162 = sphi 0, %s161
    %s176 = sphi 0, %s162
    %s180 = sphi 0, %s180
    %s182 = sphi 0, %s180
    %s183 = sphi 0, %s182
    %s197 = sphi 0, %s183
    %s201 = sphi 0, %s201
    %s203 = sphi 0, %s201
    %s204 = sphi 0, %s203
    %s218 = sphi 0, %s204
    %s222 = sphi 0, %s222
    %s224 = sphi 0, %s222
    %s225 = sphi 0, %s224
    %s239 = sphi 0, %s225
    %s243 = sphi 0, %s243
    %s245 = sphi 0, %s243
    %s246 = sphi 0, %s245
    %s260 = sphi 0, %s246
    %s264 = sphi 0, %s264
    %s266 = sphi 0, %s264
    %s267 = sphi 0, %s266
    %s281 = sphi 0, %s267
    %s285 = sphi 0, %s285
    %s287 = sphi 0, %s285
    %s288 = sphi 0, %s287
    %s302 = sphi 0, %s288
    %s306 = sphi 0, %s306
    %s308 = sphi 0, %s306
    %s309 = sphi 0, %s308
    %s323 = sphi 0, %s309
    %s329 = sphi 0, %s331
    %s332 = sphi 0, %s329
    %s333 = sphi 0, %s332
    %s349 = sphi 0, %s333
  $region4: #{unet_decoder_forward.2} parent=0 // loop_header_branch
    %23 = sbr.rel (%p21) target = $region8
  $region5: #{unet_decoder_forward.2} parent=0 // loop_body
    %s25 = ssub.s32 %s20, 1
    %s26 = ssub.s32 %s20, 2
    %s27 = sadd.s32 %s20, 1
    %s28 = ssub.s32 %s20, %s27
    %p29 = scmp.eq.s32.totalorder %s28, 0
    %s31 = sadd.s32 %s30, 1
    %s32 = scalar_select %p29, %s30, %s31
    %p35 = pneg %p29
    %p36 = scmp.eq.s32.totalorder %s20, 1
    %p37 = por %p35, %p36
    %p38 = scmp.ne.s32.totalorder %s30, %s33
    %p39 = scmp.eq.s32.totalorder %s20, 0
    %p40 = por %p38, %p39
    %p41 = scmp.ne.s32.totalorder %s30, %s33
    %p42 = scmp.eq.s32.totalorder %s25, 1
    %p43 = por %p41, %p42
    %p44 = scmp.ne.s32.totalorder %s33, %s34
    %p45 = scmp.eq.s32.totalorder %s25, 0
    %p46 = por %p44, %p45
    %p47 = scmp.ne.s32.totalorder %s33, %s34
    %p48 = scmp.eq.s32.totalorder %s26, 1
    %p49 = por %p47, %p48
    %p51 = scmp.ne.s32.totalorder %s34, %s50
    %p52 = scmp.eq.s32.totalorder %s26, 0
    %p53 = por %p51, %p52
    %s55 = sadd.s32 %s54, 1
    %p58 = scmp.eq.s32.totalorder %s20, 1
    %p59 = scmp.ne.s32.totalorder %s54, %s56
    %p60 = scmp.eq.s32.totalorder %s20, 0
    %p61 = por %p59, %p60
    %p62 = scmp.ne.s32.totalorder %s54, %s56
    %p63 = scmp.eq.s32.totalorder %s25, 1
    %p64 = por %p62, %p63
    %p65 = scmp.ne.s32.totalorder %s56, %s57
    %p66 = scmp.eq.s32.totalorder %s25, 0
    %p67 = por %p65, %p66
    %p68 = scmp.ne.s32.totalorder %s56, %s57
    %p69 = scmp.eq.s32.totalorder %s26, 1
    %p70 = por %p68, %p69
    %p72 = scmp.ne.s32.totalorder %s57, %s71
    %p73 = scmp.eq.s32.totalorder %s26, 0
    %p74 = por %p72, %p73
    %s76 = sadd.s32 %s75, 1
    %p79 = scmp.eq.s32.totalorder %s20, 1
    %p80 = scmp.ne.s32.totalorder %s75, %s77
    %p81 = scmp.eq.s32.totalorder %s20, 0
    %p82 = por %p80, %p81
    %p83 = scmp.ne.s32.totalorder %s75, %s77
    %p84 = scmp.eq.s32.totalorder %s25, 1
    %p85 = por %p83, %p84
    %p86 = scmp.ne.s32.totalorder %s77, %s78
    %p87 = scmp.eq.s32.totalorder %s25, 0
    %p88 = por %p86, %p87
    %p89 = scmp.ne.s32.totalorder %s77, %s78
    %p90 = scmp.eq.s32.totalorder %s26, 1
    %p91 = por %p89, %p90
    %p93 = scmp.ne.s32.totalorder %s78, %s92
    %p94 = scmp.eq.s32.totalorder %s26, 0
    %p95 = por %p93, %p94
    %s97 = sadd.s32 %s96, 1
    %p100 = scmp.eq.s32.totalorder %s20, 1
    %p101 = scmp.ne.s32.totalorder %s96, %s98
    %p102 = scmp.eq.s32.totalorder %s20, 0
    %p103 = por %p101, %p102
    %p104 = scmp.ne.s32.totalorder %s96, %s98
    %p105 = scmp.eq.s32.totalorder %s25, 1
    %p106 = por %p104, %p105
    %p107 = scmp.ne.s32.totalorder %s98, %s99
    %p108 = scmp.eq.s32.totalorder %s25, 0
    %p109 = por %p107, %p108
    %p110 = scmp.ne.s32.totalorder %s98, %s99
    %p111 = scmp.eq.s32.totalorder %s26, 1
    %p112 = por %p110, %p111
    %p114 = scmp.ne.s32.totalorder %s99, %s113
    %p115 = scmp.eq.s32.totalorder %s26, 0
    %p116 = por %p114, %p115
    %s118 = sadd.s32 %s117, 1
    %p121 = scmp.eq.s32.totalorder %s20, 1
    %p122 = scmp.ne.s32.totalorder %s117, %s119
    %p123 = scmp.eq.s32.totalorder %s20, 0
    %p124 = por %p122, %p123
    %p125 = scmp.ne.s32.totalorder %s117, %s119
    %p126 = scmp.eq.s32.totalorder %s25, 1
    %p127 = por %p125, %p126
    %p128 = scmp.ne.s32.totalorder %s119, %s120
    %p129 = scmp.eq.s32.totalorder %s25, 0
    %p130 = por %p128, %p129
    %p131 = scmp.ne.s32.totalorder %s119, %s120
    %p132 = scmp.eq.s32.totalorder %s26, 1
    %p133 = por %p131, %p132
    %p135 = scmp.ne.s32.totalorder %s120, %s134
    %p136 = scmp.eq.s32.totalorder %s26, 0
    %p137 = por %p135, %p136
    %s139 = sadd.s32 %s138, 1
    %p142 = scmp.eq.s32.totalorder %s20, 1
    %p143 = scmp.ne.s32.totalorder %s138, %s140
    %p144 = scmp.eq.s32.totalorder %s20, 0
    %p145 = por %p143, %p144
    %p146 = scmp.ne.s32.totalorder %s138, %s140
    %p147 = scmp.eq.s32.totalorder %s25, 1
    %p148 = por %p146, %p147
    %p149 = scmp.ne.s32.totalorder %s140, %s141
    %p150 = scmp.eq.s32.totalorder %s25, 0
    %p151 = por %p149, %p150
    %p152 = scmp.ne.s32.totalorder %s140, %s141
    %p153 = scmp.eq.s32.totalorder %s26, 1
    %p154 = por %p152, %p153
    %p156 = scmp.ne.s32.totalorder %s141, %s155
    %p157 = scmp.eq.s32.totalorder %s26, 0
    %p158 = por %p156, %p157
    %s160 = sadd.s32 %s159, 1
    %p163 = scmp.eq.s32.totalorder %s20, 1
    %p164 = scmp.ne.s32.totalorder %s159, %s161
    %p165 = scmp.eq.s32.totalorder %s20, 0
    %p166 = por %p164, %p165
    %p167 = scmp.ne.s32.totalorder %s159, %s161
    %p168 = scmp.eq.s32.totalorder %s25, 1
    %p169 = por %p167, %p168
    %p170 = scmp.ne.s32.totalorder %s161, %s162
    %p171 = scmp.eq.s32.totalorder %s25, 0
    %p172 = por %p170, %p171
    %p173 = scmp.ne.s32.totalorder %s161, %s162
    %p174 = scmp.eq.s32.totalorder %s26, 1
    %p175 = por %p173, %p174
    %p177 = scmp.ne.s32.totalorder %s162, %s176
    %p178 = scmp.eq.s32.totalorder %s26, 0
    %p179 = por %p177, %p178
    %s181 = sadd.s32 %s180, 1
    %p184 = scmp.eq.s32.totalorder %s20, 1
    %p185 = scmp.ne.s32.totalorder %s180, %s182
    %p186 = scmp.eq.s32.totalorder %s20, 0
    %p187 = por %p185, %p186
    %p188 = scmp.ne.s32.totalorder %s180, %s182
    %p189 = scmp.eq.s32.totalorder %s25, 1
    %p190 = por %p188, %p189
    %p191 = scmp.ne.s32.totalorder %s182, %s183
    %p192 = scmp.eq.s32.totalorder %s25, 0
    %p193 = por %p191, %p192
    %p194 = scmp.ne.s32.totalorder %s182, %s183
    %p195 = scmp.eq.s32.totalorder %s26, 1
    %p196 = por %p194, %p195
    %p198 = scmp.ne.s32.totalorder %s183, %s197
    %p199 = scmp.eq.s32.totalorder %s26, 0
    %p200 = por %p198, %p199
    %s202 = sadd.s32 %s201, 1
    %p205 = scmp.eq.s32.totalorder %s20, 1
    %p206 = scmp.ne.s32.totalorder %s201, %s203
    %p207 = scmp.eq.s32.totalorder %s20, 0
    %p208 = por %p206, %p207
    %p209 = scmp.ne.s32.totalorder %s201, %s203
    %p210 = scmp.eq.s32.totalorder %s25, 1
    %p211 = por %p209, %p210
    %p212 = scmp.ne.s32.totalorder %s203, %s204
    %p213 = scmp.eq.s32.totalorder %s25, 0
    %p214 = por %p212, %p213
    %p215 = scmp.ne.s32.totalorder %s203, %s204
    %p216 = scmp.eq.s32.totalorder %s26, 1
    %p217 = por %p215, %p216
    %p219 = scmp.ne.s32.totalorder %s204, %s218
    %p220 = scmp.eq.s32.totalorder %s26, 0
    %p221 = por %p219, %p220
    %s223 = sadd.s32 %s222, 1
    %p226 = scmp.eq.s32.totalorder %s20, 1
    %p227 = scmp.ne.s32.totalorder %s222, %s224
    %p228 = scmp.eq.s32.totalorder %s20, 0
    %p229 = por %p227, %p228
    %p230 = scmp.ne.s32.totalorder %s222, %s224
    %p231 = scmp.eq.s32.totalorder %s25, 1
    %p232 = por %p230, %p231
    %p233 = scmp.ne.s32.totalorder %s224, %s225
    %p234 = scmp.eq.s32.totalorder %s25, 0
    %p235 = por %p233, %p234
    %p236 = scmp.ne.s32.totalorder %s224, %s225
    %p237 = scmp.eq.s32.totalorder %s26, 1
    %p238 = por %p236, %p237
    %p240 = scmp.ne.s32.totalorder %s225, %s239
    %p241 = scmp.eq.s32.totalorder %s26, 0
    %p242 = por %p240, %p241
    %s244 = sadd.s32 %s243, 1
    %p247 = scmp.eq.s32.totalorder %s20, 1
    %p248 = scmp.ne.s32.totalorder %s243, %s245
    %p249 = scmp.eq.s32.totalorder %s20, 0
    %p250 = por %p248, %p249
    %p251 = scmp.ne.s32.totalorder %s243, %s245
    %p252 = scmp.eq.s32.totalorder %s25, 1
    %p253 = por %p251, %p252
    %p254 = scmp.ne.s32.totalorder %s245, %s246
    %p255 = scmp.eq.s32.totalorder %s25, 0
    %p256 = por %p254, %p255
    %p257 = scmp.ne.s32.totalorder %s245, %s246
    %p258 = scmp.eq.s32.totalorder %s26, 1
    %p259 = por %p257, %p258
    %p261 = scmp.ne.s32.totalorder %s246, %s260
    %p262 = scmp.eq.s32.totalorder %s26, 0
    %p263 = por %p261, %p262
    %s265 = sadd.s32 %s264, 1
    %p268 = scmp.eq.s32.totalorder %s20, 1
    %p269 = scmp.ne.s32.totalorder %s264, %s266
    %p270 = scmp.eq.s32.totalorder %s20, 0
    %p271 = por %p269, %p270
    %p272 = scmp.ne.s32.totalorder %s264, %s266
    %p273 = scmp.eq.s32.totalorder %s25, 1
    %p274 = por %p272, %p273
    %p275 = scmp.ne.s32.totalorder %s266, %s267
    %p276 = scmp.eq.s32.totalorder %s25, 0
    %p277 = por %p275, %p276
    %p278 = scmp.ne.s32.totalorder %s266, %s267
    %p279 = scmp.eq.s32.totalorder %s26, 1
    %p280 = por %p278, %p279
    %p282 = scmp.ne.s32.totalorder %s267, %s281
    %p283 = scmp.eq.s32.totalorder %s26, 0
    %p284 = por %p282, %p283
    %s286 = sadd.s32 %s285, 1
    %p289 = scmp.eq.s32.totalorder %s20, 1
    %p290 = scmp.ne.s32.totalorder %s285, %s287
    %p291 = scmp.eq.s32.totalorder %s20, 0
    %p292 = por %p290, %p291
    %p293 = scmp.ne.s32.totalorder %s285, %s287
    %p294 = scmp.eq.s32.totalorder %s25, 1
    %p295 = por %p293, %p294
    %p296 = scmp.ne.s32.totalorder %s287, %s288
    %p297 = scmp.eq.s32.totalorder %s25, 0
    %p298 = por %p296, %p297
    %p299 = scmp.ne.s32.totalorder %s287, %s288
    %p300 = scmp.eq.s32.totalorder %s26, 1
    %p301 = por %p299, %p300
    %p303 = scmp.ne.s32.totalorder %s288, %s302
    %p304 = scmp.eq.s32.totalorder %s26, 0
    %p305 = por %p303, %p304
    %s307 = sadd.s32 %s306, 1
    %p310 = scmp.eq.s32.totalorder %s20, 1
    %p311 = scmp.ne.s32.totalorder %s306, %s308
    %p312 = scmp.eq.s32.totalorder %s20, 0
    %p313 = por %p311, %p312
    %p314 = scmp.ne.s32.totalorder %s306, %s308
    %p315 = scmp.eq.s32.totalorder %s25, 1
    %p316 = por %p314, %p315
    %p317 = scmp.ne.s32.totalorder %s308, %s309
    %p318 = scmp.eq.s32.totalorder %s25, 0
    %p319 = por %p317, %p318
    %p320 = scmp.ne.s32.totalorder %s308, %s309
    %p321 = scmp.eq.s32.totalorder %s26, 1
    %p322 = por %p320, %p321
    %p324 = scmp.ne.s32.totalorder %s309, %s323
    %p325 = scmp.eq.s32.totalorder %s26, 0
    %p326 = por %p324, %p325
    %s327 = ssub.s32 %s20, %s27
    %p328 = scmp.eq.s32.totalorder %s327, 0
    %s330 = sadd.s32 %s329, 1
    %s331 = scalar_select %p328, %s329, %s330
    %p334 = pneg %p328
    %p335 = scmp.eq.s32.totalorder %s20, 1
    %p336 = por %p334, %p335
    %p337 = scmp.ne.s32.totalorder %s329, %s332
    %p338 = scmp.eq.s32.totalorder %s20, 0
    %p339 = por %p337, %p338
    %p340 = scmp.ne.s32.totalorder %s329, %s332
    %p341 = scmp.eq.s32.totalorder %s25, 1
    %p342 = por %p340, %p341
    %p343 = scmp.ne.s32.totalorder %s332, %s333
    %p344 = scmp.eq.s32.totalorder %s25, 0
    %p345 = por %p343, %p344
    %p346 = scmp.ne.s32.totalorder %s332, %s333
    %p347 = scmp.eq.s32.totalorder %s26, 1
    %p348 = por %p346, %p347
    %p350 = scmp.ne.s32.totalorder %s333, %s349
    %p351 = scmp.eq.s32.totalorder %s26, 0
    %p352 = por %p350, %p351
    %p353 = scmp.le.s32.totalorder 1, %s20
    %p354 = scmp.lt.s32.totalorder %s20, 3
    %p355 = pnand %p353, %p354
    %p356 = pneg %p355
    // Predicated region
    $region9: #{unet_decoder_forward.2} parent=5 // pred_check
      _
    $region10: #{unet_decoder_forward.2} parent=5 // pred_check_branch
      %358 = sbr.rel (%p355) target = $region12
    $region11: #{unet_decoder_forward.2} parent=5 // pred_region
      %s359 = ssub.s32 %s20, 1
      // Predicated region
      $region13: #{unet_decoder_forward.2} parent=11 // pred_check
        %p360 = pneg %p67
      $region14: #{unet_decoder_forward.2} parent=11 // pred_check_branch
        %362 = sbr.rel (%p360) target = $region16
      $region15: #{unet_decoder_forward.2} parent=11 // pred_region
        _
      $region16: #{unet_decoder_forward.2} parent=11 // pred_fallthru
        _
      // Predicated region
      $region17: #{unet_decoder_forward.2} parent=11 // pred_check
        %p363 = pneg %p88
      $region18: #{unet_decoder_forward.2} parent=11 // pred_check_branch
        %365 = sbr.rel (%p363) target = $region20
      $region19: #{unet_decoder_forward.2} parent=11 // pred_region
        _
      $region20: #{unet_decoder_forward.2} parent=11 // pred_fallthru
        _
      // Predicated region
      $region21: #{unet_decoder_forward.2} parent=11 // pred_check
        %p366 = pneg %p109
      $region22: #{unet_decoder_forward.2} parent=11 // pred_check_branch
        %368 = sbr.rel (%p366) target = $region24
      $region23: #{unet_decoder_forward.2} parent=11 // pred_region
        _
      $region24: #{unet_decoder_forward.2} parent=11 // pred_fallthru
        _
      // Predicated region
      $region25: #{unet_decoder_forward.2} parent=11 // pred_check
        %p369 = pneg %p130
      $region26: #{unet_decoder_forward.2} parent=11 // pred_check_branch
        %371 = sbr.rel (%p369) target = $region28
      $region27: #{unet_decoder_forward.2} parent=11 // pred_region
        _
      $region28: #{unet_decoder_forward.2} parent=11 // pred_fallthru
        _
      // Predicated region
      $region29: #{unet_decoder_forward.2} parent=11 // pred_check
        %p372 = pneg %p151
      $region30: #{unet_decoder_forward.2} parent=11 // pred_check_branch
        %374 = sbr.rel (%p372) target = $region32
      $region31: #{unet_decoder_forward.2} parent=11 // pred_region
        _
      $region32: #{unet_decoder_forward.2} parent=11 // pred_fallthru
        _
      // Predicated region
      $region33: #{unet_decoder_forward.2} parent=11 // pred_check
        %p375 = pneg %p172
      $region34: #{unet_decoder_forward.2} parent=11 // pred_check_branch
        %377 = sbr.rel (%p375) target = $region36
      $region35: #{unet_decoder_forward.2} parent=11 // pred_region
        _
      $region36: #{unet_decoder_forward.2} parent=11 // pred_fallthru
        _
      // Predicated region
      $region37: #{unet_decoder_forward.2} parent=11 // pred_check
        %p378 = pneg %p193
      $region38: #{unet_decoder_forward.2} parent=11 // pred_check_branch
        %380 = sbr.rel (%p378) target = $region40
      $region39: #{unet_decoder_forward.2} parent=11 // pred_region
        _
      $region40: #{unet_decoder_forward.2} parent=11 // pred_fallthru
        _
      // Predicated region
      $region41: #{unet_decoder_forward.2} parent=11 // pred_check
        %p381 = pneg %p214
      $region42: #{unet_decoder_forward.2} parent=11 // pred_check_branch
        %383 = sbr.rel (%p381) target = $region44
      $region43: #{unet_decoder_forward.2} parent=11 // pred_region
        _
      $region44: #{unet_decoder_forward.2} parent=11 // pred_fallthru
        _
      // Predicated region
      $region45: #{unet_decoder_forward.2} parent=11 // pred_check
        %p384 = pneg %p235
      $region46: #{unet_decoder_forward.2} parent=11 // pred_check_branch
        %386 = sbr.rel (%p384) target = $region48
      $region47: #{unet_decoder_forward.2} parent=11 // pred_region
        _
      $region48: #{unet_decoder_forward.2} parent=11 // pred_fallthru
        _
      // Predicated region
      $region49: #{unet_decoder_forward.2} parent=11 // pred_check
        %p387 = pneg %p256
      $region50: #{unet_decoder_forward.2} parent=11 // pred_check_branch
        %389 = sbr.rel (%p387) target = $region52
      $region51: #{unet_decoder_forward.2} parent=11 // pred_region
        _
      $region52: #{unet_decoder_forward.2} parent=11 // pred_fallthru
        _
      // Predicated region
      $region53: #{unet_decoder_forward.2} parent=11 // pred_check
        %p390 = pneg %p277
      $region54: #{unet_decoder_forward.2} parent=11 // pred_check_branch
        %392 = sbr.rel (%p390) target = $region56
      $region55: #{unet_decoder_forward.2} parent=11 // pred_region
        _
      $region56: #{unet_decoder_forward.2} parent=11 // pred_fallthru
        _
      // Predicated region
      $region57: #{unet_decoder_forward.2} parent=11 // pred_check
        %p393 = pneg %p298
      $region58: #{unet_decoder_forward.2} parent=11 // pred_check_branch
        %395 = sbr.rel (%p393) target = $region60
      $region59: #{unet_decoder_forward.2} parent=11 // pred_region
        _
      $region60: #{unet_decoder_forward.2} parent=11 // pred_fallthru
        _
      // Predicated region
      $region61: #{unet_decoder_forward.2} parent=11 // pred_check
        %p396 = pneg %p319
      $region62: #{unet_decoder_forward.2} parent=11 // pred_check_branch
        %398 = sbr.rel (%p396) target = $region64
      $region63: #{unet_decoder_forward.2} parent=11 // pred_region
        _
      $region64: #{unet_decoder_forward.2} parent=11 // pred_fallthru
        _
    $region12: #{unet_decoder_forward.2} parent=5 // pred_fallthru
      _
    %p399 = scmp.lt.s32.totalorder %s20, 2
    // Predicated region
    $region65: #{unet_decoder_forward.2} parent=5 // pred_check
      %p400 = pneg %p399
    $region66: #{unet_decoder_forward.2} parent=5 // pred_check_branch
      %402 = sbr.rel (%p400) target = $region68
    $region67: #{unet_decoder_forward.2} parent=5 // pred_region
      // Predicated region
      $region69: #{unet_decoder_forward.2} parent=67 // pred_check
        %p403 = pneg %p40
      $region70: #{unet_decoder_forward.2} parent=67 // pred_check_branch
        %405 = sbr.rel (%p403) target = $region72
      $region71: #{unet_decoder_forward.2} parent=67 // pred_region
        %p406 = scmp.lt.s32.totalorder %s20, 1
        %s407 = scalar_select %p406, %s20, 1
        %s408 = smul.addr %s407, 2
        %s409 = smul.addr %s408, 8
        %s410 = scalar_lea.vmem %s0, %s409
      $region72: #{unet_decoder_forward.2} parent=67 // pred_fallthru
        _
    $region68: #{unet_decoder_forward.2} parent=5 // pred_fallthru
      _
    %p411 = scmp.le.s32.totalorder 1, %s20
    %p412 = scmp.lt.s32.totalorder %s20, 3
    %p413 = pnand %p411, %p412
    %p414 = pneg %p413
    // Predicated region
    $region73: #{unet_decoder_forward.2} parent=5 // pred_check
      _
    $region74: #{unet_decoder_forward.2} parent=5 // pred_check_branch
      %416 = sbr.rel (%p413) target = $region76
    $region75: #{unet_decoder_forward.2} parent=5 // pred_region
      %s417 = ssub.s32 %s20, 1
      %p418 = scmp.lt.s32.totalorder %s25, 1
      %s419 = scalar_select %p418, %s25, 1
      %s420 = smul.addr %s419, 2
      %s421 = smul.addr %s420, 8
      %s422 = scalar_lea.vmem %s0, %s421
      %p423 = pneg %p46
      %p424 = pneg %p43
      %p425 = pneg %p67
      %p426 = pneg %p64
      %p427 = pneg %p88
      %p428 = pneg %p85
      %p429 = pneg %p109
      %p430 = pneg %p106
      %p431 = pneg %p130
      %p432 = pneg %p127
      %p433 = pneg %p151
      %p434 = pneg %p148
      %p435 = pneg %p172
      %p436 = pneg %p169
      %p437 = pneg %p193
      %p438 = pneg %p190
      %p439 = pneg %p214
      %p440 = pneg %p211
      %p441 = pneg %p235
      %p442 = pneg %p232
      %p443 = pneg %p256
      %p444 = pneg %p253
      %p445 = pneg %p277
      %p446 = pneg %p274
      %p447 = pneg %p298
      %p448 = pneg %p295
      %p449 = pneg %p319
      %p450 = pneg %p316
      %p451 = pneg %p345
      %p452 = pneg %p342
      %p453 = scmp.lt.s32.totalorder %s25, 1
      %s454 = scalar_select %p453, %s25, 1
      %s455 = smul.addr %s454, 8
      %s456 = smul.addr %s455, 8
      %s457 = scalar_lea.vmem %s14, %s456
      %p458 = scmp.lt.s32.totalorder %s25, 1
      %s459 = scalar_select %p458, %s25, 1
      %s460 = smul.addr %s459, 2
      %s461 = smul.addr %s460, 8
      %s462 = scalar_lea.vmem %s0, %s461
      %p463 = scmp.lt.s32.totalorder %s25, 1
      %s464 = scalar_select %p463, %s25, 1
      %s465 = smul.addr %s464, 8
      %s466 = smul.addr %s465, 8
      %s467 = scalar_lea.vmem %s14, %s466
      %v468 = vld [vmem:[%s462] sm:$0xff]
      %v469 = vld [vmem:[%s462 + $0x8] sm:$0xff]
      %v470 = vlaneseq
      %v471 = vshrl.u32 %v470, 7
      %v472 = vadd.s32 %v471, 8
      %v473 = vlaneseq
      %v474 = vand.u32 %v473, 127
      %v475 = vadd.s32 %v474, 1
      %vm476 = vcmp.eq.s32.totalorder %v471, %v475
      %vm477 = vcmp.eq.s32.totalorder %v472, %v475
      %v478 = vsel %vm476, 1.0, 0.0
      %v479 = vsel %vm477, 1.0, 0.0
      %v480 = vsub.s32 %v474, 1
      %vm481 = vcmp.eq.s32.totalorder %v471, %v480
      %vm482 = vcmp.eq.s32.totalorder %v472, %v480
      %v483 = vsel %vm481, 1.0, 0.0
      %v484 = vsel %vm482, 1.0, 0.0
      %vm485 = vcmask 130048
      %v487 = vsel %vm485, %v478, 0
      %v490 = vsel %vm485, %v479, 0
      %492 = vmatprep.subr.mxu0 0.0
      %493 = vmatpush1.msra.mxu0 %v468
      %494 = vmatprep.subr.mxu0 0.0
      %495 = vmatpush1.msra.mxu0 %v469
      %496 = vmatprep.subr.mxu0 0.0
      %497 = vmatpush1.msra.mxu0 0.0
      %498 = vmatprep.subr.mxu0 0.0
      %499 = vmatpush1.msra.mxu0 0.0
      %500 = vmatprep.subr.mxu0 0.0
      %501 = vmatpush1.msra.mxu0 0.0
      %502 = vmatprep.subr.mxu0 0.0
      %503 = vmatpush1.msra.mxu0 0.0
      %504 = vmatprep.subr.mxu0 0.0
      %505 = vmatpush1.msra.mxu0 0.0
      %506 = vmatprep.subr.mxu0 0.0
      %507 = vmatpush1.msra.mxu0 0.0
      %508 = vmatprep.subr.mxu0 0.0
      %509 = vmatpush1.msra.mxu0 0.0
      %510 = vmatprep.subr.mxu0 0.0
      %511 = vmatpush1.msra.mxu0 0.0
      %512 = vmatprep.subr.mxu0 0.0
      %513 = vmatpush1.msra.mxu0 0.0
      %514 = vmatprep.subr.mxu0 0.0
      %515 = vmatpush1.msra.mxu0 0.0
      %516 = vmatprep.subr.mxu0 0.0
      %517 = vmatpush1.msra.mxu0 0.0
      %518 = vmatprep.subr.mxu0 0.0
      %519 = vmatpush1.msra.mxu0 0.0
      %520 = vmatprep.subr.mxu0 0.0
      %521 = vmatpush1.msra.mxu0 0.0
      %522 = vmatprep.subr.mxu0 0.0
      %523 = vmatpush1.msra.mxu0 0.0
      %524 = vmatprep.subr.mxu0 0.0
      %525 = vmatpush1.msra.mxu0 0.0
      %526 = vmatprep.subr.mxu0 0.0
      %527 = vmatpush1.msra.mxu0 0.0
      %528 = vmatprep.subr.mxu0 0.0
      %529 = vmatpush1.msra.mxu0 0.0
      %530 = vmatprep.subr.mxu0 0.0
      %531 = vmatpush1.msra.mxu0 0.0
      %532 = vmatprep.subr.mxu0 0.0
      %533 = vmatpush1.msra.mxu0 0.0
      %534 = vmatprep.subr.mxu0 0.0
      %535 = vmatpush1.msra.mxu0 0.0
      %536 = vmatprep.subr.mxu0 0.0
      %537 = vmatpush1.msra.mxu0 0.0
      %538 = vmatprep.subr.mxu0 0.0
      %539 = vmatpush1.msra.mxu0 0.0
      %540 = vmatprep.subr.mxu0 0.0
      %541 = vmatpush1.msra.mxu0 0.0
      %542 = vmatprep.subr.mxu0 0.0
      %543 = vmatpush1.msra.mxu0 0.0
      %544 = vmatprep.subr.mxu0 0.0
      %545 = vmatpush1.msra.mxu0 0.0
      %546 = vmatprep.subr.mxu0 0.0
      %547 = vmatpush1.msra.mxu0 0.0
      %548 = vmatprep.subr.mxu0 0.0
      %549 = vmatpush1.msra.mxu0 0.0
      %550 = vmatprep.subr.mxu0 0.0
      %551 = vmatpush1.msra.mxu0 0.0
      %552 = vmatprep.subr.mxu0 0.0
      %553 = vmatpush1.msra.mxu0 0.0
      %554 = vmatprep.subr.mxu0 0.0
      %555 = vmatpush1.msra.mxu0 0.0
      %556 = vmatprep.mubr.f32.mxu0 0.0
      %557 = vmatmul.mubr.f32.gmra.mrb[0].mxu0 %v487
      %v558 = vpop.f32.mrb[0].mxu0
      %v559 = vadd.f32 0.0, %v558
      %v560 = vpop.f32.mrb[0].mxu0
      %561 = vmatprep.mubr.f32.mxu0 0.0
      %562 = vmatmul.mubr.f32.gmra.mrb[0].mxu0 %v490
      %v563 = vpop.f32.mrb[0].mxu0
      %v564 = vadd.f32 0.0, %v563
      %v565 = vpop.f32.mrb[0].mxu0
      %566 = vdwg.mxu0
      %v568 = vsel %vm485, %v483, 0
      %v571 = vsel %vm485, %v484, 0
      %573 = vmatprep.subr.mxu0 0.0
      %574 = vmatpush1.msra.mxu0 %v468
      %575 = vmatprep.subr.mxu0 0.0
      %576 = vmatpush1.msra.mxu0 %v469
      %577 = vmatprep.subr.mxu0 0.0
      %578 = vmatpush1.msra.mxu0 0.0
      %579 = vmatprep.subr.mxu0 0.0
      %580 = vmatpush1.msra.mxu0 0.0
      %581 = vmatprep.subr.mxu0 0.0
      %582 = vmatpush1.msra.mxu0 0.0
      %583 = vmatprep.subr.mxu0 0.0
      %584 = vmatpush1.msra.mxu0 0.0
      %585 = vmatprep.subr.mxu0 0.0
      %586 = vmatpush1.msra.mxu0 0.0
      %587 = vmatprep.subr.mxu0 0.0
      %588 = vmatpush1.msra.mxu0 0.0
      %589 = vmatprep.subr.mxu0 0.0
      %590 = vmatpush1.msra.mxu0 0.0
      %591 = vmatprep.subr.mxu0 0.0
      %592 = vmatpush1.msra.mxu0 0.0
      %593 = vmatprep.subr.mxu0 0.0
      %594 = vmatpush1.msra.mxu0 0.0
      %595 = vmatprep.subr.mxu0 0.0
      %596 = vmatpush1.msra.mxu0 0.0
      %597 = vmatprep.subr.mxu0 0.0
      %598 = vmatpush1.msra.mxu0 0.0
      %599 = vmatprep.subr.mxu0 0.0
      %600 = vmatpush1.msra.mxu0 0.0
      %601 = vmatprep.subr.mxu0 0.0
      %602 = vmatpush1.msra.mxu0 0.0
      %603 = vmatprep.subr.mxu0 0.0
      %604 = vmatpush1.msra.mxu0 0.0
      %605 = vmatprep.subr.mxu0 0.0
      %606 = vmatpush1.msra.mxu0 0.0
      %607 = vmatprep.subr.mxu0 0.0
      %608 = vmatpush1.msra.mxu0 0.0
      %609 = vmatprep.subr.mxu0 0.0
      %610 = vmatpush1.msra.mxu0 0.0
      %611 = vmatprep.subr.mxu0 0.0
      %612 = vmatpush1.msra.mxu0 0.0
      %613 = vmatprep.subr.mxu0 0.0
      %614 = vmatpush1.msra.mxu0 0.0
      %615 = vmatprep.subr.mxu0 0.0
      %616 = vmatpush1.msra.mxu0 0.0
      %617 = vmatprep.subr.mxu0 0.0
      %618 = vmatpush1.msra.mxu0 0.0
      %619 = vmatprep.subr.mxu0 0.0
      %620 = vmatpush1.msra.mxu0 0.0
      %621 = vmatprep.subr.mxu0 0.0
      %622 = vmatpush1.msra.mxu0 0.0
      %623 = vmatprep.subr.mxu0 0.0
      %624 = vmatpush1.msra.mxu0 0.0
      %625 = vmatprep.subr.mxu0 0.0
      %626 = vmatpush1.msra.mxu0 0.0
      %627 = vmatprep.subr.mxu0 0.0
      %628 = vmatpush1.msra.mxu0 0.0
      %629 = vmatprep.subr.mxu0 0.0
      %630 = vmatpush1.msra.mxu0 0.0
      %631 = vmatprep.subr.mxu0 0.0
      %632 = vmatpush1.msra.mxu0 0.0
      %633 = vmatprep.subr.mxu0 0.0
      %634 = vmatpush1.msra.mxu0 0.0
      %635 = vmatprep.subr.mxu0 0.0
      %636 = vmatpush1.msra.mxu0 0.0
      %637 = vmatprep.mubr.f32.mxu0 0.0
      %638 = vmatmul.mubr.f32.gmra.mrb[0].mxu0 %v568
      %v639 = vpop.f32.mrb[0].mxu0
      %v640 = vadd.f32 0.0, %v639
      %v641 = vpop.f32.mrb[0].mxu0
      %642 = vmatprep.mubr.f32.mxu0 0.0
      %643 = vmatmul.mubr.f32.gmra.mrb[0].mxu0 %v571
      %v644 = vpop.f32.mrb[0].mxu0
      %v645 = vadd.f32 0.0, %v644
      %v646 = vpop.f32.mrb[0].mxu0
      %647 = vdwg.mxu0
      %v648 = vld [vmem:[%s1] sm:$0xff]
      %v649 = vld [vmem:[%s1 + $0x8] sm:$0xff]
      %v650 = vld [vmem:[%s1 + $0x10] sm:$0xff]
      %v651 = vld [vmem:[%s1 + $0x18] sm:$0xff]
      %v652 = vld [vmem:[%s1 + $0x20] sm:$0xff]
      %v653 = vld [vmem:[%s1 + $0x28] sm:$0xff]
      %v654 = vld [vmem:[%s1 + $0x30] sm:$0xff]
      %v655 = vld [vmem:[%s1 + $0x38] sm:$0xff]
      %v656 = vld [vmem:[%s2] sm:$0xff]
      %v657 = vld [vmem:[%s2 + $0x8] sm:$0xff]
      %v658 = vld [vmem:[%s2 + $0x10] sm:$0xff]
      %v659 = vld [vmem:[%s2 + $0x18] sm:$0xff]
      %v660 = vld [vmem:[%s2 + $0x20] sm:$0xff]
      %v661 = vld [vmem:[%s2 + $0x28] sm:$0xff]
      %v662 = vld [vmem:[%s2 + $0x30] sm:$0xff]
      %v663 = vld [vmem:[%s2 + $0x38] sm:$0xff]
      %vm664 = vcmask 523264
      %v666 = vsel %vm664, %v468, 0
      %v669 = vsel %vm664, %v469, 0
      %671 = vmatprep.subr.mxu0 0.0
      %672 = vmatpush1.msra.mxu0 %v656
      %673 = vmatprep.subr.mxu0 0.0
      %674 = vmatpush1.msra.mxu0 %v657
      %675 = vmatprep.subr.mxu0 0.0
      %676 = vmatpush1.msra.mxu0 %v658
      %677 = vmatprep.subr.mxu0 0.0
      %678 = vmatpush1.msra.mxu0 %v659
      %679 = vmatprep.subr.mxu0 0.0
      %680 = vmatpush1.msra.mxu0 %v660
      %681 = vmatprep.subr.mxu0 0.0
      %682 = vmatpush1.msra.mxu0 %v661
      %683 = vmatprep.subr.mxu0 0.0
      %684 = vmatpush1.msra.mxu0 %v662
      %685 = vmatprep.subr.mxu0 0.0
      %686 = vmatpush1.msra.mxu0 %v663
      %687 = vmatprep.subr.mxu0 0.0
      %688 = vmatpush1.msra.mxu0 0.0
      %689 = vmatprep.subr.mxu0 0.0
      %690 = vmatpush1.msra.mxu0 0.0
      %691 = vmatprep.subr.mxu0 0.0
      %692 = vmatpush1.msra.mxu0 0.0
      %693 = vmatprep.subr.mxu0 0.0
      %694 = vmatpush1.msra.mxu0 0.0
      %695 = vmatprep.subr.mxu0 0.0
      %696 = vmatpush1.msra.mxu0 0.0
      %697 = vmatprep.subr.mxu0 0.0
      %698 = vmatpush1.msra.mxu0 0.0
      %699 = vmatprep.subr.mxu0 0.0
      %700 = vmatpush1.msra.mxu0 0.0
      %701 = vmatprep.subr.mxu0 0.0
      %702 = vmatpush1.msra.mxu0 0.0
      %703 = vmatprep.subr.mxu0 0.0
      %704 = vmatpush1.msra.mxu0 0.0
      %705 = vmatprep.subr.mxu0 0.0
      %706 = vmatpush1.msra.mxu0 0.0
      %707 = vmatprep.subr.mxu0 0.0
      %708 = vmatpush1.msra.mxu0 0.0
      %709 = vmatprep.subr.mxu0 0.0
      %710 = vmatpush1.msra.mxu0 0.0
      %711 = vmatprep.subr.mxu0 0.0
      %712 = vmatpush1.msra.mxu0 0.0
      %713 = vmatprep.subr.mxu0 0.0
      %714 = vmatpush1.msra.mxu0 0.0
      %715 = vmatprep.subr.mxu0 0.0
      %716 = vmatpush1.msra.mxu0 0.0
      %717 = vmatprep.subr.mxu0 0.0
      %718 = vmatpush1.msra.mxu0 0.0
      %719 = vmatprep.subr.mxu0 0.0
      %720 = vmatpush1.msra.mxu0 0.0
      %721 = vmatprep.subr.mxu0 0.0
      %722 = vmatpush1.msra.mxu0 0.0
      %723 = vmatprep.subr.mxu0 0.0
      %724 = vmatpush1.msra.mxu0 0.0
      %725 = vmatprep.subr.mxu0 0.0
      %726 = vmatpush1.msra.mxu0 0.0
      %727 = vmatprep.subr.mxu0 0.0
      %728 = vmatpush1.msra.mxu0 0.0
      %729 = vmatprep.subr.mxu0 0.0
      %730 = vmatpush1.msra.mxu0 0.0
      %731 = vmatprep.subr.mxu0 0.0
      %732 = vmatpush1.msra.mxu0 0.0
      %733 = vmatprep.subr.mxu0 0.0
      %734 = vmatpush1.msra.mxu0 0.0
      %735 = vmatprep.mubr.f32.mxu0 0.0
      %736 = vmatmul.mubr.f32.gmra.mrb[0].mxu0 %v666
      %v737 = vpop.f32.mrb[0].mxu0
      %v738 = vadd.f32 0.0, %v737
      %v739 = vpop.f32.mrb[0].mxu0
      %740 = vmatprep.mubr.f32.mxu0 0.0
      %741 = vmatmul.mubr.f32.gmra.mrb[0].mxu0 %v669
      %v742 = vpop.f32.mrb[0].mxu0
      %v743 = vadd.f32 0.0, %v742
      %v744 = vpop.f32.mrb[0].mxu0
      %745 = vdwg.mxu0
      %v747 = vsel %vm664, %v559, 0
      %v750 = vsel %vm664, %v564, 0
      %752 = vmatprep.subr.mxu0 0.0
      %753 = vmatpush1.msra.mxu0 %v648
      %754 = vmatprep.subr.mxu0 0.0
      %755 = vmatpush1.msra.mxu0 %v649
      %756 = vmatprep.subr.mxu0 0.0
      %757 = vmatpush1.msra.mxu0 %v650
      %758 = vmatprep.subr.mxu0 0.0
      %759 = vmatpush1.msra.mxu0 %v651
      %760 = vmatprep.subr.mxu0 0.0
      %761 = vmatpush1.msra.mxu0 %v652
      %762 = vmatprep.subr.mxu0 0.0
      %763 = vmatpush1.msra.mxu0 %v653
      %764 = vmatprep.subr.mxu0 0.0
      %765 = vmatpush1.msra.mxu0 %v654
      %766 = vmatprep.subr.mxu0 0.0
      %767 = vmatpush1.msra.mxu0 %v655
      %768 = vmatprep.subr.mxu0 0.0
      %769 = vmatpush1.msra.mxu0 0.0
      %770 = vmatprep.subr.mxu0 0.0
      %771 = vmatpush1.msra.mxu0 0.0
      %772 = vmatprep.subr.mxu0 0.0
      %773 = vmatpush1.msra.mxu0 0.0
      %774 = vmatprep.subr.mxu0 0.0
      %775 = vmatpush1.msra.mxu0 0.0
      %776 = vmatprep.subr.mxu0 0.0
      %777 = vmatpush1.msra.mxu0 0.0
      %778 = vmatprep.subr.mxu0 0.0
      %779 = vmatpush1.msra.mxu0 0.0
      %780 = vmatprep.subr.mxu0 0.0
      %781 = vmatpush1.msra.mxu0 0.0
      %782 = vmatprep.subr.mxu0 0.0
      %783 = vmatpush1.msra.mxu0 0.0
      %784 = vmatprep.subr.mxu0 0.0
      %785 = vmatpush1.msra.mxu0 0.0
      %786 = vmatprep.subr.mxu0 0.0
      %787 = vmatpush1.msra.mxu0 0.0
      %788 = vmatprep.subr.mxu0 0.0
      %789 = vmatpush1.msra.mxu0 0.0
      %790 = vmatprep.subr.mxu0 0.0
      %791 = vmatpush1.msra.mxu0 0.0
      %792 = vmatprep.subr.mxu0 0.0
      %793 = vmatpush1.msra.mxu0 0.0
      %794 = vmatprep.subr.mxu0 0.0
      %795 = vmatpush1.msra.mxu0 0.0
      %796 = vmatprep.subr.mxu0 0.0
      %797 = vmatpush1.msra.mxu0 0.0
      %798 = vmatprep.subr.mxu0 0.0
      %799 = vmatpush1.msra.mxu0 0.0
      %800 = vmatprep.subr.mxu0 0.0
      %801 = vmatpush1.msra.mxu0 0.0
      %802 = vmatprep.subr.mxu0 0.0
      %803 = vmatpush1.msra.mxu0 0.0
      %804 = vmatprep.subr.mxu0 0.0
      %805 = vmatpush1.msra.mxu0 0.0
      %806 = vmatprep.subr.mxu0 0.0
      %807 = vmatpush1.msra.mxu0 0.0
      %808 = vmatprep.subr.mxu0 0.0
      %809 = vmatpush1.msra.mxu0 0.0
      %810 = vmatprep.subr.mxu0 0.0
      %811 = vmatpush1.msra.mxu0 0.0
      %812 = vmatprep.subr.mxu0 0.0
      %813 = vmatpush1.msra.mxu0 0.0
      %814 = vmatprep.subr.mxu0 0.0
      %815 = vmatpush1.msra.mxu0 0.0
      %816 = vmatprep.mubr.f32.mxu0 0.0
      %817 = vmatmul.mubr.f32.gmra.mrb[0].mxu0 %v747
      %v818 = vpop.f32.mrb[0].mxu0
      %v819 = vadd.f32 %v738, %v818
      %v820 = vpop.f32.mrb[0].mxu0
      %821 = vmatprep.mubr.f32.mxu0 0.0
      %822 = vmatmul.mubr.f32.gmra.mrb[0].mxu0 %v750
      %v823 = vpop.f32.mrb[0].mxu0
      %v824 = vadd.f32 %v743, %v823
      %v825 = vpop.f32.mrb[0].mxu0
      %826 = vdwg.mxu0
      %v827 = vld [vmem:[%s3] sm:$0xff]
      %v828 = vld [vmem:[%s3 + $0x8] sm:$0xff]
      %v829 = vld [vmem:[%s3 + $0x10] sm:$0xff]
      %v830 = vld [vmem:[%s3 + $0x18] sm:$0xff]
      %v831 = vld [vmem:[%s3 + $0x20] sm:$0xff]
      %v832 = vld [vmem:[%s3 + $0x28] sm:$0xff]
      %v833 = vld [vmem:[%s3 + $0x30] sm:$0xff]
      %v834 = vld [vmem:[%s3 + $0x38] sm:$0xff]
      %v836 = vsel %vm664, %v640, 0
      %v839 = vsel %vm664, %v645, 0
      %841 = vmatprep.subr.mxu0 0.0
      %842 = vmatpush1.msra.mxu0 %v827
      %843 = vmatprep.subr.mxu0 0.0
      %844 = vmatpush1.msra.mxu0 %v828
      %845 = vmatprep.subr.mxu0 0.0
      %846 = vmatpush1.msra.mxu0 %v829
      %847 = vmatprep.subr.mxu0 0.0
      %848 = vmatpush1.msra.mxu0 %v830
      %849 = vmatprep.subr.mxu0 0.0
      %850 = vmatpush1.msra.mxu0 %v831
      %851 = vmatprep.subr.mxu0 0.0
      %852 = vmatpush1.msra.mxu0 %v832
      %853 = vmatprep.subr.mxu0 0.0
      %854 = vmatpush1.msra.mxu0 %v833
      %855 = vmatprep.subr.mxu0 0.0
      %856 = vmatpush1.msra.mxu0 %v834
      %857 = vmatprep.subr.mxu0 0.0
      %858 = vmatpush1.msra.mxu0 0.0
      %859 = vmatprep.subr.mxu0 0.0
      %860 = vmatpush1.msra.mxu0 0.0
      %861 = vmatprep.subr.mxu0 0.0
      %862 = vmatpush1.msra.mxu0 0.0
      %863 = vmatprep.subr.mxu0 0.0
      %864 = vmatpush1.msra.mxu0 0.0
      %865 = vmatprep.subr.mxu0 0.0
      %866 = vmatpush1.msra.mxu0 0.0
      %867 = vmatprep.subr.mxu0 0.0
      %868 = vmatpush1.msra.mxu0 0.0
      %869 = vmatprep.subr.mxu0 0.0
      %870 = vmatpush1.msra.mxu0 0.0
      %871 = vmatprep.subr.mxu0 0.0
      %872 = vmatpush1.msra.mxu0 0.0
      %873 = vmatprep.subr.mxu0 0.0
      %874 = vmatpush1.msra.mxu0 0.0
      %875 = vmatprep.subr.mxu0 0.0
      %876 = vmatpush1.msra.mxu0 0.0
      %877 = vmatprep.subr.mxu0 0.0
      %878 = vmatpush1.msra.mxu0 0.0
      %879 = vmatprep.subr.mxu0 0.0
      %880 = vmatpush1.msra.mxu0 0.0
      %881 = vmatprep.subr.mxu0 0.0
      %882 = vmatpush1.msra.mxu0 0.0
      %883 = vmatprep.subr.mxu0 0.0
      %884 = vmatpush1.msra.mxu0 0.0
      %885 = vmatprep.subr.mxu0 0.0
      %886 = vmatpush1.msra.mxu0 0.0
      %887 = vmatprep.subr.mxu0 0.0
      %888 = vmatpush1.msra.mxu0 0.0
      %889 = vmatprep.subr.mxu0 0.0
      %890 = vmatpush1.msra.mxu0 0.0
      %891 = vmatprep.subr.mxu0 0.0
      %892 = vmatpush1.msra.mxu0 0.0
      %893 = vmatprep.subr.mxu0 0.0
      %894 = vmatpush1.msra.mxu0 0.0
      %895 = vmatprep.subr.mxu0 0.0
      %896 = vmatpush1.msra.mxu0 0.0
      %897 = vmatprep.subr.mxu0 0.0
      %898 = vmatpush1.msra.mxu0 0.0
      %899 = vmatprep.subr.mxu0 0.0
      %900 = vmatpush1.msra.mxu0 0.0
      %901 = vmatprep.subr.mxu0 0.0
      %902 = vmatpush1.msra.mxu0 0.0
      %903 = vmatprep.subr.mxu0 0.0
      %904 = vmatpush1.msra.mxu0 0.0
      %905 = vmatprep.mubr.f32.mxu0 0.0
      %906 = vmatmul.mubr.f32.gmra.mrb[0].mxu0 %v836
      %v907 = vpop.f32.mrb[0].mxu0
      %v908 = vadd.f32 0.0, %v907
      %v909 = vpop.f32.mrb[0].mxu0
      %910 = vmatprep.mubr.f32.mxu0 0.0
      %911 = vmatmul.mubr.f32.gmra.mrb[0].mxu0 %v839
      %v912 = vpop.f32.mrb[0].mxu0
      %v913 = vadd.f32 0.0, %v912
      %v914 = vpop.f32.mrb[0].mxu0
      %915 = vdwg.mxu0
      %v916 = vadd.f32 %v819, %v908
      %v917 = vadd.f32 %v824, %v913
      %v918 = vld [vmem:[%s4] sm:$0x1]
      %v920 = vlaneseq
      %v921 = vshrl.u32 %v920, 7
      %v922 = vsub.s32 0, %v921
      %v923 = vrot.slane %v918, %v922
      %v925 = vadd.f32 %v916, %v923
      %v926 = vadd.f32 %v917, %v923
      %v927 = vmax.f32 %v925, 0.0
      %v928 = vmax.f32 %v926, 0.0
      %929 = vmatprep.subr.mxu0 0.0
      %930 = vmatpush1.msra.mxu0 %v927
      %931 = vmatprep.subr.mxu0 0.0
      %932 = vmatpush1.msra.mxu0 %v928
      %933 = vmatprep.subr.mxu0 0.0
      %934 = vmatpush1.msra.mxu0 0.0
      %935 = vmatprep.subr.mxu0 0.0
      %936 = vmatpush1.msra.mxu0 0.0
      %937 = vmatprep.subr.mxu0 0.0
      %938 = vmatpush1.msra.mxu0 0.0
      %939 = vmatprep.subr.mxu0 0.0
      %940 = vmatpush1.msra.mxu0 0.0
      %941 = vmatprep.subr.mxu0 0.0
      %942 = vmatpush1.msra.mxu0 0.0
      %943 = vmatprep.subr.mxu0 0.0
      %944 = vmatpush1.msra.mxu0 0.0
      %945 = vmatprep.subr.mxu0 0.0
      %946 = vmatpush1.msra.mxu0 0.0
      %947 = vmatprep.subr.mxu0 0.0
      %948 = vmatpush1.msra.mxu0 0.0
      %949 = vmatprep.subr.mxu0 0.0
      %950 = vmatpush1.msra.mxu0 0.0
      %951 = vmatprep.subr.mxu0 0.0
      %952 = vmatpush1.msra.mxu0 0.0
      %953 = vmatprep.subr.mxu0 0.0
      %954 = vmatpush1.msra.mxu0 0.0
      %955 = vmatprep.subr.mxu0 0.0
      %956 = vmatpush1.msra.mxu0 0.0
      %957 = vmatprep.subr.mxu0 0.0
      %958 = vmatpush1.msra.mxu0 0.0
      %959 = vmatprep.subr.mxu0 0.0
      %960 = vmatpush1.msra.mxu0 0.0
      %961 = vmatprep.subr.mxu0 0.0
      %962 = vmatpush1.msra.mxu0 0.0
      %963 = vmatprep.subr.mxu0 0.0
      %964 = vmatpush1.msra.mxu0 0.0
      %965 = vmatprep.subr.mxu0 0.0
      %966 = vmatpush1.msra.mxu0 0.0
      %967 = vmatprep.subr.mxu0 0.0
      %968 = vmatpush1.msra.mxu0 0.0
      %969 = vmatprep.subr.mxu0 0.0
      %970 = vmatpush1.msra.mxu0 0.0
      %971 = vmatprep.subr.mxu0 0.0
      %972 = vmatpush1.msra.mxu0 0.0
      %973 = vmatprep.subr.mxu0 0.0
      %974 = vmatpush1.msra.mxu0 0.0
      %975 = vmatprep.subr.mxu0 0.0
      %976 = vmatpush1.msra.mxu0 0.0
      %977 = vmatprep.subr.mxu0 0.0
      %978 = vmatpush1.msra.mxu0 0.0
      %979 = vmatprep.subr.mxu0 0.0
      %980 = vmatpush1.msra.mxu0 0.0
      %981 = vmatprep.subr.mxu0 0.0
      %982 = vmatpush1.msra.mxu0 0.0
      %983 = vmatprep.subr.mxu0 0.0
      %984 = vmatpush1.msra.mxu0 0.0
      %985 = vmatprep.subr.mxu0 0.0
      %986 = vmatpush1.msra.mxu0 0.0
      %987 = vmatprep.subr.mxu0 0.0
      %988 = vmatpush1.msra.mxu0 0.0
      %989 = vmatprep.subr.mxu0 0.0
      %990 = vmatpush1.msra.mxu0 0.0
      %991 = vmatprep.subr.mxu0 0.0
      %992 = vmatpush1.msra.mxu0 0.0
      %993 = vmatprep.mubr.f32.mxu0 0.0
      %994 = vmatmul.mubr.f32.gmra.mrb[0].mxu0 %v487
      %v995 = vpop.f32.mrb[0].mxu0
      %v996 = vadd.f32 0.0, %v995
      %v997 = vpop.f32.mrb[0].mxu0
      %998 = vmatprep.mubr.f32.mxu0 0.0
      %999 = vmatmul.mubr.f32.gmra.mrb[0].mxu0 %v490
      %v1000 = vpop.f32.mrb[0].mxu0
      %v1001 = vadd.f32 0.0, %v1000
      %v1002 = vpop.f32.mrb[0].mxu0
      %1003 = vdwg.mxu0
      %1004 = vmatprep.subr.mxu0 0.0
      %1005 = vmatpush1.msra.mxu0 %v927
      %1006 = vmatprep.subr.mxu0 0.0
      %1007 = vmatpush1.msra.mxu0 %v928
      %1008 = vmatprep.subr.mxu0 0.0
      %1009 = vmatpush1.msra.mxu0 0.0
      %1010 = vmatprep.subr.mxu0 0.0
      %1011 = vmatpush1.msra.mxu0 0.0
      %1012 = vmatprep.subr.mxu0 0.0
      %1013 = vmatpush1.msra.mxu0 0.0
      %1014 = vmatprep.subr.mxu0 0.0
      %1015 = vmatpush1.msra.mxu0 0.0
      %1016 = vmatprep.subr.mxu0 0.0
      %1017 = vmatpush1.msra.mxu0 0.0
      %1018 = vmatprep.subr.mxu0 0.0
      %1019 = vmatpush1.msra.mxu0 0.0
      %1020 = vmatprep.subr.mxu0 0.0
      %1021 = vmatpush1.msra.mxu0 0.0
      %1022 = vmatprep.subr.mxu0 0.0
      %1023 = vmatpush1.msra.mxu0 0.0
      %1024 = vmatprep.subr.mxu0 0.0
      %1025 = vmatpush1.msra.mxu0 0.0
      %1026 = vmatprep.subr.mxu0 0.0
      %1027 = vmatpush1.msra.mxu0 0.0
      %1028 = vmatprep.subr.mxu0 0.0
      %1029 = vmatpush1.msra.mxu0 0.0
      %1030 = vmatprep.subr.mxu0 0.0
      %1031 = vmatpush1.msra.mxu0 0.0
      %1032 = vmatprep.subr.mxu0 0.0
      %1033 = vmatpush1.msra.mxu0 0.0
      %1034 = vmatprep.subr.mxu0 0.0
      %1035 = vmatpush1.msra.mxu0 0.0
      %1036 = vmatprep.subr.mxu0 0.0
      %1037 = vmatpush1.msra.mxu0 0.0
      %1038 = vmatprep.subr.mxu0 0.0
      %1039 = vmatpush1.msra.mxu0 0.0
      %1040 = vmatprep.subr.mxu0 0.0
      %1041 = vmatpush1.msra.mxu0 0.0
      %1042 = vmatprep.subr.mxu0 0.0
      %1043 = vmatpush1.msra.mxu0 0.0
      %1044 = vmatprep.subr.mxu0 0.0
      %1045 = vmatpush1.msra.mxu0 0.0
      %1046 = vmatprep.subr.mxu0 0.0
      %1047 = vmatpush1.msra.mxu0 0.0
      %1048 = vmatprep.subr.mxu0 0.0
      %1049 = vmatpush1.msra.mxu0 0.0
      %1050 = vmatprep.subr.mxu0 0.0
      %1051 = vmatpush1.msra.mxu0 0.0
      %1052 = vmatprep.subr.mxu0 0.0
      %1053 = vmatpush1.msra.mxu0 0.0
      %1054 = vmatprep.subr.mxu0 0.0
      %1055 = vmatpush1.msra.mxu0 0.0
      %1056 = vmatprep.subr.mxu0 0.0
      %1057 = vmatpush1.msra.mxu0 0.0
      %1058 = vmatprep.subr.mxu0 0.0
      %1059 = vmatpush1.msra.mxu0 0.0
      %1060 = vmatprep.subr.mxu0 0.0
      %1061 = vmatpush1.msra.mxu0 0.0
      %1062 = vmatprep.subr.mxu0 0.0
      %1063 = vmatpush1.msra.mxu0 0.0
      %1064 = vmatprep.subr.mxu0 0.0
      %1065 = vmatpush1.msra.mxu0 0.0
      %1066 = vmatprep.subr.mxu0 0.0
      %1067 = vmatpush1.msra.mxu0 0.0
      %1068 = vmatprep.mubr.f32.mxu0 0.0
      %1069 = vmatmul.mubr.f32.gmra.mrb[0].mxu0 %v568
      %v1070 = vpop.f32.mrb[0].mxu0
      %v1071 = vadd.f32 0.0, %v1070
      %v1072 = vpop.f32.mrb[0].mxu0
      %1073 = vmatprep.mubr.f32.mxu0 0.0
      %1074 = vmatmul.mubr.f32.gmra.mrb[0].mxu0 %v571
      %v1075 = vpop.f32.mrb[0].mxu0
      %v1076 = vadd.f32 0.0, %v1075
      %v1077 = vpop.f32.mrb[0].mxu0
      %1078 = vdwg.mxu0
      %v1079 = vld [vmem:[%s5] sm:$0xff]
      %v1080 = vld [vmem:[%s5 + $0x8] sm:$0xff]
      %v1081 = vld [vmem:[%s5 + $0x10] sm:$0xff]
      %v1082 = vld [vmem:[%s5 + $0x18] sm:$0xff]
      %v1083 = vld [vmem:[%s5 + $0x20] sm:$0xff]
      %v1084 = vld [vmem:[%s5 + $0x28] sm:$0xff]
      %v1085 = vld [vmem:[%s5 + $0x30] sm:$0xff]
      %v1086 = vld [vmem:[%s5 + $0x38] sm:$0xff]
      %v1087 = vld [vmem:[%s5 + $0x40] sm:$0xff]
      %v1088 = vld [vmem:[%s5 + $0x48] sm:$0xff]
      %v1089 = vld [vmem:[%s5 + $0x50] sm:$0xff]
      %v1090 = vld [vmem:[%s5 + $0x58] sm:$0xff]
      %v1091 = vld [vmem:[%s5 + $0x60] sm:$0xff]
      %v1092 = vld [vmem:[%s5 + $0x68] sm:$0xff]
      %v1093 = vld [vmem:[%s5 + $0x70] sm:$0xff]
      %v1094 = vld [vmem:[%s5 + $0x78] sm:$0xff]
      %v1095 = vld [vmem:[%s6] sm:$0xff]
      %v1096 = vld [vmem:[%s6 + $0x8] sm:$0xff]
      %v1097 = vld [vmem:[%s6 + $0x10] sm:$0xff]
      %v1098 = vld [vmem:[%s6 + $0x18] sm:$0xff]
      %v1099 = vld [vmem:[%s6 + $0x20] sm:$0xff]
      %v1100 = vld [vmem:[%s6 + $0x28] sm:$0xff]
      %v1101 = vld [vmem:[%s6 + $0x30] sm:$0xff]
      %v1102 = vld [vmem:[%s6 + $0x38] sm:$0xff]
      %v1103 = vld [vmem:[%s6 + $0x40] sm:$0xff]
      %v1104 = vld [vmem:[%s6 + $0x48] sm:$0xff]
      %v1105 = vld [vmem:[%s6 + $0x50] sm:$0xff]
      %v1106 = vld [vmem:[%s6 + $0x58] sm:$0xff]
      %v1107 = vld [vmem:[%s6 + $0x60] sm:$0xff]
      %v1108 = vld [vmem:[%s6 + $0x68] sm:$0xff]
      %v1109 = vld [vmem:[%s6 + $0x70] sm:$0xff]
      %v1110 = vld [vmem:[%s6 + $0x78] sm:$0xff]
      %1111 = vmatprep.subr.mxu0 0.0
      %1112 = vmatpush1.msra.mxu0 %v1095
      %1113 = vmatprep.subr.mxu0 0.0
      %1114 = vmatpush1.msra.mxu0 %v1096
      %1115 = vmatprep.subr.mxu0 0.0
      %1116 = vmatpush1.msra.mxu0 %v1097
      %1117 = vmatprep.subr.mxu0 0.0
      %1118 = vmatpush1.msra.mxu0 %v1098
      %1119 = vmatprep.subr.mxu0 0.0
      %1120 = vmatpush1.msra.mxu0 %v1099
      %1121 = vmatprep.subr.mxu0 0.0
      %1122 = vmatpush1.msra.mxu0 %v1100
      %1123 = vmatprep.subr.mxu0 0.0
      %1124 = vmatpush1.msra.mxu0 %v1101
      %1125 = vmatprep.subr.mxu0 0.0
      %1126 = vmatpush1.msra.mxu0 %v1102
      %1127 = vmatprep.subr.mxu0 0.0
      %1128 = vmatpush1.msra.mxu0 %v1103
      %1129 = vmatprep.subr.mxu0 0.0
      %1130 = vmatpush1.msra.mxu0 %v1104
      %1131 = vmatprep.subr.mxu0 0.0
      %1132 = vmatpush1.msra.mxu0 %v1105
      %1133 = vmatprep.subr.mxu0 0.0
      %1134 = vmatpush1.msra.mxu0 %v1106
      %1135 = vmatprep.subr.mxu0 0.0
      %1136 = vmatpush1.msra.mxu0 %v1107
      %1137 = vmatprep.subr.mxu0 0.0
      %1138 = vmatpush1.msra.mxu0 %v1108
      %1139 = vmatprep.subr.mxu0 0.0
      %1140 = vmatpush1.msra.mxu0 %v1109
      %1141 = vmatprep.subr.mxu0 0.0
      %1142 = vmatpush1.msra.mxu0 %v1110
      %1143 = vmatprep.subr.mxu0 0.0
      %1144 = vmatpush1.msra.mxu0 0.0
      %1145 = vmatprep.subr.mxu0 0.0
      %1146 = vmatpush1.msra.mxu0 0.0
      %1147 = vmatprep.subr.mxu0 0.0
      %1148 = vmatpush1.msra.mxu0 0.0
      %1149 = vmatprep.subr.mxu0 0.0
      %1150 = vmatpush1.msra.mxu0 0.0
      %1151 = vmatprep.subr.mxu0 0.0
      %1152 = vmatpush1.msra.mxu0 0.0
      %1153 = vmatprep.subr.mxu0 0.0
      %1154 = vmatpush1.msra.mxu0 0.0
      %1155 = vmatprep.subr.mxu0 0.0
      %1156 = vmatpush1.msra.mxu0 0.0
      %1157 = vmatprep.subr.mxu0 0.0
      %1158 = vmatpush1.msra.mxu0 0.0
      %1159 = vmatprep.subr.mxu0 0.0
      %1160 = vmatpush1.msra.mxu0 0.0
      %1161 = vmatprep.subr.mxu0 0.0
      %1162 = vmatpush1.msra.mxu0 0.0
      %1163 = vmatprep.subr.mxu0 0.0
      %1164 = vmatpush1.msra.mxu0 0.0
      %1165 = vmatprep.subr.mxu0 0.0
      %1166 = vmatpush1.msra.mxu0 0.0
      %1167 = vmatprep.subr.mxu0 0.0
      %1168 = vmatpush1.msra.mxu0 0.0
      %1169 = vmatprep.subr.mxu0 0.0
      %1170 = vmatpush1.msra.mxu0 0.0
      %1171 = vmatprep.subr.mxu0 0.0
      %1172 = vmatpush1.msra.mxu0 0.0
      %1173 = vmatprep.subr.mxu0 0.0
      %1174 = vmatpush1.msra.mxu0 0.0
      %1175 = vmatprep.mubr.f32.mxu0 0.0
      %1176 = vmatmul.mubr.f32.gmra.mrb[0].mxu0 %v927
      %v1177 = vpop.f32.mrb[0].mxu0
      %v1178 = vadd.f32 0.0, %v1177
      %v1179 = vpop.f32.mrb[0].mxu0
      %1180 = vmatprep.mubr.f32.mxu0 0.0
      %1181 = vmatmul.mubr.f32.gmra.mrb[0].mxu0 %v928
      %v1182 = vpop.f32.mrb[0].mxu0
      %v1183 = vadd.f32 0.0, %v1182
      %v1184 = vpop.f32.mrb[0].mxu0
      %1185 = vdwg.mxu0
      %1186 = vmatprep.subr.mxu0 0.0
      %1187 = vmatpush1.msra.mxu0 %v1079
      %1188 = vmatprep.subr.mxu0 0.0
      %1189 = vmatpush1.msra.mxu0 %v1080
      %1190 = vmatprep.subr.mxu0 0.0
      %1191 = vmatpush1.msra.mxu0 %v1081
      %1192 = vmatprep.subr.mxu0 0.0
      %1193 = vmatpush1.msra.mxu0 %v1082
      %1194 = vmatprep.subr.mxu0 0.0
      %1195 = vmatpush1.msra.mxu0 %v1083
      %1196 = vmatprep.subr.mxu0 0.0
      %1197 = vmatpush1.msra.mxu0 %v1084
      %1198 = vmatprep.subr.mxu0 0.0
      %1199 = vmatpush1.msra.mxu0 %v1085
      %1200 = vmatprep.subr.mxu0 0.0
      %1201 = vmatpush1.msra.mxu0 %v1086
      %1202 = vmatprep.subr.mxu0 0.0
      %1203 = vmatpush1.msra.mxu0 %v1087
      %1204 = vmatprep.subr.mxu0 0.0
      %1205 = vmatpush1.msra.mxu0 %v1088
      %1206 = vmatprep.subr.mxu0 0.0
      %1207 = vmatpush1.msra.mxu0 %v1089
      %1208 = vmatprep.subr.mxu0 0.0
      %1209 = vmatpush1.msra.mxu0 %v1090
      %1210 = vmatprep.subr.mxu0 0.0
      %1211 = vmatpush1.msra.mxu0 %v1091
      %1212 = vmatprep.subr.mxu0 0.0
      %1213 = vmatpush1.msra.mxu0 %v1092
      %1214 = vmatprep.subr.mxu0 0.0
      %1215 = vmatpush1.msra.mxu0 %v1093
      %1216 = vmatprep.subr.mxu0 0.0
      %1217 = vmatpush1.msra.mxu0 %v1094
      %1218 = vmatprep.subr.mxu0 0.0
      %1219 = vmatpush1.msra.mxu0 0.0
      %1220 = vmatprep.subr.mxu0 0.0
      %1221 = vmatpush1.msra.mxu0 0.0
      %1222 = vmatprep.subr.mxu0 0.0
      %1223 = vmatpush1.msra.mxu0 0.0
      %1224 = vmatprep.subr.mxu0 0.0
      %1225 = vmatpush1.msra.mxu0 0.0
      %1226 = vmatprep.subr.mxu0 0.0
      %1227 = vmatpush1.msra.mxu0 0.0
      %1228 = vmatprep.subr.mxu0 0.0
      %1229 = vmatpush1.msra.mxu0 0.0
      %1230 = vmatprep.subr.mxu0 0.0
      %1231 = vmatpush1.msra.mxu0 0.0
      %1232 = vmatprep.subr.mxu0 0.0
      %1233 = vmatpush1.msra.mxu0 0.0
      %1234 = vmatprep.subr.mxu0 0.0
      %1235 = vmatpush1.msra.mxu0 0.0
      %1236 = vmatprep.subr.mxu0 0.0
      %1237 = vmatpush1.msra.mxu0 0.0
      %1238 = vmatprep.subr.mxu0 0.0
      %1239 = vmatpush1.msra.mxu0 0.0
      %1240 = vmatprep.subr.mxu0 0.0
      %1241 = vmatpush1.msra.mxu0 0.0
      %1242 = vmatprep.subr.mxu0 0.0
      %1243 = vmatpush1.msra.mxu0 0.0
      %1244 = vmatprep.subr.mxu0 0.0
      %1245 = vmatpush1.msra.mxu0 0.0
      %1246 = vmatprep.subr.mxu0 0.0
      %1247 = vmatpush1.msra.mxu0 0.0
      %1248 = vmatprep.subr.mxu0 0.0
      %1249 = vmatpush1.msra.mxu0 0.0
      %1250 = vmatprep.mubr.f32.mxu0 0.0
      %1251 = vmatmul.mubr.f32.gmra.mrb[0].mxu0 %v996
      %v1252 = vpop.f32.mrb[0].mxu0
      %v1253 = vadd.f32 %v1178, %v1252
      %v1254 = vpop.f32.mrb[0].mxu0
      %1255 = vmatprep.mubr.f32.mxu0 0.0
      %1256 = vmatmul.mubr.f32.gmra.mrb[0].mxu0 %v1001
      %v1257 = vpop.f32.mrb[0].mxu0
      %v1258 = vadd.f32 %v1183, %v1257
      %v1259 = vpop.f32.mrb[0].mxu0
      %1260 = vdwg.mxu0
      %v1261 = vld [vmem:[%s7] sm:$0xff]
      %v1262 = vld [vmem:[%s7 + $0x8] sm:$0xff]
      %v1263 = vld [vmem:[%s7 + $0x10] sm:$0xff]
      %v1264 = vld [vmem:[%s7 + $0x18] sm:$0xff]
      %v1265 = vld [vmem:[%s7 + $0x20] sm:$0xff]
      %v1266 = vld [vmem:[%s7 + $0x28] sm:$0xff]
      %v1267 = vld [vmem:[%s7 + $0x30] sm:$0xff]
      %v1268 = vld [vmem:[%s7 + $0x38] sm:$0xff]
      %v1269 = vld [vmem:[%s7 + $0x40] sm:$0xff]
      %v1270 = vld [vmem:[%s7 + $0x48] sm:$0xff]
      %v1271 = vld [vmem:[%s7 + $0x50] sm:$0xff]
      %v1272 = vld [vmem:[%s7 + $0x58] sm:$0xff]
      %v1273 = vld [vmem:[%s7 + $0x60] sm:$0xff]
      %v1274 = vld [vmem:[%s7 + $0x68] sm:$0xff]
      %v1275 = vld [vmem:[%s7 + $0x70] sm:$0xff]
      %v1276 = vld [vmem:[%s7 + $0x78] sm:$0xff]
      %1277 = vmatprep.subr.mxu0 0.0
      %1278 = vmatpush1.msra.mxu0 %v1261
      %1279 = vmatprep.subr.mxu0 0.0
      %1280 = vmatpush1.msra.mxu0 %v1262
      %1281 = vmatprep.subr.mxu0 0.0
      %1282 = vmatpush1.msra.mxu0 %v1263
      %1283 = vmatprep.subr.mxu0 0.0
      %1284 = vmatpush1.msra.mxu0 %v1264
      %1285 = vmatprep.subr.mxu0 0.0
      %1286 = vmatpush1.msra.mxu0 %v1265
      %1287 = vmatprep.subr.mxu0 0.0
      %1288 = vmatpush1.msra.mxu0 %v1266
      %1289 = vmatprep.subr.mxu0 0.0
      %1290 = vmatpush1.msra.mxu0 %v1267
      %1291 = vmatprep.subr.mxu0 0.0
      %1292 = vmatpush1.msra.mxu0 %v1268
      %1293 = vmatprep.subr.mxu0 0.0
      %1294 = vmatpush1.msra.mxu0 %v1269
      %1295 = vmatprep.subr.mxu0 0.0
      %1296 = vmatpush1.msra.mxu0 %v1270
      %1297 = vmatprep.subr.mxu0 0.0
      %1298 = vmatpush1.msra.mxu0 %v1271
      %1299 = vmatprep.subr.mxu0 0.0
      %1300 = vmatpush1.msra.mxu0 %v1272
      %1301 = vmatprep.subr.mxu0 0.0
      %1302 = vmatpush1.msra.mxu0 %v1273
      %1303 = vmatprep.subr.mxu0 0.0
      %1304 = vmatpush1.msra.mxu0 %v1274
      %1305 = vmatprep.subr.mxu0 0.0
      %1306 = vmatpush1.msra.mxu0 %v1275
      %1307 = vmatprep.subr.mxu0 0.0
      %1308 = vmatpush1.msra.mxu0 %v1276
      %1309 = vmatprep.subr.mxu0 0.0
      %1310 = vmatpush1.msra.mxu0 0.0
      %1311 = vmatprep.subr.mxu0 0.0
      %1312 = vmatpush1.msra.mxu0 0.0
      %1313 = vmatprep.subr.mxu0 0.0
      %1314 = vmatpush1.msra.mxu0 0.0
      %1315 = vmatprep.subr.mxu0 0.0
      %1316 = vmatpush1.msra.mxu0 0.0
      %1317 = vmatprep.subr.mxu0 0.0
      %1318 = vmatpush1.msra.mxu0 0.0
      %1319 = vmatprep.subr.mxu0 0.0
      %1320 = vmatpush1.msra.mxu0 0.0
      %1321 = vmatprep.subr.mxu0 0.0
      %1322 = vmatpush1.msra.mxu0 0.0
      %1323 = vmatprep.subr.mxu0 0.0
      %1324 = vmatpush1.msra.mxu0 0.0
      %1325 = vmatprep.subr.mxu0 0.0
      %1326 = vmatpush1.msra.mxu0 0.0
      %1327 = vmatprep.subr.mxu0 0.0
      %1328 = vmatpush1.msra.mxu0 0.0
      %1329 = vmatprep.subr.mxu0 0.0
      %1330 = vmatpush1.msra.mxu0 0.0
      %1331 = vmatprep.subr.mxu0 0.0
      %1332 = vmatpush1.msra.mxu0 0.0
      %1333 = vmatprep.subr.mxu0 0.0
      %1334 = vmatpush1.msra.mxu0 0.0
      %1335 = vmatprep.subr.mxu0 0.0
      %1336 = vmatpush1.msra.mxu0 0.0
      %1337 = vmatprep.subr.mxu0 0.0
      %1338 = vmatpush1.msra.mxu0 0.0
      %1339 = vmatprep.subr.mxu0 0.0
      %1340 = vmatpush1.msra.mxu0 0.0
      %1341 = vmatprep.mubr.f32.mxu0 0.0
      %1342 = vmatmul.mubr.f32.gmra.mrb[0].mxu0 %v1071
      %v1343 = vpop.f32.mrb[0].mxu0
      %v1344 = vadd.f32 0.0, %v1343
      %v1345 = vpop.f32.mrb[0].mxu0
      %1346 = vmatprep.mubr.f32.mxu0 0.0
      %1347 = vmatmul.mubr.f32.gmra.mrb[0].mxu0 %v1076
      %v1348 = vpop.f32.mrb[0].mxu0
      %v1349 = vadd.f32 0.0, %v1348
      %v1350 = vpop.f32.mrb[0].mxu0
      %1351 = vdwg.mxu0
      %v1352 = vadd.f32 %v1253, %v1344
      %v1353 = vadd.f32 %v1258, %v1349
      %v1354 = vld [vmem:[%s8] sm:$0x1]
      %v1356 = vlaneseq
      %v1357 = vshrl.u32 %v1356, 7
      %v1358 = vsub.s32 0, %v1357
      %v1359 = vrot.slane %v1354, %v1358
      %v1361 = vadd.f32 %v1352, %v1359
      %v1362 = vadd.f32 %v1353, %v1359
      %v1363 = vld [vmem:[%s9] sm:$0xff]
      %v1364 = vld [vmem:[%s9 + $0x8] sm:$0xff]
      %v1365 = vld [vmem:[%s9 + $0x10] sm:$0xff]
      %v1366 = vld [vmem:[%s9 + $0x18] sm:$0xff]
      %v1367 = vld [vmem:[%s9 + $0x20] sm:$0xff]
      %v1368 = vld [vmem:[%s9 + $0x28] sm:$0xff]
      %v1369 = vld [vmem:[%s9 + $0x30] sm:$0xff]
      %v1370 = vld [vmem:[%s9 + $0x38] sm:$0xff]
      %v1371 = vld [vmem:[%s10] sm:$0x1]
      %v1373 = vlaneseq
      %v1374 = vshrl.u32 %v1373, 7
      %v1375 = vsub.s32 0, %v1374
      %v1376 = vrot.slane %v1371, %v1375
      %1378 = vmatprep.subr.mxu0 0.0
      %1379 = vmatpush1.msra.mxu0 %v1363
      %1380 = vmatprep.subr.mxu0 0.0
      %1381 = vmatpush1.msra.mxu0 %v1364
      %1382 = vmatprep.subr.mxu0 0.0
      %1383 = vmatpush1.msra.mxu0 %v1365
      %1384 = vmatprep.subr.mxu0 0.0
      %1385 = vmatpush1.msra.mxu0 %v1366
      %1386 = vmatprep.subr.mxu0 0.0
      %1387 = vmatpush1.msra.mxu0 %v1367
      %1388 = vmatprep.subr.mxu0 0.0
      %1389 = vmatpush1.msra.mxu0 %v1368
      %1390 = vmatprep.subr.mxu0 0.0
      %1391 = vmatpush1.msra.mxu0 %v1369
      %1392 = vmatprep.subr.mxu0 0.0
      %1393 = vmatpush1.msra.mxu0 %v1370
      %1394 = vmatprep.subr.mxu0 0.0
      %1395 = vmatpush1.msra.mxu0 0.0
      %1396 = vmatprep.subr.mxu0 0.0
      %1397 = vmatpush1.msra.mxu0 0.0
      %1398 = vmatprep.subr.mxu0 0.0
      %1399 = vmatpush1.msra.mxu0 0.0
      %1400 = vmatprep.subr.mxu0 0.0
      %1401 = vmatpush1.msra.mxu0 0.0
      %1402 = vmatprep.subr.mxu0 0.0
      %1403 = vmatpush1.msra.mxu0 0.0
      %1404 = vmatprep.subr.mxu0 0.0
      %1405 = vmatpush1.msra.mxu0 0.0
      %1406 = vmatprep.subr.mxu0 0.0
      %1407 = vmatpush1.msra.mxu0 0.0
      %1408 = vmatprep.subr.mxu0 0.0
      %1409 = vmatpush1.msra.mxu0 0.0
      %1410 = vmatprep.subr.mxu0 0.0
      %1411 = vmatpush1.msra.mxu0 0.0
      %1412 = vmatprep.subr.mxu0 0.0
      %1413 = vmatpush1.msra.mxu0 0.0
      %1414 = vmatprep.subr.mxu0 0.0
      %1415 = vmatpush1.msra.mxu0 0.0
      %1416 = vmatprep.subr.mxu0 0.0
      %1417 = vmatpush1.msra.mxu0 0.0
      %1418 = vmatprep.subr.mxu0 0.0
      %1419 = vmatpush1.msra.mxu0 0.0
      %1420 = vmatprep.subr.mxu0 0.0
      %1421 = vmatpush1.msra.mxu0 0.0
      %1422 = vmatprep.subr.mxu0 0.0
      %1423 = vmatpush1.msra.mxu0 0.0
      %1424 = vmatprep.subr.mxu0 0.0
      %1425 = vmatpush1.msra.mxu0 0.0
      %1426 = vmatprep.subr.mxu0 0.0
      %1427 = vmatpush1.msra.mxu0 0.0
      %1428 = vmatprep.subr.mxu0 0.0
      %1429 = vmatpush1.msra.mxu0 0.0
      %1430 = vmatprep.subr.mxu0 0.0
      %1431 = vmatpush1.msra.mxu0 0.0
      %1432 = vmatprep.subr.mxu0 0.0
      %1433 = vmatpush1.msra.mxu0 0.0
      %1434 = vmatprep.subr.mxu0 0.0
      %1435 = vmatpush1.msra.mxu0 0.0
      %1436 = vmatprep.subr.mxu0 0.0
      %1437 = vmatpush1.msra.mxu0 0.0
      %1438 = vmatprep.subr.mxu0 0.0
      %1439 = vmatpush1.msra.mxu0 0.0
      %1440 = vmatprep.subr.mxu0 0.0
      %1441 = vmatpush1.msra.mxu0 0.0
      %1442 = vmatprep.mubr.f32.mxu0 0.0
      %1443 = vmatmul.mubr.f32.gmra.mrb[0].mxu0 %v666
      %v1444 = vpop.f32.mrb[0].mxu0
      %v1445 = vadd.f32 %v1376, %v1444
      %v1446 = vpop.f32.mrb[0].mxu0
      %1447 = vmatprep.mubr.f32.mxu0 0.0
      %1448 = vmatmul.mubr.f32.gmra.mrb[0].mxu0 %v669
      %v1449 = vpop.f32.mrb[0].mxu0
      %v1450 = vadd.f32 %v1376, %v1449
      %v1451 = vpop.f32.mrb[0].mxu0
      %1452 = vdwg.mxu0
      %v1453 = vadd.f32 %v1361, %v1445
      %v1454 = vadd.f32 %v1362, %v1450
      %v1455 = vmax.f32 %v1453, 0.0
      %v1456 = vmax.f32 %v1454, 0.0
      %v1457 = vld [vmem:[%s11] sm:$0xff]
      %v1458 = vld [vmem:[%s11 + $0x8] sm:$0xff]
      %v1459 = vld [vmem:[%s11 + $0x10] sm:$0xff]
      %v1460 = vld [vmem:[%s11 + $0x18] sm:$0xff]
      %v1461 = vld [vmem:[%s11 + $0x20] sm:$0xff]
      %v1462 = vld [vmem:[%s11 + $0x28] sm:$0xff]
      %v1463 = vld [vmem:[%s11 + $0x30] sm:$0xff]
      %v1464 = vld [vmem:[%s11 + $0x38] sm:$0xff]
      %v1465 = vld [vmem:[%s11 + $0x40] sm:$0xff]
      %v1466 = vld [vmem:[%s11 + $0x48] sm:$0xff]
      %v1467 = vld [vmem:[%s11 + $0x50] sm:$0xff]
      %v1468 = vld [vmem:[%s11 + $0x58] sm:$0xff]
      %v1469 = vld [vmem:[%s11 + $0x60] sm:$0xff]
      %v1470 = vld [vmem:[%s11 + $0x68] sm:$0xff]
      %v1471 = vld [vmem:[%s11 + $0x70] sm:$0xff]
      %v1472 = vld [vmem:[%s11 + $0x78] sm:$0xff]
      %v1473 = vld [vmem:[%s11 + $0x80] sm:$0xff]
      %v1474 = vld [vmem:[%s11 + $0x88] sm:$0xff]
      %v1475 = vld [vmem:[%s11 + $0x90] sm:$0xff]
      %v1476 = vld [vmem:[%s11 + $0x98] sm:$0xff]
      %v1477 = vld [vmem:[%s11 + $0xa0] sm:$0xff]
      %v1478 = vld [vmem:[%s11 + $0xa8] sm:$0xff]
      %v1479 = vld [vmem:[%s11 + $0xb0] sm:$0xff]
      %v1480 = vld [vmem:[%s11 + $0xb8] sm:$0xff]
      %v1481 = vld [vmem:[%s11 + $0xc0] sm:$0xff]
      %v1482 = vld [vmem:[%s11 + $0xc8] sm:$0xff]
      %v1483 = vld [vmem:[%s11 + $0xd0] sm:$0xff]
      %v1484 = vld [vmem:[%s11 + $0xd8] sm:$0xff]
      %v1485 = vld [vmem:[%s11 + $0xe0] sm:$0xff]
      %v1486 = vld [vmem:[%s11 + $0xe8] sm:$0xff]
      %v1487 = vld [vmem:[%s11 + $0xf0] sm:$0xff]
      %v1488 = vld [vmem:[%s11 + $0xf8] sm:$0xff]
      %v1489 = vld [vmem:[%s13] sm:$0x3]
      %v1491 = vlaneseq
      %v1492 = vshrl.u32 %v1491, 7
      %v1493 = vsub.s32 0, %v1492
      %v1494 = vrot.slane %v1489, %v1493
      %v1495 = vlaneseq
      %v1496 = vshrl.u32 %v1495, 7
      %v1497 = vsub.s32 1, %v1496
      %v1498 = vrot.slane %v1489, %v1497
      %1501 = vmatprep.subr.mxu0 %v1458
      %1502 = vmatpush1.msra.mxu0 %v1457
      %1503 = vmatprep.subr.mxu0 %v1460
      %1504 = vmatpush1.msra.mxu0 %v1459
      %1505 = vmatprep.subr.mxu0 %v1462
      %1506 = vmatpush1.msra.mxu0 %v1461
      %1507 = vmatprep.subr.mxu0 %v1464
      %1508 = vmatpush1.msra.mxu0 %v1463
      %1509 = vmatprep.subr.mxu0 %v1466
      %1510 = vmatpush1.msra.mxu0 %v1465
      %1511 = vmatprep.subr.mxu0 %v1468
      %1512 = vmatpush1.msra.mxu0 %v1467
      %1513 = vmatprep.subr.mxu0 %v1470
      %1514 = vmatpush1.msra.mxu0 %v1469
      %1515 = vmatprep.subr.mxu0 %v1472
      %1516 = vmatpush1.msra.mxu0 %v1471
      %1517 = vmatprep.subr.mxu0 %v1474
      %1518 = vmatpush1.msra.mxu0 %v1473
      %1519 = vmatprep.subr.mxu0 %v1476
      %1520 = vmatpush1.msra.mxu0 %v1475
      %1521 = vmatprep.subr.mxu0 %v1478
      %1522 = vmatpush1.msra.mxu0 %v1477
      %1523 = vmatprep.subr.mxu0 %v1480
      %1524 = vmatpush1.msra.mxu0 %v1479
      %1525 = vmatprep.subr.mxu0 %v1482
      %1526 = vmatpush1.msra.mxu0 %v1481
      %1527 = vmatprep.subr.mxu0 %v1484
      %1528 = vmatpush1.msra.mxu0 %v1483
      %1529 = vmatprep.subr.mxu0 %v1486
      %1530 = vmatpush1.msra.mxu0 %v1485
      %1531 = vmatprep.subr.mxu0 %v1488
      %1532 = vmatpush1.msra.mxu0 %v1487
      %1533 = vmatprep.subr.mxu0 0.0
      %1534 = vmatpush1.msra.mxu0 0.0
      %1535 = vmatprep.subr.mxu0 0.0
      %1536 = vmatpush1.msra.mxu0 0.0
      %1537 = vmatprep.subr.mxu0 0.0
      %1538 = vmatpush1.msra.mxu0 0.0
      %1539 = vmatprep.subr.mxu0 0.0
      %1540 = vmatpush1.msra.mxu0 0.0
      %1541 = vmatprep.subr.mxu0 0.0
      %1542 = vmatpush1.msra.mxu0 0.0
      %1543 = vmatprep.subr.mxu0 0.0
      %1544 = vmatpush1.msra.mxu0 0.0
      %1545 = vmatprep.subr.mxu0 0.0
      %1546 = vmatpush1.msra.mxu0 0.0
      %1547 = vmatprep.subr.mxu0 0.0
      %1548 = vmatpush1.msra.mxu0 0.0
      %1549 = vmatprep.subr.mxu0 0.0
      %1550 = vmatpush1.msra.mxu0 0.0
      %1551 = vmatprep.subr.mxu0 0.0
      %1552 = vmatpush1.msra.mxu0 0.0
      %1553 = vmatprep.subr.mxu0 0.0
      %1554 = vmatpush1.msra.mxu0 0.0
      %1555 = vmatprep.subr.mxu0 0.0
      %1556 = vmatpush1.msra.mxu0 0.0
      %1557 = vmatprep.subr.mxu0 0.0
      %1558 = vmatpush1.msra.mxu0 0.0
      %1559 = vmatprep.subr.mxu0 0.0
      %1560 = vmatpush1.msra.mxu0 0.0
      %1561 = vmatprep.subr.mxu0 0.0
      %1562 = vmatpush1.msra.mxu0 0.0
      %1563 = vmatprep.subr.mxu0 0.0
      %1564 = vmatpush1.msra.mxu0 0.0
      %1565 = vmatprep.mubr.f32.mxu0 0.0
      %1566 = vmatmul.mubr.f32.gmra.mrb[0].mxu0 %v1455
      %v1567 = vpop.f32.mrb[0].mxu0
      %v1568 = vadd.f32 %v1494, %v1567
      %v1569 = vpop.f32.mrb[0].mxu0
      %v1570 = vadd.f32 %v1498, %v1569
      %1571 = vmatprep.mubr.f32.mxu0 0.0
      %1572 = vmatmul.mubr.f32.gmra.mrb[0].mxu0 %v1456
      %v1573 = vpop.f32.mrb[0].mxu0
      %v1574 = vadd.f32 %v1494, %v1573
      %v1575 = vpop.f32.mrb[0].mxu0
      %v1576 = vadd.f32 %v1498, %v1575
      %1577 = vdwg.mxu0
      %1578 = vst [vmem:[%s467] sm:$0xff] %v1568
      %1579 = vst [vmem:[%s467 + $0x8] sm:$0xff] %v1570
      %1580 = vst [vmem:[%s467 + $0x10] sm:$0xff] %v1574
      %1581 = vst [vmem:[%s467 + $0x18] sm:$0xff] %v1576
      %v1582 = vld [vmem:[%s12] sm:$0xff]
      %v1583 = vld [vmem:[%s12 + $0x8] sm:$0xff]
      %v1584 = vld [vmem:[%s12 + $0x10] sm:$0xff]
      %v1585 = vld [vmem:[%s12 + $0x18] sm:$0xff]
      %v1586 = vld [vmem:[%s12 + $0x20] sm:$0xff]
      %v1587 = vld [vmem:[%s12 + $0x28] sm:$0xff]
      %v1588 = vld [vmem:[%s12 + $0x30] sm:$0xff]
      %v1589 = vld [vmem:[%s12 + $0x38] sm:$0xff]
      %v1590 = vld [vmem:[%s12 + $0x40] sm:$0xff]
      %v1591 = vld [vmem:[%s12 + $0x48] sm:$0xff]
      %v1592 = vld [vmem:[%s12 + $0x50] sm:$0xff]
      %v1593 = vld [vmem:[%s12 + $0x58] sm:$0xff]
      %v1594 = vld [vmem:[%s12 + $0x60] sm:$0xff]
      %v1595 = vld [vmem:[%s12 + $0x68] sm:$0xff]
      %v1596 = vld [vmem:[%s12 + $0x70] sm:$0xff]
      %v1597 = vld [vmem:[%s12 + $0x78] sm:$0xff]
      %v1598 = vld [vmem:[%s12 + $0x80] sm:$0xff]
      %v1599 = vld [vmem:[%s12 + $0x88] sm:$0xff]
      %v1600 = vld [vmem:[%s12 + $0x90] sm:$0xff]
      %v1601 = vld [vmem:[%s12 + $0x98] sm:$0xff]
      %v1602 = vld [vmem:[%s12 + $0xa0] sm:$0xff]
      %v1603 = vld [vmem:[%s12 + $0xa8] sm:$0xff]
      %v1604 = vld [vmem:[%s12 + $0xb0] sm:$0xff]
      %v1605 = vld [vmem:[%s12 + $0xb8] sm:$0xff]
      %v1606 = vld [vmem:[%s12 + $0xc0] sm:$0xff]
      %v1607 = vld [vmem:[%s12 + $0xc8] sm:$0xff]
      %v1608 = vld [vmem:[%s12 + $0xd0] sm:$0xff]
      %v1609 = vld [vmem:[%s12 + $0xd8] sm:$0xff]
      %v1610 = vld [vmem:[%s12 + $0xe0] sm:$0xff]
      %v1611 = vld [vmem:[%s12 + $0xe8] sm:$0xff]
      %v1612 = vld [vmem:[%s12 + $0xf0] sm:$0xff]
      %v1613 = vld [vmem:[%s12 + $0xf8] sm:$0xff]
      %v1614 = vld [vmem:[%s13] sm:$0x3]
      %v1616 = vlaneseq
      %v1617 = vshrl.u32 %v1616, 7
      %v1618 = vsub.s32 0, %v1617
      %v1619 = vrot.slane %v1614, %v1618
      %v1620 = vlaneseq
      %v1621 = vshrl.u32 %v1620, 7
      %v1622 = vsub.s32 1, %v1621
      %v1623 = vrot.slane %v1614, %v1622
      %1626 = vmatprep.subr.mxu0 %v1583
      %1627 = vmatpush1.msra.mxu0 %v1582
      %1628 = vmatprep.subr.mxu0 %v1585
      %1629 = vmatpush1.msra.mxu0 %v1584
      %1630 = vmatprep.subr.mxu0 %v1587
      %1631 = vmatpush1.msra.mxu0 %v1586
      %1632 = vmatprep.subr.mxu0 %v1589
      %1633 = vmatpush1.msra.mxu0 %v1588
      %1634 = vmatprep.subr.mxu0 %v1591
      %1635 = vmatpush1.msra.mxu0 %v1590
      %1636 = vmatprep.subr.mxu0 %v1593
      %1637 = vmatpush1.msra.mxu0 %v1592
      %1638 = vmatprep.subr.mxu0 %v1595
      %1639 = vmatpush1.msra.mxu0 %v1594
      %1640 = vmatprep.subr.mxu0 %v1597
      %1641 = vmatpush1.msra.mxu0 %v1596
      %1642 = vmatprep.subr.mxu0 %v1599
      %1643 = vmatpush1.msra.mxu0 %v1598
      %1644 = vmatprep.subr.mxu0 %v1601
      %1645 = vmatpush1.msra.mxu0 %v1600
      %1646 = vmatprep.subr.mxu0 %v1603
      %1647 = vmatpush1.msra.mxu0 %v1602
      %1648 = vmatprep.subr.mxu0 %v1605
      %1649 = vmatpush1.msra.mxu0 %v1604
      %1650 = vmatprep.subr.mxu0 %v1607
      %1651 = vmatpush1.msra.mxu0 %v1606
      %1652 = vmatprep.subr.mxu0 %v1609
      %1653 = vmatpush1.msra.mxu0 %v1608
      %1654 = vmatprep.subr.mxu0 %v1611
      %1655 = vmatpush1.msra.mxu0 %v1610
      %1656 = vmatprep.subr.mxu0 %v1613
      %1657 = vmatpush1.msra.mxu0 %v1612
      %1658 = vmatprep.subr.mxu0 0.0
      %1659 = vmatpush1.msra.mxu0 0.0
      %1660 = vmatprep.subr.mxu0 0.0
      %1661 = vmatpush1.msra.mxu0 0.0
      %1662 = vmatprep.subr.mxu0 0.0
      %1663 = vmatpush1.msra.mxu0 0.0
      %1664 = vmatprep.subr.mxu0 0.0
      %1665 = vmatpush1.msra.mxu0 0.0
      %1666 = vmatprep.subr.mxu0 0.0
      %1667 = vmatpush1.msra.mxu0 0.0
      %1668 = vmatprep.subr.mxu0 0.0
      %1669 = vmatpush1.msra.mxu0 0.0
      %1670 = vmatprep.subr.mxu0 0.0
      %1671 = vmatpush1.msra.mxu0 0.0
      %1672 = vmatprep.subr.mxu0 0.0
      %1673 = vmatpush1.msra.mxu0 0.0
      %1674 = vmatprep.subr.mxu0 0.0
      %1675 = vmatpush1.msra.mxu0 0.0
      %1676 = vmatprep.subr.mxu0 0.0
      %1677 = vmatpush1.msra.mxu0 0.0
      %1678 = vmatprep.subr.mxu0 0.0
      %1679 = vmatpush1.msra.mxu0 0.0
      %1680 = vmatprep.subr.mxu0 0.0
      %1681 = vmatpush1.msra.mxu0 0.0
      %1682 = vmatprep.subr.mxu0 0.0
      %1683 = vmatpush1.msra.mxu0 0.0
      %1684 = vmatprep.subr.mxu0 0.0
      %1685 = vmatpush1.msra.mxu0 0.0
      %1686 = vmatprep.subr.mxu0 0.0
      %1687 = vmatpush1.msra.mxu0 0.0
      %1688 = vmatprep.subr.mxu0 0.0
      %1689 = vmatpush1.msra.mxu0 0.0
      %1690 = vmatprep.mubr.f32.mxu0 0.0
      %1691 = vmatmul.mubr.f32.gmra.mrb[0].mxu0 %v1455
      %v1692 = vpop.f32.mrb[0].mxu0
      %v1693 = vadd.f32 %v1619, %v1692
      %v1694 = vpop.f32.mrb[0].mxu0
      %v1695 = vadd.f32 %v1623, %v1694
      %1696 = vmatprep.mubr.f32.mxu0 0.0
      %1697 = vmatmul.mubr.f32.gmra.mrb[0].mxu0 %v1456
      %v1698 = vpop.f32.mrb[0].mxu0
      %v1699 = vadd.f32 %v1619, %v1698
      %v1700 = vpop.f32.mrb[0].mxu0
      %v1701 = vadd.f32 %v1623, %v1700
      %1702 = vdwg.mxu0
      %s1703 = scalar_lea.vmem %s467, 32
      %1704 = vst [vmem:[%s1703] sm:$0xff] %v1693
      %1705 = vst [vmem:[%s1703 + $0x8] sm:$0xff] %v1695
      %1706 = vst [vmem:[%s1703 + $0x10] sm:$0xff] %v1699
      %1707 = vst [vmem:[%s1703 + $0x18] sm:$0xff] %v1701
      %p1708 = scmp.lt.s32.totalorder %s25, 1
      %s1709 = scalar_select %p1708, %s25, 1
      %s1710 = smul.addr %s1709, 8
      %s1711 = smul.addr %s1710, 8
      %s1712 = scalar_lea.vmem %s14, %s1711
      // Predicated region
      $region77: #{unet_decoder_forward.2} parent=75 // pred_check
        %p1713 = pneg %p342
      $region78: #{unet_decoder_forward.2} parent=75 // pred_check_branch
        %1715 = sbr.rel (%p1713) target = $region80
      $region79: #{unet_decoder_forward.2} parent=75 // pred_region
        _
      $region80: #{unet_decoder_forward.2} parent=75 // pred_fallthru
        _
    $region76: #{unet_decoder_forward.2} parent=5 // pred_fallthru
      _
    %p1716 = scmp.le.s32.totalorder 2, %s20
    // Predicated region
    $region81: #{unet_decoder_forward.2} parent=5 // pred_check
      %p1717 = pneg %p1716
    $region82: #{unet_decoder_forward.2} parent=5 // pred_check_branch
      %1719 = sbr.rel (%p1717) target = $region84
    $region83: #{unet_decoder_forward.2} parent=5 // pred_region
      %s1720 = ssub.s32 %s20, 2
      // Predicated region
      $region85: #{unet_decoder_forward.2} parent=83 // pred_check
        %p1721 = pneg %p348
      $region86: #{unet_decoder_forward.2} parent=83 // pred_check_branch
        %1723 = sbr.rel (%p1721) target = $region88
      $region87: #{unet_decoder_forward.2} parent=83 // pred_region
        %p1724 = scmp.lt.s32.totalorder %s26, 1
        %s1725 = scalar_select %p1724, %s26, 1
        %s1726 = smul.addr %s1725, 8
        %s1727 = smul.addr %s1726, 8
        %s1728 = scalar_lea.vmem %s14, %s1727
      $region88: #{unet_decoder_forward.2} parent=83 // pred_fallthru
        _
    $region84: #{unet_decoder_forward.2} parent=5 // pred_fallthru
      _
  $region6: #{unet_decoder_forward.2} parent=0 // loop_footer
    %s24 = sadd.s32 1, %s20
  $region7: #{unet_decoder_forward.2} parent=0 // loop_footer_branch
    %19 = sbr.rel target = $region3
  $region8: #{unet_decoder_forward.2} parent=0 // loop_exit
    _

// kernel: mul.350
$region0: #{mul.350}
  %s0 = inlined_call_operand.vmem [shape: f32[16,2,16], index: 0, kind: input, shape index: {}]
  %s1 = inlined_call_operand.vmem [shape: f32[16,32], index: 1, kind: output, shape index: {}]
  $region1: #{mul.350} parent=0
    #allocation0 [shape = 'u8[65536]{0}', space=vmem, size = 0x10000, scoped, tag = 'scoped mem for input reshape']
    %s3 = sshllo.u32 0, 2
    %s4 = smul.addr 2, 15
    %s5 = scalar_lea.vmem %s0, %s4
    %v6 = vld [vmem:[%s5] sm:%s3]
    %s7 = scalar_lea.vmem [#allocation0], 120
    %8 = vst [vmem:[%s7] sm:%s3] %v6
    %s9 = smul.addr 2, 14
    %s10 = scalar_lea.vmem %s0, %s9
    %v11 = vld [vmem:[%s10] sm:%s3]
    %s12 = scalar_lea.vmem [#allocation0], 112
    %13 = vst [vmem:[%s12] sm:%s3] %v11
    %s14 = smul.addr 2, 13
    %s15 = scalar_lea.vmem %s0, %s14
    %v16 = vld [vmem:[%s15] sm:%s3]
    %s17 = scalar_lea.vmem [#allocation0], 104
    %18 = vst [vmem:[%s17] sm:%s3] %v16
    %s19 = smul.addr 2, 12
    %s20 = scalar_lea.vmem %s0, %s19
    %v21 = vld [vmem:[%s20] sm:%s3]
    %s22 = scalar_lea.vmem [#allocation0], 96
    %23 = vst [vmem:[%s22] sm:%s3] %v21
    %s24 = smul.addr 2, 11
    %s25 = scalar_lea.vmem %s0, %s24
    %v26 = vld [vmem:[%s25] sm:%s3]
    %s27 = scalar_lea.vmem [#allocation0], 88
    %28 = vst [vmem:[%s27] sm:%s3] %v26
    %s29 = smul.addr 2, 10
    %s30 = scalar_lea.vmem %s0, %s29
    %v31 = vld [vmem:[%s30] sm:%s3]
    %s32 = scalar_lea.vmem [#allocation0], 80
    %33 = vst [vmem:[%s32] sm:%s3] %v31
    %s34 = smul.addr 2, 9
    %s35 = scalar_lea.vmem %s0, %s34
    %v36 = vld [vmem:[%s35] sm:%s3]
    %s37 = scalar_lea.vmem [#allocation0], 72
    %38 = vst [vmem:[%s37] sm:%s3] %v36
    %s39 = smul.addr 2, 8
    %s40 = scalar_lea.vmem %s0, %s39
    %v41 = vld [vmem:[%s40] sm:%s3]
    %s42 = scalar_lea.vmem [#allocation0], 64
    %43 = vst [vmem:[%s42] sm:%s3] %v41
    %s44 = smul.addr 2, 7
    %s45 = scalar_lea.vmem %s0, %s44
    %v46 = vld [vmem:[%s45] sm:%s3]
    %s47 = scalar_lea.vmem [#allocation0], 56
    %48 = vst [vmem:[%s47] sm:%s3] %v46
    %s49 = smul.addr 2, 6
    %s50 = scalar_lea.vmem %s0, %s49
    %v51 = vld [vmem:[%s50] sm:%s3]
    %s52 = scalar_lea.vmem [#allocation0], 48
    %53 = vst [vmem:[%s52] sm:%s3] %v51
    %s54 = smul.addr 2, 5
    %s55 = scalar_lea.vmem %s0, %s54
    %v56 = vld [vmem:[%s55] sm:%s3]
    %s57 = scalar_lea.vmem [#allocation0], 40
    %58 = vst [vmem:[%s57] sm:%s3] %v56
    %s59 = smul.addr 2, 4
    %s60 = scalar_lea.vmem %s0, %s59
    %v61 = vld [vmem:[%s60] sm:%s3]
    %s62 = scalar_lea.vmem [#allocation0], 32
    %63 = vst [vmem:[%s62] sm:%s3] %v61
    %s64 = smul.addr 2, 3
    %s65 = scalar_lea.vmem %s0, %s64
    %v66 = vld [vmem:[%s65] sm:%s3]
    %s67 = scalar_lea.vmem [#allocation0], 24
    %68 = vst [vmem:[%s67] sm:%s3] %v66
    %s69 = smul.addr 2, 2
    %s70 = scalar_lea.vmem %s0, %s69
    %v71 = vld [vmem:[%s70] sm:%s3]
    %s72 = scalar_lea.vmem [#allocation0], 16
    %73 = vst [vmem:[%s72] sm:%s3] %v71
    %s74 = scalar_lea.vmem %s0, 2
    %v75 = vld [vmem:[%s74] sm:%s3]
    %s76 = scalar_lea.vmem [#allocation0], 8
    %77 = vst [vmem:[%s76] sm:%s3] %v75
    %v78 = vld [vmem:[%s0] sm:%s3]
    %79 = vst [vmem:[#allocation0] sm:%s3] %v78
    %v80 = vld [vmem:[#allocation0] ss:$8 sm:$0xf]
    %v81 = vld [vmem:[#allocation0] ss:$8 sm:$0xf0]
    %vm82 = vcmask 1047556
    %v83 = vsel %vm82, %v81, %v80
    %vm84 = vcmask 130048
    %85 = vst.msk [vmem:[%s1] sm:$0xff] %vm84, %v83
    %s86 = scalar_lea.vmem [#allocation0], 64
    %v87 = vld [vmem:[%s86] ss:$8 sm:$0xf]
    %s88 = scalar_lea.vmem [#allocation0], 64
    %v89 = vld [vmem:[%s88] ss:$8 sm:$0xf0]
    %vm90 = vcmask 1047556
    %v91 = vsel %vm90, %v89, %v87
    %vm92 = vcmask 130048
    %s93 = scalar_lea.vmem %s1, 8
    %94 = vst.msk [vmem:[%s93] sm:$0xff] %vm92, %v91
    %s95 = scalar_lea.vmem [#allocation0], 1
    %v96 = vld [vmem:[%s95] ss:$8 sm:$0xf]
    %s97 = scalar_lea.vmem [#allocation0], 1
    %v98 = vld [vmem:[%s97] ss:$8 sm:$0xf0]
    %vm99 = vcmask 1047556
    %v100 = vsel %vm99, %v98, %v96
    %101 = vrot.lane.b32.xlu0 %v100, 16
    %v102 = vpop.permute.xlu0 %101
    %vm103 = vcmask 261248
    %104 = vst.msk [vmem:[%s1] sm:$0xff] %vm103, %v102
    %s105 = scalar_lea.vmem [#allocation0], 65
    %v106 = vld [vmem:[%s105] ss:$8 sm:$0xf]
    %s107 = scalar_lea.vmem [#allocation0], 65
    %v108 = vld [vmem:[%s107] ss:$8 sm:$0xf0]
    %vm109 = vcmask 1047556
    %v110 = vsel %vm109, %v108, %v106
    %111 = vrot.lane.b32.xlu0 %v110, 16
    %v112 = vpop.permute.xlu0 %111
    %vm113 = vcmask 261248
    %s114 = scalar_lea.vmem %s1, 8
    %115 = vst.msk [vmem:[%s114] sm:$0xff] %vm113, %v112

// kernel: unet_decoder_forward.3
$region0: #{unet_decoder_forward.3}
  #allocation0 [shape = 'u32[]', space=smem, size = 0x4, offset = 0x4, fixed_abs, tag = 'smem constant byte address 0x4 - core index']
  #allocation1 [shape = 'u32[144,128]{1,0:T(1,128)}', space=vmem, size = 0x12000, scoped, tag = 'internal scratch']
  %s0 = inlined_call_operand.vmem [shape: f32[2,2,16,256], index: 0, kind: input, shape index: {}]
  %s1 = inlined_call_operand.vmem [shape: f32[256,512], index: 1, kind: input, shape index: {}]
  %s2 = inlined_call_operand.vmem [shape: f32[256,512], index: 2, kind: input, shape index: {}]
  %s3 = inlined_call_operand.vmem [shape: f32[256,512], index: 3, kind: input, shape index: {}]
  %s4 = inlined_call_operand.vmem [shape: f32[1,512], index: 4, kind: input, shape index: {}]
  %s5 = inlined_call_operand.vmem [shape: f32[512,512], index: 5, kind: input, shape index: {}]
  %s6 = inlined_call_operand.vmem [shape: f32[512,512], index: 6, kind: input, shape index: {}]
  %s7 = inlined_call_operand.vmem [shape: f32[512,512], index: 7, kind: input, shape index: {}]
  %s8 = inlined_call_operand.vmem [shape: f32[1,512], index: 8, kind: input, shape index: {}]
  %s9 = inlined_call_operand.vmem [shape: f32[256,512], index: 9, kind: input, shape index: {}]
  %s10 = inlined_call_operand.vmem [shape: f32[1,512], index: 10, kind: input, shape index: {}]
  %s11 = inlined_call_operand.vmem [shape: f32[512,1024], index: 11, kind: input, shape index: {}]
  %s12 = inlined_call_operand.vmem [shape: f32[512,1024], index: 12, kind: input, shape index: {}]
  %s13 = inlined_call_operand.vmem [shape: f32[1,1024], index: 13, kind: input, shape index: {}]
  %s14 = inlined_call_operand.vmem [shape: f32[2,2,32,1024], index: 14, kind: output, shape index: {}]
  %s15 = sld [smem:[#allocation0]]
  $region89: #{unet_decoder_forward.3} parent=0
    _
  %s17 = ssub.s32 1, %s15
  %s18 = scalar_select 0, %s17, %s15
  loop: start=0, step=1, limit=4
  $region2: #{unet_decoder_forward.3} parent=0 // loop_pre_header
    _
  $region3: #{unet_decoder_forward.3} parent=0 // loop_header
    %s20 = sphi 0, %s24
    %p21 = scmp.ge.s32.totalorder %s20, 4
    %s30 = sphi 0, %s32
    %s33 = sphi 0, %s30
    %s34 = sphi 0, %s33
    %s50 = sphi 0, %s34
    %s54 = sphi 0, %s54
    %s56 = sphi 0, %s54
    %s57 = sphi 0, %s56
    %s71 = sphi 0, %s57
    %s75 = sphi 0, %s75
    %s77 = sphi 0, %s75
    %s78 = sphi 0, %s77
    %s92 = sphi 0, %s78
    %s96 = sphi 0, %s96
    %s98 = sphi 0, %s96
    %s99 = sphi 0, %s98
    %s113 = sphi 0, %s99
    %s117 = sphi 0, %s117
    %s119 = sphi 0, %s117
    %s120 = sphi 0, %s119
    %s134 = sphi 0, %s120
    %s138 = sphi 0, %s138
    %s140 = sphi 0, %s138
    %s141 = sphi 0, %s140
    %s155 = sphi 0, %s141
    %s159 = sphi 0, %s159
    %s161 = sphi 0, %s159
    %s162 = sphi 0, %s161
    %s176 = sphi 0, %s162
    %s180 = sphi 0, %s180
    %s182 = sphi 0, %s180
    %s183 = sphi 0, %s182
    %s197 = sphi 0, %s183
    %s201 = sphi 0, %s201
    %s203 = sphi 0, %s201
    %s204 = sphi 0, %s203
    %s218 = sphi 0, %s204
    %s222 = sphi 0, %s222
    %s224 = sphi 0, %s222
    %s225 = sphi 0, %s224
    %s239 = sphi 0, %s225
    %s243 = sphi 0, %s243
    %s245 = sphi 0, %s243
    %s246 = sphi 0, %s245
    %s260 = sphi 0, %s246
    %s264 = sphi 0, %s264
    %s266 = sphi 0, %s264
    %s267 = sphi 0, %s266
    %s281 = sphi 0, %s267
    %s285 = sphi 0, %s285
    %s287 = sphi 0, %s285
    %s288 = sphi 0, %s287
    %s302 = sphi 0, %s288
    %s306 = sphi 0, %s306
    %s308 = sphi 0, %s306
    %s309 = sphi 0, %s308
    %s323 = sphi 0, %s309
    %s329 = sphi 0, %s331
    %s332 = sphi 0, %s329
    %s333 = sphi 0, %s332
    %s349 = sphi 0, %s333
  $region4: #{unet_decoder_forward.3} parent=0 // loop_header_branch
    %23 = sbr.rel (%p21) target = $region8
  $region5: #{unet_decoder_forward.3} parent=0 // loop_body
    %s25 = ssub.s32 %s20, 1
    %s26 = ssub.s32 %s20, 2
    %s27 = sadd.s32 %s20, 1
    %s28 = ssub.s32 %s20, %s27
    %p29 = scmp.eq.s32.totalorder %s28, 0
    %s31 = sadd.s32 %s30, 1
    %s32 = scalar_select %p29, %s30, %s31
    %p35 = pneg %p29
    %p36 = scmp.eq.s32.totalorder %s20, 1
    %p37 = por %p35, %p36
    %p38 = scmp.ne.s32.totalorder %s30, %s33
    %p39 = scmp.eq.s32.totalorder %s20, 0
    %p40 = por %p38, %p39
    %p41 = scmp.ne.s32.totalorder %s30, %s33
    %p42 = scmp.eq.s32.totalorder %s25, 1
    %p43 = por %p41, %p42
    %p44 = scmp.ne.s32.totalorder %s33, %s34
    %p45 = scmp.eq.s32.totalorder %s25, 0
    %p46 = por %p44, %p45
    %p47 = scmp.ne.s32.totalorder %s33, %s34
    %p48 = scmp.eq.s32.totalorder %s26, 1
    %p49 = por %p47, %p48
    %p51 = scmp.ne.s32.totalorder %s34, %s50
    %p52 = scmp.eq.s32.totalorder %s26, 0
    %p53 = por %p51, %p52
    %s55 = sadd.s32 %s54, 1
    %p58 = scmp.eq.s32.totalorder %s20, 1
    %p59 = scmp.ne.s32.totalorder %s54, %s56
    %p60 = scmp.eq.s32.totalorder %s20, 0
    %p61 = por %p59, %p60
    %p62 = scmp.ne.s32.totalorder %s54, %s56
    %p63 = scmp.eq.s32.totalorder %s25, 1
    %p64 = por %p62, %p63
    %p65 = scmp.ne.s32.totalorder %s56, %s57
    %p66 = scmp.eq.s32.totalorder %s25, 0
    %p67 = por %p65, %p66
    %p68 = scmp.ne.s32.totalorder %s56, %s57
    %p69 = scmp.eq.s32.totalorder %s26, 1
    %p70 = por %p68, %p69
    %p72 = scmp.ne.s32.totalorder %s57, %s71
    %p73 = scmp.eq.s32.totalorder %s26, 0
    %p74 = por %p72, %p73
    %s76 = sadd.s32 %s75, 1
    %p79 = scmp.eq.s32.totalorder %s20, 1
    %p80 = scmp.ne.s32.totalorder %s75, %s77
    %p81 = scmp.eq.s32.totalorder %s20, 0
    %p82 = por %p80, %p81
    %p83 = scmp.ne.s32.totalorder %s75, %s77
    %p84 = scmp.eq.s32.totalorder %s25, 1
    %p85 = por %p83, %p84
    %p86 = scmp.ne.s32.totalorder %s77, %s78
    %p87 = scmp.eq.s32.totalorder %s25, 0
    %p88 = por %p86, %p87
    %p89 = scmp.ne.s32.totalorder %s77, %s78
    %p90 = scmp.eq.s32.totalorder %s26, 1
    %p91 = por %p89, %p90
    %p93 = scmp.ne.s32.totalorder %s78, %s92
    %p94 = scmp.eq.s32.totalorder %s26, 0
    %p95 = por %p93, %p94
    %s97 = sadd.s32 %s96, 1
    %p100 = scmp.eq.s32.totalorder %s20, 1
    %p101 = scmp.ne.s32.totalorder %s96, %s98
    %p102 = scmp.eq.s32.totalorder %s20, 0
    %p103 = por %p101, %p102
    %p104 = scmp.ne.s32.totalorder %s96, %s98
    %p105 = scmp.eq.s32.totalorder %s25, 1
    %p106 = por %p104, %p105
    %p107 = scmp.ne.s32.totalorder %s98, %s99
    %p108 = scmp.eq.s32.totalorder %s25, 0
    %p109 = por %p107, %p108
    %p110 = scmp.ne.s32.totalorder %s98, %s99
    %p111 = scmp.eq.s32.totalorder %s26, 1
    %p112 = por %p110, %p111
    %p114 = scmp.ne.s32.totalorder %s99, %s113
    %p115 = scmp.eq.s32.totalorder %s26, 0
    %p116 = por %p114, %p115
    %s118 = sadd.s32 %s117, 1
    %p121 = scmp.eq.s32.totalorder %s20, 1
    %p122 = scmp.ne.s32.totalorder %s117, %s119
    %p123 = scmp.eq.s32.totalorder %s20, 0
    %p124 = por %p122, %p123
    %p125 = scmp.ne.s32.totalorder %s117, %s119
    %p126 = scmp.eq.s32.totalorder %s25, 1
    %p127 = por %p125, %p126
    %p128 = scmp.ne.s32.totalorder %s119, %s120
    %p129 = scmp.eq.s32.totalorder %s25, 0
    %p130 = por %p128, %p129
    %p131 = scmp.ne.s32.totalorder %s119, %s120
    %p132 = scmp.eq.s32.totalorder %s26, 1
    %p133 = por %p131, %p132
    %p135 = scmp.ne.s32.totalorder %s120, %s134
    %p136 = scmp.eq.s32.totalorder %s26, 0
    %p137 = por %p135, %p136
    %s139 = sadd.s32 %s138, 1
    %p142 = scmp.eq.s32.totalorder %s20, 1
    %p143 = scmp.ne.s32.totalorder %s138, %s140
    %p144 = scmp.eq.s32.totalorder %s20, 0
    %p145 = por %p143, %p144
    %p146 = scmp.ne.s32.totalorder %s138, %s140
    %p147 = scmp.eq.s32.totalorder %s25, 1
    %p148 = por %p146, %p147
    %p149 = scmp.ne.s32.totalorder %s140, %s141
    %p150 = scmp.eq.s32.totalorder %s25, 0
    %p151 = por %p149, %p150
    %p152 = scmp.ne.s32.totalorder %s140, %s141
    %p153 = scmp.eq.s32.totalorder %s26, 1
    %p154 = por %p152, %p153
    %p156 = scmp.ne.s32.totalorder %s141, %s155
    %p157 = scmp.eq.s32.totalorder %s26, 0
    %p158 = por %p156, %p157
    %s160 = sadd.s32 %s159, 1
    %p163 = scmp.eq.s32.totalorder %s20, 1
    %p164 = scmp.ne.s32.totalorder %s159, %s161
    %p165 = scmp.eq.s32.totalorder %s20, 0
    %p166 = por %p164, %p165
    %p167 = scmp.ne.s32.totalorder %s159, %s161
    %p168 = scmp.eq.s32.totalorder %s25, 1
    %p169 = por %p167, %p168
    %p170 = scmp.ne.s32.totalorder %s161, %s162
    %p171 = scmp.eq.s32.totalorder %s25, 0
    %p172 = por %p170, %p171
    %p173 = scmp.ne.s32.totalorder %s161, %s162
    %p174 = scmp.eq.s32.totalorder %s26, 1
    %p175 = por %p173, %p174
    %p177 = scmp.ne.s32.totalorder %s162, %s176
    %p178 = scmp.eq.s32.totalorder %s26, 0
    %p179 = por %p177, %p178
    %s181 = sadd.s32 %s180, 1
    %p184 = scmp.eq.s32.totalorder %s20, 1
    %p185 = scmp.ne.s32.totalorder %s180, %s182
    %p186 = scmp.eq.s32.totalorder %s20, 0
    %p187 = por %p185, %p186
    %p188 = scmp.ne.s32.totalorder %s180, %s182
    %p189 = scmp.eq.s32.totalorder %s25, 1
    %p190 = por %p188, %p189
    %p191 = scmp.ne.s32.totalorder %s182, %s183
    %p192 = scmp.eq.s32.totalorder %s25, 0
    %p193 = por %p191, %p192
    %p194 = scmp.ne.s32.totalorder %s182, %s183
    %p195 = scmp.eq.s32.totalorder %s26, 1
    %p196 = por %p194, %p195
    %p198 = scmp.ne.s32.totalorder %s183, %s197
    %p199 = scmp.eq.s32.totalorder %s26, 0
    %p200 = por %p198, %p199
    %s202 = sadd.s32 %s201, 1
    %p205 = scmp.eq.s32.totalorder %s20, 1
    %p206 = scmp.ne.s32.totalorder %s201, %s203
    %p207 = scmp.eq.s32.totalorder %s20, 0
    %p208 = por %p206, %p207
    %p209 = scmp.ne.s32.totalorder %s201, %s203
    %p210 = scmp.eq.s32.totalorder %s25, 1
    %p211 = por %p209, %p210
    %p212 = scmp.ne.s32.totalorder %s203, %s204
    %p213 = scmp.eq.s32.totalorder %s25, 0
    %p214 = por %p212, %p213
    %p215 = scmp.ne.s32.totalorder %s203, %s204
    %p216 = scmp.eq.s32.totalorder %s26, 1
    %p217 = por %p215, %p216
    %p219 = scmp.ne.s32.totalorder %s204, %s218
    %p220 = scmp.eq.s32.totalorder %s26, 0
    %p221 = por %p219, %p220
    %s223 = sadd.s32 %s222, 1
    %p226 = scmp.eq.s32.totalorder %s20, 1
    %p227 = scmp.ne.s32.totalorder %s222, %s224
    %p228 = scmp.eq.s32.totalorder %s20, 0
    %p229 = por %p227, %p228
    %p230 = scmp.ne.s32.totalorder %s222, %s224
    %p231 = scmp.eq.s32.totalorder %s25, 1
    %p232 = por %p230, %p231
    %p233 = scmp.ne.s32.totalorder %s224, %s225
    %p234 = scmp.eq.s32.totalorder %s25, 0
    %p235 = por %p233, %p234
    %p236 = scmp.ne.s32.totalorder %s224, %s225
    %p237 = scmp.eq.s32.totalorder %s26, 1
    %p238 = por %p236, %p237
    %p240 = scmp.ne.s32.totalorder %s225, %s239
    %p241 = scmp.eq.s32.totalorder %s26, 0
    %p242 = por %p240, %p241
    %s244 = sadd.s32 %s243, 1
    %p247 = scmp.eq.s32.totalorder %s20, 1
    %p248 = scmp.ne.s32.totalorder %s243, %s245
    %p249 = scmp.eq.s32.totalorder %s20, 0
    %p250 = por %p248, %p249
    %p251 = scmp.ne.s32.totalorder %s243, %s245
    %p252 = scmp.eq.s32.totalorder %s25, 1
    %p253 = por %p251, %p252
    %p254 = scmp.ne.s32.totalorder %s245, %s246
    %p255 = scmp.eq.s32.totalorder %s25, 0
    %p256 = por %p254, %p255
    %p257 = scmp.ne.s32.totalorder %s245, %s246
    %p258 = scmp.eq.s32.totalorder %s26, 1
    %p259 = por %p257, %p258
    %p261 = scmp.ne.s32.totalorder %s246, %s260
    %p262 = scmp.eq.s32.totalorder %s26, 0
    %p263 = por %p261, %p262
    %s265 = sadd.s32 %s264, 1
    %p268 = scmp.eq.s32.totalorder %s20, 1
    %p269 = scmp.ne.s32.totalorder %s264, %s266
    %p270 = scmp.eq.s32.totalorder %s20, 0
    %p271 = por %p269, %p270
    %p272 = scmp.ne.s32.totalorder %s264, %s266
    %p273 = scmp.eq.s32.totalorder %s25, 1
    %p274 = por %p272, %p273
    %p275 = scmp.ne.s32.totalorder %s266, %s267
    %p276 = scmp.eq.s32.totalorder %s25, 0
    %p277 = por %p275, %p276
    %p278 = scmp.ne.s32.totalorder %s266, %s267
    %p279 = scmp.eq.s32.totalorder %s26, 1
    %p280 = por %p278, %p279
    %p282 = scmp.ne.s32.totalorder %s267, %s281
    %p283 = scmp.eq.s32.totalorder %s26, 0
    %p284 = por %p282, %p283
    %s286 = sadd.s32 %s285, 1
    %p289 = scmp.eq.s32.totalorder %s20, 1
    %p290 = scmp.ne.s32.totalorder %s285, %s287
    %p291 = scmp.eq.s32.totalorder %s20, 0
    %p292 = por %p290, %p291
    %p293 = scmp.ne.s32.totalorder %s285, %s287
    %p294 = scmp.eq.s32.totalorder %s25, 1
    %p295 = por %p293, %p294
    %p296 = scmp.ne.s32.totalorder %s287, %s288
    %p297 = scmp.eq.s32.totalorder %s25, 0
    %p298 = por %p296, %p297
    %p299 = scmp.ne.s32.totalorder %s287, %s288
    %p300 = scmp.eq.s32.totalorder %s26, 1
    %p301 = por %p299, %p300
    %p303 = scmp.ne.s32.totalorder %s288, %s302
    %p304 = scmp.eq.s32.totalorder %s26, 0
    %p305 = por %p303, %p304
    %s307 = sadd.s32 %s306, 1
    %p310 = scmp.eq.s32.totalorder %s20, 1
    %p311 = scmp.ne.s32.totalorder %s306, %s308
    %p312 = scmp.eq.s32.totalorder %s20, 0
    %p313 = por %p311, %p312
    %p314 = scmp.ne.s32.totalorder %s306, %s308
    %p315 = scmp.eq.s32.totalorder %s25, 1
    %p316 = por %p314, %p315
    %p317 = scmp.ne.s32.totalorder %s308, %s309
    %p318 = scmp.eq.s32.totalorder %s25, 0
    %p319 = por %p317, %p318
    %p320 = scmp.ne.s32.totalorder %s308, %s309
    %p321 = scmp.eq.s32.totalorder %s26, 1
    %p322 = por %p320, %p321
    %p324 = scmp.ne.s32.totalorder %s309, %s323
    %p325 = scmp.eq.s32.totalorder %s26, 0
    %p326 = por %p324, %p325
    %s327 = ssub.s32 %s20, %s27
    %p328 = scmp.eq.s32.totalorder %s327, 0
    %s330 = sadd.s32 %s329, 1
    %s331 = scalar_select %p328, %s329, %s330
    %p334 = pneg %p328
    %p335 = scmp.eq.s32.totalorder %s20, 1
    %p336 = por %p334, %p335
    %p337 = scmp.ne.s32.totalorder %s329, %s332
    %p338 = scmp.eq.s32.totalorder %s20, 0
    %p339 = por %p337, %p338
    %p340 = scmp.ne.s32.totalorder %s329, %s332
    %p341 = scmp.eq.s32.totalorder %s25, 1
    %p342 = por %p340, %p341
    %p343 = scmp.ne.s32.totalorder %s332, %s333
    %p344 = scmp.eq.s32.totalorder %s25, 0
    %p345 = por %p343, %p344
    %p346 = scmp.ne.s32.totalorder %s332, %s333
    %p347 = scmp.eq.s32.totalorder %s26, 1
    %p348 = por %p346, %p347
    %p350 = scmp.ne.s32.totalorder %s333, %s349
    %p351 = scmp.eq.s32.totalorder %s26, 0
    %p352 = por %p350, %p351
    %p353 = scmp.le.s32.totalorder 1, %s20
    %p354 = scmp.lt.s32.totalorder %s20, 3
    %p355 = pnand %p353, %p354
    %p356 = pneg %p355
    // Predicated region
    $region9: #{unet_decoder_forward.3} parent=5 // pred_check
      _
    $region10: #{unet_decoder_forward.3} parent=5 // pred_check_branch
      %358 = sbr.rel (%p355) target = $region12
    $region11: #{unet_decoder_forward.3} parent=5 // pred_region
      %s359 = ssub.s32 %s20, 1
      // Predicated region
      $region13: #{unet_decoder_forward.3} parent=11 // pred_check
        %p360 = pneg %p67
      $region14: #{unet_decoder_forward.3} parent=11 // pred_check_branch
        %362 = sbr.rel (%p360) target = $region16
      $region15: #{unet_decoder_forward.3} parent=11 // pred_region
        _
      $region16: #{unet_decoder_forward.3} parent=11 // pred_fallthru
        _
      // Predicated region
      $region17: #{unet_decoder_forward.3} parent=11 // pred_check
        %p363 = pneg %p88
      $region18: #{unet_decoder_forward.3} parent=11 // pred_check_branch
        %365 = sbr.rel (%p363) target = $region20
      $region19: #{unet_decoder_forward.3} parent=11 // pred_region
        _
      $region20: #{unet_decoder_forward.3} parent=11 // pred_fallthru
        _
      // Predicated region
      $region21: #{unet_decoder_forward.3} parent=11 // pred_check
        %p366 = pneg %p109
      $region22: #{unet_decoder_forward.3} parent=11 // pred_check_branch
        %368 = sbr.rel (%p366) target = $region24
      $region23: #{unet_decoder_forward.3} parent=11 // pred_region
        _
      $region24: #{unet_decoder_forward.3} parent=11 // pred_fallthru
        _
      // Predicated region
      $region25: #{unet_decoder_forward.3} parent=11 // pred_check
        %p369 = pneg %p130
      $region26: #{unet_decoder_forward.3} parent=11 // pred_check_branch
        %371 = sbr.rel (%p369) target = $region28
      $region27: #{unet_decoder_forward.3} parent=11 // pred_region
        _
      $region28: #{unet_decoder_forward.3} parent=11 // pred_fallthru
        _
      // Predicated region
      $region29: #{unet_decoder_forward.3} parent=11 // pred_check
        %p372 = pneg %p151
      $region30: #{unet_decoder_forward.3} parent=11 // pred_check_branch
        %374 = sbr.rel (%p372) target = $region32
      $region31: #{unet_decoder_forward.3} parent=11 // pred_region
        _
      $region32: #{unet_decoder_forward.3} parent=11 // pred_fallthru
        _
      // Predicated region
      $region33: #{unet_decoder_forward.3} parent=11 // pred_check
        %p375 = pneg %p172
      $region34: #{unet_decoder_forward.3} parent=11 // pred_check_branch
        %377 = sbr.rel (%p375) target = $region36
      $region35: #{unet_decoder_forward.3} parent=11 // pred_region
        _
      $region36: #{unet_decoder_forward.3} parent=11 // pred_fallthru
        _
      // Predicated region
      $region37: #{unet_decoder_forward.3} parent=11 // pred_check
        %p378 = pneg %p193
      $region38: #{unet_decoder_forward.3} parent=11 // pred_check_branch
        %380 = sbr.rel (%p378) target = $region40
      $region39: #{unet_decoder_forward.3} parent=11 // pred_region
        _
      $region40: #{unet_decoder_forward.3} parent=11 // pred_fallthru
        _
      // Predicated region
      $region41: #{unet_decoder_forward.3} parent=11 // pred_check
        %p381 = pneg %p214
      $region42: #{unet_decoder_forward.3} parent=11 // pred_check_branch
        %383 = sbr.rel (%p381) target = $region44
      $region43: #{unet_decoder_forward.3} parent=11 // pred_region
        _
      $region44: #{unet_decoder_forward.3} parent=11 // pred_fallthru
        _
      // Predicated region
      $region45: #{unet_decoder_forward.3} parent=11 // pred_check
        %p384 = pneg %p235
      $region46: #{unet_decoder_forward.3} parent=11 // pred_check_branch
        %386 = sbr.rel (%p384) target = $region48
      $region47: #{unet_decoder_forward.3} parent=11 // pred_region
        _
      $region48: #{unet_decoder_forward.3} parent=11 // pred_fallthru
        _
      // Predicated region
      $region49: #{unet_decoder_forward.3} parent=11 // pred_check
        %p387 = pneg %p256
      $region50: #{unet_decoder_forward.3} parent=11 // pred_check_branch
        %389 = sbr.rel (%p387) target = $region52
      $region51: #{unet_decoder_forward.3} parent=11 // pred_region
        _
      $region52: #{unet_decoder_forward.3} parent=11 // pred_fallthru
        _
      // Predicated region
      $region53: #{unet_decoder_forward.3} parent=11 // pred_check
        %p390 = pneg %p277
      $region54: #{unet_decoder_forward.3} parent=11 // pred_check_branch
        %392 = sbr.rel (%p390) target = $region56
      $region55: #{unet_decoder_forward.3} parent=11 // pred_region
        _
      $region56: #{unet_decoder_forward.3} parent=11 // pred_fallthru
        _
      // Predicated region
      $region57: #{unet_decoder_forward.3} parent=11 // pred_check
        %p393 = pneg %p298
      $region58: #{unet_decoder_forward.3} parent=11 // pred_check_branch
        %395 = sbr.rel (%p393) target = $region60
      $region59: #{unet_decoder_forward.3} parent=11 // pred_region
        _
      $region60: #{unet_decoder_forward.3} parent=11 // pred_fallthru
        _
      // Predicated region
      $region61: #{unet_decoder_forward.3} parent=11 // pred_check
        %p396 = pneg %p319
      $region62: #{unet_decoder_forward.3} parent=11 // pred_check_branch
        %398 = sbr.rel (%p396) target = $region64
      $region63: #{unet_decoder_forward.3} parent=11 // pred_region
        _
      $region64: #{unet_decoder_forward.3} parent=11 // pred_fallthru
        _
    $region12: #{unet_decoder_forward.3} parent=5 // pred_fallthru
      _
    %p399 = scmp.lt.s32.totalorder %s20, 2
    // Predicated region
    $region65: #{unet_decoder_forward.3} parent=5 // pred_check
      %p400 = pneg %p399
    $region66: #{unet_decoder_forward.3} parent=5 // pred_check_branch
      %402 = sbr.rel (%p400) target = $region68
    $region67: #{unet_decoder_forward.3} parent=5 // pred_region
      // Predicated region
      $region69: #{unet_decoder_forward.3} parent=67 // pred_check
        %p403 = pneg %p40
      $region70: #{unet_decoder_forward.3} parent=67 // pred_check_branch
        %405 = sbr.rel (%p403) target = $region72
      $region71: #{unet_decoder_forward.3} parent=67 // pred_region
        %p406 = scmp.lt.s32.totalorder %s20, 1
        %s407 = scalar_select %p406, %s20, 1
        %s408 = smul.addr %s407, 8
        %s409 = smul.addr %s408, 8
        %s410 = scalar_lea.vmem %s0, %s409
      $region72: #{unet_decoder_forward.3} parent=67 // pred_fallthru
        _
    $region68: #{unet_decoder_forward.3} parent=5 // pred_fallthru
      _
    %p411 = scmp.le.s32.totalorder 1, %s20
    %p412 = scmp.lt.s32.totalorder %s20, 3
    %p413 = pnand %p411, %p412
    %p414 = pneg %p413
    // Predicated region
    $region73: #{unet_decoder_forward.3} parent=5 // pred_check
      _
    $region74: #{unet_decoder_forward.3} parent=5 // pred_check_branch
      %416 = sbr.rel (%p413) target = $region76
    $region75: #{unet_decoder_forward.3} parent=5 // pred_region
      %s417 = ssub.s32 %s20, 1
      %p418 = scmp.lt.s32.totalorder %s25, 1
      %s419 = scalar_select %p418, %s25, 1
      %s420 = smul.addr %s419, 8
      %s421 = smul.addr %s420, 8
      %s422 = scalar_lea.vmem %s0, %s421
      %p423 = pneg %p46
      %p424 = pneg %p43
      %p425 = pneg %p67
      %p426 = pneg %p64
      %p427 = pneg %p88
      %p428 = pneg %p85
      %p429 = pneg %p109
      %p430 = pneg %p106
      %p431 = pneg %p130
      %p432 = pneg %p127
      %p433 = pneg %p151
      %p434 = pneg %p148
      %p435 = pneg %p172
      %p436 = pneg %p169
      %p437 = pneg %p193
      %p438 = pneg %p190
      %p439 = pneg %p214
      %p440 = pneg %p211
      %p441 = pneg %p235
      %p442 = pneg %p232
      %p443 = pneg %p256
      %p444 = pneg %p253
      %p445 = pneg %p277
      %p446 = pneg %p274
      %p447 = pneg %p298
      %p448 = pneg %p295
      %p449 = pneg %p319
      %p450 = pneg %p316
      %p451 = pneg %p345
      %p452 = pneg %p342
      %p453 = scmp.lt.s32.totalorder %s25, 1
      %s454 = scalar_select %p453, %s25, 1
      %s455 = smul.addr %s454, 64
      %s456 = smul.addr %s455, 8
      %s457 = scalar_lea.vmem %s14, %s456
      %p458 = scmp.lt.s32.totalorder %s25, 1
      %s459 = scalar_select %p458, %s25, 1
      %s460 = smul.addr %s459, 8
      %s461 = smul.addr %s460, 8
      %s462 = scalar_lea.vmem %s0, %s461
      %p463 = scmp.lt.s32.totalorder %s25, 1
      %s464 = scalar_select %p463, %s25, 1
      %s465 = smul.addr %s464, 64
      %s466 = smul.addr %s465, 8
      %s467 = scalar_lea.vmem %s14, %s466
      %v468 = vlaneseq
      %v469 = vshrl.u32 %v468, 7
      %v470 = vadd.s32 %v469, 8
      %v471 = vadd.s32 %v469, 16
      %v472 = vadd.s32 %v469, 24
      %v473 = vlaneseq
      %v474 = vand.u32 %v473, 127
      %v475 = vmul.u32 %v474, 2
      %vm476 = vcmp.eq.s32.totalorder %v469, %v475
      %vm477 = vcmp.eq.s32.totalorder %v470, %v475
      %vm478 = vcmp.eq.s32.totalorder %v471, %v475
      %vm479 = vcmp.eq.s32.totalorder %v472, %v475
      %v480 = vsel %vm476, 1.0, 0.0
      %v481 = vsel %vm477, 1.0, 0.0
      %v482 = vsel %vm478, 1.0, 0.0
      %v483 = vsel %vm479, 1.0, 0.0
      %v484 = vadd.s32 %v475, 1
      %vm485 = vcmp.eq.s32.totalorder %v469, %v484
      %vm486 = vcmp.eq.s32.totalorder %v470, %v484
      %vm487 = vcmp.eq.s32.totalorder %v471, %v484
      %vm488 = vcmp.eq.s32.totalorder %v472, %v484
      %v489 = vsel %vm485, 1.0, 0.0
      %v490 = vsel %vm486, 1.0, 0.0
      %v491 = vsel %vm487, 1.0, 0.0
      %v492 = vsel %vm488, 1.0, 0.0
      %v493 = vld [vmem:[%s462] sm:$0xff]
      %v494 = vld [vmem:[%s462 + $0x8] sm:$0xff]
      %v495 = vld [vmem:[%s462 + $0x10] sm:$0xff]
      %v496 = vld [vmem:[%s462 + $0x18] sm:$0xff]
      %s497 = scalar_lea.vmem %s462, 32
      %v498 = vld [vmem:[%s497] sm:$0xff]
      %v499 = vld [vmem:[%s497 + $0x8] sm:$0xff]
      %v500 = vld [vmem:[%s497 + $0x10] sm:$0xff]
      %v501 = vld [vmem:[%s497 + $0x18] sm:$0xff]
      %vm502 = vcmask 130048
      %v504 = vsel %vm502, %v489, 0
      %v507 = vsel %vm502, %v490, 0
      %v510 = vsel %vm502, %v491, 0
      %v513 = vsel %vm502, %v492, 0
      %515 = vmatprep.subr.mxu0 %v499
      %516 = vmatpush1.msra.mxu0 %v498
      %517 = vmatprep.subr.mxu0 %v501
      %518 = vmatpush1.msra.mxu0 %v500
      %519 = vmatprep.subr.mxu0 0.0
      %520 = vmatpush1.msra.mxu0 0.0
      %521 = vmatprep.subr.mxu0 0.0
      %522 = vmatpush1.msra.mxu0 0.0
      %523 = vmatprep.subr.mxu0 0.0
      %524 = vmatpush1.msra.mxu0 0.0
      %525 = vmatprep.subr.mxu0 0.0
      %526 = vmatpush1.msra.mxu0 0.0
      %527 = vmatprep.subr.mxu0 0.0
      %528 = vmatpush1.msra.mxu0 0.0
      %529 = vmatprep.subr.mxu0 0.0
      %530 = vmatpush1.msra.mxu0 0.0
      %531 = vmatprep.subr.mxu0 0.0
      %532 = vmatpush1.msra.mxu0 0.0
      %533 = vmatprep.subr.mxu0 0.0
      %534 = vmatpush1.msra.mxu0 0.0
      %535 = vmatprep.subr.mxu0 0.0
      %536 = vmatpush1.msra.mxu0 0.0
      %537 = vmatprep.subr.mxu0 0.0
      %538 = vmatpush1.msra.mxu0 0.0
      %539 = vmatprep.subr.mxu0 0.0
      %540 = vmatpush1.msra.mxu0 0.0
      %541 = vmatprep.subr.mxu0 0.0
      %542 = vmatpush1.msra.mxu0 0.0
      %543 = vmatprep.subr.mxu0 0.0
      %544 = vmatpush1.msra.mxu0 0.0
      %545 = vmatprep.subr.mxu0 0.0
      %546 = vmatpush1.msra.mxu0 0.0
      %547 = vmatprep.subr.mxu0 0.0
      %548 = vmatpush1.msra.mxu0 0.0
      %549 = vmatprep.subr.mxu0 0.0
      %550 = vmatpush1.msra.mxu0 0.0
      %551 = vmatprep.subr.mxu0 0.0
      %552 = vmatpush1.msra.mxu0 0.0
      %553 = vmatprep.subr.mxu0 0.0
      %554 = vmatpush1.msra.mxu0 0.0
      %555 = vmatprep.subr.mxu0 0.0
      %556 = vmatpush1.msra.mxu0 0.0
      %557 = vmatprep.subr.mxu0 0.0
      %558 = vmatpush1.msra.mxu0 0.0
      %559 = vmatprep.subr.mxu0 0.0
      %560 = vmatpush1.msra.mxu0 0.0
      %561 = vmatprep.subr.mxu0 0.0
      %562 = vmatpush1.msra.mxu0 0.0
      %563 = vmatprep.subr.mxu0 0.0
      %564 = vmatpush1.msra.mxu0 0.0
      %565 = vmatprep.subr.mxu0 0.0
      %566 = vmatpush1.msra.mxu0 0.0
      %567 = vmatprep.subr.mxu0 0.0
      %568 = vmatpush1.msra.mxu0 0.0
      %569 = vmatprep.subr.mxu0 0.0
      %570 = vmatpush1.msra.mxu0 0.0
      %571 = vmatprep.subr.mxu0 0.0
      %572 = vmatpush1.msra.mxu0 0.0
      %573 = vmatprep.subr.mxu0 0.0
      %574 = vmatpush1.msra.mxu0 0.0
      %575 = vmatprep.subr.mxu0 0.0
      %576 = vmatpush1.msra.mxu0 0.0
      %577 = vmatprep.subr.mxu0 0.0
      %578 = vmatpush1.msra.mxu0 0.0
      %579 = vmatprep.mubr.f32.mxu0 0.0
      %580 = vmatmul.mubr.f32.gmra.mrb[0].mxu0 %v504
      %v581 = vpop.f32.mrb[0].mxu0
      %v582 = vadd.f32 0.0, %v581
      %v583 = vpop.f32.mrb[0].mxu0
      %v584 = vadd.f32 0.0, %v583
      %585 = vmatprep.mubr.f32.mxu0 0.0
      %586 = vmatmul.mubr.f32.gmra.mrb[0].mxu0 %v507
      %v587 = vpop.f32.mrb[0].mxu0
      %v588 = vadd.f32 0.0, %v587
      %v589 = vpop.f32.mrb[0].mxu0
      %v590 = vadd.f32 0.0, %v589
      %591 = vmatprep.mubr.f32.mxu0 0.0
      %592 = vmatmul.mubr.f32.gmra.mrb[0].mxu0 %v510
      %v593 = vpop.f32.mrb[0].mxu0
      %v594 = vadd.f32 0.0, %v593
      %v595 = vpop.f32.mrb[0].mxu0
      %v596 = vadd.f32 0.0, %v595
      %597 = vmatprep.mubr.f32.mxu0 0.0
      %598 = vmatmul.mubr.f32.gmra.mrb[0].mxu0 %v513
      %v599 = vpop.f32.mrb[0].mxu0
      %v600 = vadd.f32 0.0, %v599
      %v601 = vpop.f32.mrb[0].mxu0
      %v602 = vadd.f32 0.0, %v601
      %603 = vdwg.mxu0
      %v605 = vsel %vm502, %v480, 0
      %v608 = vsel %vm502, %v481, 0
      %v611 = vsel %vm502, %v482, 0
      %v614 = vsel %vm502, %v483, 0
      %616 = vmatprep.subr.mxu0 %v494
      %617 = vmatpush1.msra.mxu0 %v493
      %618 = vmatprep.subr.mxu0 %v496
      %619 = vmatpush1.msra.mxu0 %v495
      %620 = vmatprep.subr.mxu0 0.0
      %621 = vmatpush1.msra.mxu0 0.0
      %622 = vmatprep.subr.mxu0 0.0
      %623 = vmatpush1.msra.mxu0 0.0
      %624 = vmatprep.subr.mxu0 0.0
      %625 = vmatpush1.msra.mxu0 0.0
      %626 = vmatprep.subr.mxu0 0.0
      %627 = vmatpush1.msra.mxu0 0.0
      %628 = vmatprep.subr.mxu0 0.0
      %629 = vmatpush1.msra.mxu0 0.0
      %630 = vmatprep.subr.mxu0 0.0
      %631 = vmatpush1.msra.mxu0 0.0
      %632 = vmatprep.subr.mxu0 0.0
      %633 = vmatpush1.msra.mxu0 0.0
      %634 = vmatprep.subr.mxu0 0.0
      %635 = vmatpush1.msra.mxu0 0.0
      %636 = vmatprep.subr.mxu0 0.0
      %637 = vmatpush1.msra.mxu0 0.0
      %638 = vmatprep.subr.mxu0 0.0
      %639 = vmatpush1.msra.mxu0 0.0
      %640 = vmatprep.subr.mxu0 0.0
      %641 = vmatpush1.msra.mxu0 0.0
      %642 = vmatprep.subr.mxu0 0.0
      %643 = vmatpush1.msra.mxu0 0.0
      %644 = vmatprep.subr.mxu0 0.0
      %645 = vmatpush1.msra.mxu0 0.0
      %646 = vmatprep.subr.mxu0 0.0
      %647 = vmatpush1.msra.mxu0 0.0
      %648 = vmatprep.subr.mxu0 0.0
      %649 = vmatpush1.msra.mxu0 0.0
      %650 = vmatprep.subr.mxu0 0.0
      %651 = vmatpush1.msra.mxu0 0.0
      %652 = vmatprep.subr.mxu0 0.0
      %653 = vmatpush1.msra.mxu0 0.0
      %654 = vmatprep.subr.mxu0 0.0
      %655 = vmatpush1.msra.mxu0 0.0
      %656 = vmatprep.subr.mxu0 0.0
      %657 = vmatpush1.msra.mxu0 0.0
      %658 = vmatprep.subr.mxu0 0.0
      %659 = vmatpush1.msra.mxu0 0.0
      %660 = vmatprep.subr.mxu0 0.0
      %661 = vmatpush1.msra.mxu0 0.0
      %662 = vmatprep.subr.mxu0 0.0
      %663 = vmatpush1.msra.mxu0 0.0
      %664 = vmatprep.subr.mxu0 0.0
      %665 = vmatpush1.msra.mxu0 0.0
      %666 = vmatprep.subr.mxu0 0.0
      %667 = vmatpush1.msra.mxu0 0.0
      %668 = vmatprep.subr.mxu0 0.0
      %669 = vmatpush1.msra.mxu0 0.0
      %670 = vmatprep.subr.mxu0 0.0
      %671 = vmatpush1.msra.mxu0 0.0
      %672 = vmatprep.subr.mxu0 0.0
      %673 = vmatpush1.msra.mxu0 0.0
      %674 = vmatprep.subr.mxu0 0.0
      %675 = vmatpush1.msra.mxu0 0.0
      %676 = vmatprep.subr.mxu0 0.0
      %677 = vmatpush1.msra.mxu0 0.0
      %678 = vmatprep.subr.mxu0 0.0
      %679 = vmatpush1.msra.mxu0 0.0
      %680 = vmatprep.mubr.f32.mxu0 0.0
      %681 = vmatmul.mubr.f32.gmra.mrb[0].mxu0 %v605
      %v682 = vpop.f32.mrb[0].mxu0
      %v683 = vadd.f32 %v582, %v682
      %v684 = vpop.f32.mrb[0].mxu0
      %v685 = vadd.f32 %v584, %v684
      %686 = vmatprep.mubr.f32.mxu0 0.0
      %687 = vmatmul.mubr.f32.gmra.mrb[0].mxu0 %v608
      %v688 = vpop.f32.mrb[0].mxu0
      %v689 = vadd.f32 %v588, %v688
      %v690 = vpop.f32.mrb[0].mxu0
      %v691 = vadd.f32 %v590, %v690
      %692 = vmatprep.mubr.f32.mxu0 0.0
      %693 = vmatmul.mubr.f32.gmra.mrb[0].mxu0 %v611
      %v694 = vpop.f32.mrb[0].mxu0
      %v695 = vadd.f32 %v594, %v694
      %v696 = vpop.f32.mrb[0].mxu0
      %v697 = vadd.f32 %v596, %v696
      %698 = vmatprep.mubr.f32.mxu0 0.0
      %699 = vmatmul.mubr.f32.gmra.mrb[0].mxu0 %v614
      %v700 = vpop.f32.mrb[0].mxu0
      %v701 = vadd.f32 %v600, %v700
      %v702 = vpop.f32.mrb[0].mxu0
      %v703 = vadd.f32 %v602, %v702
      %704 = vdwg.mxu0
      %v705 = vadd.s32 %v474, 1
      %vm706 = vcmp.eq.s32.totalorder %v469, %v705
      %vm707 = vcmp.eq.s32.totalorder %v470, %v705
      %vm708 = vcmp.eq.s32.totalorder %v471, %v705
      %vm709 = vcmp.eq.s32.totalorder %v472, %v705
      %v710 = vsel %vm706, 1.0, 0.0
      %v711 = vsel %vm707, 1.0, 0.0
      %v712 = vsel %vm708, 1.0, 0.0
      %v713 = vsel %vm709, 1.0, 0.0
      %v714 = vsub.s32 %v474, 1
      %vm715 = vcmp.eq.s32.totalorder %v469, %v714
      %vm716 = vcmp.eq.s32.totalorder %v470, %v714
      %vm717 = vcmp.eq.s32.totalorder %v471, %v714
      %vm718 = vcmp.eq.s32.totalorder %v472, %v714
      %v719 = vsel %vm715, 1.0, 0.0
      %v720 = vsel %vm716, 1.0, 0.0
      %v721 = vsel %vm717, 1.0, 0.0
      %v722 = vsel %vm718, 1.0, 0.0
      %vm723 = vcmask 261120
      %v725 = vsel %vm723, %v710, 0
      %v728 = vsel %vm723, %v711, 0
      %v731 = vsel %vm723, %v712, 0
      %v734 = vsel %vm723, %v713, 0
      %736 = vmatprep.subr.mxu0 %v685
      %737 = vmatpush1.msra.mxu0 %v683
      %738 = vmatprep.subr.mxu0 %v691
      %739 = vmatpush1.msra.mxu0 %v689
      %740 = vmatprep.subr.mxu0 %v697
      %741 = vmatpush1.msra.mxu0 %v695
      %742 = vmatprep.subr.mxu0 %v703
      %743 = vmatpush1.msra.mxu0 %v701
      %744 = vmatprep.subr.mxu0 0.0
      %745 = vmatpush1.msra.mxu0 0.0
      %746 = vmatprep.subr.mxu0 0.0
      %747 = vmatpush1.msra.mxu0 0.0
      %748 = vmatprep.subr.mxu0 0.0
      %749 = vmatpush1.msra.mxu0 0.0
      %750 = vmatprep.subr.mxu0 0.0
      %751 = vmatpush1.msra.mxu0 0.0
      %752 = vmatprep.subr.mxu0 0.0
      %753 = vmatpush1.msra.mxu0 0.0
      %754 = vmatprep.subr.mxu0 0.0
      %755 = vmatpush1.msra.mxu0 0.0
      %756 = vmatprep.subr.mxu0 0.0
      %757 = vmatpush1.msra.mxu0 0.0
      %758 = vmatprep.subr.mxu0 0.0
      %759 = vmatpush1.msra.mxu0 0.0
      %760 = vmatprep.subr.mxu0 0.0
      %761 = vmatpush1.msra.mxu0 0.0
      %762 = vmatprep.subr.mxu0 0.0
      %763 = vmatpush1.msra.mxu0 0.0
      %764 = vmatprep.subr.mxu0 0.0
      %765 = vmatpush1.msra.mxu0 0.0
      %766 = vmatprep.subr.mxu0 0.0
      %767 = vmatpush1.msra.mxu0 0.0
      %768 = vmatprep.subr.mxu0 0.0
      %769 = vmatpush1.msra.mxu0 0.0
      %770 = vmatprep.subr.mxu0 0.0
      %771 = vmatpush1.msra.mxu0 0.0
      %772 = vmatprep.subr.mxu0 0.0
      %773 = vmatpush1.msra.mxu0 0.0
      %774 = vmatprep.subr.mxu0 0.0
      %775 = vmatpush1.msra.mxu0 0.0
      %776 = vmatprep.subr.mxu0 0.0
      %777 = vmatpush1.msra.mxu0 0.0
      %778 = vmatprep.subr.mxu0 0.0
      %779 = vmatpush1.msra.mxu0 0.0
      %780 = vmatprep.subr.mxu0 0.0
      %781 = vmatpush1.msra.mxu0 0.0
      %782 = vmatprep.subr.mxu0 0.0
      %783 = vmatpush1.msra.mxu0 0.0
      %784 = vmatprep.subr.mxu0 0.0
      %785 = vmatpush1.msra.mxu0 0.0
      %786 = vmatprep.subr.mxu0 0.0
      %787 = vmatpush1.msra.mxu0 0.0
      %788 = vmatprep.subr.mxu0 0.0
      %789 = vmatpush1.msra.mxu0 0.0
      %790 = vmatprep.subr.mxu0 0.0
      %791 = vmatpush1.msra.mxu0 0.0
      %792 = vmatprep.subr.mxu0 0.0
      %793 = vmatpush1.msra.mxu0 0.0
      %794 = vmatprep.subr.mxu0 0.0
      %795 = vmatpush1.msra.mxu0 0.0
      %796 = vmatprep.subr.mxu0 0.0
      %797 = vmatpush1.msra.mxu0 0.0
      %798 = vmatprep.subr.mxu0 0.0
      %799 = vmatpush1.msra.mxu0 0.0
      %800 = vmatprep.mubr.f32.mxu0 0.0
      %801 = vmatmul.mubr.f32.gmra.mrb[0].mxu0 %v725
      %v802 = vpop.f32.mrb[0].mxu0
      %v803 = vadd.f32 0.0, %v802
      %v804 = vpop.f32.mrb[0].mxu0
      %v805 = vadd.f32 0.0, %v804
      %806 = vmatprep.mubr.f32.mxu0 0.0
      %807 = vmatmul.mubr.f32.gmra.mrb[0].mxu0 %v728
      %v808 = vpop.f32.mrb[0].mxu0
      %v809 = vadd.f32 0.0, %v808
      %v810 = vpop.f32.mrb[0].mxu0
      %v811 = vadd.f32 0.0, %v810
      %812 = vmatprep.mubr.f32.mxu0 0.0
      %813 = vmatmul.mubr.f32.gmra.mrb[0].mxu0 %v731
      %v814 = vpop.f32.mrb[0].mxu0
      %v815 = vadd.f32 0.0, %v814
      %v816 = vpop.f32.mrb[0].mxu0
      %v817 = vadd.f32 0.0, %v816
      %818 = vmatprep.mubr.f32.mxu0 0.0
      %819 = vmatmul.mubr.f32.gmra.mrb[0].mxu0 %v734
      %v820 = vpop.f32.mrb[0].mxu0
      %v821 = vadd.f32 0.0, %v820
      %v822 = vpop.f32.mrb[0].mxu0
      %v823 = vadd.f32 0.0, %v822
      %824 = vdwg.mxu0
      %v826 = vsel %vm723, %v719, 0
      %v829 = vsel %vm723, %v720, 0
      %v832 = vsel %vm723, %v721, 0
      %v835 = vsel %vm723, %v722, 0
      %837 = vmatprep.subr.mxu0 %v685
      %838 = vmatpush1.msra.mxu0 %v683
      %839 = vmatprep.subr.mxu0 %v691
      %840 = vmatpush1.msra.mxu0 %v689
      %841 = vmatprep.subr.mxu0 %v697
      %842 = vmatpush1.msra.mxu0 %v695
      %843 = vmatprep.subr.mxu0 %v703
      %844 = vmatpush1.msra.mxu0 %v701
      %845 = vmatprep.subr.mxu0 0.0
      %846 = vmatpush1.msra.mxu0 0.0
      %847 = vmatprep.subr.mxu0 0.0
      %848 = vmatpush1.msra.mxu0 0.0
      %849 = vmatprep.subr.mxu0 0.0
      %850 = vmatpush1.msra.mxu0 0.0
      %851 = vmatprep.subr.mxu0 0.0
      %852 = vmatpush1.msra.mxu0 0.0
      %853 = vmatprep.subr.mxu0 0.0
      %854 = vmatpush1.msra.mxu0 0.0
      %855 = vmatprep.subr.mxu0 0.0
      %856 = vmatpush1.msra.mxu0 0.0
      %857 = vmatprep.subr.mxu0 0.0
      %858 = vmatpush1.msra.mxu0 0.0
      %859 = vmatprep.subr.mxu0 0.0
      %860 = vmatpush1.msra.mxu0 0.0
      %861 = vmatprep.subr.mxu0 0.0
      %862 = vmatpush1.msra.mxu0 0.0
      %863 = vmatprep.subr.mxu0 0.0
      %864 = vmatpush1.msra.mxu0 0.0
      %865 = vmatprep.subr.mxu0 0.0
      %866 = vmatpush1.msra.mxu0 0.0
      %867 = vmatprep.subr.mxu0 0.0
      %868 = vmatpush1.msra.mxu0 0.0
      %869 = vmatprep.subr.mxu0 0.0
      %870 = vmatpush1.msra.mxu0 0.0
      %871 = vmatprep.subr.mxu0 0.0
      %872 = vmatpush1.msra.mxu0 0.0
      %873 = vmatprep.subr.mxu0 0.0
      %874 = vmatpush1.msra.mxu0 0.0
      %875 = vmatprep.subr.mxu0 0.0
      %876 = vmatpush1.msra.mxu0 0.0
      %877 = vmatprep.subr.mxu0 0.0
      %878 = vmatpush1.msra.mxu0 0.0
      %879 = vmatprep.subr.mxu0 0.0
      %880 = vmatpush1.msra.mxu0 0.0
      %881 = vmatprep.subr.mxu0 0.0
      %882 = vmatpush1.msra.mxu0 0.0
      %883 = vmatprep.subr.mxu0 0.0
      %884 = vmatpush1.msra.mxu0 0.0
      %885 = vmatprep.subr.mxu0 0.0
      %886 = vmatpush1.msra.mxu0 0.0
      %887 = vmatprep.subr.mxu0 0.0
      %888 = vmatpush1.msra.mxu0 0.0
      %889 = vmatprep.subr.mxu0 0.0
      %890 = vmatpush1.msra.mxu0 0.0
      %891 = vmatprep.subr.mxu0 0.0
      %892 = vmatpush1.msra.mxu0 0.0
      %893 = vmatprep.subr.mxu0 0.0
      %894 = vmatpush1.msra.mxu0 0.0
      %895 = vmatprep.subr.mxu0 0.0
      %896 = vmatpush1.msra.mxu0 0.0
      %897 = vmatprep.subr.mxu0 0.0
      %898 = vmatpush1.msra.mxu0 0.0
      %899 = vmatprep.subr.mxu0 0.0
      %900 = vmatpush1.msra.mxu0 0.0
      %901 = vmatprep.mubr.f32.mxu0 0.0
      %902 = vmatmul.mubr.f32.gmra.mrb[0].mxu0 %v826
      %v903 = vpop.f32.mrb[0].mxu0
      %v904 = vadd.f32 0.0, %v903
      %v905 = vpop.f32.mrb[0].mxu0
      %v906 = vadd.f32 0.0, %v905
      %907 = vmatprep.mubr.f32.mxu0 0.0
      %908 = vmatmul.mubr.f32.gmra.mrb[0].mxu0 %v829
      %v909 = vpop.f32.mrb[0].mxu0
      %v910 = vadd.f32 0.0, %v909
      %v911 = vpop.f32.mrb[0].mxu0
      %v912 = vadd.f32 0.0, %v911
      %913 = vmatprep.mubr.f32.mxu0 0.0
      %914 = vmatmul.mubr.f32.gmra.mrb[0].mxu0 %v832
      %v915 = vpop.f32.mrb[0].mxu0
      %v916 = vadd.f32 0.0, %v915
      %v917 = vpop.f32.mrb[0].mxu0
      %v918 = vadd.f32 0.0, %v917
      %919 = vmatprep.mubr.f32.mxu0 0.0
      %920 = vmatmul.mubr.f32.gmra.mrb[0].mxu0 %v835
      %v921 = vpop.f32.mrb[0].mxu0
      %v922 = vadd.f32 0.0, %v921
      %v923 = vpop.f32.mrb[0].mxu0
      %v924 = vadd.f32 0.0, %v923
      %925 = vdwg.mxu0
      %v926 = vld [vmem:[%s1] sm:$0xff]
      %v927 = vld [vmem:[%s1 + $0x8] sm:$0xff]
      %v928 = vld [vmem:[%s1 + $0x10] sm:$0xff]
      %v929 = vld [vmem:[%s1 + $0x18] sm:$0xff]
      %v930 = vld [vmem:[%s1 + $0x20] sm:$0xff]
      %v931 = vld [vmem:[%s1 + $0x28] sm:$0xff]
      %v932 = vld [vmem:[%s1 + $0x30] sm:$0xff]
      %v933 = vld [vmem:[%s1 + $0x38] sm:$0xff]
      %v934 = vld [vmem:[%s1 + $0x40] sm:$0xff]
      %v935 = vld [vmem:[%s1 + $0x48] sm:$0xff]
      %v936 = vld [vmem:[%s1 + $0x50] sm:$0xff]
      %v937 = vld [vmem:[%s1 + $0x58] sm:$0xff]
      %v938 = vld [vmem:[%s1 + $0x60] sm:$0xff]
      %v939 = vld [vmem:[%s1 + $0x68] sm:$0xff]
      %v940 = vld [vmem:[%s1 + $0x70] sm:$0xff]
      %v941 = vld [vmem:[%s1 + $0x78] sm:$0xff]
      %v942 = vld [vmem:[%s1 + $0x80] sm:$0xff]
      %v943 = vld [vmem:[%s1 + $0x88] sm:$0xff]
      %v944 = vld [vmem:[%s1 + $0x90] sm:$0xff]
      %v945 = vld [vmem:[%s1 + $0x98] sm:$0xff]
      %v946 = vld [vmem:[%s1 + $0xa0] sm:$0xff]
      %v947 = vld [vmem:[%s1 + $0xa8] sm:$0xff]
      %v948 = vld [vmem:[%s1 + $0xb0] sm:$0xff]
      %v949 = vld [vmem:[%s1 + $0xb8] sm:$0xff]
      %v950 = vld [vmem:[%s1 + $0xc0] sm:$0xff]
      %v951 = vld [vmem:[%s1 + $0xc8] sm:$0xff]
      %v952 = vld [vmem:[%s1 + $0xd0] sm:$0xff]
      %v953 = vld [vmem:[%s1 + $0xd8] sm:$0xff]
      %v954 = vld [vmem:[%s1 + $0xe0] sm:$0xff]
      %v955 = vld [vmem:[%s1 + $0xe8] sm:$0xff]
      %v956 = vld [vmem:[%s1 + $0xf0] sm:$0xff]
      %v957 = vld [vmem:[%s1 + $0xf8] sm:$0xff]
      %v958 = vld [vmem:[%s1 + $0x100] sm:$0xff]
      %v959 = vld [vmem:[%s1 + $0x108] sm:$0xff]
      %v960 = vld [vmem:[%s1 + $0x110] sm:$0xff]
      %v961 = vld [vmem:[%s1 + $0x118] sm:$0xff]
      %v962 = vld [vmem:[%s1 + $0x120] sm:$0xff]
      %v963 = vld [vmem:[%s1 + $0x128] sm:$0xff]
      %v964 = vld [vmem:[%s1 + $0x130] sm:$0xff]
      %v965 = vld [vmem:[%s1 + $0x138] sm:$0xff]
      %v966 = vld [vmem:[%s1 + $0x140] sm:$0xff]
      %v967 = vld [vmem:[%s1 + $0x148] sm:$0xff]
      %v968 = vld [vmem:[%s1 + $0x150] sm:$0xff]
      %v969 = vld [vmem:[%s1 + $0x158] sm:$0xff]
      %v970 = vld [vmem:[%s1 + $0x160] sm:$0xff]
      %v971 = vld [vmem:[%s1 + $0x168] sm:$0xff]
      %v972 = vld [vmem:[%s1 + $0x170] sm:$0xff]
      %v973 = vld [vmem:[%s1 + $0x178] sm:$0xff]
      %v974 = vld [vmem:[%s1 + $0x180] sm:$0xff]
      %v975 = vld [vmem:[%s1 + $0x188] sm:$0xff]
      %v976 = vld [vmem:[%s1 + $0x190] sm:$0xff]
      %v977 = vld [vmem:[%s1 + $0x198] sm:$0xff]
      %v978 = vld [vmem:[%s1 + $0x1a0] sm:$0xff]
      %v979 = vld [vmem:[%s1 + $0x1a8] sm:$0xff]
      %v980 = vld [vmem:[%s1 + $0x1b0] sm:$0xff]
      %v981 = vld [vmem:[%s1 + $0x1b8] sm:$0xff]
      %v982 = vld [vmem:[%s1 + $0x1c0] sm:$0xff]
      %v983 = vld [vmem:[%s1 + $0x1c8] sm:$0xff]
      %v984 = vld [vmem:[%s1 + $0x1d0] sm:$0xff]
      %v985 = vld [vmem:[%s1 + $0x1d8] sm:$0xff]
      %v986 = vld [vmem:[%s1 + $0x1e0] sm:$0xff]
      %v987 = vld [vmem:[%s1 + $0x1e8] sm:$0xff]
      %v988 = vld [vmem:[%s1 + $0x1f0] sm:$0xff]
      %v989 = vld [vmem:[%s1 + $0x1f8] sm:$0xff]
      %v990 = vld [vmem:[%s1 + $0x200] sm:$0xff]
      %v991 = vld [vmem:[%s1 + $0x208] sm:$0xff]
      %v992 = vld [vmem:[%s1 + $0x210] sm:$0xff]
      %v993 = vld [vmem:[%s1 + $0x218] sm:$0xff]
      %v994 = vld [vmem:[%s1 + $0x220] sm:$0xff]
      %v995 = vld [vmem:[%s1 + $0x228] sm:$0xff]
      %v996 = vld [vmem:[%s1 + $0x230] sm:$0xff]
      %v997 = vld [vmem:[%s1 + $0x238] sm:$0xff]
      %v998 = vld [vmem:[%s1 + $0x240] sm:$0xff]
      %v999 = vld [vmem:[%s1 + $0x248] sm:$0xff]
      %v1000 = vld [vmem:[%s1 + $0x250] sm:$0xff]
      %v1001 = vld [vmem:[%s1 + $0x258] sm:$0xff]
      %v1002 = vld [vmem:[%s1 + $0x260] sm:$0xff]
      %v1003 = vld [vmem:[%s1 + $0x268] sm:$0xff]
      %v1004 = vld [vmem:[%s1 + $0x270] sm:$0xff]
      %v1005 = vld [vmem:[%s1 + $0x278] sm:$0xff]
      %v1006 = vld [vmem:[%s1 + $0x280] sm:$0xff]
      %v1007 = vld [vmem:[%s1 + $0x288] sm:$0xff]
      %v1008 = vld [vmem:[%s1 + $0x290] sm:$0xff]
      %v1009 = vld [vmem:[%s1 + $0x298] sm:$0xff]
      %v1010 = vld [vmem:[%s1 + $0x2a0] sm:$0xff]
      %v1011 = vld [vmem:[%s1 + $0x2a8] sm:$0xff]
      %v1012 = vld [vmem:[%s1 + $0x2b0] sm:$0xff]
      %v1013 = vld [vmem:[%s1 + $0x2b8] sm:$0xff]
      %v1014 = vld [vmem:[%s1 + $0x2c0] sm:$0xff]
      %v1015 = vld [vmem:[%s1 + $0x2c8] sm:$0xff]
      %v1016 = vld [vmem:[%s1 + $0x2d0] sm:$0xff]
      %v1017 = vld [vmem:[%s1 + $0x2d8] sm:$0xff]
      %v1018 = vld [vmem:[%s1 + $0x2e0] sm:$0xff]
      %v1019 = vld [vmem:[%s1 + $0x2e8] sm:$0xff]
      %v1020 = vld [vmem:[%s1 + $0x2f0] sm:$0xff]
      %v1021 = vld [vmem:[%s1 + $0x2f8] sm:$0xff]
      %v1022 = vld [vmem:[%s1 + $0x300] sm:$0xff]
      %v1023 = vld [vmem:[%s1 + $0x308] sm:$0xff]
      %v1024 = vld [vmem:[%s1 + $0x310] sm:$0xff]
      %v1025 = vld [vmem:[%s1 + $0x318] sm:$0xff]
      %v1026 = vld [vmem:[%s1 + $0x320] sm:$0xff]
      %v1027 = vld [vmem:[%s1 + $0x328] sm:$0xff]
      %v1028 = vld [vmem:[%s1 + $0x330] sm:$0xff]
      %v1029 = vld [vmem:[%s1 + $0x338] sm:$0xff]
      %v1030 = vld [vmem:[%s1 + $0x340] sm:$0xff]
      %v1031 = vld [vmem:[%s1 + $0x348] sm:$0xff]
      %v1032 = vld [vmem:[%s1 + $0x350] sm:$0xff]
      %v1033 = vld [vmem:[%s1 + $0x358] sm:$0xff]
      %v1034 = vld [vmem:[%s1 + $0x360] sm:$0xff]
      %v1035 = vld [vmem:[%s1 + $0x368] sm:$0xff]
      %v1036 = vld [vmem:[%s1 + $0x370] sm:$0xff]
      %v1037 = vld [vmem:[%s1 + $0x378] sm:$0xff]
      %v1038 = vld [vmem:[%s1 + $0x380] sm:$0xff]
      %v1039 = vld [vmem:[%s1 + $0x388] sm:$0xff]
      %v1040 = vld [vmem:[%s1 + $0x390] sm:$0xff]
      %v1041 = vld [vmem:[%s1 + $0x398] sm:$0xff]
      %v1042 = vld [vmem:[%s1 + $0x3a0] sm:$0xff]
      %v1043 = vld [vmem:[%s1 + $0x3a8] sm:$0xff]
      %v1044 = vld [vmem:[%s1 + $0x3b0] sm:$0xff]
      %v1045 = vld [vmem:[%s1 + $0x3b8] sm:$0xff]
      %v1046 = vld [vmem:[%s1 + $0x3c0] sm:$0xff]
      %v1047 = vld [vmem:[%s1 + $0x3c8] sm:$0xff]
      %v1048 = vld [vmem:[%s1 + $0x3d0] sm:$0xff]
      %v1049 = vld [vmem:[%s1 + $0x3d8] sm:$0xff]
      %v1050 = vld [vmem:[%s1 + $0x3e0] sm:$0xff]
      %v1051 = vld [vmem:[%s1 + $0x3e8] sm:$0xff]
      %v1052 = vld [vmem:[%s1 + $0x3f0] sm:$0xff]
      %v1053 = vld [vmem:[%s1 + $0x3f8] sm:$0xff]
      %v1054 = vld [vmem:[%s2] sm:$0xff]
      %v1055 = vld [vmem:[%s2 + $0x8] sm:$0xff]
      %v1056 = vld [vmem:[%s2 + $0x10] sm:$0xff]
      %v1057 = vld [vmem:[%s2 + $0x18] sm:$0xff]
      %v1058 = vld [vmem:[%s2 + $0x20] sm:$0xff]
      %v1059 = vld [vmem:[%s2 + $0x28] sm:$0xff]
      %v1060 = vld [vmem:[%s2 + $0x30] sm:$0xff]
      %v1061 = vld [vmem:[%s2 + $0x38] sm:$0xff]
      %v1062 = vld [vmem:[%s2 + $0x40] sm:$0xff]
      %v1063 = vld [vmem:[%s2 + $0x48] sm:$0xff]
      %v1064 = vld [vmem:[%s2 + $0x50] sm:$0xff]
      %v1065 = vld [vmem:[%s2 + $0x58] sm:$0xff]
      %v1066 = vld [vmem:[%s2 + $0x60] sm:$0xff]
      %v1067 = vld [vmem:[%s2 + $0x68] sm:$0xff]
      %v1068 = vld [vmem:[%s2 + $0x70] sm:$0xff]
      %v1069 = vld [vmem:[%s2 + $0x78] sm:$0xff]
      %v1070 = vld [vmem:[%s2 + $0x80] sm:$0xff]
      %v1071 = vld [vmem:[%s2 + $0x88] sm:$0xff]
      %v1072 = vld [vmem:[%s2 + $0x90] sm:$0xff]
      %v1073 = vld [vmem:[%s2 + $0x98] sm:$0xff]
      %v1074 = vld [vmem:[%s2 + $0xa0] sm:$0xff]
      %v1075 = vld [vmem:[%s2 + $0xa8] sm:$0xff]
      %v1076 = vld [vmem:[%s2 + $0xb0] sm:$0xff]
      %v1077 = vld [vmem:[%s2 + $0xb8] sm:$0xff]
      %v1078 = vld [vmem:[%s2 + $0xc0] sm:$0xff]
      %v1079 = vld [vmem:[%s2 + $0xc8] sm:$0xff]
      %v1080 = vld [vmem:[%s2 + $0xd0] sm:$0xff]
      %v1081 = vld [vmem:[%s2 + $0xd8] sm:$0xff]
      %v1082 = vld [vmem:[%s2 + $0xe0] sm:$0xff]
      %v1083 = vld [vmem:[%s2 + $0xe8] sm:$0xff]
      %v1084 = vld [vmem:[%s2 + $0xf0] sm:$0xff]
      %v1085 = vld [vmem:[%s2 + $0xf8] sm:$0xff]
      %v1086 = vld [vmem:[%s2 + $0x100] sm:$0xff]
      %v1087 = vld [vmem:[%s2 + $0x108] sm:$0xff]
      %v1088 = vld [vmem:[%s2 + $0x110] sm:$0xff]
      %v1089 = vld [vmem:[%s2 + $0x118] sm:$0xff]
      %v1090 = vld [vmem:[%s2 + $0x120] sm:$0xff]
      %v1091 = vld [vmem:[%s2 + $0x128] sm:$0xff]
      %v1092 = vld [vmem:[%s2 + $0x130] sm:$0xff]
      %v1093 = vld [vmem:[%s2 + $0x138] sm:$0xff]
      %v1094 = vld [vmem:[%s2 + $0x140] sm:$0xff]
      %v1095 = vld [vmem:[%s2 + $0x148] sm:$0xff]
      %v1096 = vld [vmem:[%s2 + $0x150] sm:$0xff]
      %v1097 = vld [vmem:[%s2 + $0x158] sm:$0xff]
      %v1098 = vld [vmem:[%s2 + $0x160] sm:$0xff]
      %v1099 = vld [vmem:[%s2 + $0x168] sm:$0xff]
      %v1100 = vld [vmem:[%s2 + $0x170] sm:$0xff]
      %v1101 = vld [vmem:[%s2 + $0x178] sm:$0xff]
      %v1102 = vld [vmem:[%s2 + $0x180] sm:$0xff]
      %v1103 = vld [vmem:[%s2 + $0x188] sm:$0xff]
      %v1104 = vld [vmem:[%s2 + $0x190] sm:$0xff]
      %v1105 = vld [vmem:[%s2 + $0x198] sm:$0xff]
      %v1106 = vld [vmem:[%s2 + $0x1a0] sm:$0xff]
      %v1107 = vld [vmem:[%s2 + $0x1a8] sm:$0xff]
      %v1108 = vld [vmem:[%s2 + $0x1b0] sm:$0xff]
      %v1109 = vld [vmem:[%s2 + $0x1b8] sm:$0xff]
      %v1110 = vld [vmem:[%s2 + $0x1c0] sm:$0xff]
      %v1111 = vld [vmem:[%s2 + $0x1c8] sm:$0xff]
      %v1112 = vld [vmem:[%s2 + $0x1d0] sm:$0xff]
      %v1113 = vld [vmem:[%s2 + $0x1d8] sm:$0xff]
      %v1114 = vld [vmem:[%s2 + $0x1e0] sm:$0xff]
      %v1115 = vld [vmem:[%s2 + $0x1e8] sm:$0xff]
      %v1116 = vld [vmem:[%s2 + $0x1f0] sm:$0xff]
      %v1117 = vld [vmem:[%s2 + $0x1f8] sm:$0xff]
      %v1118 = vld [vmem:[%s2 + $0x200] sm:$0xff]
      %v1119 = vld [vmem:[%s2 + $0x208] sm:$0xff]
      %v1120 = vld [vmem:[%s2 + $0x210] sm:$0xff]
      %v1121 = vld [vmem:[%s2 + $0x218] sm:$0xff]
      %v1122 = vld [vmem:[%s2 + $0x220] sm:$0xff]
      %v1123 = vld [vmem:[%s2 + $0x228] sm:$0xff]
      %v1124 = vld [vmem:[%s2 + $0x230] sm:$0xff]
      %v1125 = vld [vmem:[%s2 + $0x238] sm:$0xff]
      %v1126 = vld [vmem:[%s2 + $0x240] sm:$0xff]
      %v1127 = vld [vmem:[%s2 + $0x248] sm:$0xff]
      %v1128 = vld [vmem:[%s2 + $0x250] sm:$0xff]
      %v1129 = vld [vmem:[%s2 + $0x258] sm:$0xff]
      %v1130 = vld [vmem:[%s2 + $0x260] sm:$0xff]
      %v1131 = vld [vmem:[%s2 + $0x268] sm:$0xff]
      %v1132 = vld [vmem:[%s2 + $0x270] sm:$0xff]
      %v1133 = vld [vmem:[%s2 + $0x278] sm:$0xff]
      %v1134 = vld [vmem:[%s2 + $0x280] sm:$0xff]
      %v1135 = vld [vmem:[%s2 + $0x288] sm:$0xff]
      %v1136 = vld [vmem:[%s2 + $0x290] sm:$0xff]
      %v1137 = vld [vmem:[%s2 + $0x298] sm:$0xff]
      %v1138 = vld [vmem:[%s2 + $0x2a0] sm:$0xff]
      %v1139 = vld [vmem:[%s2 + $0x2a8] sm:$0xff]
      %v1140 = vld [vmem:[%s2 + $0x2b0] sm:$0xff]
      %v1141 = vld [vmem:[%s2 + $0x2b8] sm:$0xff]
      %v1142 = vld [vmem:[%s2 + $0x2c0] sm:$0xff]
      %v1143 = vld [vmem:[%s2 + $0x2c8] sm:$0xff]
      %v1144 = vld [vmem:[%s2 + $0x2d0] sm:$0xff]
      %v1145 = vld [vmem:[%s2 + $0x2d8] sm:$0xff]
      %v1146 = vld [vmem:[%s2 + $0x2e0] sm:$0xff]
      %v1147 = vld [vmem:[%s2 + $0x2e8] sm:$0xff]
      %v1148 = vld [vmem:[%s2 + $0x2f0] sm:$0xff]
      %v1149 = vld [vmem:[%s2 + $0x2f8] sm:$0xff]
      %v1150 = vld [vmem:[%s2 + $0x300] sm:$0xff]
      %v1151 = vld [vmem:[%s2 + $0x308] sm:$0xff]
      %v1152 = vld [vmem:[%s2 + $0x310] sm:$0xff]
      %v1153 = vld [vmem:[%s2 + $0x318] sm:$0xff]
      %v1154 = vld [vmem:[%s2 + $0x320] sm:$0xff]
      %v1155 = vld [vmem:[%s2 + $0x328] sm:$0xff]
      %v1156 = vld [vmem:[%s2 + $0x330] sm:$0xff]
      %v1157 = vld [vmem:[%s2 + $0x338] sm:$0xff]
      %v1158 = vld [vmem:[%s2 + $0x340] sm:$0xff]
      %v1159 = vld [vmem:[%s2 + $0x348] sm:$0xff]
      %v1160 = vld [vmem:[%s2 + $0x350] sm:$0xff]
      %v1161 = vld [vmem:[%s2 + $0x358] sm:$0xff]
      %v1162 = vld [vmem:[%s2 + $0x360] sm:$0xff]
      %v1163 = vld [vmem:[%s2 + $0x368] sm:$0xff]
      %v1164 = vld [vmem:[%s2 + $0x370] sm:$0xff]
      %v1165 = vld [vmem:[%s2 + $0x378] sm:$0xff]
      %v1166 = vld [vmem:[%s2 + $0x380] sm:$0xff]
      %v1167 = vld [vmem:[%s2 + $0x388] sm:$0xff]
      %v1168 = vld [vmem:[%s2 + $0x390] sm:$0xff]
      %v1169 = vld [vmem:[%s2 + $0x398] sm:$0xff]
      %v1170 = vld [vmem:[%s2 + $0x3a0] sm:$0xff]
      %v1171 = vld [vmem:[%s2 + $0x3a8] sm:$0xff]
      %v1172 = vld [vmem:[%s2 + $0x3b0] sm:$0xff]
      %v1173 = vld [vmem:[%s2 + $0x3b8] sm:$0xff]
      %v1174 = vld [vmem:[%s2 + $0x3c0] sm:$0xff]
      %v1175 = vld [vmem:[%s2 + $0x3c8] sm:$0xff]
      %v1176 = vld [vmem:[%s2 + $0x3d0] sm:$0xff]
      %v1177 = vld [vmem:[%s2 + $0x3d8] sm:$0xff]
      %v1178 = vld [vmem:[%s2 + $0x3e0] sm:$0xff]
      %v1179 = vld [vmem:[%s2 + $0x3e8] sm:$0xff]
      %v1180 = vld [vmem:[%s2 + $0x3f0] sm:$0xff]
      %v1181 = vld [vmem:[%s2 + $0x3f8] sm:$0xff]
      %1182 = vmatprep.subr.mxu0 %v1055
      %1183 = vmatpush1.msra.mxu0 %v1054
      %1184 = vmatprep.subr.mxu0 %v1059
      %1185 = vmatpush1.msra.mxu0 %v1058
      %1186 = vmatprep.subr.mxu0 %v1063
      %1187 = vmatpush1.msra.mxu0 %v1062
      %1188 = vmatprep.subr.mxu0 %v1067
      %1189 = vmatpush1.msra.mxu0 %v1066
      %1190 = vmatprep.subr.mxu0 %v1071
      %1191 = vmatpush1.msra.mxu0 %v1070
      %1192 = vmatprep.subr.mxu0 %v1075
      %1193 = vmatpush1.msra.mxu0 %v1074
      %1194 = vmatprep.subr.mxu0 %v1079
      %1195 = vmatpush1.msra.mxu0 %v1078
      %1196 = vmatprep.subr.mxu0 %v1083
      %1197 = vmatpush1.msra.mxu0 %v1082
      %1198 = vmatprep.subr.mxu0 %v1087
      %1199 = vmatpush1.msra.mxu0 %v1086
      %1200 = vmatprep.subr.mxu0 %v1091
      %1201 = vmatpush1.msra.mxu0 %v1090
      %1202 = vmatprep.subr.mxu0 %v1095
      %1203 = vmatpush1.msra.mxu0 %v1094
      %1204 = vmatprep.subr.mxu0 %v1099
      %1205 = vmatpush1.msra.mxu0 %v1098
      %1206 = vmatprep.subr.mxu0 %v1103
      %1207 = vmatpush1.msra.mxu0 %v1102
      %1208 = vmatprep.subr.mxu0 %v1107
      %1209 = vmatpush1.msra.mxu0 %v1106
      %1210 = vmatprep.subr.mxu0 %v1111
      %1211 = vmatpush1.msra.mxu0 %v1110
      %1212 = vmatprep.subr.mxu0 %v1115
      %1213 = vmatpush1.msra.mxu0 %v1114
      %1214 = vmatprep.subr.mxu0 %v1119
      %1215 = vmatpush1.msra.mxu0 %v1118
      %1216 = vmatprep.subr.mxu0 %v1123
      %1217 = vmatpush1.msra.mxu0 %v1122
      %1218 = vmatprep.subr.mxu0 %v1127
      %1219 = vmatpush1.msra.mxu0 %v1126
      %1220 = vmatprep.subr.mxu0 %v1131
      %1221 = vmatpush1.msra.mxu0 %v1130
      %1222 = vmatprep.subr.mxu0 %v1135
      %1223 = vmatpush1.msra.mxu0 %v1134
      %1224 = vmatprep.subr.mxu0 %v1139
      %1225 = vmatpush1.msra.mxu0 %v1138
      %1226 = vmatprep.subr.mxu0 %v1143
      %1227 = vmatpush1.msra.mxu0 %v1142
      %1228 = vmatprep.subr.mxu0 %v1147
      %1229 = vmatpush1.msra.mxu0 %v1146
      %1230 = vmatprep.subr.mxu0 %v1151
      %1231 = vmatpush1.msra.mxu0 %v1150
      %1232 = vmatprep.subr.mxu0 %v1155
      %1233 = vmatpush1.msra.mxu0 %v1154
      %1234 = vmatprep.subr.mxu0 %v1159
      %1235 = vmatpush1.msra.mxu0 %v1158
      %1236 = vmatprep.subr.mxu0 %v1163
      %1237 = vmatpush1.msra.mxu0 %v1162
      %1238 = vmatprep.subr.mxu0 %v1167
      %1239 = vmatpush1.msra.mxu0 %v1166
      %1240 = vmatprep.subr.mxu0 %v1171
      %1241 = vmatpush1.msra.mxu0 %v1170
      %1242 = vmatprep.subr.mxu0 %v1175
      %1243 = vmatpush1.msra.mxu0 %v1174
      %1244 = vmatprep.subr.mxu0 %v1179
      %1245 = vmatpush1.msra.mxu0 %v1178
      %1246 = vmatprep.mubr.f32.mxu0 %v685
      %1247 = vmatmul.mubr.f32.gmra.mrb[0].mxu0 %v683
      %v1248 = vpop.f32.mrb[0].mxu0
      %v1249 = vadd.f32 0.0, %v1248
      %v1250 = vpop.f32.mrb[0].mxu0
      %v1251 = vadd.f32 0.0, %v1250
      %1252 = vmatprep.mubr.f32.mxu0 %v691
      %1253 = vmatmul.mubr.f32.gmra.mrb[0].mxu0 %v689
      %v1254 = vpop.f32.mrb[0].mxu0
      %v1255 = vadd.f32 0.0, %v1254
      %v1256 = vpop.f32.mrb[0].mxu0
      %v1257 = vadd.f32 0.0, %v1256
      %1258 = vmatprep.mubr.f32.mxu0 %v697
      %1259 = vmatmul.mubr.f32.gmra.mrb[0].mxu0 %v695
      %v1260 = vpop.f32.mrb[0].mxu0
      %v1261 = vadd.f32 0.0, %v1260
      %v1262 = vpop.f32.mrb[0].mxu0
      %v1263 = vadd.f32 0.0, %v1262
      %1264 = vmatprep.mubr.f32.mxu0 %v703
      %1265 = vmatmul.mubr.f32.gmra.mrb[0].mxu0 %v701
      %v1266 = vpop.f32.mrb[0].mxu0
      %v1267 = vadd.f32 0.0, %v1266
      %v1268 = vpop.f32.mrb[0].mxu0
      %v1269 = vadd.f32 0.0, %v1268
      %1270 = vdwg.mxu0
      %1271 = vmatprep.subr.mxu0 %v1057
      %1272 = vmatpush1.msra.mxu0 %v1056
      %1273 = vmatprep.subr.mxu0 %v1061
      %1274 = vmatpush1.msra.mxu0 %v1060
      %1275 = vmatprep.subr.mxu0 %v1065
      %1276 = vmatpush1.msra.mxu0 %v1064
      %1277 = vmatprep.subr.mxu0 %v1069
      %1278 = vmatpush1.msra.mxu0 %v1068
      %1279 = vmatprep.subr.mxu0 %v1073
      %1280 = vmatpush1.msra.mxu0 %v1072
      %1281 = vmatprep.subr.mxu0 %v1077
      %1282 = vmatpush1.msra.mxu0 %v1076
      %1283 = vmatprep.subr.mxu0 %v1081
      %1284 = vmatpush1.msra.mxu0 %v1080
      %1285 = vmatprep.subr.mxu0 %v1085
      %1286 = vmatpush1.msra.mxu0 %v1084
      %1287 = vmatprep.subr.mxu0 %v1089
      %1288 = vmatpush1.msra.mxu0 %v1088
      %1289 = vmatprep.subr.mxu0 %v1093
      %1290 = vmatpush1.msra.mxu0 %v1092
      %1291 = vmatprep.subr.mxu0 %v1097
      %1292 = vmatpush1.msra.mxu0 %v1096
      %1293 = vmatprep.subr.mxu0 %v1101
      %1294 = vmatpush1.msra.mxu0 %v1100
      %1295 = vmatprep.subr.mxu0 %v1105
      %1296 = vmatpush1.msra.mxu0 %v1104
      %1297 = vmatprep.subr.mxu0 %v1109
      %1298 = vmatpush1.msra.mxu0 %v1108
      %1299 = vmatprep.subr.mxu0 %v1113
      %1300 = vmatpush1.msra.mxu0 %v1112
      %1301 = vmatprep.subr.mxu0 %v1117
      %1302 = vmatpush1.msra.mxu0 %v1116
      %1303 = vmatprep.subr.mxu0 %v1121
      %1304 = vmatpush1.msra.mxu0 %v1120
      %1305 = vmatprep.subr.mxu0 %v1125
      %1306 = vmatpush1.msra.mxu0 %v1124
      %1307 = vmatprep.subr.mxu0 %v1129
      %1308 = vmatpush1.msra.mxu0 %v1128
      %1309 = vmatprep.subr.mxu0 %v1133
      %1310 = vmatpush1.msra.mxu0 %v1132
      %1311 = vmatprep.subr.mxu0 %v1137
      %1312 = vmatpush1.msra.mxu0 %v1136
      %1313 = vmatprep.subr.mxu0 %v1141
      %1314 = vmatpush1.msra.mxu0 %v1140
      %1315 = vmatprep.subr.mxu0 %v1145
      %1316 = vmatpush1.msra.mxu0 %v1144
      %1317 = vmatprep.subr.mxu0 %v1149
      %1318 = vmatpush1.msra.mxu0 %v1148
      %1319 = vmatprep.subr.mxu0 %v1153
      %1320 = vmatpush1.msra.mxu0 %v1152
      %1321 = vmatprep.subr.mxu0 %v1157
      %1322 = vmatpush1.msra.mxu0 %v1156
      %1323 = vmatprep.subr.mxu0 %v1161
      %1324 = vmatpush1.msra.mxu0 %v1160
      %1325 = vmatprep.subr.mxu0 %v1165
      %1326 = vmatpush1.msra.mxu0 %v1164
      %1327 = vmatprep.subr.mxu0 %v1169
      %1328 = vmatpush1.msra.mxu0 %v1168
      %1329 = vmatprep.subr.mxu0 %v1173
      %1330 = vmatpush1.msra.mxu0 %v1172
      %1331 = vmatprep.subr.mxu0 %v1177
      %1332 = vmatpush1.msra.mxu0 %v1176
      %1333 = vmatprep.subr.mxu0 %v1181
      %1334 = vmatpush1.msra.mxu0 %v1180
      %1335 = vmatprep.mubr.f32.mxu0 %v685
      %1336 = vmatmul.mubr.f32.gmra.mrb[0].mxu0 %v683
      %v1337 = vpop.f32.mrb[0].mxu0
      %v1338 = vadd.f32 0.0, %v1337
      %v1339 = vpop.f32.mrb[0].mxu0
      %v1340 = vadd.f32 0.0, %v1339
      %1341 = vmatprep.mubr.f32.mxu0 %v691
      %1342 = vmatmul.mubr.f32.gmra.mrb[0].mxu0 %v689
      %v1343 = vpop.f32.mrb[0].mxu0
      %v1344 = vadd.f32 0.0, %v1343
      %v1345 = vpop.f32.mrb[0].mxu0
      %v1346 = vadd.f32 0.0, %v1345
      %1347 = vmatprep.mubr.f32.mxu0 %v697
      %1348 = vmatmul.mubr.f32.gmra.mrb[0].mxu0 %v695
      %v1349 = vpop.f32.mrb[0].mxu0
      %v1350 = vadd.f32 0.0, %v1349
      %v1351 = vpop.f32.mrb[0].mxu0
      %v1352 = vadd.f32 0.0, %v1351
      %1353 = vmatprep.mubr.f32.mxu0 %v703
      %1354 = vmatmul.mubr.f32.gmra.mrb[0].mxu0 %v701
      %v1355 = vpop.f32.mrb[0].mxu0
      %v1356 = vadd.f32 0.0, %v1355
      %v1357 = vpop.f32.mrb[0].mxu0
      %v1358 = vadd.f32 0.0, %v1357
      %1359 = vdwg.mxu0
      %1360 = vmatprep.subr.mxu0 %v927
      %1361 = vmatpush1.msra.mxu0 %v926
      %1362 = vmatprep.subr.mxu0 %v931
      %1363 = vmatpush1.msra.mxu0 %v930
      %1364 = vmatprep.subr.mxu0 %v935
      %1365 = vmatpush1.msra.mxu0 %v934
      %1366 = vmatprep.subr.mxu0 %v939
      %1367 = vmatpush1.msra.mxu0 %v938
      %1368 = vmatprep.subr.mxu0 %v943
      %1369 = vmatpush1.msra.mxu0 %v942
      %1370 = vmatprep.subr.mxu0 %v947
      %1371 = vmatpush1.msra.mxu0 %v946
      %1372 = vmatprep.subr.mxu0 %v951
      %1373 = vmatpush1.msra.mxu0 %v950
      %1374 = vmatprep.subr.mxu0 %v955
      %1375 = vmatpush1.msra.mxu0 %v954
      %1376 = vmatprep.subr.mxu0 %v959
      %1377 = vmatpush1.msra.mxu0 %v958
      %1378 = vmatprep.subr.mxu0 %v963
      %1379 = vmatpush1.msra.mxu0 %v962
      %1380 = vmatprep.subr.mxu0 %v967
      %1381 = vmatpush1.msra.mxu0 %v966
      %1382 = vmatprep.subr.mxu0 %v971
      %1383 = vmatpush1.msra.mxu0 %v970
      %1384 = vmatprep.subr.mxu0 %v975
      %1385 = vmatpush1.msra.mxu0 %v974
      %1386 = vmatprep.subr.mxu0 %v979
      %1387 = vmatpush1.msra.mxu0 %v978
      %1388 = vmatprep.subr.mxu0 %v983
      %1389 = vmatpush1.msra.mxu0 %v982
      %1390 = vmatprep.subr.mxu0 %v987
      %1391 = vmatpush1.msra.mxu0 %v986
      %1392 = vmatprep.subr.mxu0 %v991
      %1393 = vmatpush1.msra.mxu0 %v990
      %1394 = vmatprep.subr.mxu0 %v995
      %1395 = vmatpush1.msra.mxu0 %v994
      %1396 = vmatprep.subr.mxu0 %v999
      %1397 = vmatpush1.msra.mxu0 %v998
      %1398 = vmatprep.subr.mxu0 %v1003
      %1399 = vmatpush1.msra.mxu0 %v1002
      %1400 = vmatprep.subr.mxu0 %v1007
      %1401 = vmatpush1.msra.mxu0 %v1006
      %1402 = vmatprep.subr.mxu0 %v1011
      %1403 = vmatpush1.msra.mxu0 %v1010
      %1404 = vmatprep.subr.mxu0 %v1015
      %1405 = vmatpush1.msra.mxu0 %v1014
      %1406 = vmatprep.subr.mxu0 %v1019
      %1407 = vmatpush1.msra.mxu0 %v1018
      %1408 = vmatprep.subr.mxu0 %v1023
      %1409 = vmatpush1.msra.mxu0 %v1022
      %1410 = vmatprep.subr.mxu0 %v1027
      %1411 = vmatpush1.msra.mxu0 %v1026
      %1412 = vmatprep.subr.mxu0 %v1031
      %1413 = vmatpush1.msra.mxu0 %v1030
      %1414 = vmatprep.subr.mxu0 %v1035
      %1415 = vmatpush1.msra.mxu0 %v1034
      %1416 = vmatprep.subr.mxu0 %v1039
      %1417 = vmatpush1.msra.mxu0 %v1038
      %1418 = vmatprep.subr.mxu0 %v1043
      %1419 = vmatpush1.msra.mxu0 %v1042
      %1420 = vmatprep.subr.mxu0 %v1047
      %1421 = vmatpush1.msra.mxu0 %v1046
      %1422 = vmatprep.subr.mxu0 %v1051
      %1423 = vmatpush1.msra.mxu0 %v1050
      %1424 = vmatprep.mubr.f32.mxu0 %v805
      %1425 = vmatmul.mubr.f32.gmra.mrb[0].mxu0 %v803
      %v1426 = vpop.f32.mrb[0].mxu0
      %v1427 = vadd.f32 %v1249, %v1426
      %v1428 = vpop.f32.mrb[0].mxu0
      %v1429 = vadd.f32 %v1251, %v1428
      %1430 = vmatprep.mubr.f32.mxu0 %v811
      %1431 = vmatmul.mubr.f32.gmra.mrb[0].mxu0 %v809
      %v1432 = vpop.f32.mrb[0].mxu0
      %v1433 = vadd.f32 %v1255, %v1432
      %v1434 = vpop.f32.mrb[0].mxu0
      %v1435 = vadd.f32 %v1257, %v1434
      %1436 = vmatprep.mubr.f32.mxu0 %v817
      %1437 = vmatmul.mubr.f32.gmra.mrb[0].mxu0 %v815
      %v1438 = vpop.f32.mrb[0].mxu0
      %v1439 = vadd.f32 %v1261, %v1438
      %v1440 = vpop.f32.mrb[0].mxu0
      %v1441 = vadd.f32 %v1263, %v1440
      %1442 = vmatprep.mubr.f32.mxu0 %v823
      %1443 = vmatmul.mubr.f32.gmra.mrb[0].mxu0 %v821
      %v1444 = vpop.f32.mrb[0].mxu0
      %v1445 = vadd.f32 %v1267, %v1444
      %v1446 = vpop.f32.mrb[0].mxu0
      %v1447 = vadd.f32 %v1269, %v1446
      %1448 = vdwg.mxu0
      %1449 = vmatprep.subr.mxu0 %v929
      %1450 = vmatpush1.msra.mxu0 %v928
      %1451 = vmatprep.subr.mxu0 %v933
      %1452 = vmatpush1.msra.mxu0 %v932
      %1453 = vmatprep.subr.mxu0 %v937
      %1454 = vmatpush1.msra.mxu0 %v936
      %1455 = vmatprep.subr.mxu0 %v941
      %1456 = vmatpush1.msra.mxu0 %v940
      %1457 = vmatprep.subr.mxu0 %v945
      %1458 = vmatpush1.msra.mxu0 %v944
      %1459 = vmatprep.subr.mxu0 %v949
      %1460 = vmatpush1.msra.mxu0 %v948
      %1461 = vmatprep.subr.mxu0 %v953
      %1462 = vmatpush1.msra.mxu0 %v952
      %1463 = vmatprep.subr.mxu0 %v957
      %1464 = vmatpush1.msra.mxu0 %v956
      %1465 = vmatprep.subr.mxu0 %v961
      %1466 = vmatpush1.msra.mxu0 %v960
      %1467 = vmatprep.subr.mxu0 %v965
      %1468 = vmatpush1.msra.mxu0 %v964
      %1469 = vmatprep.subr.mxu0 %v969
      %1470 = vmatpush1.msra.mxu0 %v968
      %1471 = vmatprep.subr.mxu0 %v973
      %1472 = vmatpush1.msra.mxu0 %v972
      %1473 = vmatprep.subr.mxu0 %v977
      %1474 = vmatpush1.msra.mxu0 %v976
      %1475 = vmatprep.subr.mxu0 %v981
      %1476 = vmatpush1.msra.mxu0 %v980
      %1477 = vmatprep.subr.mxu0 %v985
      %1478 = vmatpush1.msra.mxu0 %v984
      %1479 = vmatprep.subr.mxu0 %v989
      %1480 = vmatpush1.msra.mxu0 %v988
      %1481 = vmatprep.subr.mxu0 %v993
      %1482 = vmatpush1.msra.mxu0 %v992
      %1483 = vmatprep.subr.mxu0 %v997
      %1484 = vmatpush1.msra.mxu0 %v996
      %1485 = vmatprep.subr.mxu0 %v1001
      %1486 = vmatpush1.msra.mxu0 %v1000
      %1487 = vmatprep.subr.mxu0 %v1005
      %1488 = vmatpush1.msra.mxu0 %v1004
      %1489 = vmatprep.subr.mxu0 %v1009
      %1490 = vmatpush1.msra.mxu0 %v1008
      %1491 = vmatprep.subr.mxu0 %v1013
      %1492 = vmatpush1.msra.mxu0 %v1012
      %1493 = vmatprep.subr.mxu0 %v1017
      %1494 = vmatpush1.msra.mxu0 %v1016
      %1495 = vmatprep.subr.mxu0 %v1021
      %1496 = vmatpush1.msra.mxu0 %v1020
      %1497 = vmatprep.subr.mxu0 %v1025
      %1498 = vmatpush1.msra.mxu0 %v1024
      %1499 = vmatprep.subr.mxu0 %v1029
      %1500 = vmatpush1.msra.mxu0 %v1028
      %1501 = vmatprep.subr.mxu0 %v1033
      %1502 = vmatpush1.msra.mxu0 %v1032
      %1503 = vmatprep.subr.mxu0 %v1037
      %1504 = vmatpush1.msra.mxu0 %v1036
      %1505 = vmatprep.subr.mxu0 %v1041
      %1506 = vmatpush1.msra.mxu0 %v1040
      %1507 = vmatprep.subr.mxu0 %v1045
      %1508 = vmatpush1.msra.mxu0 %v1044
      %1509 = vmatprep.subr.mxu0 %v1049
      %1510 = vmatpush1.msra.mxu0 %v1048
      %1511 = vmatprep.subr.mxu0 %v1053
      %1512 = vmatpush1.msra.mxu0 %v1052
      %1513 = vmatprep.mubr.f32.mxu0 %v805
      %1514 = vmatmul.mubr.f32.gmra.mrb[0].mxu0 %v803
      %v1515 = vpop.f32.mrb[0].mxu0
      %v1516 = vadd.f32 %v1338, %v1515
      %v1517 = vpop.f32.mrb[0].mxu0
      %v1518 = vadd.f32 %v1340, %v1517
      %1519 = vmatprep.mubr.f32.mxu0 %v811
      %1520 = vmatmul.mubr.f32.gmra.mrb[0].mxu0 %v809
      %v1521 = vpop.f32.mrb[0].mxu0
      %v1522 = vadd.f32 %v1344, %v1521
      %v1523 = vpop.f32.mrb[0].mxu0
      %v1524 = vadd.f32 %v1346, %v1523
      %1525 = vmatprep.mubr.f32.mxu0 %v817
      %1526 = vmatmul.mubr.f32.gmra.mrb[0].mxu0 %v815
      %v1527 = vpop.f32.mrb[0].mxu0
      %v1528 = vadd.f32 %v1350, %v1527
      %v1529 = vpop.f32.mrb[0].mxu0
      %v1530 = vadd.f32 %v1352, %v1529
      %1531 = vmatprep.mubr.f32.mxu0 %v823
      %1532 = vmatmul.mubr.f32.gmra.mrb[0].mxu0 %v821
      %v1533 = vpop.f32.mrb[0].mxu0
      %v1534 = vadd.f32 %v1356, %v1533
      %v1535 = vpop.f32.mrb[0].mxu0
      %v1536 = vadd.f32 %v1358, %v1535
      %1537 = vdwg.mxu0
      %v1538 = vld [vmem:[%s3] sm:$0xff]
      %v1539 = vld [vmem:[%s3 + $0x8] sm:$0xff]
      %v1540 = vld [vmem:[%s3 + $0x10] sm:$0xff]
      %v1541 = vld [vmem:[%s3 + $0x18] sm:$0xff]
      %v1542 = vld [vmem:[%s3 + $0x20] sm:$0xff]
      %v1543 = vld [vmem:[%s3 + $0x28] sm:$0xff]
      %v1544 = vld [vmem:[%s3 + $0x30] sm:$0xff]
      %v1545 = vld [vmem:[%s3 + $0x38] sm:$0xff]
      %v1546 = vld [vmem:[%s3 + $0x40] sm:$0xff]
      %v1547 = vld [vmem:[%s3 + $0x48] sm:$0xff]
      %v1548 = vld [vmem:[%s3 + $0x50] sm:$0xff]
      %v1549 = vld [vmem:[%s3 + $0x58] sm:$0xff]
      %v1550 = vld [vmem:[%s3 + $0x60] sm:$0xff]
      %v1551 = vld [vmem:[%s3 + $0x68] sm:$0xff]
      %v1552 = vld [vmem:[%s3 + $0x70] sm:$0xff]
      %v1553 = vld [vmem:[%s3 + $0x78] sm:$0xff]
      %v1554 = vld [vmem:[%s3 + $0x80] sm:$0xff]
      %v1555 = vld [vmem:[%s3 + $0x88] sm:$0xff]
      %v1556 = vld [vmem:[%s3 + $0x90] sm:$0xff]
      %v1557 = vld [vmem:[%s3 + $0x98] sm:$0xff]
      %v1558 = vld [vmem:[%s3 + $0xa0] sm:$0xff]
      %v1559 = vld [vmem:[%s3 + $0xa8] sm:$0xff]
      %v1560 = vld [vmem:[%s3 + $0xb0] sm:$0xff]
      %v1561 = vld [vmem:[%s3 + $0xb8] sm:$0xff]
      %v1562 = vld [vmem:[%s3 + $0xc0] sm:$0xff]
      %v1563 = vld [vmem:[%s3 + $0xc8] sm:$0xff]
      %v1564 = vld [vmem:[%s3 + $0xd0] sm:$0xff]
      %v1565 = vld [vmem:[%s3 + $0xd8] sm:$0xff]
      %v1566 = vld [vmem:[%s3 + $0xe0] sm:$0xff]
      %v1567 = vld [vmem:[%s3 + $0xe8] sm:$0xff]
      %v1568 = vld [vmem:[%s3 + $0xf0] sm:$0xff]
      %v1569 = vld [vmem:[%s3 + $0xf8] sm:$0xff]
      %v1570 = vld [vmem:[%s3 + $0x100] sm:$0xff]
      %v1571 = vld [vmem:[%s3 + $0x108] sm:$0xff]
      %v1572 = vld [vmem:[%s3 + $0x110] sm:$0xff]
      %v1573 = vld [vmem:[%s3 + $0x118] sm:$0xff]
      %v1574 = vld [vmem:[%s3 + $0x120] sm:$0xff]
      %v1575 = vld [vmem:[%s3 + $0x128] sm:$0xff]
      %v1576 = vld [vmem:[%s3 + $0x130] sm:$0xff]
      %v1577 = vld [vmem:[%s3 + $0x138] sm:$0xff]
      %v1578 = vld [vmem:[%s3 + $0x140] sm:$0xff]
      %v1579 = vld [vmem:[%s3 + $0x148] sm:$0xff]
      %v1580 = vld [vmem:[%s3 + $0x150] sm:$0xff]
      %v1581 = vld [vmem:[%s3 + $0x158] sm:$0xff]
      %v1582 = vld [vmem:[%s3 + $0x160] sm:$0xff]
      %v1583 = vld [vmem:[%s3 + $0x168] sm:$0xff]
      %v1584 = vld [vmem:[%s3 + $0x170] sm:$0xff]
      %v1585 = vld [vmem:[%s3 + $0x178] sm:$0xff]
      %v1586 = vld [vmem:[%s3 + $0x180] sm:$0xff]
      %v1587 = vld [vmem:[%s3 + $0x188] sm:$0xff]
      %v1588 = vld [vmem:[%s3 + $0x190] sm:$0xff]
      %v1589 = vld [vmem:[%s3 + $0x198] sm:$0xff]
      %v1590 = vld [vmem:[%s3 + $0x1a0] sm:$0xff]
      %v1591 = vld [vmem:[%s3 + $0x1a8] sm:$0xff]
      %v1592 = vld [vmem:[%s3 + $0x1b0] sm:$0xff]
      %v1593 = vld [vmem:[%s3 + $0x1b8] sm:$0xff]
      %v1594 = vld [vmem:[%s3 + $0x1c0] sm:$0xff]
      %v1595 = vld [vmem:[%s3 + $0x1c8] sm:$0xff]
      %v1596 = vld [vmem:[%s3 + $0x1d0] sm:$0xff]
      %v1597 = vld [vmem:[%s3 + $0x1d8] sm:$0xff]
      %v1598 = vld [vmem:[%s3 + $0x1e0] sm:$0xff]
      %v1599 = vld [vmem:[%s3 + $0x1e8] sm:$0xff]
      %v1600 = vld [vmem:[%s3 + $0x1f0] sm:$0xff]
      %v1601 = vld [vmem:[%s3 + $0x1f8] sm:$0xff]
      %v1602 = vld [vmem:[%s3 + $0x200] sm:$0xff]
      %v1603 = vld [vmem:[%s3 + $0x208] sm:$0xff]
      %v1604 = vld [vmem:[%s3 + $0x210] sm:$0xff]
      %v1605 = vld [vmem:[%s3 + $0x218] sm:$0xff]
      %v1606 = vld [vmem:[%s3 + $0x220] sm:$0xff]
      %v1607 = vld [vmem:[%s3 + $0x228] sm:$0xff]
      %v1608 = vld [vmem:[%s3 + $0x230] sm:$0xff]
      %v1609 = vld [vmem:[%s3 + $0x238] sm:$0xff]
      %v1610 = vld [vmem:[%s3 + $0x240] sm:$0xff]
      %v1611 = vld [vmem:[%s3 + $0x248] sm:$0xff]
      %v1612 = vld [vmem:[%s3 + $0x250] sm:$0xff]
      %v1613 = vld [vmem:[%s3 + $0x258] sm:$0xff]
      %v1614 = vld [vmem:[%s3 + $0x260] sm:$0xff]
      %v1615 = vld [vmem:[%s3 + $0x268] sm:$0xff]
      %v1616 = vld [vmem:[%s3 + $0x270] sm:$0xff]
      %v1617 = vld [vmem:[%s3 + $0x278] sm:$0xff]
      %v1618 = vld [vmem:[%s3 + $0x280] sm:$0xff]
      %v1619 = vld [vmem:[%s3 + $0x288] sm:$0xff]
      %v1620 = vld [vmem:[%s3 + $0x290] sm:$0xff]
      %v1621 = vld [vmem:[%s3 + $0x298] sm:$0xff]
      %v1622 = vld [vmem:[%s3 + $0x2a0] sm:$0xff]
      %v1623 = vld [vmem:[%s3 + $0x2a8] sm:$0xff]
      %v1624 = vld [vmem:[%s3 + $0x2b0] sm:$0xff]
      %v1625 = vld [vmem:[%s3 + $0x2b8] sm:$0xff]
      %v1626 = vld [vmem:[%s3 + $0x2c0] sm:$0xff]
      %v1627 = vld [vmem:[%s3 + $0x2c8] sm:$0xff]
      %v1628 = vld [vmem:[%s3 + $0x2d0] sm:$0xff]
      %v1629 = vld [vmem:[%s3 + $0x2d8] sm:$0xff]
      %v1630 = vld [vmem:[%s3 + $0x2e0] sm:$0xff]
      %v1631 = vld [vmem:[%s3 + $0x2e8] sm:$0xff]
      %v1632 = vld [vmem:[%s3 + $0x2f0] sm:$0xff]
      %v1633 = vld [vmem:[%s3 + $0x2f8] sm:$0xff]
      %v1634 = vld [vmem:[%s3 + $0x300] sm:$0xff]
      %v1635 = vld [vmem:[%s3 + $0x308] sm:$0xff]
      %v1636 = vld [vmem:[%s3 + $0x310] sm:$0xff]
      %v1637 = vld [vmem:[%s3 + $0x318] sm:$0xff]
      %v1638 = vld [vmem:[%s3 + $0x320] sm:$0xff]
      %v1639 = vld [vmem:[%s3 + $0x328] sm:$0xff]
      %v1640 = vld [vmem:[%s3 + $0x330] sm:$0xff]
      %v1641 = vld [vmem:[%s3 + $0x338] sm:$0xff]
      %v1642 = vld [vmem:[%s3 + $0x340] sm:$0xff]
      %v1643 = vld [vmem:[%s3 + $0x348] sm:$0xff]
      %v1644 = vld [vmem:[%s3 + $0x350] sm:$0xff]
      %v1645 = vld [vmem:[%s3 + $0x358] sm:$0xff]
      %v1646 = vld [vmem:[%s3 + $0x360] sm:$0xff]
      %v1647 = vld [vmem:[%s3 + $0x368] sm:$0xff]
      %v1648 = vld [vmem:[%s3 + $0x370] sm:$0xff]
      %v1649 = vld [vmem:[%s3 + $0x378] sm:$0xff]
      %v1650 = vld [vmem:[%s3 + $0x380] sm:$0xff]
      %v1651 = vld [vmem:[%s3 + $0x388] sm:$0xff]
      %v1652 = vld [vmem:[%s3 + $0x390] sm:$0xff]
      %v1653 = vld [vmem:[%s3 + $0x398] sm:$0xff]
      %v1654 = vld [vmem:[%s3 + $0x3a0] sm:$0xff]
      %v1655 = vld [vmem:[%s3 + $0x3a8] sm:$0xff]
      %v1656 = vld [vmem:[%s3 + $0x3b0] sm:$0xff]
      %v1657 = vld [vmem:[%s3 + $0x3b8] sm:$0xff]
      %v1658 = vld [vmem:[%s3 + $0x3c0] sm:$0xff]
      %v1659 = vld [vmem:[%s3 + $0x3c8] sm:$0xff]
      %v1660 = vld [vmem:[%s3 + $0x3d0] sm:$0xff]
      %v1661 = vld [vmem:[%s3 + $0x3d8] sm:$0xff]
      %v1662 = vld [vmem:[%s3 + $0x3e0] sm:$0xff]
      %v1663 = vld [vmem:[%s3 + $0x3e8] sm:$0xff]
      %v1664 = vld [vmem:[%s3 + $0x3f0] sm:$0xff]
      %v1665 = vld [vmem:[%s3 + $0x3f8] sm:$0xff]
      %1666 = vmatprep.subr.mxu0 %v1539
      %1667 = vmatpush1.msra.mxu0 %v1538
      %1668 = vmatprep.subr.mxu0 %v1543
      %1669 = vmatpush1.msra.mxu0 %v1542
      %1670 = vmatprep.subr.mxu0 %v1547
      %1671 = vmatpush1.msra.mxu0 %v1546
      %1672 = vmatprep.subr.mxu0 %v1551
      %1673 = vmatpush1.msra.mxu0 %v1550
      %1674 = vmatprep.subr.mxu0 %v1555
      %1675 = vmatpush1.msra.mxu0 %v1554
      %1676 = vmatprep.subr.mxu0 %v1559
      %1677 = vmatpush1.msra.mxu0 %v1558
      %1678 = vmatprep.subr.mxu0 %v1563
      %1679 = vmatpush1.msra.mxu0 %v1562
      %1680 = vmatprep.subr.mxu0 %v1567
      %1681 = vmatpush1.msra.mxu0 %v1566
      %1682 = vmatprep.subr.mxu0 %v1571
      %1683 = vmatpush1.msra.mxu0 %v1570
      %1684 = vmatprep.subr.mxu0 %v1575
      %1685 = vmatpush1.msra.mxu0 %v1574
      %1686 = vmatprep.subr.mxu0 %v1579
      %1687 = vmatpush1.msra.mxu0 %v1578
      %1688 = vmatprep.subr.mxu0 %v1583
      %1689 = vmatpush1.msra.mxu0 %v1582
      %1690 = vmatprep.subr.mxu0 %v1587
      %1691 = vmatpush1.msra.mxu0 %v1586
      %1692 = vmatprep.subr.mxu0 %v1591
      %1693 = vmatpush1.msra.mxu0 %v1590
      %1694 = vmatprep.subr.mxu0 %v1595
      %1695 = vmatpush1.msra.mxu0 %v1594
      %1696 = vmatprep.subr.mxu0 %v1599
      %1697 = vmatpush1.msra.mxu0 %v1598
      %1698 = vmatprep.subr.mxu0 %v1603
      %1699 = vmatpush1.msra.mxu0 %v1602
      %1700 = vmatprep.subr.mxu0 %v1607
      %1701 = vmatpush1.msra.mxu0 %v1606
      %1702 = vmatprep.subr.mxu0 %v1611
      %1703 = vmatpush1.msra.mxu0 %v1610
      %1704 = vmatprep.subr.mxu0 %v1615
      %1705 = vmatpush1.msra.mxu0 %v1614
      %1706 = vmatprep.subr.mxu0 %v1619
      %1707 = vmatpush1.msra.mxu0 %v1618
      %1708 = vmatprep.subr.mxu0 %v1623
      %1709 = vmatpush1.msra.mxu0 %v1622
      %1710 = vmatprep.subr.mxu0 %v1627
      %1711 = vmatpush1.msra.mxu0 %v1626
      %1712 = vmatprep.subr.mxu0 %v1631
      %1713 = vmatpush1.msra.mxu0 %v1630
      %1714 = vmatprep.subr.mxu0 %v1635
      %1715 = vmatpush1.msra.mxu0 %v1634
      %1716 = vmatprep.subr.mxu0 %v1639
      %1717 = vmatpush1.msra.mxu0 %v1638
      %1718 = vmatprep.subr.mxu0 %v1643
      %1719 = vmatpush1.msra.mxu0 %v1642
      %1720 = vmatprep.subr.mxu0 %v1647
      %1721 = vmatpush1.msra.mxu0 %v1646
      %1722 = vmatprep.subr.mxu0 %v1651
      %1723 = vmatpush1.msra.mxu0 %v1650
      %1724 = vmatprep.subr.mxu0 %v1655
      %1725 = vmatpush1.msra.mxu0 %v1654
      %1726 = vmatprep.subr.mxu0 %v1659
      %1727 = vmatpush1.msra.mxu0 %v1658
      %1728 = vmatprep.subr.mxu0 %v1663
      %1729 = vmatpush1.msra.mxu0 %v1662
      %1730 = vmatprep.mubr.f32.mxu0 %v906
      %1731 = vmatmul.mubr.f32.gmra.mrb[0].mxu0 %v904
      %v1732 = vpop.f32.mrb[0].mxu0
      %v1733 = vadd.f32 0.0, %v1732
      %v1734 = vpop.f32.mrb[0].mxu0
      %v1735 = vadd.f32 0.0, %v1734
      %1736 = vmatprep.mubr.f32.mxu0 %v912
      %1737 = vmatmul.mubr.f32.gmra.mrb[0].mxu0 %v910
      %v1738 = vpop.f32.mrb[0].mxu0
      %v1739 = vadd.f32 0.0, %v1738
      %v1740 = vpop.f32.mrb[0].mxu0
      %v1741 = vadd.f32 0.0, %v1740
      %1742 = vmatprep.mubr.f32.mxu0 %v918
      %1743 = vmatmul.mubr.f32.gmra.mrb[0].mxu0 %v916
      %v1744 = vpop.f32.mrb[0].mxu0
      %v1745 = vadd.f32 0.0, %v1744
      %v1746 = vpop.f32.mrb[0].mxu0
      %v1747 = vadd.f32 0.0, %v1746
      %1748 = vmatprep.mubr.f32.mxu0 %v924
      %1749 = vmatmul.mubr.f32.gmra.mrb[0].mxu0 %v922
      %v1750 = vpop.f32.mrb[0].mxu0
      %v1751 = vadd.f32 0.0, %v1750
      %v1752 = vpop.f32.mrb[0].mxu0
      %v1753 = vadd.f32 0.0, %v1752
      %1754 = vdwg.mxu0
      %1755 = vmatprep.subr.mxu0 %v1541
      %1756 = vmatpush1.msra.mxu0 %v1540
      %1757 = vmatprep.subr.mxu0 %v1545
      %1758 = vmatpush1.msra.mxu0 %v1544
      %1759 = vmatprep.subr.mxu0 %v1549
      %1760 = vmatpush1.msra.mxu0 %v1548
      %1761 = vmatprep.subr.mxu0 %v1553
      %1762 = vmatpush1.msra.mxu0 %v1552
      %1763 = vmatprep.subr.mxu0 %v1557
      %1764 = vmatpush1.msra.mxu0 %v1556
      %1765 = vmatprep.subr.mxu0 %v1561
      %1766 = vmatpush1.msra.mxu0 %v1560
      %1767 = vmatprep.subr.mxu0 %v1565
      %1768 = vmatpush1.msra.mxu0 %v1564
      %1769 = vmatprep.subr.mxu0 %v1569
      %1770 = vmatpush1.msra.mxu0 %v1568
      %1771 = vmatprep.subr.mxu0 %v1573
      %1772 = vmatpush1.msra.mxu0 %v1572
      %1773 = vmatprep.subr.mxu0 %v1577
      %1774 = vmatpush1.msra.mxu0 %v1576
      %1775 = vmatprep.subr.mxu0 %v1581
      %1776 = vmatpush1.msra.mxu0 %v1580
      %1777 = vmatprep.subr.mxu0 %v1585
      %1778 = vmatpush1.msra.mxu0 %v1584
      %1779 = vmatprep.subr.mxu0 %v1589
      %1780 = vmatpush1.msra.mxu0 %v1588
      %1781 = vmatprep.subr.mxu0 %v1593
      %1782 = vmatpush1.msra.mxu0 %v1592
      %1783 = vmatprep.subr.mxu0 %v1597
      %1784 = vmatpush1.msra.mxu0 %v1596
      %1785 = vmatprep.subr.mxu0 %v1601
      %1786 = vmatpush1.msra.mxu0 %v1600
      %1787 = vmatprep.subr.mxu0 %v1605
      %1788 = vmatpush1.msra.mxu0 %v1604
      %1789 = vmatprep.subr.mxu0 %v1609
      %1790 = vmatpush1.msra.mxu0 %v1608
      %1791 = vmatprep.subr.mxu0 %v1613
      %1792 = vmatpush1.msra.mxu0 %v1612
      %1793 = vmatprep.subr.mxu0 %v1617
      %1794 = vmatpush1.msra.mxu0 %v1616
      %1795 = vmatprep.subr.mxu0 %v1621
      %1796 = vmatpush1.msra.mxu0 %v1620
      %1797 = vmatprep.subr.mxu0 %v1625
      %1798 = vmatpush1.msra.mxu0 %v1624
      %1799 = vmatprep.subr.mxu0 %v1629
      %1800 = vmatpush1.msra.mxu0 %v1628
      %1801 = vmatprep.subr.mxu0 %v1633
      %1802 = vmatpush1.msra.mxu0 %v1632
      %1803 = vmatprep.subr.mxu0 %v1637
      %1804 = vmatpush1.msra.mxu0 %v1636
      %1805 = vmatprep.subr.mxu0 %v1641
      %1806 = vmatpush1.msra.mxu0 %v1640
      %1807 = vmatprep.subr.mxu0 %v1645
      %1808 = vmatpush1.msra.mxu0 %v1644
      %1809 = vmatprep.subr.mxu0 %v1649
      %1810 = vmatpush1.msra.mxu0 %v1648
      %1811 = vmatprep.subr.mxu0 %v1653
      %1812 = vmatpush1.msra.mxu0 %v1652
      %1813 = vmatprep.subr.mxu0 %v1657
      %1814 = vmatpush1.msra.mxu0 %v1656
      %1815 = vmatprep.subr.mxu0 %v1661
      %1816 = vmatpush1.msra.mxu0 %v1660
      %1817 = vmatprep.subr.mxu0 %v1665
      %1818 = vmatpush1.msra.mxu0 %v1664
      %1819 = vmatprep.mubr.f32.mxu0 %v906
      %1820 = vmatmul.mubr.f32.gmra.mrb[0].mxu0 %v904
      %v1821 = vpop.f32.mrb[0].mxu0
      %v1822 = vadd.f32 0.0, %v1821
      %v1823 = vpop.f32.mrb[0].mxu0
      %v1824 = vadd.f32 0.0, %v1823
      %1825 = vmatprep.mubr.f32.mxu0 %v912
      %1826 = vmatmul.mubr.f32.gmra.mrb[0].mxu0 %v910
      %v1827 = vpop.f32.mrb[0].mxu0
      %v1828 = vadd.f32 0.0, %v1827
      %v1829 = vpop.f32.mrb[0].mxu0
      %v1830 = vadd.f32 0.0, %v1829
      %1831 = vmatprep.mubr.f32.mxu0 %v918
      %1832 = vmatmul.mubr.f32.gmra.mrb[0].mxu0 %v916
      %v1833 = vpop.f32.mrb[0].mxu0
      %v1834 = vadd.f32 0.0, %v1833
      %v1835 = vpop.f32.mrb[0].mxu0
      %v1836 = vadd.f32 0.0, %v1835
      %1837 = vmatprep.mubr.f32.mxu0 %v924
      %1838 = vmatmul.mubr.f32.gmra.mrb[0].mxu0 %v922
      %v1839 = vpop.f32.mrb[0].mxu0
      %v1840 = vadd.f32 0.0, %v1839
      %v1841 = vpop.f32.mrb[0].mxu0
      %v1842 = vadd.f32 0.0, %v1841
      %1843 = vdwg.mxu0
      %v1844 = vadd.f32 %v1427, %v1733
      %v1845 = vadd.f32 %v1429, %v1735
      %v1846 = vadd.f32 %v1516, %v1822
      %v1847 = vadd.f32 %v1518, %v1824
      %v1848 = vadd.f32 %v1433, %v1739
      %v1849 = vadd.f32 %v1435, %v1741
      %v1850 = vadd.f32 %v1522, %v1828
      %v1851 = vadd.f32 %v1524, %v1830
      %v1852 = vadd.f32 %v1439, %v1745
      %v1853 = vadd.f32 %v1441, %v1747
      %v1854 = vadd.f32 %v1528, %v1834
      %v1855 = vadd.f32 %v1530, %v1836
      %v1856 = vadd.f32 %v1445, %v1751
      %v1857 = vadd.f32 %v1447, %v1753
      %v1858 = vadd.f32 %v1534, %v1840
      %v1859 = vadd.f32 %v1536, %v1842
      %v1860 = vld [vmem:[%s4] sm:$0xf]
      %v1862 = vlaneseq
      %v1863 = vshrl.u32 %v1862, 7
      %v1864 = vsub.s32 0, %v1863
      %v1865 = vrot.slane %v1860, %v1864
      %v1866 = vlaneseq
      %v1867 = vshrl.u32 %v1866, 7
      %v1868 = vsub.s32 1, %v1867
      %v1869 = vrot.slane %v1860, %v1868
      %v1870 = vlaneseq
      %v1871 = vshrl.u32 %v1870, 7
      %v1872 = vsub.s32 2, %v1871
      %v1873 = vrot.slane %v1860, %v1872
      %v1874 = vlaneseq
      %v1875 = vshrl.u32 %v1874, 7
      %v1876 = vsub.s32 3, %v1875
      %v1877 = vrot.slane %v1860, %v1876
      %v1882 = vadd.f32 %v1844, %v1865
      %v1883 = vadd.f32 %v1845, %v1869
      %v1884 = vadd.f32 %v1846, %v1873
      %v1885 = vadd.f32 %v1847, %v1877
      %v1886 = vadd.f32 %v1848, %v1865
      %v1887 = vadd.f32 %v1849, %v1869
      %v1888 = vadd.f32 %v1850, %v1873
      %v1889 = vadd.f32 %v1851, %v1877
      %v1890 = vadd.f32 %v1852, %v1865
      %v1891 = vadd.f32 %v1853, %v1869
      %v1892 = vadd.f32 %v1854, %v1873
      %v1893 = vadd.f32 %v1855, %v1877
      %v1894 = vadd.f32 %v1856, %v1865
      %v1895 = vadd.f32 %v1857, %v1869
      %v1896 = vadd.f32 %v1858, %v1873
      %v1897 = vadd.f32 %v1859, %v1877
      %v1898 = vmax.f32 %v1882, 0.0
      %v1899 = vmax.f32 %v1883, 0.0
      %v1900 = vmax.f32 %v1884, 0.0
      %v1901 = vmax.f32 %v1885, 0.0
      %v1902 = vmax.f32 %v1886, 0.0
      %v1903 = vmax.f32 %v1887, 0.0
      %v1904 = vmax.f32 %v1888, 0.0
      %v1905 = vmax.f32 %v1889, 0.0
      %v1906 = vmax.f32 %v1890, 0.0
      %v1907 = vmax.f32 %v1891, 0.0
      %v1908 = vmax.f32 %v1892, 0.0
      %v1909 = vmax.f32 %v1893, 0.0
      %v1910 = vmax.f32 %v1894, 0.0
      %v1911 = vmax.f32 %v1895, 0.0
      %v1912 = vmax.f32 %v1896, 0.0
      %v1913 = vmax.f32 %v1897, 0.0
      %1914 = vmatprep.subr.mxu0 %v1899
      %1915 = vmatpush1.msra.mxu0 %v1898
      %1916 = vmatprep.subr.mxu0 %v1903
      %1917 = vmatpush1.msra.mxu0 %v1902
      %1918 = vmatprep.subr.mxu0 %v1907
      %1919 = vmatpush1.msra.mxu0 %v1906
      %1920 = vmatprep.subr.mxu0 %v1911
      %1921 = vmatpush1.msra.mxu0 %v1910
      %1922 = vmatprep.subr.mxu0 0.0
      %1923 = vmatpush1.msra.mxu0 0.0
      %1924 = vmatprep.subr.mxu0 0.0
      %1925 = vmatpush1.msra.mxu0 0.0
      %1926 = vmatprep.subr.mxu0 0.0
      %1927 = vmatpush1.msra.mxu0 0.0
      %1928 = vmatprep.subr.mxu0 0.0
      %1929 = vmatpush1.msra.mxu0 0.0
      %1930 = vmatprep.subr.mxu0 0.0
      %1931 = vmatpush1.msra.mxu0 0.0
      %1932 = vmatprep.subr.mxu0 0.0
      %1933 = vmatpush1.msra.mxu0 0.0
      %1934 = vmatprep.subr.mxu0 0.0
      %1935 = vmatpush1.msra.mxu0 0.0
      %1936 = vmatprep.subr.mxu0 0.0
      %1937 = vmatpush1.msra.mxu0 0.0
      %1938 = vmatprep.subr.mxu0 0.0
      %1939 = vmatpush1.msra.mxu0 0.0
      %1940 = vmatprep.subr.mxu0 0.0
      %1941 = vmatpush1.msra.mxu0 0.0
      %1942 = vmatprep.subr.mxu0 0.0
      %1943 = vmatpush1.msra.mxu0 0.0
      %1944 = vmatprep.subr.mxu0 0.0
      %1945 = vmatpush1.msra.mxu0 0.0
      %1946 = vmatprep.subr.mxu0 0.0
      %1947 = vmatpush1.msra.mxu0 0.0
      %1948 = vmatprep.subr.mxu0 0.0
      %1949 = vmatpush1.msra.mxu0 0.0
      %1950 = vmatprep.subr.mxu0 0.0
      %1951 = vmatpush1.msra.mxu0 0.0
      %1952 = vmatprep.subr.mxu0 0.0
      %1953 = vmatpush1.msra.mxu0 0.0
      %1954 = vmatprep.subr.mxu0 0.0
      %1955 = vmatpush1.msra.mxu0 0.0
      %1956 = vmatprep.subr.mxu0 0.0
      %1957 = vmatpush1.msra.mxu0 0.0
      %1958 = vmatprep.subr.mxu0 0.0
      %1959 = vmatpush1.msra.mxu0 0.0
      %1960 = vmatprep.subr.mxu0 0.0
      %1961 = vmatpush1.msra.mxu0 0.0
      %1962 = vmatprep.subr.mxu0 0.0
      %1963 = vmatpush1.msra.mxu0 0.0
      %1964 = vmatprep.subr.mxu0 0.0
      %1965 = vmatpush1.msra.mxu0 0.0
      %1966 = vmatprep.subr.mxu0 0.0
      %1967 = vmatpush1.msra.mxu0 0.0
      %1968 = vmatprep.subr.mxu0 0.0
      %1969 = vmatpush1.msra.mxu0 0.0
      %1970 = vmatprep.subr.mxu0 0.0
      %1971 = vmatpush1.msra.mxu0 0.0
      %1972 = vmatprep.subr.mxu0 0.0
      %1973 = vmatpush1.msra.mxu0 0.0
      %1974 = vmatprep.subr.mxu0 0.0
      %1975 = vmatpush1.msra.mxu0 0.0
      %1976 = vmatprep.subr.mxu0 0.0
      %1977 = vmatpush1.msra.mxu0 0.0
      %1978 = vmatprep.mubr.f32.mxu0 0.0
      %1979 = vmatmul.mubr.f32.gmra.mrb[0].mxu0 %v725
      %v1980 = vpop.f32.mrb[0].mxu0
      %v1981 = vadd.f32 0.0, %v1980
      %v1982 = vpop.f32.mrb[0].mxu0
      %v1983 = vadd.f32 0.0, %v1982
      %1984 = vmatprep.mubr.f32.mxu0 0.0
      %1985 = vmatmul.mubr.f32.gmra.mrb[0].mxu0 %v728
      %v1986 = vpop.f32.mrb[0].mxu0
      %v1987 = vadd.f32 0.0, %v1986
      %v1988 = vpop.f32.mrb[0].mxu0
      %v1989 = vadd.f32 0.0, %v1988
      %1990 = vmatprep.mubr.f32.mxu0 0.0
      %1991 = vmatmul.mubr.f32.gmra.mrb[0].mxu0 %v731
      %v1992 = vpop.f32.mrb[0].mxu0
      %v1993 = vadd.f32 0.0, %v1992
      %v1994 = vpop.f32.mrb[0].mxu0
      %v1995 = vadd.f32 0.0, %v1994
      %1996 = vmatprep.mubr.f32.mxu0 0.0
      %1997 = vmatmul.mubr.f32.gmra.mrb[0].mxu0 %v734
      %v1998 = vpop.f32.mrb[0].mxu0
      %v1999 = vadd.f32 0.0, %v1998
      %v2000 = vpop.f32.mrb[0].mxu0
      %v2001 = vadd.f32 0.0, %v2000
      %2002 = vdwg.mxu0
      %2003 = vmatprep.subr.mxu0 %v1901
      %2004 = vmatpush1.msra.mxu0 %v1900
      %2005 = vmatprep.subr.mxu0 %v1905
      %2006 = vmatpush1.msra.mxu0 %v1904
      %2007 = vmatprep.subr.mxu0 %v1909
      %2008 = vmatpush1.msra.mxu0 %v1908
      %2009 = vmatprep.subr.mxu0 %v1913
      %2010 = vmatpush1.msra.mxu0 %v1912
      %2011 = vmatprep.subr.mxu0 0.0
      %2012 = vmatpush1.msra.mxu0 0.0
      %2013 = vmatprep.subr.mxu0 0.0
      %2014 = vmatpush1.msra.mxu0 0.0
      %2015 = vmatprep.subr.mxu0 0.0
      %2016 = vmatpush1.msra.mxu0 0.0
      %2017 = vmatprep.subr.mxu0 0.0
      %2018 = vmatpush1.msra.mxu0 0.0
      %2019 = vmatprep.subr.mxu0 0.0
      %2020 = vmatpush1.msra.mxu0 0.0
      %2021 = vmatprep.subr.mxu0 0.0
      %2022 = vmatpush1.msra.mxu0 0.0
      %2023 = vmatprep.subr.mxu0 0.0
      %2024 = vmatpush1.msra.mxu0 0.0
      %2025 = vmatprep.subr.mxu0 0.0
      %2026 = vmatpush1.msra.mxu0 0.0
      %2027 = vmatprep.subr.mxu0 0.0
      %2028 = vmatpush1.msra.mxu0 0.0
      %2029 = vmatprep.subr.mxu0 0.0
      %2030 = vmatpush1.msra.mxu0 0.0
      %2031 = vmatprep.subr.mxu0 0.0
      %2032 = vmatpush1.msra.mxu0 0.0
      %2033 = vmatprep.subr.mxu0 0.0
      %2034 = vmatpush1.msra.mxu0 0.0
      %2035 = vmatprep.subr.mxu0 0.0
      %2036 = vmatpush1.msra.mxu0 0.0
      %2037 = vmatprep.subr.mxu0 0.0
      %2038 = vmatpush1.msra.mxu0 0.0
      %2039 = vmatprep.subr.mxu0 0.0
      %2040 = vmatpush1.msra.mxu0 0.0
      %2041 = vmatprep.subr.mxu0 0.0
      %2042 = vmatpush1.msra.mxu0 0.0
      %2043 = vmatprep.subr.mxu0 0.0
      %2044 = vmatpush1.msra.mxu0 0.0
      %2045 = vmatprep.subr.mxu0 0.0
      %2046 = vmatpush1.msra.mxu0 0.0
      %2047 = vmatprep.subr.mxu0 0.0
      %2048 = vmatpush1.msra.mxu0 0.0
      %2049 = vmatprep.subr.mxu0 0.0
      %2050 = vmatpush1.msra.mxu0 0.0
      %2051 = vmatprep.subr.mxu0 0.0
      %2052 = vmatpush1.msra.mxu0 0.0
      %2053 = vmatprep.subr.mxu0 0.0
      %2054 = vmatpush1.msra.mxu0 0.0
      %2055 = vmatprep.subr.mxu0 0.0
      %2056 = vmatpush1.msra.mxu0 0.0
      %2057 = vmatprep.subr.mxu0 0.0
      %2058 = vmatpush1.msra.mxu0 0.0
      %2059 = vmatprep.subr.mxu0 0.0
      %2060 = vmatpush1.msra.mxu0 0.0
      %2061 = vmatprep.subr.mxu0 0.0
      %2062 = vmatpush1.msra.mxu0 0.0
      %2063 = vmatprep.subr.mxu0 0.0
      %2064 = vmatpush1.msra.mxu0 0.0
      %2065 = vmatprep.subr.mxu0 0.0
      %2066 = vmatpush1.msra.mxu0 0.0
      %2067 = vmatprep.mubr.f32.mxu0 0.0
      %2068 = vmatmul.mubr.f32.gmra.mrb[0].mxu0 %v725
      %v2069 = vpop.f32.mrb[0].mxu0
      %v2070 = vadd.f32 0.0, %v2069
      %v2071 = vpop.f32.mrb[0].mxu0
      %v2072 = vadd.f32 0.0, %v2071
      %2073 = vmatprep.mubr.f32.mxu0 0.0
      %2074 = vmatmul.mubr.f32.gmra.mrb[0].mxu0 %v728
      %v2075 = vpop.f32.mrb[0].mxu0
      %v2076 = vadd.f32 0.0, %v2075
      %v2077 = vpop.f32.mrb[0].mxu0
      %v2078 = vadd.f32 0.0, %v2077
      %2079 = vmatprep.mubr.f32.mxu0 0.0
      %2080 = vmatmul.mubr.f32.gmra.mrb[0].mxu0 %v731
      %v2081 = vpop.f32.mrb[0].mxu0
      %v2082 = vadd.f32 0.0, %v2081
      %v2083 = vpop.f32.mrb[0].mxu0
      %v2084 = vadd.f32 0.0, %v2083
      %2085 = vmatprep.mubr.f32.mxu0 0.0
      %2086 = vmatmul.mubr.f32.gmra.mrb[0].mxu0 %v734
      %v2087 = vpop.f32.mrb[0].mxu0
      %v2088 = vadd.f32 0.0, %v2087
      %v2089 = vpop.f32.mrb[0].mxu0
      %v2090 = vadd.f32 0.0, %v2089
      %2091 = vdwg.mxu0
      %2092 = vmatprep.subr.mxu0 %v1899
      %2093 = vmatpush1.msra.mxu0 %v1898
      %2094 = vmatprep.subr.mxu0 %v1903
      %2095 = vmatpush1.msra.mxu0 %v1902
      %2096 = vmatprep.subr.mxu0 %v1907
      %2097 = vmatpush1.msra.mxu0 %v1906
      %2098 = vmatprep.subr.mxu0 %v1911
      %2099 = vmatpush1.msra.mxu0 %v1910
      %2100 = vmatprep.subr.mxu0 0.0
      %2101 = vmatpush1.msra.mxu0 0.0
      %2102 = vmatprep.subr.mxu0 0.0
      %2103 = vmatpush1.msra.mxu0 0.0
      %2104 = vmatprep.subr.mxu0 0.0
      %2105 = vmatpush1.msra.mxu0 0.0
      %2106 = vmatprep.subr.mxu0 0.0
      %2107 = vmatpush1.msra.mxu0 0.0
      %2108 = vmatprep.subr.mxu0 0.0
      %2109 = vmatpush1.msra.mxu0 0.0
      %2110 = vmatprep.subr.mxu0 0.0
      %2111 = vmatpush1.msra.mxu0 0.0
      %2112 = vmatprep.subr.mxu0 0.0
      %2113 = vmatpush1.msra.mxu0 0.0
      %2114 = vmatprep.subr.mxu0 0.0
      %2115 = vmatpush1.msra.mxu0 0.0
      %2116 = vmatprep.subr.mxu0 0.0
      %2117 = vmatpush1.msra.mxu0 0.0
      %2118 = vmatprep.subr.mxu0 0.0
      %2119 = vmatpush1.msra.mxu0 0.0
      %2120 = vmatprep.subr.mxu0 0.0
      %2121 = vmatpush1.msra.mxu0 0.0
      %2122 = vmatprep.subr.mxu0 0.0
      %2123 = vmatpush1.msra.mxu0 0.0
      %2124 = vmatprep.subr.mxu0 0.0
      %2125 = vmatpush1.msra.mxu0 0.0
      %2126 = vmatprep.subr.mxu0 0.0
      %2127 = vmatpush1.msra.mxu0 0.0
      %2128 = vmatprep.subr.mxu0 0.0
      %2129 = vmatpush1.msra.mxu0 0.0
      %2130 = vmatprep.subr.mxu0 0.0
      %2131 = vmatpush1.msra.mxu0 0.0
      %2132 = vmatprep.subr.mxu0 0.0
      %2133 = vmatpush1.msra.mxu0 0.0
      %2134 = vmatprep.subr.mxu0 0.0
      %2135 = vmatpush1.msra.mxu0 0.0
      %2136 = vmatprep.subr.mxu0 0.0
      %2137 = vmatpush1.msra.mxu0 0.0
      %2138 = vmatprep.subr.mxu0 0.0
      %2139 = vmatpush1.msra.mxu0 0.0
      %2140 = vmatprep.subr.mxu0 0.0
      %2141 = vmatpush1.msra.mxu0 0.0
      %2142 = vmatprep.subr.mxu0 0.0
      %2143 = vmatpush1.msra.mxu0 0.0
      %2144 = vmatprep.subr.mxu0 0.0
      %2145 = vmatpush1.msra.mxu0 0.0
      %2146 = vmatprep.subr.mxu0 0.0
      %2147 = vmatpush1.msra.mxu0 0.0
      %2148 = vmatprep.subr.mxu0 0.0
      %2149 = vmatpush1.msra.mxu0 0.0
      %2150 = vmatprep.subr.mxu0 0.0
      %2151 = vmatpush1.msra.mxu0 0.0
      %2152 = vmatprep.subr.mxu0 0.0
      %2153 = vmatpush1.msra.mxu0 0.0
      %2154 = vmatprep.subr.mxu0 0.0
      %2155 = vmatpush1.msra.mxu0 0.0
      %2156 = vmatprep.mubr.f32.mxu0 0.0
      %2157 = vmatmul.mubr.f32.gmra.mrb[0].mxu0 %v826
      %v2158 = vpop.f32.mrb[0].mxu0
      %v2159 = vadd.f32 0.0, %v2158
      %v2160 = vpop.f32.mrb[0].mxu0
      %v2161 = vadd.f32 0.0, %v2160
      %2162 = vmatprep.mubr.f32.mxu0 0.0
      %2163 = vmatmul.mubr.f32.gmra.mrb[0].mxu0 %v829
      %v2164 = vpop.f32.mrb[0].mxu0
      %v2165 = vadd.f32 0.0, %v2164
      %v2166 = vpop.f32.mrb[0].mxu0
      %v2167 = vadd.f32 0.0, %v2166
      %2168 = vmatprep.mubr.f32.mxu0 0.0
      %2169 = vmatmul.mubr.f32.gmra.mrb[0].mxu0 %v832
      %v2170 = vpop.f32.mrb[0].mxu0
      %v2171 = vadd.f32 0.0, %v2170
      %v2172 = vpop.f32.mrb[0].mxu0
      %v2173 = vadd.f32 0.0, %v2172
      %2174 = vmatprep.mubr.f32.mxu0 0.0
      %2175 = vmatmul.mubr.f32.gmra.mrb[0].mxu0 %v835
      %v2176 = vpop.f32.mrb[0].mxu0
      %v2177 = vadd.f32 0.0, %v2176
      %v2178 = vpop.f32.mrb[0].mxu0
      %v2179 = vadd.f32 0.0, %v2178
      %2180 = vdwg.mxu0
      %2181 = vmatprep.subr.mxu0 %v1901
      %2182 = vmatpush1.msra.mxu0 %v1900
      %2183 = vmatprep.subr.mxu0 %v1905
      %2184 = vmatpush1.msra.mxu0 %v1904
      %2185 = vmatprep.subr.mxu0 %v1909
      %2186 = vmatpush1.msra.mxu0 %v1908
      %2187 = vmatprep.subr.mxu0 %v1913
      %2188 = vmatpush1.msra.mxu0 %v1912
      %2189 = vmatprep.subr.mxu0 0.0
      %2190 = vmatpush1.msra.mxu0 0.0
      %2191 = vmatprep.subr.mxu0 0.0
      %2192 = vmatpush1.msra.mxu0 0.0
      %2193 = vmatprep.subr.mxu0 0.0
      %2194 = vmatpush1.msra.mxu0 0.0
      %2195 = vmatprep.subr.mxu0 0.0
      %2196 = vmatpush1.msra.mxu0 0.0
      %2197 = vmatprep.subr.mxu0 0.0
      %2198 = vmatpush1.msra.mxu0 0.0
      %2199 = vmatprep.subr.mxu0 0.0
      %2200 = vmatpush1.msra.mxu0 0.0
      %2201 = vmatprep.subr.mxu0 0.0
      %2202 = vmatpush1.msra.mxu0 0.0
      %2203 = vmatprep.subr.mxu0 0.0
      %2204 = vmatpush1.msra.mxu0 0.0
      %2205 = vmatprep.subr.mxu0 0.0
      %2206 = vmatpush1.msra.mxu0 0.0
      %2207 = vmatprep.subr.mxu0 0.0
      %2208 = vmatpush1.msra.mxu0 0.0
      %2209 = vmatprep.subr.mxu0 0.0
      %2210 = vmatpush1.msra.mxu0 0.0
      %2211 = vmatprep.subr.mxu0 0.0
      %2212 = vmatpush1.msra.mxu0 0.0
      %2213 = vmatprep.subr.mxu0 0.0
      %2214 = vmatpush1.msra.mxu0 0.0
      %2215 = vmatprep.subr.mxu0 0.0
      %2216 = vmatpush1.msra.mxu0 0.0
      %2217 = vmatprep.subr.mxu0 0.0
      %2218 = vmatpush1.msra.mxu0 0.0
      %2219 = vmatprep.subr.mxu0 0.0
      %2220 = vmatpush1.msra.mxu0 0.0
      %2221 = vmatprep.subr.mxu0 0.0
      %2222 = vmatpush1.msra.mxu0 0.0
      %2223 = vmatprep.subr.mxu0 0.0
      %2224 = vmatpush1.msra.mxu0 0.0
      %2225 = vmatprep.subr.mxu0 0.0
      %2226 = vmatpush1.msra.mxu0 0.0
      %2227 = vmatprep.subr.mxu0 0.0
      %2228 = vmatpush1.msra.mxu0 0.0
      %2229 = vmatprep.subr.mxu0 0.0
      %2230 = vmatpush1.msra.mxu0 0.0
      %2231 = vmatprep.subr.mxu0 0.0
      %2232 = vmatpush1.msra.mxu0 0.0
      %2233 = vmatprep.subr.mxu0 0.0
      %2234 = vmatpush1.msra.mxu0 0.0
      %2235 = vmatprep.subr.mxu0 0.0
      %2236 = vmatpush1.msra.mxu0 0.0
      %2237 = vmatprep.subr.mxu0 0.0
      %2238 = vmatpush1.msra.mxu0 0.0
      %2239 = vmatprep.subr.mxu0 0.0
      %2240 = vmatpush1.msra.mxu0 0.0
      %2241 = vmatprep.subr.mxu0 0.0
      %2242 = vmatpush1.msra.mxu0 0.0
      %2243 = vmatprep.subr.mxu0 0.0
      %2244 = vmatpush1.msra.mxu0 0.0
      %2245 = vmatprep.mubr.f32.mxu0 0.0
      %2246 = vmatmul.mubr.f32.gmra.mrb[0].mxu0 %v826
      %v2247 = vpop.f32.mrb[0].mxu0
      %v2248 = vadd.f32 0.0, %v2247
      %v2249 = vpop.f32.mrb[0].mxu0
      %v2250 = vadd.f32 0.0, %v2249
      %2251 = vmatprep.mubr.f32.mxu0 0.0
      %2252 = vmatmul.mubr.f32.gmra.mrb[0].mxu0 %v829
      %v2253 = vpop.f32.mrb[0].mxu0
      %v2254 = vadd.f32 0.0, %v2253
      %v2255 = vpop.f32.mrb[0].mxu0
      %v2256 = vadd.f32 0.0, %v2255
      %2257 = vmatprep.mubr.f32.mxu0 0.0
      %2258 = vmatmul.mubr.f32.gmra.mrb[0].mxu0 %v832
      %v2259 = vpop.f32.mrb[0].mxu0
      %v2260 = vadd.f32 0.0, %v2259
      %v2261 = vpop.f32.mrb[0].mxu0
      %v2262 = vadd.f32 0.0, %v2261
      %2263 = vmatprep.mubr.f32.mxu0 0.0
      %2264 = vmatmul.mubr.f32.gmra.mrb[0].mxu0 %v835
      %v2265 = vpop.f32.mrb[0].mxu0
      %v2266 = vadd.f32 0.0, %v2265
      %v2267 = vpop.f32.mrb[0].mxu0
      %v2268 = vadd.f32 0.0, %v2267
      %2269 = vdwg.mxu0
      %v2270 = vld [vmem:[%s5] sm:$0xff]
      %v2271 = vld [vmem:[%s5 + $0x8] sm:$0xff]
      %v2272 = vld [vmem:[%s5 + $0x10] sm:$0xff]
      %v2273 = vld [vmem:[%s5 + $0x18] sm:$0xff]
      %v2274 = vld [vmem:[%s5 + $0x20] sm:$0xff]
      %v2275 = vld [vmem:[%s5 + $0x28] sm:$0xff]
      %v2276 = vld [vmem:[%s5 + $0x30] sm:$0xff]
      %v2277 = vld [vmem:[%s5 + $0x38] sm:$0xff]
      %v2278 = vld [vmem:[%s5 + $0x40] sm:$0xff]
      %v2279 = vld [vmem:[%s5 + $0x48] sm:$0xff]
      %v2280 = vld [vmem:[%s5 + $0x50] sm:$0xff]
      %v2281 = vld [vmem:[%s5 + $0x58] sm:$0xff]
      %v2282 = vld [vmem:[%s5 + $0x60] sm:$0xff]
      %v2283 = vld [vmem:[%s5 + $0x68] sm:$0xff]
      %v2284 = vld [vmem:[%s5 + $0x70] sm:$0xff]
      %v2285 = vld [vmem:[%s5 + $0x78] sm:$0xff]
      %v2286 = vld [vmem:[%s5 + $0x80] sm:$0xff]
      %v2287 = vld [vmem:[%s5 + $0x88] sm:$0xff]
      %v2288 = vld [vmem:[%s5 + $0x90] sm:$0xff]
      %v2289 = vld [vmem:[%s5 + $0x98] sm:$0xff]
      %v2290 = vld [vmem:[%s5 + $0xa0] sm:$0xff]
      %v2291 = vld [vmem:[%s5 + $0xa8] sm:$0xff]
      %v2292 = vld [vmem:[%s5 + $0xb0] sm:$0xff]
      %v2293 = vld [vmem:[%s5 + $0xb8] sm:$0xff]
      %v2294 = vld [vmem:[%s5 + $0xc0] sm:$0xff]
      %v2295 = vld [vmem:[%s5 + $0xc8] sm:$0xff]
      %v2296 = vld [vmem:[%s5 + $0xd0] sm:$0xff]
      %v2297 = vld [vmem:[%s5 + $0xd8] sm:$0xff]
      %v2298 = vld [vmem:[%s5 + $0xe0] sm:$0xff]
      %v2299 = vld [vmem:[%s5 + $0xe8] sm:$0xff]
      %v2300 = vld [vmem:[%s5 + $0xf0] sm:$0xff]
      %v2301 = vld [vmem:[%s5 + $0xf8] sm:$0xff]
      %v2302 = vld [vmem:[%s5 + $0x100] sm:$0xff]
      %v2303 = vld [vmem:[%s5 + $0x108] sm:$0xff]
      %v2304 = vld [vmem:[%s5 + $0x110] sm:$0xff]
      %v2305 = vld [vmem:[%s5 + $0x118] sm:$0xff]
      %v2306 = vld [vmem:[%s5 + $0x120] sm:$0xff]
      %v2307 = vld [vmem:[%s5 + $0x128] sm:$0xff]
      %v2308 = vld [vmem:[%s5 + $0x130] sm:$0xff]
      %v2309 = vld [vmem:[%s5 + $0x138] sm:$0xff]
      %v2310 = vld [vmem:[%s5 + $0x140] sm:$0xff]
      %v2311 = vld [vmem:[%s5 + $0x148] sm:$0xff]
      %v2312 = vld [vmem:[%s5 + $0x150] sm:$0xff]
      %v2313 = vld [vmem:[%s5 + $0x158] sm:$0xff]
      %v2314 = vld [vmem:[%s5 + $0x160] sm:$0xff]
      %v2315 = vld [vmem:[%s5 + $0x168] sm:$0xff]
      %v2316 = vld [vmem:[%s5 + $0x170] sm:$0xff]
      %v2317 = vld [vmem:[%s5 + $0x178] sm:$0xff]
      %v2318 = vld [vmem:[%s5 + $0x180] sm:$0xff]
      %v2319 = vld [vmem:[%s5 + $0x188] sm:$0xff]
      %v2320 = vld [vmem:[%s5 + $0x190] sm:$0xff]
      %v2321 = vld [vmem:[%s5 + $0x198] sm:$0xff]
      %v2322 = vld [vmem:[%s5 + $0x1a0] sm:$0xff]
      %v2323 = vld [vmem:[%s5 + $0x1a8] sm:$0xff]
      %v2324 = vld [vmem:[%s5 + $0x1b0] sm:$0xff]
      %v2325 = vld [vmem:[%s5 + $0x1b8] sm:$0xff]
      %v2326 = vld [vmem:[%s5 + $0x1c0] sm:$0xff]
      %v2327 = vld [vmem:[%s5 + $0x1c8] sm:$0xff]
      %v2328 = vld [vmem:[%s5 + $0x1d0] sm:$0xff]
      %v2329 = vld [vmem:[%s5 + $0x1d8] sm:$0xff]
      %v2330 = vld [vmem:[%s5 + $0x1e0] sm:$0xff]
      %v2331 = vld [vmem:[%s5 + $0x1e8] sm:$0xff]
      %v2332 = vld [vmem:[%s5 + $0x1f0] sm:$0xff]
      %v2333 = vld [vmem:[%s5 + $0x1f8] sm:$0xff]
      %v2334 = vld [vmem:[%s5 + $0x200] sm:$0xff]
      %v2335 = vld [vmem:[%s5 + $0x208] sm:$0xff]
      %v2336 = vld [vmem:[%s5 + $0x210] sm:$0xff]
      %v2337 = vld [vmem:[%s5 + $0x218] sm:$0xff]
      %v2338 = vld [vmem:[%s5 + $0x220] sm:$0xff]
      %v2339 = vld [vmem:[%s5 + $0x228] sm:$0xff]
      %v2340 = vld [vmem:[%s5 + $0x230] sm:$0xff]
      %v2341 = vld [vmem:[%s5 + $0x238] sm:$0xff]
      %v2342 = vld [vmem:[%s5 + $0x240] sm:$0xff]
      %v2343 = vld [vmem:[%s5 + $0x248] sm:$0xff]
      %v2344 = vld [vmem:[%s5 + $0x250] sm:$0xff]
      %v2345 = vld [vmem:[%s5 + $0x258] sm:$0xff]
      %v2346 = vld [vmem:[%s5 + $0x260] sm:$0xff]
      %v2347 = vld [vmem:[%s5 + $0x268] sm:$0xff]
      %v2348 = vld [vmem:[%s5 + $0x270] sm:$0xff]
      %v2349 = vld [vmem:[%s5 + $0x278] sm:$0xff]
      %v2350 = vld [vmem:[%s5 + $0x280] sm:$0xff]
      %v2351 = vld [vmem:[%s5 + $0x288] sm:$0xff]
      %v2352 = vld [vmem:[%s5 + $0x290] sm:$0xff]
      %v2353 = vld [vmem:[%s5 + $0x298] sm:$0xff]
      %v2354 = vld [vmem:[%s5 + $0x2a0] sm:$0xff]
      %v2355 = vld [vmem:[%s5 + $0x2a8] sm:$0xff]
      %v2356 = vld [vmem:[%s5 + $0x2b0] sm:$0xff]
      %v2357 = vld [vmem:[%s5 + $0x2b8] sm:$0xff]
      %v2358 = vld [vmem:[%s5 + $0x2c0] sm:$0xff]
      %v2359 = vld [vmem:[%s5 + $0x2c8] sm:$0xff]
      %v2360 = vld [vmem:[%s5 + $0x2d0] sm:$0xff]
      %v2361 = vld [vmem:[%s5 + $0x2d8] sm:$0xff]
      %v2362 = vld [vmem:[%s5 + $0x2e0] sm:$0xff]
      %v2363 = vld [vmem:[%s5 + $0x2e8] sm:$0xff]
      %v2364 = vld [vmem:[%s5 + $0x2f0] sm:$0xff]
      %v2365 = vld [vmem:[%s5 + $0x2f8] sm:$0xff]
      %v2366 = vld [vmem:[%s5 + $0x300] sm:$0xff]
      %v2367 = vld [vmem:[%s5 + $0x308] sm:$0xff]
      %v2368 = vld [vmem:[%s5 + $0x310] sm:$0xff]
      %v2369 = vld [vmem:[%s5 + $0x318] sm:$0xff]
      %v2370 = vld [vmem:[%s5 + $0x320] sm:$0xff]
      %v2371 = vld [vmem:[%s5 + $0x328] sm:$0xff]
      %v2372 = vld [vmem:[%s5 + $0x330] sm:$0xff]
      %v2373 = vld [vmem:[%s5 + $0x338] sm:$0xff]
      %v2374 = vld [vmem:[%s5 + $0x340] sm:$0xff]
      %v2375 = vld [vmem:[%s5 + $0x348] sm:$0xff]
      %v2376 = vld [vmem:[%s5 + $0x350] sm:$0xff]
      %v2377 = vld [vmem:[%s5 + $0x358] sm:$0xff]
      %v2378 = vld [vmem:[%s5 + $0x360] sm:$0xff]
      %v2379 = vld [vmem:[%s5 + $0x368] sm:$0xff]
      %v2380 = vld [vmem:[%s5 + $0x370] sm:$0xff]
      %v2381 = vld [vmem:[%s5 + $0x378] sm:$0xff]
      %v2382 = vld [vmem:[%s5 + $0x380] sm:$0xff]
      %v2383 = vld [vmem:[%s5 + $0x388] sm:$0xff]
      %v2384 = vld [vmem:[%s5 + $0x390] sm:$0xff]
      %v2385 = vld [vmem:[%s5 + $0x398] sm:$0xff]
      %v2386 = vld [vmem:[%s5 + $0x3a0] sm:$0xff]
      %v2387 = vld [vmem:[%s5 + $0x3a8] sm:$0xff]
      %v2388 = vld [vmem:[%s5 + $0x3b0] sm:$0xff]
      %v2389 = vld [vmem:[%s5 + $0x3b8] sm:$0xff]
      %v2390 = vld [vmem:[%s5 + $0x3c0] sm:$0xff]
      %v2391 = vld [vmem:[%s5 + $0x3c8] sm:$0xff]
      %v2392 = vld [vmem:[%s5 + $0x3d0] sm:$0xff]
      %v2393 = vld [vmem:[%s5 + $0x3d8] sm:$0xff]
      %v2394 = vld [vmem:[%s5 + $0x3e0] sm:$0xff]
      %v2395 = vld [vmem:[%s5 + $0x3e8] sm:$0xff]
      %v2396 = vld [vmem:[%s5 + $0x3f0] sm:$0xff]
      %v2397 = vld [vmem:[%s5 + $0x3f8] sm:$0xff]
      %v2398 = vld [vmem:[%s5 + $0x400] sm:$0xff]
      %v2399 = vld [vmem:[%s5 + $0x408] sm:$0xff]
      %v2400 = vld [vmem:[%s5 + $0x410] sm:$0xff]
      %v2401 = vld [vmem:[%s5 + $0x418] sm:$0xff]
      %v2402 = vld [vmem:[%s5 + $0x420] sm:$0xff]
      %v2403 = vld [vmem:[%s5 + $0x428] sm:$0xff]
      %v2404 = vld [vmem:[%s5 + $0x430] sm:$0xff]
      %v2405 = vld [vmem:[%s5 + $0x438] sm:$0xff]
      %v2406 = vld [vmem:[%s5 + $0x440] sm:$0xff]
      %v2407 = vld [vmem:[%s5 + $0x448] sm:$0xff]
      %v2408 = vld [vmem:[%s5 + $0x450] sm:$0xff]
      %v2409 = vld [vmem:[%s5 + $0x458] sm:$0xff]
      %v2410 = vld [vmem:[%s5 + $0x460] sm:$0xff]
      %v2411 = vld [vmem:[%s5 + $0x468] sm:$0xff]
      %v2412 = vld [vmem:[%s5 + $0x470] sm:$0xff]
      %v2413 = vld [vmem:[%s5 + $0x478] sm:$0xff]
      %v2414 = vld [vmem:[%s5 + $0x480] sm:$0xff]
      %v2415 = vld [vmem:[%s5 + $0x488] sm:$0xff]
      %v2416 = vld [vmem:[%s5 + $0x490] sm:$0xff]
      %v2417 = vld [vmem:[%s5 + $0x498] sm:$0xff]
      %v2418 = vld [vmem:[%s5 + $0x4a0] sm:$0xff]
      %v2419 = vld [vmem:[%s5 + $0x4a8] sm:$0xff]
      %v2420 = vld [vmem:[%s5 + $0x4b0] sm:$0xff]
      %v2421 = vld [vmem:[%s5 + $0x4b8] sm:$0xff]
      %v2422 = vld [vmem:[%s5 + $0x4c0] sm:$0xff]
      %v2423 = vld [vmem:[%s5 + $0x4c8] sm:$0xff]
      %v2424 = vld [vmem:[%s5 + $0x4d0] sm:$0xff]
      %v2425 = vld [vmem:[%s5 + $0x4d8] sm:$0xff]
      %v2426 = vld [vmem:[%s5 + $0x4e0] sm:$0xff]
      %v2427 = vld [vmem:[%s5 + $0x4e8] sm:$0xff]
      %v2428 = vld [vmem:[%s5 + $0x4f0] sm:$0xff]
      %v2429 = vld [vmem:[%s5 + $0x4f8] sm:$0xff]
      %v2430 = vld [vmem:[%s5 + $0x500] sm:$0xff]
      %v2431 = vld [vmem:[%s5 + $0x508] sm:$0xff]
      %v2432 = vld [vmem:[%s5 + $0x510] sm:$0xff]
      %v2433 = vld [vmem:[%s5 + $0x518] sm:$0xff]
      %v2434 = vld [vmem:[%s5 + $0x520] sm:$0xff]
      %v2435 = vld [vmem:[%s5 + $0x528] sm:$0xff]
      %v2436 = vld [vmem:[%s5 + $0x530] sm:$0xff]
      %v2437 = vld [vmem:[%s5 + $0x538] sm:$0xff]
      %v2438 = vld [vmem:[%s5 + $0x540] sm:$0xff]
      %v2439 = vld [vmem:[%s5 + $0x548] sm:$0xff]
      %v2440 = vld [vmem:[%s5 + $0x550] sm:$0xff]
      %v2441 = vld [vmem:[%s5 + $0x558] sm:$0xff]
      %v2442 = vld [vmem:[%s5 + $0x560] sm:$0xff]
      %v2443 = vld [vmem:[%s5 + $0x568] sm:$0xff]
      %v2444 = vld [vmem:[%s5 + $0x570] sm:$0xff]
      %v2445 = vld [vmem:[%s5 + $0x578] sm:$0xff]
      %v2446 = vld [vmem:[%s5 + $0x580] sm:$0xff]
      %v2447 = vld [vmem:[%s5 + $0x588] sm:$0xff]
      %v2448 = vld [vmem:[%s5 + $0x590] sm:$0xff]
      %v2449 = vld [vmem:[%s5 + $0x598] sm:$0xff]
      %v2450 = vld [vmem:[%s5 + $0x5a0] sm:$0xff]
      %v2451 = vld [vmem:[%s5 + $0x5a8] sm:$0xff]
      %v2452 = vld [vmem:[%s5 + $0x5b0] sm:$0xff]
      %v2453 = vld [vmem:[%s5 + $0x5b8] sm:$0xff]
      %v2454 = vld [vmem:[%s5 + $0x5c0] sm:$0xff]
      %v2455 = vld [vmem:[%s5 + $0x5c8] sm:$0xff]
      %v2456 = vld [vmem:[%s5 + $0x5d0] sm:$0xff]
      %v2457 = vld [vmem:[%s5 + $0x5d8] sm:$0xff]
      %v2458 = vld [vmem:[%s5 + $0x5e0] sm:$0xff]
      %v2459 = vld [vmem:[%s5 + $0x5e8] sm:$0xff]
      %v2460 = vld [vmem:[%s5 + $0x5f0] sm:$0xff]
      %v2461 = vld [vmem:[%s5 + $0x5f8] sm:$0xff]
      %v2462 = vld [vmem:[%s5 + $0x600] sm:$0xff]
      %v2463 = vld [vmem:[%s5 + $0x608] sm:$0xff]
      %v2464 = vld [vmem:[%s5 + $0x610] sm:$0xff]
      %v2465 = vld [vmem:[%s5 + $0x618] sm:$0xff]
      %v2466 = vld [vmem:[%s5 + $0x620] sm:$0xff]
      %v2467 = vld [vmem:[%s5 + $0x628] sm:$0xff]
      %v2468 = vld [vmem:[%s5 + $0x630] sm:$0xff]
      %v2469 = vld [vmem:[%s5 + $0x638] sm:$0xff]
      %v2470 = vld [vmem:[%s5 + $0x640] sm:$0xff]
      %v2471 = vld [vmem:[%s5 + $0x648] sm:$0xff]
      %v2472 = vld [vmem:[%s5 + $0x650] sm:$0xff]
      %v2473 = vld [vmem:[%s5 + $0x658] sm:$0xff]
      %v2474 = vld [vmem:[%s5 + $0x660] sm:$0xff]
      %v2475 = vld [vmem:[%s5 + $0x668] sm:$0xff]
      %v2476 = vld [vmem:[%s5 + $0x670] sm:$0xff]
      %v2477 = vld [vmem:[%s5 + $0x678] sm:$0xff]
      %v2478 = vld [vmem:[%s5 + $0x680] sm:$0xff]
      %v2479 = vld [vmem:[%s5 + $0x688] sm:$0xff]
      %v2480 = vld [vmem:[%s5 + $0x690] sm:$0xff]
      %v2481 = vld [vmem:[%s5 + $0x698] sm:$0xff]
      %v2482 = vld [vmem:[%s5 + $0x6a0] sm:$0xff]
      %v2483 = vld [vmem:[%s5 + $0x6a8] sm:$0xff]
      %v2484 = vld [vmem:[%s5 + $0x6b0] sm:$0xff]
      %v2485 = vld [vmem:[%s5 + $0x6b8] sm:$0xff]
      %v2486 = vld [vmem:[%s5 + $0x6c0] sm:$0xff]
      %v2487 = vld [vmem:[%s5 + $0x6c8] sm:$0xff]
      %v2488 = vld [vmem:[%s5 + $0x6d0] sm:$0xff]
      %v2489 = vld [vmem:[%s5 + $0x6d8] sm:$0xff]
      %v2490 = vld [vmem:[%s5 + $0x6e0] sm:$0xff]
      %v2491 = vld [vmem:[%s5 + $0x6e8] sm:$0xff]
      %v2492 = vld [vmem:[%s5 + $0x6f0] sm:$0xff]
      %v2493 = vld [vmem:[%s5 + $0x6f8] sm:$0xff]
      %v2494 = vld [vmem:[%s5 + $0x700] sm:$0xff]
      %v2495 = vld [vmem:[%s5 + $0x708] sm:$0xff]
      %v2496 = vld [vmem:[%s5 + $0x710] sm:$0xff]
      %v2497 = vld [vmem:[%s5 + $0x718] sm:$0xff]
      %v2498 = vld [vmem:[%s5 + $0x720] sm:$0xff]
      %v2499 = vld [vmem:[%s5 + $0x728] sm:$0xff]
      %v2500 = vld [vmem:[%s5 + $0x730] sm:$0xff]
      %v2501 = vld [vmem:[%s5 + $0x738] sm:$0xff]
      %v2502 = vld [vmem:[%s5 + $0x740] sm:$0xff]
      %v2503 = vld [vmem:[%s5 + $0x748] sm:$0xff]
      %v2504 = vld [vmem:[%s5 + $0x750] sm:$0xff]
      %v2505 = vld [vmem:[%s5 + $0x758] sm:$0xff]
      %v2506 = vld [vmem:[%s5 + $0x760] sm:$0xff]
      %v2507 = vld [vmem:[%s5 + $0x768] sm:$0xff]
      %v2508 = vld [vmem:[%s5 + $0x770] sm:$0xff]
      %v2509 = vld [vmem:[%s5 + $0x778] sm:$0xff]
      %v2510 = vld [vmem:[%s5 + $0x780] sm:$0xff]
      %v2511 = vld [vmem:[%s5 + $0x788] sm:$0xff]
      %v2512 = vld [vmem:[%s5 + $0x790] sm:$0xff]
      %v2513 = vld [vmem:[%s5 + $0x798] sm:$0xff]
      %v2514 = vld [vmem:[%s5 + $0x7a0] sm:$0xff]
      %v2515 = vld [vmem:[%s5 + $0x7a8] sm:$0xff]
      %v2516 = vld [vmem:[%s5 + $0x7b0] sm:$0xff]
      %v2517 = vld [vmem:[%s5 + $0x7b8] sm:$0xff]
      %v2518 = vld [vmem:[%s5 + $0x7c0] sm:$0xff]
      %v2519 = vld [vmem:[%s5 + $0x7c8] sm:$0xff]
      %v2520 = vld [vmem:[%s5 + $0x7d0] sm:$0xff]
      %v2521 = vld [vmem:[%s5 + $0x7d8] sm:$0xff]
      %v2522 = vld [vmem:[%s5 + $0x7e0] sm:$0xff]
      %v2523 = vld [vmem:[%s5 + $0x7e8] sm:$0xff]
      %v2524 = vld [vmem:[%s5 + $0x7f0] sm:$0xff]
      %v2525 = vld [vmem:[%s5 + $0x7f8] sm:$0xff]
      %v2526 = vld [vmem:[%s6] sm:$0xff]
      %v2527 = vld [vmem:[%s6 + $0x8] sm:$0xff]
      %v2528 = vld [vmem:[%s6 + $0x10] sm:$0xff]
      %v2529 = vld [vmem:[%s6 + $0x18] sm:$0xff]
      %v2530 = vld [vmem:[%s6 + $0x20] sm:$0xff]
      %v2531 = vld [vmem:[%s6 + $0x28] sm:$0xff]
      %v2532 = vld [vmem:[%s6 + $0x30] sm:$0xff]
      %v2533 = vld [vmem:[%s6 + $0x38] sm:$0xff]
      %v2534 = vld [vmem:[%s6 + $0x40] sm:$0xff]
      %v2535 = vld [vmem:[%s6 + $0x48] sm:$0xff]
      %v2536 = vld [vmem:[%s6 + $0x50] sm:$0xff]
      %v2537 = vld [vmem:[%s6 + $0x58] sm:$0xff]
      %v2538 = vld [vmem:[%s6 + $0x60] sm:$0xff]
      %v2539 = vld [vmem:[%s6 + $0x68] sm:$0xff]
      %v2540 = vld [vmem:[%s6 + $0x70] sm:$0xff]
      %v2541 = vld [vmem:[%s6 + $0x78] sm:$0xff]
      %v2542 = vld [vmem:[%s6 + $0x80] sm:$0xff]
      %v2543 = vld [vmem:[%s6 + $0x88] sm:$0xff]
      %v2544 = vld [vmem:[%s6 + $0x90] sm:$0xff]
      %v2545 = vld [vmem:[%s6 + $0x98] sm:$0xff]
      %v2546 = vld [vmem:[%s6 + $0xa0] sm:$0xff]
      %v2547 = vld [vmem:[%s6 + $0xa8] sm:$0xff]
      %v2548 = vld [vmem:[%s6 + $0xb0] sm:$0xff]
      %v2549 = vld [vmem:[%s6 + $0xb8] sm:$0xff]
      %v2550 = vld [vmem:[%s6 + $0xc0] sm:$0xff]
      %v2551 = vld [vmem:[%s6 + $0xc8] sm:$0xff]
      %v2552 = vld [vmem:[%s6 + $0xd0] sm:$0xff]
      %v2553 = vld [vmem:[%s6 + $0xd8] sm:$0xff]
      %v2554 = vld [vmem:[%s6 + $0xe0] sm:$0xff]
      %v2555 = vld [vmem:[%s6 + $0xe8] sm:$0xff]
      %v2556 = vld [vmem:[%s6 + $0xf0] sm:$0xff]
      %v2557 = vld [vmem:[%s6 + $0xf8] sm:$0xff]
      %v2558 = vld [vmem:[%s6 + $0x100] sm:$0xff]
      %v2559 = vld [vmem:[%s6 + $0x108] sm:$0xff]
      %v2560 = vld [vmem:[%s6 + $0x110] sm:$0xff]
      %v2561 = vld [vmem:[%s6 + $0x118] sm:$0xff]
      %v2562 = vld [vmem:[%s6 + $0x120] sm:$0xff]
      %v2563 = vld [vmem:[%s6 + $0x128] sm:$0xff]
      %v2564 = vld [vmem:[%s6 + $0x130] sm:$0xff]
      %v2565 = vld [vmem:[%s6 + $0x138] sm:$0xff]
      %v2566 = vld [vmem:[%s6 + $0x140] sm:$0xff]
      %v2567 = vld [vmem:[%s6 + $0x148] sm:$0xff]
      %v2568 = vld [vmem:[%s6 + $0x150] sm:$0xff]
      %v2569 = vld [vmem:[%s6 + $0x158] sm:$0xff]
      %v2570 = vld [vmem:[%s6 + $0x160] sm:$0xff]
      %v2571 = vld [vmem:[%s6 + $0x168] sm:$0xff]
      %v2572 = vld [vmem:[%s6 + $0x170] sm:$0xff]
      %v2573 = vld [vmem:[%s6 + $0x178] sm:$0xff]
      %v2574 = vld [vmem:[%s6 + $0x180] sm:$0xff]
      %v2575 = vld [vmem:[%s6 + $0x188] sm:$0xff]
      %v2576 = vld [vmem:[%s6 + $0x190] sm:$0xff]
      %v2577 = vld [vmem:[%s6 + $0x198] sm:$0xff]
      %v2578 = vld [vmem:[%s6 + $0x1a0] sm:$0xff]
      %v2579 = vld [vmem:[%s6 + $0x1a8] sm:$0xff]
      %v2580 = vld [vmem:[%s6 + $0x1b0] sm:$0xff]
      %v2581 = vld [vmem:[%s6 + $0x1b8] sm:$0xff]
      %v2582 = vld [vmem:[%s6 + $0x1c0] sm:$0xff]
      %v2583 = vld [vmem:[%s6 + $0x1c8] sm:$0xff]
      %v2584 = vld [vmem:[%s6 + $0x1d0] sm:$0xff]
      %v2585 = vld [vmem:[%s6 + $0x1d8] sm:$0xff]
      %v2586 = vld [vmem:[%s6 + $0x1e0] sm:$0xff]
      %v2587 = vld [vmem:[%s6 + $0x1e8] sm:$0xff]
      %v2588 = vld [vmem:[%s6 + $0x1f0] sm:$0xff]
      %v2589 = vld [vmem:[%s6 + $0x1f8] sm:$0xff]
      %v2590 = vld [vmem:[%s6 + $0x200] sm:$0xff]
      %v2591 = vld [vmem:[%s6 + $0x208] sm:$0xff]
      %v2592 = vld [vmem:[%s6 + $0x210] sm:$0xff]
      %v2593 = vld [vmem:[%s6 + $0x218] sm:$0xff]
      %v2594 = vld [vmem:[%s6 + $0x220] sm:$0xff]
      %v2595 = vld [vmem:[%s6 + $0x228] sm:$0xff]
      %v2596 = vld [vmem:[%s6 + $0x230] sm:$0xff]
      %v2597 = vld [vmem:[%s6 + $0x238] sm:$0xff]
      %v2598 = vld [vmem:[%s6 + $0x240] sm:$0xff]
      %v2599 = vld [vmem:[%s6 + $0x248] sm:$0xff]
      %v2600 = vld [vmem:[%s6 + $0x250] sm:$0xff]
      %v2601 = vld [vmem:[%s6 + $0x258] sm:$0xff]
      %v2602 = vld [vmem:[%s6 + $0x260] sm:$0xff]
      %v2603 = vld [vmem:[%s6 + $0x268] sm:$0xff]
      %v2604 = vld [vmem:[%s6 + $0x270] sm:$0xff]
      %v2605 = vld [vmem:[%s6 + $0x278] sm:$0xff]
      %v2606 = vld [vmem:[%s6 + $0x280] sm:$0xff]
      %v2607 = vld [vmem:[%s6 + $0x288] sm:$0xff]
      %v2608 = vld [vmem:[%s6 + $0x290] sm:$0xff]
      %v2609 = vld [vmem:[%s6 + $0x298] sm:$0xff]
      %v2610 = vld [vmem:[%s6 + $0x2a0] sm:$0xff]
      %v2611 = vld [vmem:[%s6 + $0x2a8] sm:$0xff]
      %v2612 = vld [vmem:[%s6 + $0x2b0] sm:$0xff]
      %v2613 = vld [vmem:[%s6 + $0x2b8] sm:$0xff]
      %v2614 = vld [vmem:[%s6 + $0x2c0] sm:$0xff]
      %v2615 = vld [vmem:[%s6 + $0x2c8] sm:$0xff]
      %v2616 = vld [vmem:[%s6 + $0x2d0] sm:$0xff]
      %v2617 = vld [vmem:[%s6 + $0x2d8] sm:$0xff]
      %v2618 = vld [vmem:[%s6 + $0x2e0] sm:$0xff]
      %v2619 = vld [vmem:[%s6 + $0x2e8] sm:$0xff]
      %v2620 = vld [vmem:[%s6 + $0x2f0] sm:$0xff]
      %v2621 = vld [vmem:[%s6 + $0x2f8] sm:$0xff]
      %v2622 = vld [vmem:[%s6 + $0x300] sm:$0xff]
      %v2623 = vld [vmem:[%s6 + $0x308] sm:$0xff]
      %v2624 = vld [vmem:[%s6 + $0x310] sm:$0xff]
      %v2625 = vld [vmem:[%s6 + $0x318] sm:$0xff]
      %v2626 = vld [vmem:[%s6 + $0x320] sm:$0xff]
      %v2627 = vld [vmem:[%s6 + $0x328] sm:$0xff]
      %v2628 = vld [vmem:[%s6 + $0x330] sm:$0xff]
      %v2629 = vld [vmem:[%s6 + $0x338] sm:$0xff]
      %v2630 = vld [vmem:[%s6 + $0x340] sm:$0xff]
      %v2631 = vld [vmem:[%s6 + $0x348] sm:$0xff]
      %v2632 = vld [vmem:[%s6 + $0x350] sm:$0xff]
      %v2633 = vld [vmem:[%s6 + $0x358] sm:$0xff]
      %v2634 = vld [vmem:[%s6 + $0x360] sm:$0xff]
      %v2635 = vld [vmem:[%s6 + $0x368] sm:$0xff]
      %v2636 = vld [vmem:[%s6 + $0x370] sm:$0xff]
      %v2637 = vld [vmem:[%s6 + $0x378] sm:$0xff]
      %v2638 = vld [vmem:[%s6 + $0x380] sm:$0xff]
      %v2639 = vld [vmem:[%s6 + $0x388] sm:$0xff]
      %v2640 = vld [vmem:[%s6 + $0x390] sm:$0xff]
      %v2641 = vld [vmem:[%s6 + $0x398] sm:$0xff]
      %v2642 = vld [vmem:[%s6 + $0x3a0] sm:$0xff]
      %v2643 = vld [vmem:[%s6 + $0x3a8] sm:$0xff]
      %v2644 = vld [vmem:[%s6 + $0x3b0] sm:$0xff]
      %v2645 = vld [vmem:[%s6 + $0x3b8] sm:$0xff]
      %v2646 = vld [vmem:[%s6 + $0x3c0] sm:$0xff]
      %v2647 = vld [vmem:[%s6 + $0x3c8] sm:$0xff]
      %v2648 = vld [vmem:[%s6 + $0x3d0] sm:$0xff]
      %v2649 = vld [vmem:[%s6 + $0x3d8] sm:$0xff]
      %v2650 = vld [vmem:[%s6 + $0x3e0] sm:$0xff]
      %v2651 = vld [vmem:[%s6 + $0x3e8] sm:$0xff]
      %v2652 = vld [vmem:[%s6 + $0x3f0] sm:$0xff]
      %v2653 = vld [vmem:[%s6 + $0x3f8] sm:$0xff]
      %v2654 = vld [vmem:[%s6 + $0x400] sm:$0xff]
      %v2655 = vld [vmem:[%s6 + $0x408] sm:$0xff]
      %v2656 = vld [vmem:[%s6 + $0x410] sm:$0xff]
      %v2657 = vld [vmem:[%s6 + $0x418] sm:$0xff]
      %v2658 = vld [vmem:[%s6 + $0x420] sm:$0xff]
      %v2659 = vld [vmem:[%s6 + $0x428] sm:$0xff]
      %v2660 = vld [vmem:[%s6 + $0x430] sm:$0xff]
      %v2661 = vld [vmem:[%s6 + $0x438] sm:$0xff]
      %v2662 = vld [vmem:[%s6 + $0x440] sm:$0xff]
      %v2663 = vld [vmem:[%s6 + $0x448] sm:$0xff]
      %v2664 = vld [vmem:[%s6 + $0x450] sm:$0xff]
      %v2665 = vld [vmem:[%s6 + $0x458] sm:$0xff]
      %v2666 = vld [vmem:[%s6 + $0x460] sm:$0xff]
      %v2667 = vld [vmem:[%s6 + $0x468] sm:$0xff]
      %v2668 = vld [vmem:[%s6 + $0x470] sm:$0xff]
      %v2669 = vld [vmem:[%s6 + $0x478] sm:$0xff]
      %v2670 = vld [vmem:[%s6 + $0x480] sm:$0xff]
      %v2671 = vld [vmem:[%s6 + $0x488] sm:$0xff]
      %v2672 = vld [vmem:[%s6 + $0x490] sm:$0xff]
      %v2673 = vld [vmem:[%s6 + $0x498] sm:$0xff]
      %v2674 = vld [vmem:[%s6 + $0x4a0] sm:$0xff]
      %v2675 = vld [vmem:[%s6 + $0x4a8] sm:$0xff]
      %v2676 = vld [vmem:[%s6 + $0x4b0] sm:$0xff]
      %v2677 = vld [vmem:[%s6 + $0x4b8] sm:$0xff]
      %v2678 = vld [vmem:[%s6 + $0x4c0] sm:$0xff]
      %v2679 = vld [vmem:[%s6 + $0x4c8] sm:$0xff]
      %v2680 = vld [vmem:[%s6 + $0x4d0] sm:$0xff]
      %v2681 = vld [vmem:[%s6 + $0x4d8] sm:$0xff]
      %v2682 = vld [vmem:[%s6 + $0x4e0] sm:$0xff]
      %v2683 = vld [vmem:[%s6 + $0x4e8] sm:$0xff]
      %v2684 = vld [vmem:[%s6 + $0x4f0] sm:$0xff]
      %v2685 = vld [vmem:[%s6 + $0x4f8] sm:$0xff]
      %v2686 = vld [vmem:[%s6 + $0x500] sm:$0xff]
      %v2687 = vld [vmem:[%s6 + $0x508] sm:$0xff]
      %v2688 = vld [vmem:[%s6 + $0x510] sm:$0xff]
      %v2689 = vld [vmem:[%s6 + $0x518] sm:$0xff]
      %v2690 = vld [vmem:[%s6 + $0x520] sm:$0xff]
      %v2691 = vld [vmem:[%s6 + $0x528] sm:$0xff]
      %v2692 = vld [vmem:[%s6 + $0x530] sm:$0xff]
      %v2693 = vld [vmem:[%s6 + $0x538] sm:$0xff]
      %v2694 = vld [vmem:[%s6 + $0x540] sm:$0xff]
      %v2695 = vld [vmem:[%s6 + $0x548] sm:$0xff]
      %v2696 = vld [vmem:[%s6 + $0x550] sm:$0xff]
      %v2697 = vld [vmem:[%s6 + $0x558] sm:$0xff]
      %v2698 = vld [vmem:[%s6 + $0x560] sm:$0xff]
      %v2699 = vld [vmem:[%s6 + $0x568] sm:$0xff]
      %v2700 = vld [vmem:[%s6 + $0x570] sm:$0xff]
      %v2701 = vld [vmem:[%s6 + $0x578] sm:$0xff]
      %v2702 = vld [vmem:[%s6 + $0x580] sm:$0xff]
      %v2703 = vld [vmem:[%s6 + $0x588] sm:$0xff]
      %v2704 = vld [vmem:[%s6 + $0x590] sm:$0xff]
      %v2705 = vld [vmem:[%s6 + $0x598] sm:$0xff]
      %v2706 = vld [vmem:[%s6 + $0x5a0] sm:$0xff]
      %v2707 = vld [vmem:[%s6 + $0x5a8] sm:$0xff]
      %v2708 = vld [vmem:[%s6 + $0x5b0] sm:$0xff]
      %v2709 = vld [vmem:[%s6 + $0x5b8] sm:$0xff]
      %v2710 = vld [vmem:[%s6 + $0x5c0] sm:$0xff]
      %v2711 = vld [vmem:[%s6 + $0x5c8] sm:$0xff]
      %v2712 = vld [vmem:[%s6 + $0x5d0] sm:$0xff]
      %v2713 = vld [vmem:[%s6 + $0x5d8] sm:$0xff]
      %v2714 = vld [vmem:[%s6 + $0x5e0] sm:$0xff]
      %v2715 = vld [vmem:[%s6 + $0x5e8] sm:$0xff]
      %v2716 = vld [vmem:[%s6 + $0x5f0] sm:$0xff]
      %v2717 = vld [vmem:[%s6 + $0x5f8] sm:$0xff]
      %v2718 = vld [vmem:[%s6 + $0x600] sm:$0xff]
      %v2719 = vld [vmem:[%s6 + $0x608] sm:$0xff]
      %v2720 = vld [vmem:[%s6 + $0x610] sm:$0xff]
      %v2721 = vld [vmem:[%s6 + $0x618] sm:$0xff]
      %v2722 = vld [vmem:[%s6 + $0x620] sm:$0xff]
      %v2723 = vld [vmem:[%s6 + $0x628] sm:$0xff]
      %v2724 = vld [vmem:[%s6 + $0x630] sm:$0xff]
      %v2725 = vld [vmem:[%s6 + $0x638] sm:$0xff]
      %v2726 = vld [vmem:[%s6 + $0x640] sm:$0xff]
      %v2727 = vld [vmem:[%s6 + $0x648] sm:$0xff]
      %v2728 = vld [vmem:[%s6 + $0x650] sm:$0xff]
      %v2729 = vld [vmem:[%s6 + $0x658] sm:$0xff]
      %v2730 = vld [vmem:[%s6 + $0x660] sm:$0xff]
      %v2731 = vld [vmem:[%s6 + $0x668] sm:$0xff]
      %v2732 = vld [vmem:[%s6 + $0x670] sm:$0xff]
      %v2733 = vld [vmem:[%s6 + $0x678] sm:$0xff]
      %v2734 = vld [vmem:[%s6 + $0x680] sm:$0xff]
      %v2735 = vld [vmem:[%s6 + $0x688] sm:$0xff]
      %v2736 = vld [vmem:[%s6 + $0x690] sm:$0xff]
      %v2737 = vld [vmem:[%s6 + $0x698] sm:$0xff]
      %v2738 = vld [vmem:[%s6 + $0x6a0] sm:$0xff]
      %v2739 = vld [vmem:[%s6 + $0x6a8] sm:$0xff]
      %v2740 = vld [vmem:[%s6 + $0x6b0] sm:$0xff]
      %v2741 = vld [vmem:[%s6 + $0x6b8] sm:$0xff]
      %v2742 = vld [vmem:[%s6 + $0x6c0] sm:$0xff]
      %v2743 = vld [vmem:[%s6 + $0x6c8] sm:$0xff]
      %v2744 = vld [vmem:[%s6 + $0x6d0] sm:$0xff]
      %v2745 = vld [vmem:[%s6 + $0x6d8] sm:$0xff]
      %v2746 = vld [vmem:[%s6 + $0x6e0] sm:$0xff]
      %v2747 = vld [vmem:[%s6 + $0x6e8] sm:$0xff]
      %v2748 = vld [vmem:[%s6 + $0x6f0] sm:$0xff]
      %v2749 = vld [vmem:[%s6 + $0x6f8] sm:$0xff]
      %v2750 = vld [vmem:[%s6 + $0x700] sm:$0xff]
      %v2751 = vld [vmem:[%s6 + $0x708] sm:$0xff]
      %v2752 = vld [vmem:[%s6 + $0x710] sm:$0xff]
      %v2753 = vld [vmem:[%s6 + $0x718] sm:$0xff]
      %v2754 = vld [vmem:[%s6 + $0x720] sm:$0xff]
      %v2755 = vld [vmem:[%s6 + $0x728] sm:$0xff]
      %v2756 = vld [vmem:[%s6 + $0x730] sm:$0xff]
      %v2757 = vld [vmem:[%s6 + $0x738] sm:$0xff]
      %v2758 = vld [vmem:[%s6 + $0x740] sm:$0xff]
      %v2759 = vld [vmem:[%s6 + $0x748] sm:$0xff]
      %v2760 = vld [vmem:[%s6 + $0x750] sm:$0xff]
      %v2761 = vld [vmem:[%s6 + $0x758] sm:$0xff]
      %v2762 = vld [vmem:[%s6 + $0x760] sm:$0xff]
      %v2763 = vld [vmem:[%s6 + $0x768] sm:$0xff]
      %v2764 = vld [vmem:[%s6 + $0x770] sm:$0xff]
      %v2765 = vld [vmem:[%s6 + $0x778] sm:$0xff]
      %v2766 = vld [vmem:[%s6 + $0x780] sm:$0xff]
      %v2767 = vld [vmem:[%s6 + $0x788] sm:$0xff]
      %v2768 = vld [vmem:[%s6 + $0x790] sm:$0xff]
      %v2769 = vld [vmem:[%s6 + $0x798] sm:$0xff]
      %v2770 = vld [vmem:[%s6 + $0x7a0] sm:$0xff]
      %v2771 = vld [vmem:[%s6 + $0x7a8] sm:$0xff]
      %v2772 = vld [vmem:[%s6 + $0x7b0] sm:$0xff]
      %v2773 = vld [vmem:[%s6 + $0x7b8] sm:$0xff]
      %v2774 = vld [vmem:[%s6 + $0x7c0] sm:$0xff]
      %v2775 = vld [vmem:[%s6 + $0x7c8] sm:$0xff]
      %v2776 = vld [vmem:[%s6 + $0x7d0] sm:$0xff]
      %v2777 = vld [vmem:[%s6 + $0x7d8] sm:$0xff]
      %v2778 = vld [vmem:[%s6 + $0x7e0] sm:$0xff]
      %v2779 = vld [vmem:[%s6 + $0x7e8] sm:$0xff]
      %v2780 = vld [vmem:[%s6 + $0x7f0] sm:$0xff]
      %v2781 = vld [vmem:[%s6 + $0x7f8] sm:$0xff]
      %2782 = vmatprep.subr.mxu0 %v2527
      %2783 = vmatpush1.msra.mxu0 %v2526
      %2784 = vmatprep.subr.mxu0 %v2531
      %2785 = vmatpush1.msra.mxu0 %v2530
      %2786 = vmatprep.subr.mxu0 %v2535
      %2787 = vmatpush1.msra.mxu0 %v2534
      %2788 = vmatprep.subr.mxu0 %v2539
      %2789 = vmatpush1.msra.mxu0 %v2538
      %2790 = vmatprep.subr.mxu0 %v2543
      %2791 = vmatpush1.msra.mxu0 %v2542
      %2792 = vmatprep.subr.mxu0 %v2547
      %2793 = vmatpush1.msra.mxu0 %v2546
      %2794 = vmatprep.subr.mxu0 %v2551
      %2795 = vmatpush1.msra.mxu0 %v2550
      %2796 = vmatprep.subr.mxu0 %v2555
      %2797 = vmatpush1.msra.mxu0 %v2554
      %2798 = vmatprep.subr.mxu0 %v2559
      %2799 = vmatpush1.msra.mxu0 %v2558
      %2800 = vmatprep.subr.mxu0 %v2563
      %2801 = vmatpush1.msra.mxu0 %v2562
      %2802 = vmatprep.subr.mxu0 %v2567
      %2803 = vmatpush1.msra.mxu0 %v2566
      %2804 = vmatprep.subr.mxu0 %v2571
      %2805 = vmatpush1.msra.mxu0 %v2570
      %2806 = vmatprep.subr.mxu0 %v2575
      %2807 = vmatpush1.msra.mxu0 %v2574
      %2808 = vmatprep.subr.mxu0 %v2579
      %2809 = vmatpush1.msra.mxu0 %v2578
      %2810 = vmatprep.subr.mxu0 %v2583
      %2811 = vmatpush1.msra.mxu0 %v2582
      %2812 = vmatprep.subr.mxu0 %v2587
      %2813 = vmatpush1.msra.mxu0 %v2586
      %2814 = vmatprep.subr.mxu0 %v2591
      %2815 = vmatpush1.msra.mxu0 %v2590
      %2816 = vmatprep.subr.mxu0 %v2595
      %2817 = vmatpush1.msra.mxu0 %v2594
      %2818 = vmatprep.subr.mxu0 %v2599
      %2819 = vmatpush1.msra.mxu0 %v2598
      %2820 = vmatprep.subr.mxu0 %v2603
      %2821 = vmatpush1.msra.mxu0 %v2602
      %2822 = vmatprep.subr.mxu0 %v2607
      %2823 = vmatpush1.msra.mxu0 %v2606
      %2824 = vmatprep.subr.mxu0 %v2611
      %2825 = vmatpush1.msra.mxu0 %v2610
      %2826 = vmatprep.subr.mxu0 %v2615
      %2827 = vmatpush1.msra.mxu0 %v2614
      %2828 = vmatprep.subr.mxu0 %v2619
      %2829 = vmatpush1.msra.mxu0 %v2618
      %2830 = vmatprep.subr.mxu0 %v2623
      %2831 = vmatpush1.msra.mxu0 %v2622
      %2832 = vmatprep.subr.mxu0 %v2627
      %2833 = vmatpush1.msra.mxu0 %v2626
      %2834 = vmatprep.subr.mxu0 %v2631
      %2835 = vmatpush1.msra.mxu0 %v2630
      %2836 = vmatprep.subr.mxu0 %v2635
      %2837 = vmatpush1.msra.mxu0 %v2634
      %2838 = vmatprep.subr.mxu0 %v2639
      %2839 = vmatpush1.msra.mxu0 %v2638
      %2840 = vmatprep.subr.mxu0 %v2643
      %2841 = vmatpush1.msra.mxu0 %v2642
      %2842 = vmatprep.subr.mxu0 %v2647
      %2843 = vmatpush1.msra.mxu0 %v2646
      %2844 = vmatprep.subr.mxu0 %v2651
      %2845 = vmatpush1.msra.mxu0 %v2650
      %2846 = vmatprep.mubr.f32.mxu0 %v1899
      %2847 = vmatmul.mubr.f32.gmra.mrb[0].mxu0 %v1898
      %v2848 = vpop.f32.mrb[0].mxu0
      %v2849 = vadd.f32 0.0, %v2848
      %v2850 = vpop.f32.mrb[0].mxu0
      %v2851 = vadd.f32 0.0, %v2850
      %2852 = vmatprep.mubr.f32.mxu0 %v1903
      %2853 = vmatmul.mubr.f32.gmra.mrb[0].mxu0 %v1902
      %v2854 = vpop.f32.mrb[0].mxu0
      %v2855 = vadd.f32 0.0, %v2854
      %v2856 = vpop.f32.mrb[0].mxu0
      %v2857 = vadd.f32 0.0, %v2856
      %2858 = vmatprep.mubr.f32.mxu0 %v1907
      %2859 = vmatmul.mubr.f32.gmra.mrb[0].mxu0 %v1906
      %v2860 = vpop.f32.mrb[0].mxu0
      %v2861 = vadd.f32 0.0, %v2860
      %v2862 = vpop.f32.mrb[0].mxu0
      %v2863 = vadd.f32 0.0, %v2862
      %2864 = vmatprep.mubr.f32.mxu0 %v1911
      %2865 = vmatmul.mubr.f32.gmra.mrb[0].mxu0 %v1910
      %v2866 = vpop.f32.mrb[0].mxu0
      %v2867 = vadd.f32 0.0, %v2866
      %v2868 = vpop.f32.mrb[0].mxu0
      %v2869 = vadd.f32 0.0, %v2868
      %2870 = vdwg.mxu0
      %2871 = vmatprep.subr.mxu0 %v2655
      %2872 = vmatpush1.msra.mxu0 %v2654
      %2873 = vmatprep.subr.mxu0 %v2659
      %2874 = vmatpush1.msra.mxu0 %v2658
      %2875 = vmatprep.subr.mxu0 %v2663
      %2876 = vmatpush1.msra.mxu0 %v2662
      %2877 = vmatprep.subr.mxu0 %v2667
      %2878 = vmatpush1.msra.mxu0 %v2666
      %2879 = vmatprep.subr.mxu0 %v2671
      %2880 = vmatpush1.msra.mxu0 %v2670
      %2881 = vmatprep.subr.mxu0 %v2675
      %2882 = vmatpush1.msra.mxu0 %v2674
      %2883 = vmatprep.subr.mxu0 %v2679
      %2884 = vmatpush1.msra.mxu0 %v2678
      %2885 = vmatprep.subr.mxu0 %v2683
      %2886 = vmatpush1.msra.mxu0 %v2682
      %2887 = vmatprep.subr.mxu0 %v2687
      %2888 = vmatpush1.msra.mxu0 %v2686
      %2889 = vmatprep.subr.mxu0 %v2691
      %2890 = vmatpush1.msra.mxu0 %v2690
      %2891 = vmatprep.subr.mxu0 %v2695
      %2892 = vmatpush1.msra.mxu0 %v2694
      %2893 = vmatprep.subr.mxu0 %v2699
      %2894 = vmatpush1.msra.mxu0 %v2698
      %2895 = vmatprep.subr.mxu0 %v2703
      %2896 = vmatpush1.msra.mxu0 %v2702
      %2897 = vmatprep.subr.mxu0 %v2707
      %2898 = vmatpush1.msra.mxu0 %v2706
      %2899 = vmatprep.subr.mxu0 %v2711
      %2900 = vmatpush1.msra.mxu0 %v2710
      %2901 = vmatprep.subr.mxu0 %v2715
      %2902 = vmatpush1.msra.mxu0 %v2714
      %2903 = vmatprep.subr.mxu0 %v2719
      %2904 = vmatpush1.msra.mxu0 %v2718
      %2905 = vmatprep.subr.mxu0 %v2723
      %2906 = vmatpush1.msra.mxu0 %v2722
      %2907 = vmatprep.subr.mxu0 %v2727
      %2908 = vmatpush1.msra.mxu0 %v2726
      %2909 = vmatprep.subr.mxu0 %v2731
      %2910 = vmatpush1.msra.mxu0 %v2730
      %2911 = vmatprep.subr.mxu0 %v2735
      %2912 = vmatpush1.msra.mxu0 %v2734
      %2913 = vmatprep.subr.mxu0 %v2739
      %2914 = vmatpush1.msra.mxu0 %v2738
      %2915 = vmatprep.subr.mxu0 %v2743
      %2916 = vmatpush1.msra.mxu0 %v2742
      %2917 = vmatprep.subr.mxu0 %v2747
      %2918 = vmatpush1.msra.mxu0 %v2746
      %2919 = vmatprep.subr.mxu0 %v2751
      %2920 = vmatpush1.msra.mxu0 %v2750
      %2921 = vmatprep.subr.mxu0 %v2755
      %2922 = vmatpush1.msra.mxu0 %v2754
      %2923 = vmatprep.subr.mxu0 %v2759
      %2924 = vmatpush1.msra.mxu0 %v2758
      %2925 = vmatprep.subr.mxu0 %v2763
      %2926 = vmatpush1.msra.mxu0 %v2762
      %2927 = vmatprep.subr.mxu0 %v2767
      %2928 = vmatpush1.msra.mxu0 %v2766
      %2929 = vmatprep.subr.mxu0 %v2771
      %2930 = vmatpush1.msra.mxu0 %v2770
      %2931 = vmatprep.subr.mxu0 %v2775
      %2932 = vmatpush1.msra.mxu0 %v2774
      %2933 = vmatprep.subr.mxu0 %v2779
      %2934 = vmatpush1.msra.mxu0 %v2778
      %2935 = vmatprep.mubr.f32.mxu0 %v1901
      %2936 = vmatmul.mubr.f32.gmra.mrb[0].mxu0 %v1900
      %v2937 = vpop.f32.mrb[0].mxu0
      %v2938 = vadd.f32 %v2849, %v2937
      %v2939 = vpop.f32.mrb[0].mxu0
      %v2940 = vadd.f32 %v2851, %v2939
      %2941 = vmatprep.mubr.f32.mxu0 %v1905
      %2942 = vmatmul.mubr.f32.gmra.mrb[0].mxu0 %v1904
      %v2943 = vpop.f32.mrb[0].mxu0
      %v2944 = vadd.f32 %v2855, %v2943
      %v2945 = vpop.f32.mrb[0].mxu0
      %v2946 = vadd.f32 %v2857, %v2945
      %2947 = vmatprep.mubr.f32.mxu0 %v1909
      %2948 = vmatmul.mubr.f32.gmra.mrb[0].mxu0 %v1908
      %v2949 = vpop.f32.mrb[0].mxu0
      %v2950 = vadd.f32 %v2861, %v2949
      %v2951 = vpop.f32.mrb[0].mxu0
      %v2952 = vadd.f32 %v2863, %v2951
      %2953 = vmatprep.mubr.f32.mxu0 %v1913
      %2954 = vmatmul.mubr.f32.gmra.mrb[0].mxu0 %v1912
      %v2955 = vpop.f32.mrb[0].mxu0
      %v2956 = vadd.f32 %v2867, %v2955
      %v2957 = vpop.f32.mrb[0].mxu0
      %v2958 = vadd.f32 %v2869, %v2957
      %2959 = vdwg.mxu0
      %2960 = vmatprep.subr.mxu0 %v2529
      %2961 = vmatpush1.msra.mxu0 %v2528
      %2962 = vmatprep.subr.mxu0 %v2533
      %2963 = vmatpush1.msra.mxu0 %v2532
      %2964 = vmatprep.subr.mxu0 %v2537
      %2965 = vmatpush1.msra.mxu0 %v2536
      %2966 = vmatprep.subr.mxu0 %v2541
      %2967 = vmatpush1.msra.mxu0 %v2540
      %2968 = vmatprep.subr.mxu0 %v2545
      %2969 = vmatpush1.msra.mxu0 %v2544
      %2970 = vmatprep.subr.mxu0 %v2549
      %2971 = vmatpush1.msra.mxu0 %v2548
      %2972 = vmatprep.subr.mxu0 %v2553
      %2973 = vmatpush1.msra.mxu0 %v2552
      %2974 = vmatprep.subr.mxu0 %v2557
      %2975 = vmatpush1.msra.mxu0 %v2556
      %2976 = vmatprep.subr.mxu0 %v2561
      %2977 = vmatpush1.msra.mxu0 %v2560
      %2978 = vmatprep.subr.mxu0 %v2565
      %2979 = vmatpush1.msra.mxu0 %v2564
      %2980 = vmatprep.subr.mxu0 %v2569
      %2981 = vmatpush1.msra.mxu0 %v2568
      %2982 = vmatprep.subr.mxu0 %v2573
      %2983 = vmatpush1.msra.mxu0 %v2572
      %2984 = vmatprep.subr.mxu0 %v2577
      %2985 = vmatpush1.msra.mxu0 %v2576
      %2986 = vmatprep.subr.mxu0 %v2581
      %2987 = vmatpush1.msra.mxu0 %v2580
      %2988 = vmatprep.subr.mxu0 %v2585
      %2989 = vmatpush1.msra.mxu0 %v2584
      %2990 = vmatprep.subr.mxu0 %v2589
      %2991 = vmatpush1.msra.mxu0 %v2588
      %2992 = vmatprep.subr.mxu0 %v2593
      %2993 = vmatpush1.msra.mxu0 %v2592
      %2994 = vmatprep.subr.mxu0 %v2597
      %2995 = vmatpush1.msra.mxu0 %v2596
      %2996 = vmatprep.subr.mxu0 %v2601
      %2997 = vmatpush1.msra.mxu0 %v2600
      %2998 = vmatprep.subr.mxu0 %v2605
      %2999 = vmatpush1.msra.mxu0 %v2604
      %3000 = vmatprep.subr.mxu0 %v2609
      %3001 = vmatpush1.msra.mxu0 %v2608
      %3002 = vmatprep.subr.mxu0 %v2613
      %3003 = vmatpush1.msra.mxu0 %v2612
      %3004 = vmatprep.subr.mxu0 %v2617
      %3005 = vmatpush1.msra.mxu0 %v2616
      %3006 = vmatprep.subr.mxu0 %v2621
      %3007 = vmatpush1.msra.mxu0 %v2620
      %3008 = vmatprep.subr.mxu0 %v2625
      %3009 = vmatpush1.msra.mxu0 %v2624
      %3010 = vmatprep.subr.mxu0 %v2629
      %3011 = vmatpush1.msra.mxu0 %v2628
      %3012 = vmatprep.subr.mxu0 %v2633
      %3013 = vmatpush1.msra.mxu0 %v2632
      %3014 = vmatprep.subr.mxu0 %v2637
      %3015 = vmatpush1.msra.mxu0 %v2636
      %3016 = vmatprep.subr.mxu0 %v2641
      %3017 = vmatpush1.msra.mxu0 %v2640
      %3018 = vmatprep.subr.mxu0 %v2645
      %3019 = vmatpush1.msra.mxu0 %v2644
      %3020 = vmatprep.subr.mxu0 %v2649
      %3021 = vmatpush1.msra.mxu0 %v2648
      %3022 = vmatprep.subr.mxu0 %v2653
      %3023 = vmatpush1.msra.mxu0 %v2652
      %3024 = vmatprep.mubr.f32.mxu0 %v1899
      %3025 = vmatmul.mubr.f32.gmra.mrb[0].mxu0 %v1898
      %v3026 = vpop.f32.mrb[0].mxu0
      %v3027 = vadd.f32 0.0, %v3026
      %v3028 = vpop.f32.mrb[0].mxu0
      %v3029 = vadd.f32 0.0, %v3028
      %3030 = vmatprep.mubr.f32.mxu0 %v1903
      %3031 = vmatmul.mubr.f32.gmra.mrb[0].mxu0 %v1902
      %v3032 = vpop.f32.mrb[0].mxu0
      %v3033 = vadd.f32 0.0, %v3032
      %v3034 = vpop.f32.mrb[0].mxu0
      %v3035 = vadd.f32 0.0, %v3034
      %3036 = vmatprep.mubr.f32.mxu0 %v1907
      %3037 = vmatmul.mubr.f32.gmra.mrb[0].mxu0 %v1906
      %v3038 = vpop.f32.mrb[0].mxu0
      %v3039 = vadd.f32 0.0, %v3038
      %v3040 = vpop.f32.mrb[0].mxu0
      %v3041 = vadd.f32 0.0, %v3040
      %3042 = vmatprep.mubr.f32.mxu0 %v1911
      %3043 = vmatmul.mubr.f32.gmra.mrb[0].mxu0 %v1910
      %v3044 = vpop.f32.mrb[0].mxu0
      %v3045 = vadd.f32 0.0, %v3044
      %v3046 = vpop.f32.mrb[0].mxu0
      %v3047 = vadd.f32 0.0, %v3046
      %3048 = vdwg.mxu0
      %3049 = vmatprep.subr.mxu0 %v2657
      %3050 = vmatpush1.msra.mxu0 %v2656
      %3051 = vmatprep.subr.mxu0 %v2661
      %3052 = vmatpush1.msra.mxu0 %v2660
      %3053 = vmatprep.subr.mxu0 %v2665
      %3054 = vmatpush1.msra.mxu0 %v2664
      %3055 = vmatprep.subr.mxu0 %v2669
      %3056 = vmatpush1.msra.mxu0 %v2668
      %3057 = vmatprep.subr.mxu0 %v2673
      %3058 = vmatpush1.msra.mxu0 %v2672
      %3059 = vmatprep.subr.mxu0 %v2677
      %3060 = vmatpush1.msra.mxu0 %v2676
      %3061 = vmatprep.subr.mxu0 %v2681
      %3062 = vmatpush1.msra.mxu0 %v2680
      %3063 = vmatprep.subr.mxu0 %v2685
      %3064 = vmatpush1.msra.mxu0 %v2684
      %3065 = vmatprep.subr.mxu0 %v2689
      %3066 = vmatpush1.msra.mxu0 %v2688
      %3067 = vmatprep.subr.mxu0 %v2693
      %3068 = vmatpush1.msra.mxu0 %v2692
      %3069 = vmatprep.subr.mxu0 %v2697
      %3070 = vmatpush1.msra.mxu0 %v2696
      %3071 = vmatprep.subr.mxu0 %v2701
      %3072 = vmatpush1.msra.mxu0 %v2700
      %3073 = vmatprep.subr.mxu0 %v2705
      %3074 = vmatpush1.msra.mxu0 %v2704
      %3075 = vmatprep.subr.mxu0 %v2709
      %3076 = vmatpush1.msra.mxu0 %v2708
      %3077 = vmatprep.subr.mxu0 %v2713
      %3078 = vmatpush1.msra.mxu0 %v2712
      %3079 = vmatprep.subr.mxu0 %v2717
      %3080 = vmatpush1.msra.mxu0 %v2716
      %3081 = vmatprep.subr.mxu0 %v2721
      %3082 = vmatpush1.msra.mxu0 %v2720
      %3083 = vmatprep.subr.mxu0 %v2725
      %3084 = vmatpush1.msra.mxu0 %v2724
      %3085 = vmatprep.subr.mxu0 %v2729
      %3086 = vmatpush1.msra.mxu0 %v2728
      %3087 = vmatprep.subr.mxu0 %v2733
      %3088 = vmatpush1.msra.mxu0 %v2732
      %3089 = vmatprep.subr.mxu0 %v2737
      %3090 = vmatpush1.msra.mxu0 %v2736
      %3091 = vmatprep.subr.mxu0 %v2741
      %3092 = vmatpush1.msra.mxu0 %v2740
      %3093 = vmatprep.subr.mxu0 %v2745
      %3094 = vmatpush1.msra.mxu0 %v2744
      %3095 = vmatprep.subr.mxu0 %v2749
      %3096 = vmatpush1.msra.mxu0 %v2748
      %3097 = vmatprep.subr.mxu0 %v2753
      %3098 = vmatpush1.msra.mxu0 %v2752
      %3099 = vmatprep.subr.mxu0 %v2757
      %3100 = vmatpush1.msra.mxu0 %v2756
      %3101 = vmatprep.subr.mxu0 %v2761
      %3102 = vmatpush1.msra.mxu0 %v2760
      %3103 = vmatprep.subr.mxu0 %v2765
      %3104 = vmatpush1.msra.mxu0 %v2764
      %3105 = vmatprep.subr.mxu0 %v2769
      %3106 = vmatpush1.msra.mxu0 %v2768
      %3107 = vmatprep.subr.mxu0 %v2773
      %3108 = vmatpush1.msra.mxu0 %v2772
      %3109 = vmatprep.subr.mxu0 %v2777
      %3110 = vmatpush1.msra.mxu0 %v2776
      %3111 = vmatprep.subr.mxu0 %v2781
      %3112 = vmatpush1.msra.mxu0 %v2780
      %3113 = vmatprep.mubr.f32.mxu0 %v1901
      %3114 = vmatmul.mubr.f32.gmra.mrb[0].mxu0 %v1900
      %v3115 = vpop.f32.mrb[0].mxu0
      %v3116 = vadd.f32 %v3027, %v3115
      %v3117 = vpop.f32.mrb[0].mxu0
      %v3118 = vadd.f32 %v3029, %v3117
      %3119 = vmatprep.mubr.f32.mxu0 %v1905
      %3120 = vmatmul.mubr.f32.gmra.mrb[0].mxu0 %v1904
      %v3121 = vpop.f32.mrb[0].mxu0
      %v3122 = vadd.f32 %v3033, %v3121
      %v3123 = vpop.f32.mrb[0].mxu0
      %v3124 = vadd.f32 %v3035, %v3123
      %3125 = vmatprep.mubr.f32.mxu0 %v1909
      %3126 = vmatmul.mubr.f32.gmra.mrb[0].mxu0 %v1908
      %v3127 = vpop.f32.mrb[0].mxu0
      %v3128 = vadd.f32 %v3039, %v3127
      %v3129 = vpop.f32.mrb[0].mxu0
      %v3130 = vadd.f32 %v3041, %v3129
      %3131 = vmatprep.mubr.f32.mxu0 %v1913
      %3132 = vmatmul.mubr.f32.gmra.mrb[0].mxu0 %v1912
      %v3133 = vpop.f32.mrb[0].mxu0
      %v3134 = vadd.f32 %v3045, %v3133
      %v3135 = vpop.f32.mrb[0].mxu0
      %v3136 = vadd.f32 %v3047, %v3135
      %3137 = vdwg.mxu0
      %3138 = vmatprep.subr.mxu0 %v2271
      %3139 = vmatpush1.msra.mxu0 %v2270
      %3140 = vmatprep.subr.mxu0 %v2275
      %3141 = vmatpush1.msra.mxu0 %v2274
      %3142 = vmatprep.subr.mxu0 %v2279
      %3143 = vmatpush1.msra.mxu0 %v2278
      %3144 = vmatprep.subr.mxu0 %v2283
      %3145 = vmatpush1.msra.mxu0 %v2282
      %3146 = vmatprep.subr.mxu0 %v2287
      %3147 = vmatpush1.msra.mxu0 %v2286
      %3148 = vmatprep.subr.mxu0 %v2291
      %3149 = vmatpush1.msra.mxu0 %v2290
      %3150 = vmatprep.subr.mxu0 %v2295
      %3151 = vmatpush1.msra.mxu0 %v2294
      %3152 = vmatprep.subr.mxu0 %v2299
      %3153 = vmatpush1.msra.mxu0 %v2298
      %3154 = vmatprep.subr.mxu0 %v2303
      %3155 = vmatpush1.msra.mxu0 %v2302
      %3156 = vmatprep.subr.mxu0 %v2307
      %3157 = vmatpush1.msra.mxu0 %v2306
      %3158 = vmatprep.subr.mxu0 %v2311
      %3159 = vmatpush1.msra.mxu0 %v2310
      %3160 = vmatprep.subr.mxu0 %v2315
      %3161 = vmatpush1.msra.mxu0 %v2314
      %3162 = vmatprep.subr.mxu0 %v2319
      %3163 = vmatpush1.msra.mxu0 %v2318
      %3164 = vmatprep.subr.mxu0 %v2323
      %3165 = vmatpush1.msra.mxu0 %v2322
      %3166 = vmatprep.subr.mxu0 %v2327
      %3167 = vmatpush1.msra.mxu0 %v2326
      %3168 = vmatprep.subr.mxu0 %v2331
      %3169 = vmatpush1.msra.mxu0 %v2330
      %3170 = vmatprep.subr.mxu0 %v2335
      %3171 = vmatpush1.msra.mxu0 %v2334
      %3172 = vmatprep.subr.mxu0 %v2339
      %3173 = vmatpush1.msra.mxu0 %v2338
      %3174 = vmatprep.subr.mxu0 %v2343
      %3175 = vmatpush1.msra.mxu0 %v2342
      %3176 = vmatprep.subr.mxu0 %v2347
      %3177 = vmatpush1.msra.mxu0 %v2346
      %3178 = vmatprep.subr.mxu0 %v2351
      %3179 = vmatpush1.msra.mxu0 %v2350
      %3180 = vmatprep.subr.mxu0 %v2355
      %3181 = vmatpush1.msra.mxu0 %v2354
      %3182 = vmatprep.subr.mxu0 %v2359
      %3183 = vmatpush1.msra.mxu0 %v2358
      %3184 = vmatprep.subr.mxu0 %v2363
      %3185 = vmatpush1.msra.mxu0 %v2362
      %3186 = vmatprep.subr.mxu0 %v2367
      %3187 = vmatpush1.msra.mxu0 %v2366
      %3188 = vmatprep.subr.mxu0 %v2371
      %3189 = vmatpush1.msra.mxu0 %v2370
      %3190 = vmatprep.subr.mxu0 %v2375
      %3191 = vmatpush1.msra.mxu0 %v2374
      %3192 = vmatprep.subr.mxu0 %v2379
      %3193 = vmatpush1.msra.mxu0 %v2378
      %3194 = vmatprep.subr.mxu0 %v2383
      %3195 = vmatpush1.msra.mxu0 %v2382
      %3196 = vmatprep.subr.mxu0 %v2387
      %3197 = vmatpush1.msra.mxu0 %v2386
      %3198 = vmatprep.subr.mxu0 %v2391
      %3199 = vmatpush1.msra.mxu0 %v2390
      %3200 = vmatprep.subr.mxu0 %v2395
      %3201 = vmatpush1.msra.mxu0 %v2394
      %3202 = vmatprep.mubr.f32.mxu0 %v1983
      %3203 = vmatmul.mubr.f32.gmra.mrb[0].mxu0 %v1981
      %v3204 = vpop.f32.mrb[0].mxu0
      %v3205 = vadd.f32 %v2938, %v3204
      %v3206 = vpop.f32.mrb[0].mxu0
      %v3207 = vadd.f32 %v2940, %v3206
      %3208 = vmatprep.mubr.f32.mxu0 %v1989
      %3209 = vmatmul.mubr.f32.gmra.mrb[0].mxu0 %v1987
      %v3210 = vpop.f32.mrb[0].mxu0
      %v3211 = vadd.f32 %v2944, %v3210
      %v3212 = vpop.f32.mrb[0].mxu0
      %v3213 = vadd.f32 %v2946, %v3212
      %3214 = vmatprep.mubr.f32.mxu0 %v1995
      %3215 = vmatmul.mubr.f32.gmra.mrb[0].mxu0 %v1993
      %v3216 = vpop.f32.mrb[0].mxu0
      %v3217 = vadd.f32 %v2950, %v3216
      %v3218 = vpop.f32.mrb[0].mxu0
      %v3219 = vadd.f32 %v2952, %v3218
      %3220 = vmatprep.mubr.f32.mxu0 %v2001
      %3221 = vmatmul.mubr.f32.gmra.mrb[0].mxu0 %v1999
      %v3222 = vpop.f32.mrb[0].mxu0
      %v3223 = vadd.f32 %v2956, %v3222
      %v3224 = vpop.f32.mrb[0].mxu0
      %v3225 = vadd.f32 %v2958, %v3224
      %3226 = vdwg.mxu0
      %3227 = vmatprep.subr.mxu0 %v2399
      %3228 = vmatpush1.msra.mxu0 %v2398
      %3229 = vmatprep.subr.mxu0 %v2403
      %3230 = vmatpush1.msra.mxu0 %v2402
      %3231 = vmatprep.subr.mxu0 %v2407
      %3232 = vmatpush1.msra.mxu0 %v2406
      %3233 = vmatprep.subr.mxu0 %v2411
      %3234 = vmatpush1.msra.mxu0 %v2410
      %3235 = vmatprep.subr.mxu0 %v2415
      %3236 = vmatpush1.msra.mxu0 %v2414
      %3237 = vmatprep.subr.mxu0 %v2419
      %3238 = vmatpush1.msra.mxu0 %v2418
      %3239 = vmatprep.subr.mxu0 %v2423
      %3240 = vmatpush1.msra.mxu0 %v2422
      %3241 = vmatprep.subr.mxu0 %v2427
      %3242 = vmatpush1.msra.mxu0 %v2426
      %3243 = vmatprep.subr.mxu0 %v2431
      %3244 = vmatpush1.msra.mxu0 %v2430
      %3245 = vmatprep.subr.mxu0 %v2435
      %3246 = vmatpush1.msra.mxu0 %v2434
      %3247 = vmatprep.subr.mxu0 %v2439
      %3248 = vmatpush1.msra.mxu0 %v2438
      %3249 = vmatprep.subr.mxu0 %v2443
      %3250 = vmatpush1.msra.mxu0 %v2442
      %3251 = vmatprep.subr.mxu0 %v2447
      %3252 = vmatpush1.msra.mxu0 %v2446
      %3253 = vmatprep.subr.mxu0 %v2451
      %3254 = vmatpush1.msra.mxu0 %v2450
      %3255 = vmatprep.subr.mxu0 %v2455
      %3256 = vmatpush1.msra.mxu0 %v2454
      %3257 = vmatprep.subr.mxu0 %v2459
      %3258 = vmatpush1.msra.mxu0 %v2458
      %3259 = vmatprep.subr.mxu0 %v2463
      %3260 = vmatpush1.msra.mxu0 %v2462
      %3261 = vmatprep.subr.mxu0 %v2467
      %3262 = vmatpush1.msra.mxu0 %v2466
      %3263 = vmatprep.subr.mxu0 %v2471
      %3264 = vmatpush1.msra.mxu0 %v2470
      %3265 = vmatprep.subr.mxu0 %v2475
      %3266 = vmatpush1.msra.mxu0 %v2474
      %3267 = vmatprep.subr.mxu0 %v2479
      %3268 = vmatpush1.msra.mxu0 %v2478
      %3269 = vmatprep.subr.mxu0 %v2483
      %3270 = vmatpush1.msra.mxu0 %v2482
      %3271 = vmatprep.subr.mxu0 %v2487
      %3272 = vmatpush1.msra.mxu0 %v2486
      %3273 = vmatprep.subr.mxu0 %v2491
      %3274 = vmatpush1.msra.mxu0 %v2490
      %3275 = vmatprep.subr.mxu0 %v2495
      %3276 = vmatpush1.msra.mxu0 %v2494
      %3277 = vmatprep.subr.mxu0 %v2499
      %3278 = vmatpush1.msra.mxu0 %v2498
      %3279 = vmatprep.subr.mxu0 %v2503
      %3280 = vmatpush1.msra.mxu0 %v2502
      %3281 = vmatprep.subr.mxu0 %v2507
      %3282 = vmatpush1.msra.mxu0 %v2506
      %3283 = vmatprep.subr.mxu0 %v2511
      %3284 = vmatpush1.msra.mxu0 %v2510
      %3285 = vmatprep.subr.mxu0 %v2515
      %3286 = vmatpush1.msra.mxu0 %v2514
      %3287 = vmatprep.subr.mxu0 %v2519
      %3288 = vmatpush1.msra.mxu0 %v2518
      %3289 = vmatprep.subr.mxu0 %v2523
      %3290 = vmatpush1.msra.mxu0 %v2522
      %3291 = vmatprep.mubr.f32.mxu0 %v2072
      %3292 = vmatmul.mubr.f32.gmra.mrb[0].mxu0 %v2070
      %v3293 = vpop.f32.mrb[0].mxu0
      %v3294 = vadd.f32 %v3205, %v3293
      %v3295 = vpop.f32.mrb[0].mxu0
      %v3296 = vadd.f32 %v3207, %v3295
      %3297 = vmatprep.mubr.f32.mxu0 %v2078
      %3298 = vmatmul.mubr.f32.gmra.mrb[0].mxu0 %v2076
      %v3299 = vpop.f32.mrb[0].mxu0
      %v3300 = vadd.f32 %v3211, %v3299
      %v3301 = vpop.f32.mrb[0].mxu0
      %v3302 = vadd.f32 %v3213, %v3301
      %3303 = vmatprep.mubr.f32.mxu0 %v2084
      %3304 = vmatmul.mubr.f32.gmra.mrb[0].mxu0 %v2082
      %v3305 = vpop.f32.mrb[0].mxu0
      %v3306 = vadd.f32 %v3217, %v3305
      %v3307 = vpop.f32.mrb[0].mxu0
      %v3308 = vadd.f32 %v3219, %v3307
      %3309 = vmatprep.mubr.f32.mxu0 %v2090
      %3310 = vmatmul.mubr.f32.gmra.mrb[0].mxu0 %v2088
      %v3311 = vpop.f32.mrb[0].mxu0
      %v3312 = vadd.f32 %v3223, %v3311
      %v3313 = vpop.f32.mrb[0].mxu0
      %v3314 = vadd.f32 %v3225, %v3313
      %3315 = vdwg.mxu0
      %3316 = vmatprep.subr.mxu0 %v2273
      %3317 = vmatpush1.msra.mxu0 %v2272
      %3318 = vmatprep.subr.mxu0 %v2277
      %3319 = vmatpush1.msra.mxu0 %v2276
      %3320 = vmatprep.subr.mxu0 %v2281
      %3321 = vmatpush1.msra.mxu0 %v2280
      %3322 = vmatprep.subr.mxu0 %v2285
      %3323 = vmatpush1.msra.mxu0 %v2284
      %3324 = vmatprep.subr.mxu0 %v2289
      %3325 = vmatpush1.msra.mxu0 %v2288
      %3326 = vmatprep.subr.mxu0 %v2293
      %3327 = vmatpush1.msra.mxu0 %v2292
      %3328 = vmatprep.subr.mxu0 %v2297
      %3329 = vmatpush1.msra.mxu0 %v2296
      %3330 = vmatprep.subr.mxu0 %v2301
      %3331 = vmatpush1.msra.mxu0 %v2300
      %3332 = vmatprep.subr.mxu0 %v2305
      %3333 = vmatpush1.msra.mxu0 %v2304
      %3334 = vmatprep.subr.mxu0 %v2309
      %3335 = vmatpush1.msra.mxu0 %v2308
      %3336 = vmatprep.subr.mxu0 %v2313
      %3337 = vmatpush1.msra.mxu0 %v2312
      %3338 = vmatprep.subr.mxu0 %v2317
      %3339 = vmatpush1.msra.mxu0 %v2316
      %3340 = vmatprep.subr.mxu0 %v2321
      %3341 = vmatpush1.msra.mxu0 %v2320
      %3342 = vmatprep.subr.mxu0 %v2325
      %3343 = vmatpush1.msra.mxu0 %v2324
      %3344 = vmatprep.subr.mxu0 %v2329
      %3345 = vmatpush1.msra.mxu0 %v2328
      %3346 = vmatprep.subr.mxu0 %v2333
      %3347 = vmatpush1.msra.mxu0 %v2332
      %3348 = vmatprep.subr.mxu0 %v2337
      %3349 = vmatpush1.msra.mxu0 %v2336
      %3350 = vmatprep.subr.mxu0 %v2341
      %3351 = vmatpush1.msra.mxu0 %v2340
      %3352 = vmatprep.subr.mxu0 %v2345
      %3353 = vmatpush1.msra.mxu0 %v2344
      %3354 = vmatprep.subr.mxu0 %v2349
      %3355 = vmatpush1.msra.mxu0 %v2348
      %3356 = vmatprep.subr.mxu0 %v2353
      %3357 = vmatpush1.msra.mxu0 %v2352
      %3358 = vmatprep.subr.mxu0 %v2357
      %3359 = vmatpush1.msra.mxu0 %v2356
      %3360 = vmatprep.subr.mxu0 %v2361
      %3361 = vmatpush1.msra.mxu0 %v2360
      %3362 = vmatprep.subr.mxu0 %v2365
      %3363 = vmatpush1.msra.mxu0 %v2364
      %3364 = vmatprep.subr.mxu0 %v2369
      %3365 = vmatpush1.msra.mxu0 %v2368
      %3366 = vmatprep.subr.mxu0 %v2373
      %3367 = vmatpush1.msra.mxu0 %v2372
      %3368 = vmatprep.subr.mxu0 %v2377
      %3369 = vmatpush1.msra.mxu0 %v2376
      %3370 = vmatprep.subr.mxu0 %v2381
      %3371 = vmatpush1.msra.mxu0 %v2380
      %3372 = vmatprep.subr.mxu0 %v2385
      %3373 = vmatpush1.msra.mxu0 %v2384
      %3374 = vmatprep.subr.mxu0 %v2389
      %3375 = vmatpush1.msra.mxu0 %v2388
      %3376 = vmatprep.subr.mxu0 %v2393
      %3377 = vmatpush1.msra.mxu0 %v2392
      %3378 = vmatprep.subr.mxu0 %v2397
      %3379 = vmatpush1.msra.mxu0 %v2396
      %3380 = vmatprep.mubr.f32.mxu0 %v1983
      %3381 = vmatmul.mubr.f32.gmra.mrb[0].mxu0 %v1981
      %v3382 = vpop.f32.mrb[0].mxu0
      %v3383 = vadd.f32 %v3116, %v3382
      %v3384 = vpop.f32.mrb[0].mxu0
      %v3385 = vadd.f32 %v3118, %v3384
      %3386 = vmatprep.mubr.f32.mxu0 %v1989
      %3387 = vmatmul.mubr.f32.gmra.mrb[0].mxu0 %v1987
      %v3388 = vpop.f32.mrb[0].mxu0
      %v3389 = vadd.f32 %v3122, %v3388
      %v3390 = vpop.f32.mrb[0].mxu0
      %v3391 = vadd.f32 %v3124, %v3390
      %3392 = vmatprep.mubr.f32.mxu0 %v1995
      %3393 = vmatmul.mubr.f32.gmra.mrb[0].mxu0 %v1993
      %v3394 = vpop.f32.mrb[0].mxu0
      %v3395 = vadd.f32 %v3128, %v3394
      %v3396 = vpop.f32.mrb[0].mxu0
      %v3397 = vadd.f32 %v3130, %v3396
      %3398 = vmatprep.mubr.f32.mxu0 %v2001
      %3399 = vmatmul.mubr.f32.gmra.mrb[0].mxu0 %v1999
      %v3400 = vpop.f32.mrb[0].mxu0
      %v3401 = vadd.f32 %v3134, %v3400
      %v3402 = vpop.f32.mrb[0].mxu0
      %v3403 = vadd.f32 %v3136, %v3402
      %3404 = vdwg.mxu0
      %3405 = vmatprep.subr.mxu0 %v2401
      %3406 = vmatpush1.msra.mxu0 %v2400
      %3407 = vmatprep.subr.mxu0 %v2405
      %3408 = vmatpush1.msra.mxu0 %v2404
      %3409 = vmatprep.subr.mxu0 %v2409
      %3410 = vmatpush1.msra.mxu0 %v2408
      %3411 = vmatprep.subr.mxu0 %v2413
      %3412 = vmatpush1.msra.mxu0 %v2412
      %3413 = vmatprep.subr.mxu0 %v2417
      %3414 = vmatpush1.msra.mxu0 %v2416
      %3415 = vmatprep.subr.mxu0 %v2421
      %3416 = vmatpush1.msra.mxu0 %v2420
      %3417 = vmatprep.subr.mxu0 %v2425
      %3418 = vmatpush1.msra.mxu0 %v2424
      %3419 = vmatprep.subr.mxu0 %v2429
      %3420 = vmatpush1.msra.mxu0 %v2428
      %3421 = vmatprep.subr.mxu0 %v2433
      %3422 = vmatpush1.msra.mxu0 %v2432
      %3423 = vmatprep.subr.mxu0 %v2437
      %3424 = vmatpush1.msra.mxu0 %v2436
      %3425 = vmatprep.subr.mxu0 %v2441
      %3426 = vmatpush1.msra.mxu0 %v2440
      %3427 = vmatprep.subr.mxu0 %v2445
      %3428 = vmatpush1.msra.mxu0 %v2444
      %3429 = vmatprep.subr.mxu0 %v2449
      %3430 = vmatpush1.msra.mxu0 %v2448
      %3431 = vmatprep.subr.mxu0 %v2453
      %3432 = vmatpush1.msra.mxu0 %v2452
      %3433 = vmatprep.subr.mxu0 %v2457
      %3434 = vmatpush1.msra.mxu0 %v2456
      %3435 = vmatprep.subr.mxu0 %v2461
      %3436 = vmatpush1.msra.mxu0 %v2460
      %3437 = vmatprep.subr.mxu0 %v2465
      %3438 = vmatpush1.msra.mxu0 %v2464
      %3439 = vmatprep.subr.mxu0 %v2469
      %3440 = vmatpush1.msra.mxu0 %v2468
      %3441 = vmatprep.subr.mxu0 %v2473
      %3442 = vmatpush1.msra.mxu0 %v2472
      %3443 = vmatprep.subr.mxu0 %v2477
      %3444 = vmatpush1.msra.mxu0 %v2476
      %3445 = vmatprep.subr.mxu0 %v2481
      %3446 = vmatpush1.msra.mxu0 %v2480
      %3447 = vmatprep.subr.mxu0 %v2485
      %3448 = vmatpush1.msra.mxu0 %v2484
      %3449 = vmatprep.subr.mxu0 %v2489
      %3450 = vmatpush1.msra.mxu0 %v2488
      %3451 = vmatprep.subr.mxu0 %v2493
      %3452 = vmatpush1.msra.mxu0 %v2492
      %3453 = vmatprep.subr.mxu0 %v2497
      %3454 = vmatpush1.msra.mxu0 %v2496
      %3455 = vmatprep.subr.mxu0 %v2501
      %3456 = vmatpush1.msra.mxu0 %v2500
      %3457 = vmatprep.subr.mxu0 %v2505
      %3458 = vmatpush1.msra.mxu0 %v2504
      %3459 = vmatprep.subr.mxu0 %v2509
      %3460 = vmatpush1.msra.mxu0 %v2508
      %3461 = vmatprep.subr.mxu0 %v2513
      %3462 = vmatpush1.msra.mxu0 %v2512
      %3463 = vmatprep.subr.mxu0 %v2517
      %3464 = vmatpush1.msra.mxu0 %v2516
      %3465 = vmatprep.subr.mxu0 %v2521
      %3466 = vmatpush1.msra.mxu0 %v2520
      %3467 = vmatprep.subr.mxu0 %v2525
      %3468 = vmatpush1.msra.mxu0 %v2524
      %3469 = vmatprep.mubr.f32.mxu0 %v2072
      %3470 = vmatmul.mubr.f32.gmra.mrb[0].mxu0 %v2070
      %v3471 = vpop.f32.mrb[0].mxu0
      %v3472 = vadd.f32 %v3383, %v3471
      %v3473 = vpop.f32.mrb[0].mxu0
      %v3474 = vadd.f32 %v3385, %v3473
      %3475 = vmatprep.mubr.f32.mxu0 %v2078
      %3476 = vmatmul.mubr.f32.gmra.mrb[0].mxu0 %v2076
      %v3477 = vpop.f32.mrb[0].mxu0
      %v3478 = vadd.f32 %v3389, %v3477
      %v3479 = vpop.f32.mrb[0].mxu0
      %v3480 = vadd.f32 %v3391, %v3479
      %3481 = vmatprep.mubr.f32.mxu0 %v2084
      %3482 = vmatmul.mubr.f32.gmra.mrb[0].mxu0 %v2082
      %v3483 = vpop.f32.mrb[0].mxu0
      %v3484 = vadd.f32 %v3395, %v3483
      %v3485 = vpop.f32.mrb[0].mxu0
      %v3486 = vadd.f32 %v3397, %v3485
      %3487 = vmatprep.mubr.f32.mxu0 %v2090
      %3488 = vmatmul.mubr.f32.gmra.mrb[0].mxu0 %v2088
      %v3489 = vpop.f32.mrb[0].mxu0
      %v3490 = vadd.f32 %v3401, %v3489
      %v3491 = vpop.f32.mrb[0].mxu0
      %v3492 = vadd.f32 %v3403, %v3491
      %3493 = vdwg.mxu0
      %v3494 = vld [vmem:[%s7] sm:$0xff]
      %v3495 = vld [vmem:[%s7 + $0x8] sm:$0xff]
      %v3496 = vld [vmem:[%s7 + $0x10] sm:$0xff]
      %v3497 = vld [vmem:[%s7 + $0x18] sm:$0xff]
      %v3498 = vld [vmem:[%s7 + $0x20] sm:$0xff]
      %v3499 = vld [vmem:[%s7 + $0x28] sm:$0xff]
      %v3500 = vld [vmem:[%s7 + $0x30] sm:$0xff]
      %v3501 = vld [vmem:[%s7 + $0x38] sm:$0xff]
      %v3502 = vld [vmem:[%s7 + $0x40] sm:$0xff]
      %v3503 = vld [vmem:[%s7 + $0x48] sm:$0xff]
      %v3504 = vld [vmem:[%s7 + $0x50] sm:$0xff]
      %v3505 = vld [vmem:[%s7 + $0x58] sm:$0xff]
      %v3506 = vld [vmem:[%s7 + $0x60] sm:$0xff]
      %v3507 = vld [vmem:[%s7 + $0x68] sm:$0xff]
      %v3508 = vld [vmem:[%s7 + $0x70] sm:$0xff]
      %v3509 = vld [vmem:[%s7 + $0x78] sm:$0xff]
      %v3510 = vld [vmem:[%s7 + $0x80] sm:$0xff]
      %v3511 = vld [vmem:[%s7 + $0x88] sm:$0xff]
      %v3512 = vld [vmem:[%s7 + $0x90] sm:$0xff]
      %v3513 = vld [vmem:[%s7 + $0x98] sm:$0xff]
      %v3514 = vld [vmem:[%s7 + $0xa0] sm:$0xff]
      %v3515 = vld [vmem:[%s7 + $0xa8] sm:$0xff]
      %v3516 = vld [vmem:[%s7 + $0xb0] sm:$0xff]
      %v3517 = vld [vmem:[%s7 + $0xb8] sm:$0xff]
      %v3518 = vld [vmem:[%s7 + $0xc0] sm:$0xff]
      %v3519 = vld [vmem:[%s7 + $0xc8] sm:$0xff]
      %v3520 = vld [vmem:[%s7 + $0xd0] sm:$0xff]
      %v3521 = vld [vmem:[%s7 + $0xd8] sm:$0xff]
      %v3522 = vld [vmem:[%s7 + $0xe0] sm:$0xff]
      %v3523 = vld [vmem:[%s7 + $0xe8] sm:$0xff]
      %v3524 = vld [vmem:[%s7 + $0xf0] sm:$0xff]
      %v3525 = vld [vmem:[%s7 + $0xf8] sm:$0xff]
      %v3526 = vld [vmem:[%s7 + $0x100] sm:$0xff]
      %v3527 = vld [vmem:[%s7 + $0x108] sm:$0xff]
      %v3528 = vld [vmem:[%s7 + $0x110] sm:$0xff]
      %v3529 = vld [vmem:[%s7 + $0x118] sm:$0xff]
      %v3530 = vld [vmem:[%s7 + $0x120] sm:$0xff]
      %v3531 = vld [vmem:[%s7 + $0x128] sm:$0xff]
      %v3532 = vld [vmem:[%s7 + $0x130] sm:$0xff]
      %v3533 = vld [vmem:[%s7 + $0x138] sm:$0xff]
      %v3534 = vld [vmem:[%s7 + $0x140] sm:$0xff]
      %v3535 = vld [vmem:[%s7 + $0x148] sm:$0xff]
      %v3536 = vld [vmem:[%s7 + $0x150] sm:$0xff]
      %v3537 = vld [vmem:[%s7 + $0x158] sm:$0xff]
      %v3538 = vld [vmem:[%s7 + $0x160] sm:$0xff]
      %v3539 = vld [vmem:[%s7 + $0x168] sm:$0xff]
      %v3540 = vld [vmem:[%s7 + $0x170] sm:$0xff]
      %v3541 = vld [vmem:[%s7 + $0x178] sm:$0xff]
      %v3542 = vld [vmem:[%s7 + $0x180] sm:$0xff]
      %v3543 = vld [vmem:[%s7 + $0x188] sm:$0xff]
      %v3544 = vld [vmem:[%s7 + $0x190] sm:$0xff]
      %v3545 = vld [vmem:[%s7 + $0x198] sm:$0xff]
      %v3546 = vld [vmem:[%s7 + $0x1a0] sm:$0xff]
      %v3547 = vld [vmem:[%s7 + $0x1a8] sm:$0xff]
      %v3548 = vld [vmem:[%s7 + $0x1b0] sm:$0xff]
      %v3549 = vld [vmem:[%s7 + $0x1b8] sm:$0xff]
      %v3550 = vld [vmem:[%s7 + $0x1c0] sm:$0xff]
      %v3551 = vld [vmem:[%s7 + $0x1c8] sm:$0xff]
      %v3552 = vld [vmem:[%s7 + $0x1d0] sm:$0xff]
      %v3553 = vld [vmem:[%s7 + $0x1d8] sm:$0xff]
      %v3554 = vld [vmem:[%s7 + $0x1e0] sm:$0xff]
      %v3555 = vld [vmem:[%s7 + $0x1e8] sm:$0xff]
      %v3556 = vld [vmem:[%s7 + $0x1f0] sm:$0xff]
      %v3557 = vld [vmem:[%s7 + $0x1f8] sm:$0xff]
      %v3558 = vld [vmem:[%s7 + $0x200] sm:$0xff]
      %v3559 = vld [vmem:[%s7 + $0x208] sm:$0xff]
      %v3560 = vld [vmem:[%s7 + $0x210] sm:$0xff]
      %v3561 = vld [vmem:[%s7 + $0x218] sm:$0xff]
      %v3562 = vld [vmem:[%s7 + $0x220] sm:$0xff]
      %v3563 = vld [vmem:[%s7 + $0x228] sm:$0xff]
      %v3564 = vld [vmem:[%s7 + $0x230] sm:$0xff]
      %v3565 = vld [vmem:[%s7 + $0x238] sm:$0xff]
      %v3566 = vld [vmem:[%s7 + $0x240] sm:$0xff]
      %v3567 = vld [vmem:[%s7 + $0x248] sm:$0xff]
      %v3568 = vld [vmem:[%s7 + $0x250] sm:$0xff]
      %v3569 = vld [vmem:[%s7 + $0x258] sm:$0xff]
      %v3570 = vld [vmem:[%s7 + $0x260] sm:$0xff]
      %v3571 = vld [vmem:[%s7 + $0x268] sm:$0xff]
      %v3572 = vld [vmem:[%s7 + $0x270] sm:$0xff]
      %v3573 = vld [vmem:[%s7 + $0x278] sm:$0xff]
      %v3574 = vld [vmem:[%s7 + $0x280] sm:$0xff]
      %v3575 = vld [vmem:[%s7 + $0x288] sm:$0xff]
      %v3576 = vld [vmem:[%s7 + $0x290] sm:$0xff]
      %v3577 = vld [vmem:[%s7 + $0x298] sm:$0xff]
      %v3578 = vld [vmem:[%s7 + $0x2a0] sm:$0xff]
      %v3579 = vld [vmem:[%s7 + $0x2a8] sm:$0xff]
      %v3580 = vld [vmem:[%s7 + $0x2b0] sm:$0xff]
      %v3581 = vld [vmem:[%s7 + $0x2b8] sm:$0xff]
      %v3582 = vld [vmem:[%s7 + $0x2c0] sm:$0xff]
      %v3583 = vld [vmem:[%s7 + $0x2c8] sm:$0xff]
      %v3584 = vld [vmem:[%s7 + $0x2d0] sm:$0xff]
      %v3585 = vld [vmem:[%s7 + $0x2d8] sm:$0xff]
      %v3586 = vld [vmem:[%s7 + $0x2e0] sm:$0xff]
      %v3587 = vld [vmem:[%s7 + $0x2e8] sm:$0xff]
      %v3588 = vld [vmem:[%s7 + $0x2f0] sm:$0xff]
      %v3589 = vld [vmem:[%s7 + $0x2f8] sm:$0xff]
      %v3590 = vld [vmem:[%s7 + $0x300] sm:$0xff]
      %v3591 = vld [vmem:[%s7 + $0x308] sm:$0xff]
      %v3592 = vld [vmem:[%s7 + $0x310] sm:$0xff]
      %v3593 = vld [vmem:[%s7 + $0x318] sm:$0xff]
      %v3594 = vld [vmem:[%s7 + $0x320] sm:$0xff]
      %v3595 = vld [vmem:[%s7 + $0x328] sm:$0xff]
      %v3596 = vld [vmem:[%s7 + $0x330] sm:$0xff]
      %v3597 = vld [vmem:[%s7 + $0x338] sm:$0xff]
      %v3598 = vld [vmem:[%s7 + $0x340] sm:$0xff]
      %v3599 = vld [vmem:[%s7 + $0x348] sm:$0xff]
      %v3600 = vld [vmem:[%s7 + $0x350] sm:$0xff]
      %v3601 = vld [vmem:[%s7 + $0x358] sm:$0xff]
      %v3602 = vld [vmem:[%s7 + $0x360] sm:$0xff]
      %v3603 = vld [vmem:[%s7 + $0x368] sm:$0xff]
      %v3604 = vld [vmem:[%s7 + $0x370] sm:$0xff]
      %v3605 = vld [vmem:[%s7 + $0x378] sm:$0xff]
      %v3606 = vld [vmem:[%s7 + $0x380] sm:$0xff]
      %v3607 = vld [vmem:[%s7 + $0x388] sm:$0xff]
      %v3608 = vld [vmem:[%s7 + $0x390] sm:$0xff]
      %v3609 = vld [vmem:[%s7 + $0x398] sm:$0xff]
      %v3610 = vld [vmem:[%s7 + $0x3a0] sm:$0xff]
      %v3611 = vld [vmem:[%s7 + $0x3a8] sm:$0xff]
      %v3612 = vld [vmem:[%s7 + $0x3b0] sm:$0xff]
      %v3613 = vld [vmem:[%s7 + $0x3b8] sm:$0xff]
      %v3614 = vld [vmem:[%s7 + $0x3c0] sm:$0xff]
      %v3615 = vld [vmem:[%s7 + $0x3c8] sm:$0xff]
      %v3616 = vld [vmem:[%s7 + $0x3d0] sm:$0xff]
      %v3617 = vld [vmem:[%s7 + $0x3d8] sm:$0xff]
      %v3618 = vld [vmem:[%s7 + $0x3e0] sm:$0xff]
      %v3619 = vld [vmem:[%s7 + $0x3e8] sm:$0xff]
      %v3620 = vld [vmem:[%s7 + $0x3f0] sm:$0xff]
      %v3621 = vld [vmem:[%s7 + $0x3f8] sm:$0xff]
      %v3622 = vld [vmem:[%s7 + $0x400] sm:$0xff]
      %v3623 = vld [vmem:[%s7 + $0x408] sm:$0xff]
      %v3624 = vld [vmem:[%s7 + $0x410] sm:$0xff]
      %v3625 = vld [vmem:[%s7 + $0x418] sm:$0xff]
      %v3626 = vld [vmem:[%s7 + $0x420] sm:$0xff]
      %v3627 = vld [vmem:[%s7 + $0x428] sm:$0xff]
      %v3628 = vld [vmem:[%s7 + $0x430] sm:$0xff]
      %v3629 = vld [vmem:[%s7 + $0x438] sm:$0xff]
      %v3630 = vld [vmem:[%s7 + $0x440] sm:$0xff]
      %v3631 = vld [vmem:[%s7 + $0x448] sm:$0xff]
      %v3632 = vld [vmem:[%s7 + $0x450] sm:$0xff]
      %v3633 = vld [vmem:[%s7 + $0x458] sm:$0xff]
      %v3634 = vld [vmem:[%s7 + $0x460] sm:$0xff]
      %v3635 = vld [vmem:[%s7 + $0x468] sm:$0xff]
      %v3636 = vld [vmem:[%s7 + $0x470] sm:$0xff]
      %v3637 = vld [vmem:[%s7 + $0x478] sm:$0xff]
      %v3638 = vld [vmem:[%s7 + $0x480] sm:$0xff]
      %v3639 = vld [vmem:[%s7 + $0x488] sm:$0xff]
      %v3640 = vld [vmem:[%s7 + $0x490] sm:$0xff]
      %v3641 = vld [vmem:[%s7 + $0x498] sm:$0xff]
      %v3642 = vld [vmem:[%s7 + $0x4a0] sm:$0xff]
      %v3643 = vld [vmem:[%s7 + $0x4a8] sm:$0xff]
      %v3644 = vld [vmem:[%s7 + $0x4b0] sm:$0xff]
      %v3645 = vld [vmem:[%s7 + $0x4b8] sm:$0xff]
      %v3646 = vld [vmem:[%s7 + $0x4c0] sm:$0xff]
      %v3647 = vld [vmem:[%s7 + $0x4c8] sm:$0xff]
      %v3648 = vld [vmem:[%s7 + $0x4d0] sm:$0xff]
      %v3649 = vld [vmem:[%s7 + $0x4d8] sm:$0xff]
      %v3650 = vld [vmem:[%s7 + $0x4e0] sm:$0xff]
      %v3651 = vld [vmem:[%s7 + $0x4e8] sm:$0xff]
      %v3652 = vld [vmem:[%s7 + $0x4f0] sm:$0xff]
      %v3653 = vld [vmem:[%s7 + $0x4f8] sm:$0xff]
      %v3654 = vld [vmem:[%s7 + $0x500] sm:$0xff]
      %v3655 = vld [vmem:[%s7 + $0x508] sm:$0xff]
      %v3656 = vld [vmem:[%s7 + $0x510] sm:$0xff]
      %v3657 = vld [vmem:[%s7 + $0x518] sm:$0xff]
      %v3658 = vld [vmem:[%s7 + $0x520] sm:$0xff]
      %v3659 = vld [vmem:[%s7 + $0x528] sm:$0xff]
      %v3660 = vld [vmem:[%s7 + $0x530] sm:$0xff]
      %v3661 = vld [vmem:[%s7 + $0x538] sm:$0xff]
      %v3662 = vld [vmem:[%s7 + $0x540] sm:$0xff]
      %v3663 = vld [vmem:[%s7 + $0x548] sm:$0xff]
      %v3664 = vld [vmem:[%s7 + $0x550] sm:$0xff]
      %v3665 = vld [vmem:[%s7 + $0x558] sm:$0xff]
      %v3666 = vld [vmem:[%s7 + $0x560] sm:$0xff]
      %v3667 = vld [vmem:[%s7 + $0x568] sm:$0xff]
      %v3668 = vld [vmem:[%s7 + $0x570] sm:$0xff]
      %v3669 = vld [vmem:[%s7 + $0x578] sm:$0xff]
      %v3670 = vld [vmem:[%s7 + $0x580] sm:$0xff]
      %v3671 = vld [vmem:[%s7 + $0x588] sm:$0xff]
      %v3672 = vld [vmem:[%s7 + $0x590] sm:$0xff]
      %v3673 = vld [vmem:[%s7 + $0x598] sm:$0xff]
      %v3674 = vld [vmem:[%s7 + $0x5a0] sm:$0xff]
      %v3675 = vld [vmem:[%s7 + $0x5a8] sm:$0xff]
      %v3676 = vld [vmem:[%s7 + $0x5b0] sm:$0xff]
      %v3677 = vld [vmem:[%s7 + $0x5b8] sm:$0xff]
      %v3678 = vld [vmem:[%s7 + $0x5c0] sm:$0xff]
      %v3679 = vld [vmem:[%s7 + $0x5c8] sm:$0xff]
      %v3680 = vld [vmem:[%s7 + $0x5d0] sm:$0xff]
      %v3681 = vld [vmem:[%s7 + $0x5d8] sm:$0xff]
      %v3682 = vld [vmem:[%s7 + $0x5e0] sm:$0xff]
      %v3683 = vld [vmem:[%s7 + $0x5e8] sm:$0xff]
      %v3684 = vld [vmem:[%s7 + $0x5f0] sm:$0xff]
      %v3685 = vld [vmem:[%s7 + $0x5f8] sm:$0xff]
      %v3686 = vld [vmem:[%s7 + $0x600] sm:$0xff]
      %v3687 = vld [vmem:[%s7 + $0x608] sm:$0xff]
      %v3688 = vld [vmem:[%s7 + $0x610] sm:$0xff]
      %v3689 = vld [vmem:[%s7 + $0x618] sm:$0xff]
      %v3690 = vld [vmem:[%s7 + $0x620] sm:$0xff]
      %v3691 = vld [vmem:[%s7 + $0x628] sm:$0xff]
      %v3692 = vld [vmem:[%s7 + $0x630] sm:$0xff]
      %v3693 = vld [vmem:[%s7 + $0x638] sm:$0xff]
      %v3694 = vld [vmem:[%s7 + $0x640] sm:$0xff]
      %v3695 = vld [vmem:[%s7 + $0x648] sm:$0xff]
      %v3696 = vld [vmem:[%s7 + $0x650] sm:$0xff]
      %v3697 = vld [vmem:[%s7 + $0x658] sm:$0xff]
      %v3698 = vld [vmem:[%s7 + $0x660] sm:$0xff]
      %v3699 = vld [vmem:[%s7 + $0x668] sm:$0xff]
      %v3700 = vld [vmem:[%s7 + $0x670] sm:$0xff]
      %v3701 = vld [vmem:[%s7 + $0x678] sm:$0xff]
      %v3702 = vld [vmem:[%s7 + $0x680] sm:$0xff]
      %v3703 = vld [vmem:[%s7 + $0x688] sm:$0xff]
      %v3704 = vld [vmem:[%s7 + $0x690] sm:$0xff]
      %v3705 = vld [vmem:[%s7 + $0x698] sm:$0xff]
      %v3706 = vld [vmem:[%s7 + $0x6a0] sm:$0xff]
      %v3707 = vld [vmem:[%s7 + $0x6a8] sm:$0xff]
      %v3708 = vld [vmem:[%s7 + $0x6b0] sm:$0xff]
      %v3709 = vld [vmem:[%s7 + $0x6b8] sm:$0xff]
      %v3710 = vld [vmem:[%s7 + $0x6c0] sm:$0xff]
      %v3711 = vld [vmem:[%s7 + $0x6c8] sm:$0xff]
      %v3712 = vld [vmem:[%s7 + $0x6d0] sm:$0xff]
      %v3713 = vld [vmem:[%s7 + $0x6d8] sm:$0xff]
      %v3714 = vld [vmem:[%s7 + $0x6e0] sm:$0xff]
      %v3715 = vld [vmem:[%s7 + $0x6e8] sm:$0xff]
      %v3716 = vld [vmem:[%s7 + $0x6f0] sm:$0xff]
      %v3717 = vld [vmem:[%s7 + $0x6f8] sm:$0xff]
      %v3718 = vld [vmem:[%s7 + $0x700] sm:$0xff]
      %v3719 = vld [vmem:[%s7 + $0x708] sm:$0xff]
      %v3720 = vld [vmem:[%s7 + $0x710] sm:$0xff]
      %v3721 = vld [vmem:[%s7 + $0x718] sm:$0xff]
      %v3722 = vld [vmem:[%s7 + $0x720] sm:$0xff]
      %v3723 = vld [vmem:[%s7 + $0x728] sm:$0xff]
      %v3724 = vld [vmem:[%s7 + $0x730] sm:$0xff]
      %v3725 = vld [vmem:[%s7 + $0x738] sm:$0xff]
      %v3726 = vld [vmem:[%s7 + $0x740] sm:$0xff]
      %v3727 = vld [vmem:[%s7 + $0x748] sm:$0xff]
      %v3728 = vld [vmem:[%s7 + $0x750] sm:$0xff]
      %v3729 = vld [vmem:[%s7 + $0x758] sm:$0xff]
      %v3730 = vld [vmem:[%s7 + $0x760] sm:$0xff]
      %v3731 = vld [vmem:[%s7 + $0x768] sm:$0xff]
      %v3732 = vld [vmem:[%s7 + $0x770] sm:$0xff]
      %v3733 = vld [vmem:[%s7 + $0x778] sm:$0xff]
      %v3734 = vld [vmem:[%s7 + $0x780] sm:$0xff]
      %v3735 = vld [vmem:[%s7 + $0x788] sm:$0xff]
      %v3736 = vld [vmem:[%s7 + $0x790] sm:$0xff]
      %v3737 = vld [vmem:[%s7 + $0x798] sm:$0xff]
      %v3738 = vld [vmem:[%s7 + $0x7a0] sm:$0xff]
      %v3739 = vld [vmem:[%s7 + $0x7a8] sm:$0xff]
      %v3740 = vld [vmem:[%s7 + $0x7b0] sm:$0xff]
      %v3741 = vld [vmem:[%s7 + $0x7b8] sm:$0xff]
      %v3742 = vld [vmem:[%s7 + $0x7c0] sm:$0xff]
      %v3743 = vld [vmem:[%s7 + $0x7c8] sm:$0xff]
      %v3744 = vld [vmem:[%s7 + $0x7d0] sm:$0xff]
      %v3745 = vld [vmem:[%s7 + $0x7d8] sm:$0xff]
      %v3746 = vld [vmem:[%s7 + $0x7e0] sm:$0xff]
      %v3747 = vld [vmem:[%s7 + $0x7e8] sm:$0xff]
      %v3748 = vld [vmem:[%s7 + $0x7f0] sm:$0xff]
      %v3749 = vld [vmem:[%s7 + $0x7f8] sm:$0xff]
      %3750 = vmatprep.subr.mxu0 %v3495
      %3751 = vmatpush1.msra.mxu0 %v3494
      %3752 = vmatprep.subr.mxu0 %v3499
      %3753 = vmatpush1.msra.mxu0 %v3498
      %3754 = vmatprep.subr.mxu0 %v3503
      %3755 = vmatpush1.msra.mxu0 %v3502
      %3756 = vmatprep.subr.mxu0 %v3507
      %3757 = vmatpush1.msra.mxu0 %v3506
      %3758 = vmatprep.subr.mxu0 %v3511
      %3759 = vmatpush1.msra.mxu0 %v3510
      %3760 = vmatprep.subr.mxu0 %v3515
      %3761 = vmatpush1.msra.mxu0 %v3514
      %3762 = vmatprep.subr.mxu0 %v3519
      %3763 = vmatpush1.msra.mxu0 %v3518
      %3764 = vmatprep.subr.mxu0 %v3523
      %3765 = vmatpush1.msra.mxu0 %v3522
      %3766 = vmatprep.subr.mxu0 %v3527
      %3767 = vmatpush1.msra.mxu0 %v3526
      %3768 = vmatprep.subr.mxu0 %v3531
      %3769 = vmatpush1.msra.mxu0 %v3530
      %3770 = vmatprep.subr.mxu0 %v3535
      %3771 = vmatpush1.msra.mxu0 %v3534
      %3772 = vmatprep.subr.mxu0 %v3539
      %3773 = vmatpush1.msra.mxu0 %v3538
      %3774 = vmatprep.subr.mxu0 %v3543
      %3775 = vmatpush1.msra.mxu0 %v3542
      %3776 = vmatprep.subr.mxu0 %v3547
      %3777 = vmatpush1.msra.mxu0 %v3546
      %3778 = vmatprep.subr.mxu0 %v3551
      %3779 = vmatpush1.msra.mxu0 %v3550
      %3780 = vmatprep.subr.mxu0 %v3555
      %3781 = vmatpush1.msra.mxu0 %v3554
      %3782 = vmatprep.subr.mxu0 %v3559
      %3783 = vmatpush1.msra.mxu0 %v3558
      %3784 = vmatprep.subr.mxu0 %v3563
      %3785 = vmatpush1.msra.mxu0 %v3562
      %3786 = vmatprep.subr.mxu0 %v3567
      %3787 = vmatpush1.msra.mxu0 %v3566
      %3788 = vmatprep.subr.mxu0 %v3571
      %3789 = vmatpush1.msra.mxu0 %v3570
      %3790 = vmatprep.subr.mxu0 %v3575
      %3791 = vmatpush1.msra.mxu0 %v3574
      %3792 = vmatprep.subr.mxu0 %v3579
      %3793 = vmatpush1.msra.mxu0 %v3578
      %3794 = vmatprep.subr.mxu0 %v3583
      %3795 = vmatpush1.msra.mxu0 %v3582
      %3796 = vmatprep.subr.mxu0 %v3587
      %3797 = vmatpush1.msra.mxu0 %v3586
      %3798 = vmatprep.subr.mxu0 %v3591
      %3799 = vmatpush1.msra.mxu0 %v3590
      %3800 = vmatprep.subr.mxu0 %v3595
      %3801 = vmatpush1.msra.mxu0 %v3594
      %3802 = vmatprep.subr.mxu0 %v3599
      %3803 = vmatpush1.msra.mxu0 %v3598
      %3804 = vmatprep.subr.mxu0 %v3603
      %3805 = vmatpush1.msra.mxu0 %v3602
      %3806 = vmatprep.subr.mxu0 %v3607
      %3807 = vmatpush1.msra.mxu0 %v3606
      %3808 = vmatprep.subr.mxu0 %v3611
      %3809 = vmatpush1.msra.mxu0 %v3610
      %3810 = vmatprep.subr.mxu0 %v3615
      %3811 = vmatpush1.msra.mxu0 %v3614
      %3812 = vmatprep.subr.mxu0 %v3619
      %3813 = vmatpush1.msra.mxu0 %v3618
      %3814 = vmatprep.mubr.f32.mxu0 %v2161
      %3815 = vmatmul.mubr.f32.gmra.mrb[0].mxu0 %v2159
      %v3816 = vpop.f32.mrb[0].mxu0
      %v3817 = vadd.f32 0.0, %v3816
      %v3818 = vpop.f32.mrb[0].mxu0
      %v3819 = vadd.f32 0.0, %v3818
      %3820 = vmatprep.mubr.f32.mxu0 %v2167
      %3821 = vmatmul.mubr.f32.gmra.mrb[0].mxu0 %v2165
      %v3822 = vpop.f32.mrb[0].mxu0
      %v3823 = vadd.f32 0.0, %v3822
      %v3824 = vpop.f32.mrb[0].mxu0
      %v3825 = vadd.f32 0.0, %v3824
      %3826 = vmatprep.mubr.f32.mxu0 %v2173
      %3827 = vmatmul.mubr.f32.gmra.mrb[0].mxu0 %v2171
      %v3828 = vpop.f32.mrb[0].mxu0
      %v3829 = vadd.f32 0.0, %v3828
      %v3830 = vpop.f32.mrb[0].mxu0
      %v3831 = vadd.f32 0.0, %v3830
      %3832 = vmatprep.mubr.f32.mxu0 %v2179
      %3833 = vmatmul.mubr.f32.gmra.mrb[0].mxu0 %v2177
      %v3834 = vpop.f32.mrb[0].mxu0
      %v3835 = vadd.f32 0.0, %v3834
      %v3836 = vpop.f32.mrb[0].mxu0
      %v3837 = vadd.f32 0.0, %v3836
      %3838 = vdwg.mxu0
      %3839 = vmatprep.subr.mxu0 %v3623
      %3840 = vmatpush1.msra.mxu0 %v3622
      %3841 = vmatprep.subr.mxu0 %v3627
      %3842 = vmatpush1.msra.mxu0 %v3626
      %3843 = vmatprep.subr.mxu0 %v3631
      %3844 = vmatpush1.msra.mxu0 %v3630
      %3845 = vmatprep.subr.mxu0 %v3635
      %3846 = vmatpush1.msra.mxu0 %v3634
      %3847 = vmatprep.subr.mxu0 %v3639
      %3848 = vmatpush1.msra.mxu0 %v3638
      %3849 = vmatprep.subr.mxu0 %v3643
      %3850 = vmatpush1.msra.mxu0 %v3642
      %3851 = vmatprep.subr.mxu0 %v3647
      %3852 = vmatpush1.msra.mxu0 %v3646
      %3853 = vmatprep.subr.mxu0 %v3651
      %3854 = vmatpush1.msra.mxu0 %v3650
      %3855 = vmatprep.subr.mxu0 %v3655
      %3856 = vmatpush1.msra.mxu0 %v3654
      %3857 = vmatprep.subr.mxu0 %v3659
      %3858 = vmatpush1.msra.mxu0 %v3658
      %3859 = vmatprep.subr.mxu0 %v3663
      %3860 = vmatpush1.msra.mxu0 %v3662
      %3861 = vmatprep.subr.mxu0 %v3667
      %3862 = vmatpush1.msra.mxu0 %v3666
      %3863 = vmatprep.subr.mxu0 %v3671
      %3864 = vmatpush1.msra.mxu0 %v3670
      %3865 = vmatprep.subr.mxu0 %v3675
      %3866 = vmatpush1.msra.mxu0 %v3674
      %3867 = vmatprep.subr.mxu0 %v3679
      %3868 = vmatpush1.msra.mxu0 %v3678
      %3869 = vmatprep.subr.mxu0 %v3683
      %3870 = vmatpush1.msra.mxu0 %v3682
      %3871 = vmatprep.subr.mxu0 %v3687
      %3872 = vmatpush1.msra.mxu0 %v3686
      %3873 = vmatprep.subr.mxu0 %v3691
      %3874 = vmatpush1.msra.mxu0 %v3690
      %3875 = vmatprep.subr.mxu0 %v3695
      %3876 = vmatpush1.msra.mxu0 %v3694
      %3877 = vmatprep.subr.mxu0 %v3699
      %3878 = vmatpush1.msra.mxu0 %v3698
      %3879 = vmatprep.subr.mxu0 %v3703
      %3880 = vmatpush1.msra.mxu0 %v3702
      %3881 = vmatprep.subr.mxu0 %v3707
      %3882 = vmatpush1.msra.mxu0 %v3706
      %3883 = vmatprep.subr.mxu0 %v3711
      %3884 = vmatpush1.msra.mxu0 %v3710
      %3885 = vmatprep.subr.mxu0 %v3715
      %3886 = vmatpush1.msra.mxu0 %v3714
      %3887 = vmatprep.subr.mxu0 %v3719
      %3888 = vmatpush1.msra.mxu0 %v3718
      %3889 = vmatprep.subr.mxu0 %v3723
      %3890 = vmatpush1.msra.mxu0 %v3722
      %3891 = vmatprep.subr.mxu0 %v3727
      %3892 = vmatpush1.msra.mxu0 %v3726
      %3893 = vmatprep.subr.mxu0 %v3731
      %3894 = vmatpush1.msra.mxu0 %v3730
      %3895 = vmatprep.subr.mxu0 %v3735
      %3896 = vmatpush1.msra.mxu0 %v3734
      %3897 = vmatprep.subr.mxu0 %v3739
      %3898 = vmatpush1.msra.mxu0 %v3738
      %3899 = vmatprep.subr.mxu0 %v3743
      %3900 = vmatpush1.msra.mxu0 %v3742
      %3901 = vmatprep.subr.mxu0 %v3747
      %3902 = vmatpush1.msra.mxu0 %v3746
      %3903 = vmatprep.mubr.f32.mxu0 %v2250
      %3904 = vmatmul.mubr.f32.gmra.mrb[0].mxu0 %v2248
      %v3905 = vpop.f32.mrb[0].mxu0
      %v3906 = vadd.f32 %v3817, %v3905
      %v3907 = vpop.f32.mrb[0].mxu0
      %v3908 = vadd.f32 %v3819, %v3907
      %3909 = vmatprep.mubr.f32.mxu0 %v2256
      %3910 = vmatmul.mubr.f32.gmra.mrb[0].mxu0 %v2254
      %v3911 = vpop.f32.mrb[0].mxu0
      %v3912 = vadd.f32 %v3823, %v3911
      %v3913 = vpop.f32.mrb[0].mxu0
      %v3914 = vadd.f32 %v3825, %v3913
      %3915 = vmatprep.mubr.f32.mxu0 %v2262
      %3916 = vmatmul.mubr.f32.gmra.mrb[0].mxu0 %v2260
      %v3917 = vpop.f32.mrb[0].mxu0
      %v3918 = vadd.f32 %v3829, %v3917
      %v3919 = vpop.f32.mrb[0].mxu0
      %v3920 = vadd.f32 %v3831, %v3919
      %3921 = vmatprep.mubr.f32.mxu0 %v2268
      %3922 = vmatmul.mubr.f32.gmra.mrb[0].mxu0 %v2266
      %v3923 = vpop.f32.mrb[0].mxu0
      %v3924 = vadd.f32 %v3835, %v3923
      %v3925 = vpop.f32.mrb[0].mxu0
      %v3926 = vadd.f32 %v3837, %v3925
      %3927 = vdwg.mxu0
      %3928 = vmatprep.subr.mxu0 %v3497
      %3929 = vmatpush1.msra.mxu0 %v3496
      %3930 = vmatprep.subr.mxu0 %v3501
      %3931 = vmatpush1.msra.mxu0 %v3500
      %3932 = vmatprep.subr.mxu0 %v3505
      %3933 = vmatpush1.msra.mxu0 %v3504
      %3934 = vmatprep.subr.mxu0 %v3509
      %3935 = vmatpush1.msra.mxu0 %v3508
      %3936 = vmatprep.subr.mxu0 %v3513
      %3937 = vmatpush1.msra.mxu0 %v3512
      %3938 = vmatprep.subr.mxu0 %v3517
      %3939 = vmatpush1.msra.mxu0 %v3516
      %3940 = vmatprep.subr.mxu0 %v3521
      %3941 = vmatpush1.msra.mxu0 %v3520
      %3942 = vmatprep.subr.mxu0 %v3525
      %3943 = vmatpush1.msra.mxu0 %v3524
      %3944 = vmatprep.subr.mxu0 %v3529
      %3945 = vmatpush1.msra.mxu0 %v3528
      %3946 = vmatprep.subr.mxu0 %v3533
      %3947 = vmatpush1.msra.mxu0 %v3532
      %3948 = vmatprep.subr.mxu0 %v3537
      %3949 = vmatpush1.msra.mxu0 %v3536
      %3950 = vmatprep.subr.mxu0 %v3541
      %3951 = vmatpush1.msra.mxu0 %v3540
      %3952 = vmatprep.subr.mxu0 %v3545
      %3953 = vmatpush1.msra.mxu0 %v3544
      %3954 = vmatprep.subr.mxu0 %v3549
      %3955 = vmatpush1.msra.mxu0 %v3548
      %3956 = vmatprep.subr.mxu0 %v3553
      %3957 = vmatpush1.msra.mxu0 %v3552
      %3958 = vmatprep.subr.mxu0 %v3557
      %3959 = vmatpush1.msra.mxu0 %v3556
      %3960 = vmatprep.subr.mxu0 %v3561
      %3961 = vmatpush1.msra.mxu0 %v3560
      %3962 = vmatprep.subr.mxu0 %v3565
      %3963 = vmatpush1.msra.mxu0 %v3564
      %3964 = vmatprep.subr.mxu0 %v3569
      %3965 = vmatpush1.msra.mxu0 %v3568
      %3966 = vmatprep.subr.mxu0 %v3573
      %3967 = vmatpush1.msra.mxu0 %v3572
      %3968 = vmatprep.subr.mxu0 %v3577
      %3969 = vmatpush1.msra.mxu0 %v3576
      %3970 = vmatprep.subr.mxu0 %v3581
      %3971 = vmatpush1.msra.mxu0 %v3580
      %3972 = vmatprep.subr.mxu0 %v3585
      %3973 = vmatpush1.msra.mxu0 %v3584
      %3974 = vmatprep.subr.mxu0 %v3589
      %3975 = vmatpush1.msra.mxu0 %v3588
      %3976 = vmatprep.subr.mxu0 %v3593
      %3977 = vmatpush1.msra.mxu0 %v3592
      %3978 = vmatprep.subr.mxu0 %v3597
      %3979 = vmatpush1.msra.mxu0 %v3596
      %3980 = vmatprep.subr.mxu0 %v3601
      %3981 = vmatpush1.msra.mxu0 %v3600
      %3982 = vmatprep.subr.mxu0 %v3605
      %3983 = vmatpush1.msra.mxu0 %v3604
      %3984 = vmatprep.subr.mxu0 %v3609
      %3985 = vmatpush1.msra.mxu0 %v3608
      %3986 = vmatprep.subr.mxu0 %v3613
      %3987 = vmatpush1.msra.mxu0 %v3612
      %3988 = vmatprep.subr.mxu0 %v3617
      %3989 = vmatpush1.msra.mxu0 %v3616
      %3990 = vmatprep.subr.mxu0 %v3621
      %3991 = vmatpush1.msra.mxu0 %v3620
      %3992 = vmatprep.mubr.f32.mxu0 %v2161
      %3993 = vmatmul.mubr.f32.gmra.mrb[0].mxu0 %v2159
      %v3994 = vpop.f32.mrb[0].mxu0
      %v3995 = vadd.f32 0.0, %v3994
      %v3996 = vpop.f32.mrb[0].mxu0
      %v3997 = vadd.f32 0.0, %v3996
      %3998 = vmatprep.mubr.f32.mxu0 %v2167
      %3999 = vmatmul.mubr.f32.gmra.mrb[0].mxu0 %v2165
      %v4000 = vpop.f32.mrb[0].mxu0
      %v4001 = vadd.f32 0.0, %v4000
      %v4002 = vpop.f32.mrb[0].mxu0
      %v4003 = vadd.f32 0.0, %v4002
      %4004 = vmatprep.mubr.f32.mxu0 %v2173
      %4005 = vmatmul.mubr.f32.gmra.mrb[0].mxu0 %v2171
      %v4006 = vpop.f32.mrb[0].mxu0
      %v4007 = vadd.f32 0.0, %v4006
      %v4008 = vpop.f32.mrb[0].mxu0
      %v4009 = vadd.f32 0.0, %v4008
      %4010 = vmatprep.mubr.f32.mxu0 %v2179
      %4011 = vmatmul.mubr.f32.gmra.mrb[0].mxu0 %v2177
      %v4012 = vpop.f32.mrb[0].mxu0
      %v4013 = vadd.f32 0.0, %v4012
      %v4014 = vpop.f32.mrb[0].mxu0
      %v4015 = vadd.f32 0.0, %v4014
      %4016 = vdwg.mxu0
      %4017 = vmatprep.subr.mxu0 %v3625
      %4018 = vmatpush1.msra.mxu0 %v3624
      %4019 = vmatprep.subr.mxu0 %v3629
      %4020 = vmatpush1.msra.mxu0 %v3628
      %4021 = vmatprep.subr.mxu0 %v3633
      %4022 = vmatpush1.msra.mxu0 %v3632
      %4023 = vmatprep.subr.mxu0 %v3637
      %4024 = vmatpush1.msra.mxu0 %v3636
      %4025 = vmatprep.subr.mxu0 %v3641
      %4026 = vmatpush1.msra.mxu0 %v3640
      %4027 = vmatprep.subr.mxu0 %v3645
      %4028 = vmatpush1.msra.mxu0 %v3644
      %4029 = vmatprep.subr.mxu0 %v3649
      %4030 = vmatpush1.msra.mxu0 %v3648
      %4031 = vmatprep.subr.mxu0 %v3653
      %4032 = vmatpush1.msra.mxu0 %v3652
      %4033 = vmatprep.subr.mxu0 %v3657
      %4034 = vmatpush1.msra.mxu0 %v3656
      %4035 = vmatprep.subr.mxu0 %v3661
      %4036 = vmatpush1.msra.mxu0 %v3660
      %4037 = vmatprep.subr.mxu0 %v3665
      %4038 = vmatpush1.msra.mxu0 %v3664
      %4039 = vmatprep.subr.mxu0 %v3669
      %4040 = vmatpush1.msra.mxu0 %v3668
      %4041 = vmatprep.subr.mxu0 %v3673
      %4042 = vmatpush1.msra.mxu0 %v3672
      %4043 = vmatprep.subr.mxu0 %v3677
      %4044 = vmatpush1.msra.mxu0 %v3676
      %4045 = vmatprep.subr.mxu0 %v3681
      %4046 = vmatpush1.msra.mxu0 %v3680
      %4047 = vmatprep.subr.mxu0 %v3685
      %4048 = vmatpush1.msra.mxu0 %v3684
      %4049 = vmatprep.subr.mxu0 %v3689
      %4050 = vmatpush1.msra.mxu0 %v3688
      %4051 = vmatprep.subr.mxu0 %v3693
      %4052 = vmatpush1.msra.mxu0 %v3692
      %4053 = vmatprep.subr.mxu0 %v3697
      %4054 = vmatpush1.msra.mxu0 %v3696
      %4055 = vmatprep.subr.mxu0 %v3701
      %4056 = vmatpush1.msra.mxu0 %v3700
      %4057 = vmatprep.subr.mxu0 %v3705
      %4058 = vmatpush1.msra.mxu0 %v3704
      %4059 = vmatprep.subr.mxu0 %v3709
      %4060 = vmatpush1.msra.mxu0 %v3708
      %4061 = vmatprep.subr.mxu0 %v3713
      %4062 = vmatpush1.msra.mxu0 %v3712
      %4063 = vmatprep.subr.mxu0 %v3717
      %4064 = vmatpush1.msra.mxu0 %v3716
      %4065 = vmatprep.subr.mxu0 %v3721
      %4066 = vmatpush1.msra.mxu0 %v3720
      %4067 = vmatprep.subr.mxu0 %v3725
      %4068 = vmatpush1.msra.mxu0 %v3724
      %4069 = vmatprep.subr.mxu0 %v3729
      %4070 = vmatpush1.msra.mxu0 %v3728
      %4071 = vmatprep.subr.mxu0 %v3733
      %4072 = vmatpush1.msra.mxu0 %v3732
      %4073 = vmatprep.subr.mxu0 %v3737
      %4074 = vmatpush1.msra.mxu0 %v3736
      %4075 = vmatprep.subr.mxu0 %v3741
      %4076 = vmatpush1.msra.mxu0 %v3740
      %4077 = vmatprep.subr.mxu0 %v3745
      %4078 = vmatpush1.msra.mxu0 %v3744
      %4079 = vmatprep.subr.mxu0 %v3749
      %4080 = vmatpush1.msra.mxu0 %v3748
      %4081 = vmatprep.mubr.f32.mxu0 %v2250
      %4082 = vmatmul.mubr.f32.gmra.mrb[0].mxu0 %v2248
      %v4083 = vpop.f32.mrb[0].mxu0
      %v4084 = vadd.f32 %v3995, %v4083
      %v4085 = vpop.f32.mrb[0].mxu0
      %v4086 = vadd.f32 %v3997, %v4085
      %4087 = vmatprep.mubr.f32.mxu0 %v2256
      %4088 = vmatmul.mubr.f32.gmra.mrb[0].mxu0 %v2254
      %v4089 = vpop.f32.mrb[0].mxu0
      %v4090 = vadd.f32 %v4001, %v4089
      %v4091 = vpop.f32.mrb[0].mxu0
      %v4092 = vadd.f32 %v4003, %v4091
      %4093 = vmatprep.mubr.f32.mxu0 %v2262
      %4094 = vmatmul.mubr.f32.gmra.mrb[0].mxu0 %v2260
      %v4095 = vpop.f32.mrb[0].mxu0
      %v4096 = vadd.f32 %v4007, %v4095
      %v4097 = vpop.f32.mrb[0].mxu0
      %v4098 = vadd.f32 %v4009, %v4097
      %4099 = vmatprep.mubr.f32.mxu0 %v2268
      %4100 = vmatmul.mubr.f32.gmra.mrb[0].mxu0 %v2266
      %v4101 = vpop.f32.mrb[0].mxu0
      %v4102 = vadd.f32 %v4013, %v4101
      %v4103 = vpop.f32.mrb[0].mxu0
      %v4104 = vadd.f32 %v4015, %v4103
      %4105 = vdwg.mxu0
      %v4106 = vadd.f32 %v3294, %v3906
      %v4107 = vadd.f32 %v3296, %v3908
      %v4108 = vadd.f32 %v3472, %v4084
      %v4109 = vadd.f32 %v3474, %v4086
      %v4110 = vadd.f32 %v3300, %v3912
      %v4111 = vadd.f32 %v3302, %v3914
      %v4112 = vadd.f32 %v3478, %v4090
      %v4113 = vadd.f32 %v3480, %v4092
      %v4114 = vadd.f32 %v3306, %v3918
      %v4115 = vadd.f32 %v3308, %v3920
      %v4116 = vadd.f32 %v3484, %v4096
      %v4117 = vadd.f32 %v3486, %v4098
      %v4118 = vadd.f32 %v3312, %v3924
      %v4119 = vadd.f32 %v3314, %v3926
      %v4120 = vadd.f32 %v3490, %v4102
      %v4121 = vadd.f32 %v3492, %v4104
      %v4122 = vld [vmem:[%s8] sm:$0xf]
      %v4124 = vlaneseq
      %v4125 = vshrl.u32 %v4124, 7
      %v4126 = vsub.s32 0, %v4125
      %v4127 = vrot.slane %v4122, %v4126
      %v4128 = vlaneseq
      %v4129 = vshrl.u32 %v4128, 7
      %v4130 = vsub.s32 1, %v4129
      %v4131 = vrot.slane %v4122, %v4130
      %v4132 = vlaneseq
      %v4133 = vshrl.u32 %v4132, 7
      %v4134 = vsub.s32 2, %v4133
      %v4135 = vrot.slane %v4122, %v4134
      %v4136 = vlaneseq
      %v4137 = vshrl.u32 %v4136, 7
      %v4138 = vsub.s32 3, %v4137
      %v4139 = vrot.slane %v4122, %v4138
      %v4144 = vadd.f32 %v4106, %v4127
      %v4145 = vadd.f32 %v4107, %v4131
      %v4146 = vadd.f32 %v4108, %v4135
      %v4147 = vadd.f32 %v4109, %v4139
      %v4148 = vadd.f32 %v4110, %v4127
      %v4149 = vadd.f32 %v4111, %v4131
      %v4150 = vadd.f32 %v4112, %v4135
      %v4151 = vadd.f32 %v4113, %v4139
      %v4152 = vadd.f32 %v4114, %v4127
      %v4153 = vadd.f32 %v4115, %v4131
      %v4154 = vadd.f32 %v4116, %v4135
      %v4155 = vadd.f32 %v4117, %v4139
      %v4156 = vadd.f32 %v4118, %v4127
      %v4157 = vadd.f32 %v4119, %v4131
      %v4158 = vadd.f32 %v4120, %v4135
      %v4159 = vadd.f32 %v4121, %v4139
      %v4160 = vld [vmem:[%s9] sm:$0xff]
      %v4161 = vld [vmem:[%s9 + $0x8] sm:$0xff]
      %v4162 = vld [vmem:[%s9 + $0x10] sm:$0xff]
      %v4163 = vld [vmem:[%s9 + $0x18] sm:$0xff]
      %v4164 = vld [vmem:[%s9 + $0x20] sm:$0xff]
      %v4165 = vld [vmem:[%s9 + $0x28] sm:$0xff]
      %v4166 = vld [vmem:[%s9 + $0x30] sm:$0xff]
      %v4167 = vld [vmem:[%s9 + $0x38] sm:$0xff]
      %v4168 = vld [vmem:[%s9 + $0x40] sm:$0xff]
      %v4169 = vld [vmem:[%s9 + $0x48] sm:$0xff]
      %v4170 = vld [vmem:[%s9 + $0x50] sm:$0xff]
      %v4171 = vld [vmem:[%s9 + $0x58] sm:$0xff]
      %v4172 = vld [vmem:[%s9 + $0x60] sm:$0xff]
      %v4173 = vld [vmem:[%s9 + $0x68] sm:$0xff]
      %v4174 = vld [vmem:[%s9 + $0x70] sm:$0xff]
      %v4175 = vld [vmem:[%s9 + $0x78] sm:$0xff]
      %v4176 = vld [vmem:[%s9 + $0x80] sm:$0xff]
      %v4177 = vld [vmem:[%s9 + $0x88] sm:$0xff]
      %v4178 = vld [vmem:[%s9 + $0x90] sm:$0xff]
      %v4179 = vld [vmem:[%s9 + $0x98] sm:$0xff]
      %v4180 = vld [vmem:[%s9 + $0xa0] sm:$0xff]
      %v4181 = vld [vmem:[%s9 + $0xa8] sm:$0xff]
      %v4182 = vld [vmem:[%s9 + $0xb0] sm:$0xff]
      %v4183 = vld [vmem:[%s9 + $0xb8] sm:$0xff]
      %v4184 = vld [vmem:[%s9 + $0xc0] sm:$0xff]
      %v4185 = vld [vmem:[%s9 + $0xc8] sm:$0xff]
      %v4186 = vld [vmem:[%s9 + $0xd0] sm:$0xff]
      %v4187 = vld [vmem:[%s9 + $0xd8] sm:$0xff]
      %v4188 = vld [vmem:[%s9 + $0xe0] sm:$0xff]
      %v4189 = vld [vmem:[%s9 + $0xe8] sm:$0xff]
      %v4190 = vld [vmem:[%s9 + $0xf0] sm:$0xff]
      %v4191 = vld [vmem:[%s9 + $0xf8] sm:$0xff]
      %v4192 = vld [vmem:[%s9 + $0x100] sm:$0xff]
      %v4193 = vld [vmem:[%s9 + $0x108] sm:$0xff]
      %v4194 = vld [vmem:[%s9 + $0x110] sm:$0xff]
      %v4195 = vld [vmem:[%s9 + $0x118] sm:$0xff]
      %v4196 = vld [vmem:[%s9 + $0x120] sm:$0xff]
      %v4197 = vld [vmem:[%s9 + $0x128] sm:$0xff]
      %v4198 = vld [vmem:[%s9 + $0x130] sm:$0xff]
      %v4199 = vld [vmem:[%s9 + $0x138] sm:$0xff]
      %v4200 = vld [vmem:[%s9 + $0x140] sm:$0xff]
      %v4201 = vld [vmem:[%s9 + $0x148] sm:$0xff]
      %v4202 = vld [vmem:[%s9 + $0x150] sm:$0xff]
      %v4203 = vld [vmem:[%s9 + $0x158] sm:$0xff]
      %v4204 = vld [vmem:[%s9 + $0x160] sm:$0xff]
      %v4205 = vld [vmem:[%s9 + $0x168] sm:$0xff]
      %v4206 = vld [vmem:[%s9 + $0x170] sm:$0xff]
      %v4207 = vld [vmem:[%s9 + $0x178] sm:$0xff]
      %v4208 = vld [vmem:[%s9 + $0x180] sm:$0xff]
      %v4209 = vld [vmem:[%s9 + $0x188] sm:$0xff]
      %v4210 = vld [vmem:[%s9 + $0x190] sm:$0xff]
      %v4211 = vld [vmem:[%s9 + $0x198] sm:$0xff]
      %v4212 = vld [vmem:[%s9 + $0x1a0] sm:$0xff]
      %v4213 = vld [vmem:[%s9 + $0x1a8] sm:$0xff]
      %v4214 = vld [vmem:[%s9 + $0x1b0] sm:$0xff]
      %v4215 = vld [vmem:[%s9 + $0x1b8] sm:$0xff]
      %v4216 = vld [vmem:[%s9 + $0x1c0] sm:$0xff]
      %v4217 = vld [vmem:[%s9 + $0x1c8] sm:$0xff]
      %v4218 = vld [vmem:[%s9 + $0x1d0] sm:$0xff]
      %v4219 = vld [vmem:[%s9 + $0x1d8] sm:$0xff]
      %v4220 = vld [vmem:[%s9 + $0x1e0] sm:$0xff]
      %v4221 = vld [vmem:[%s9 + $0x1e8] sm:$0xff]
      %v4222 = vld [vmem:[%s9 + $0x1f0] sm:$0xff]
      %v4223 = vld [vmem:[%s9 + $0x1f8] sm:$0xff]
      %v4224 = vld [vmem:[%s9 + $0x200] sm:$0xff]
      %v4225 = vld [vmem:[%s9 + $0x208] sm:$0xff]
      %v4226 = vld [vmem:[%s9 + $0x210] sm:$0xff]
      %v4227 = vld [vmem:[%s9 + $0x218] sm:$0xff]
      %v4228 = vld [vmem:[%s9 + $0x220] sm:$0xff]
      %v4229 = vld [vmem:[%s9 + $0x228] sm:$0xff]
      %v4230 = vld [vmem:[%s9 + $0x230] sm:$0xff]
      %v4231 = vld [vmem:[%s9 + $0x238] sm:$0xff]
      %v4232 = vld [vmem:[%s9 + $0x240] sm:$0xff]
      %v4233 = vld [vmem:[%s9 + $0x248] sm:$0xff]
      %v4234 = vld [vmem:[%s9 + $0x250] sm:$0xff]
      %v4235 = vld [vmem:[%s9 + $0x258] sm:$0xff]
      %v4236 = vld [vmem:[%s9 + $0x260] sm:$0xff]
      %v4237 = vld [vmem:[%s9 + $0x268] sm:$0xff]
      %v4238 = vld [vmem:[%s9 + $0x270] sm:$0xff]
      %v4239 = vld [vmem:[%s9 + $0x278] sm:$0xff]
      %v4240 = vld [vmem:[%s9 + $0x280] sm:$0xff]
      %v4241 = vld [vmem:[%s9 + $0x288] sm:$0xff]
      %v4242 = vld [vmem:[%s9 + $0x290] sm:$0xff]
      %v4243 = vld [vmem:[%s9 + $0x298] sm:$0xff]
      %v4244 = vld [vmem:[%s9 + $0x2a0] sm:$0xff]
      %v4245 = vld [vmem:[%s9 + $0x2a8] sm:$0xff]
      %v4246 = vld [vmem:[%s9 + $0x2b0] sm:$0xff]
      %v4247 = vld [vmem:[%s9 + $0x2b8] sm:$0xff]
      %v4248 = vld [vmem:[%s9 + $0x2c0] sm:$0xff]
      %v4249 = vld [vmem:[%s9 + $0x2c8] sm:$0xff]
      %v4250 = vld [vmem:[%s9 + $0x2d0] sm:$0xff]
      %v4251 = vld [vmem:[%s9 + $0x2d8] sm:$0xff]
      %v4252 = vld [vmem:[%s9 + $0x2e0] sm:$0xff]
      %v4253 = vld [vmem:[%s9 + $0x2e8] sm:$0xff]
      %v4254 = vld [vmem:[%s9 + $0x2f0] sm:$0xff]
      %v4255 = vld [vmem:[%s9 + $0x2f8] sm:$0xff]
      %v4256 = vld [vmem:[%s9 + $0x300] sm:$0xff]
      %v4257 = vld [vmem:[%s9 + $0x308] sm:$0xff]
      %v4258 = vld [vmem:[%s9 + $0x310] sm:$0xff]
      %v4259 = vld [vmem:[%s9 + $0x318] sm:$0xff]
      %v4260 = vld [vmem:[%s9 + $0x320] sm:$0xff]
      %v4261 = vld [vmem:[%s9 + $0x328] sm:$0xff]
      %v4262 = vld [vmem:[%s9 + $0x330] sm:$0xff]
      %v4263 = vld [vmem:[%s9 + $0x338] sm:$0xff]
      %v4264 = vld [vmem:[%s9 + $0x340] sm:$0xff]
      %v4265 = vld [vmem:[%s9 + $0x348] sm:$0xff]
      %v4266 = vld [vmem:[%s9 + $0x350] sm:$0xff]
      %v4267 = vld [vmem:[%s9 + $0x358] sm:$0xff]
      %v4268 = vld [vmem:[%s9 + $0x360] sm:$0xff]
      %v4269 = vld [vmem:[%s9 + $0x368] sm:$0xff]
      %v4270 = vld [vmem:[%s9 + $0x370] sm:$0xff]
      %v4271 = vld [vmem:[%s9 + $0x378] sm:$0xff]
      %v4272 = vld [vmem:[%s9 + $0x380] sm:$0xff]
      %v4273 = vld [vmem:[%s9 + $0x388] sm:$0xff]
      %v4274 = vld [vmem:[%s9 + $0x390] sm:$0xff]
      %v4275 = vld [vmem:[%s9 + $0x398] sm:$0xff]
      %v4276 = vld [vmem:[%s9 + $0x3a0] sm:$0xff]
      %v4277 = vld [vmem:[%s9 + $0x3a8] sm:$0xff]
      %v4278 = vld [vmem:[%s9 + $0x3b0] sm:$0xff]
      %v4279 = vld [vmem:[%s9 + $0x3b8] sm:$0xff]
      %v4280 = vld [vmem:[%s9 + $0x3c0] sm:$0xff]
      %v4281 = vld [vmem:[%s9 + $0x3c8] sm:$0xff]
      %v4282 = vld [vmem:[%s9 + $0x3d0] sm:$0xff]
      %v4283 = vld [vmem:[%s9 + $0x3d8] sm:$0xff]
      %v4284 = vld [vmem:[%s9 + $0x3e0] sm:$0xff]
      %v4285 = vld [vmem:[%s9 + $0x3e8] sm:$0xff]
      %v4286 = vld [vmem:[%s9 + $0x3f0] sm:$0xff]
      %v4287 = vld [vmem:[%s9 + $0x3f8] sm:$0xff]
      %v4288 = vld [vmem:[%s10] sm:$0xf]
      %v4290 = vlaneseq
      %v4291 = vshrl.u32 %v4290, 7
      %v4292 = vsub.s32 0, %v4291
      %v4293 = vrot.slane %v4288, %v4292
      %v4294 = vlaneseq
      %v4295 = vshrl.u32 %v4294, 7
      %v4296 = vsub.s32 1, %v4295
      %v4297 = vrot.slane %v4288, %v4296
      %v4298 = vlaneseq
      %v4299 = vshrl.u32 %v4298, 7
      %v4300 = vsub.s32 2, %v4299
      %v4301 = vrot.slane %v4288, %v4300
      %v4302 = vlaneseq
      %v4303 = vshrl.u32 %v4302, 7
      %v4304 = vsub.s32 3, %v4303
      %v4305 = vrot.slane %v4288, %v4304
      %4310 = vmatprep.subr.mxu0 %v4161
      %4311 = vmatpush1.msra.mxu0 %v4160
      %4312 = vmatprep.subr.mxu0 %v4165
      %4313 = vmatpush1.msra.mxu0 %v4164
      %4314 = vmatprep.subr.mxu0 %v4169
      %4315 = vmatpush1.msra.mxu0 %v4168
      %4316 = vmatprep.subr.mxu0 %v4173
      %4317 = vmatpush1.msra.mxu0 %v4172
      %4318 = vmatprep.subr.mxu0 %v4177
      %4319 = vmatpush1.msra.mxu0 %v4176
      %4320 = vmatprep.subr.mxu0 %v4181
      %4321 = vmatpush1.msra.mxu0 %v4180
      %4322 = vmatprep.subr.mxu0 %v4185
      %4323 = vmatpush1.msra.mxu0 %v4184
      %4324 = vmatprep.subr.mxu0 %v4189
      %4325 = vmatpush1.msra.mxu0 %v4188
      %4326 = vmatprep.subr.mxu0 %v4193
      %4327 = vmatpush1.msra.mxu0 %v4192
      %4328 = vmatprep.subr.mxu0 %v4197
      %4329 = vmatpush1.msra.mxu0 %v4196
      %4330 = vmatprep.subr.mxu0 %v4201
      %4331 = vmatpush1.msra.mxu0 %v4200
      %4332 = vmatprep.subr.mxu0 %v4205
      %4333 = vmatpush1.msra.mxu0 %v4204
      %4334 = vmatprep.subr.mxu0 %v4209
      %4335 = vmatpush1.msra.mxu0 %v4208
      %4336 = vmatprep.subr.mxu0 %v4213
      %4337 = vmatpush1.msra.mxu0 %v4212
      %4338 = vmatprep.subr.mxu0 %v4217
      %4339 = vmatpush1.msra.mxu0 %v4216
      %4340 = vmatprep.subr.mxu0 %v4221
      %4341 = vmatpush1.msra.mxu0 %v4220
      %4342 = vmatprep.subr.mxu0 %v4225
      %4343 = vmatpush1.msra.mxu0 %v4224
      %4344 = vmatprep.subr.mxu0 %v4229
      %4345 = vmatpush1.msra.mxu0 %v4228
      %4346 = vmatprep.subr.mxu0 %v4233
      %4347 = vmatpush1.msra.mxu0 %v4232
      %4348 = vmatprep.subr.mxu0 %v4237
      %4349 = vmatpush1.msra.mxu0 %v4236
      %4350 = vmatprep.subr.mxu0 %v4241
      %4351 = vmatpush1.msra.mxu0 %v4240
      %4352 = vmatprep.subr.mxu0 %v4245
      %4353 = vmatpush1.msra.mxu0 %v4244
      %4354 = vmatprep.subr.mxu0 %v4249
      %4355 = vmatpush1.msra.mxu0 %v4248
      %4356 = vmatprep.subr.mxu0 %v4253
      %4357 = vmatpush1.msra.mxu0 %v4252
      %4358 = vmatprep.subr.mxu0 %v4257
      %4359 = vmatpush1.msra.mxu0 %v4256
      %4360 = vmatprep.subr.mxu0 %v4261
      %4361 = vmatpush1.msra.mxu0 %v4260
      %4362 = vmatprep.subr.mxu0 %v4265
      %4363 = vmatpush1.msra.mxu0 %v4264
      %4364 = vmatprep.subr.mxu0 %v4269
      %4365 = vmatpush1.msra.mxu0 %v4268
      %4366 = vmatprep.subr.mxu0 %v4273
      %4367 = vmatpush1.msra.mxu0 %v4272
      %4368 = vmatprep.subr.mxu0 %v4277
      %4369 = vmatpush1.msra.mxu0 %v4276
      %4370 = vmatprep.subr.mxu0 %v4281
      %4371 = vmatpush1.msra.mxu0 %v4280
      %4372 = vmatprep.subr.mxu0 %v4285
      %4373 = vmatpush1.msra.mxu0 %v4284
      %4374 = vmatprep.mubr.f32.mxu0 %v685
      %4375 = vmatmul.mubr.f32.gmra.mrb[0].mxu0 %v683
      %v4376 = vpop.f32.mrb[0].mxu0
      %v4377 = vadd.f32 %v4293, %v4376
      %v4378 = vpop.f32.mrb[0].mxu0
      %v4379 = vadd.f32 %v4297, %v4378
      %4380 = vmatprep.mubr.f32.mxu0 %v691
      %4381 = vmatmul.mubr.f32.gmra.mrb[0].mxu0 %v689
      %v4382 = vpop.f32.mrb[0].mxu0
      %v4383 = vadd.f32 %v4293, %v4382
      %v4384 = vpop.f32.mrb[0].mxu0
      %v4385 = vadd.f32 %v4297, %v4384
      %4386 = vmatprep.mubr.f32.mxu0 %v697
      %4387 = vmatmul.mubr.f32.gmra.mrb[0].mxu0 %v695
      %v4388 = vpop.f32.mrb[0].mxu0
      %v4389 = vadd.f32 %v4293, %v4388
      %v4390 = vpop.f32.mrb[0].mxu0
      %v4391 = vadd.f32 %v4297, %v4390
      %4392 = vmatprep.mubr.f32.mxu0 %v703
      %4393 = vmatmul.mubr.f32.gmra.mrb[0].mxu0 %v701
      %v4394 = vpop.f32.mrb[0].mxu0
      %v4395 = vadd.f32 %v4293, %v4394
      %v4396 = vpop.f32.mrb[0].mxu0
      %v4397 = vadd.f32 %v4297, %v4396
      %4398 = vdwg.mxu0
      %4399 = vmatprep.subr.mxu0 %v4163
      %4400 = vmatpush1.msra.mxu0 %v4162
      %4401 = vmatprep.subr.mxu0 %v4167
      %4402 = vmatpush1.msra.mxu0 %v4166
      %4403 = vmatprep.subr.mxu0 %v4171
      %4404 = vmatpush1.msra.mxu0 %v4170
      %4405 = vmatprep.subr.mxu0 %v4175
      %4406 = vmatpush1.msra.mxu0 %v4174
      %4407 = vmatprep.subr.mxu0 %v4179
      %4408 = vmatpush1.msra.mxu0 %v4178
      %4409 = vmatprep.subr.mxu0 %v4183
      %4410 = vmatpush1.msra.mxu0 %v4182
      %4411 = vmatprep.subr.mxu0 %v4187
      %4412 = vmatpush1.msra.mxu0 %v4186
      %4413 = vmatprep.subr.mxu0 %v4191
      %4414 = vmatpush1.msra.mxu0 %v4190
      %4415 = vmatprep.subr.mxu0 %v4195
      %4416 = vmatpush1.msra.mxu0 %v4194
      %4417 = vmatprep.subr.mxu0 %v4199
      %4418 = vmatpush1.msra.mxu0 %v4198
      %4419 = vmatprep.subr.mxu0 %v4203
      %4420 = vmatpush1.msra.mxu0 %v4202
      %4421 = vmatprep.subr.mxu0 %v4207
      %4422 = vmatpush1.msra.mxu0 %v4206
      %4423 = vmatprep.subr.mxu0 %v4211
      %4424 = vmatpush1.msra.mxu0 %v4210
      %4425 = vmatprep.subr.mxu0 %v4215
      %4426 = vmatpush1.msra.mxu0 %v4214
      %4427 = vmatprep.subr.mxu0 %v4219
      %4428 = vmatpush1.msra.mxu0 %v4218
      %4429 = vmatprep.subr.mxu0 %v4223
      %4430 = vmatpush1.msra.mxu0 %v4222
      %4431 = vmatprep.subr.mxu0 %v4227
      %4432 = vmatpush1.msra.mxu0 %v4226
      %4433 = vmatprep.subr.mxu0 %v4231
      %4434 = vmatpush1.msra.mxu0 %v4230
      %4435 = vmatprep.subr.mxu0 %v4235
      %4436 = vmatpush1.msra.mxu0 %v4234
      %4437 = vmatprep.subr.mxu0 %v4239
      %4438 = vmatpush1.msra.mxu0 %v4238
      %4439 = vmatprep.subr.mxu0 %v4243
      %4440 = vmatpush1.msra.mxu0 %v4242
      %4441 = vmatprep.subr.mxu0 %v4247
      %4442 = vmatpush1.msra.mxu0 %v4246
      %4443 = vmatprep.subr.mxu0 %v4251
      %4444 = vmatpush1.msra.mxu0 %v4250
      %4445 = vmatprep.subr.mxu0 %v4255
      %4446 = vmatpush1.msra.mxu0 %v4254
      %4447 = vmatprep.subr.mxu0 %v4259
      %4448 = vmatpush1.msra.mxu0 %v4258
      %4449 = vmatprep.subr.mxu0 %v4263
      %4450 = vmatpush1.msra.mxu0 %v4262
      %4451 = vmatprep.subr.mxu0 %v4267
      %4452 = vmatpush1.msra.mxu0 %v4266
      %4453 = vmatprep.subr.mxu0 %v4271
      %4454 = vmatpush1.msra.mxu0 %v4270
      %4455 = vmatprep.subr.mxu0 %v4275
      %4456 = vmatpush1.msra.mxu0 %v4274
      %4457 = vmatprep.subr.mxu0 %v4279
      %4458 = vmatpush1.msra.mxu0 %v4278
      %4459 = vmatprep.subr.mxu0 %v4283
      %4460 = vmatpush1.msra.mxu0 %v4282
      %4461 = vmatprep.subr.mxu0 %v4287
      %4462 = vmatpush1.msra.mxu0 %v4286
      %4463 = vmatprep.mubr.f32.mxu0 %v685
      %4464 = vmatmul.mubr.f32.gmra.mrb[0].mxu0 %v683
      %v4465 = vpop.f32.mrb[0].mxu0
      %v4466 = vadd.f32 %v4301, %v4465
      %v4467 = vpop.f32.mrb[0].mxu0
      %v4468 = vadd.f32 %v4305, %v4467
      %4469 = vmatprep.mubr.f32.mxu0 %v691
      %4470 = vmatmul.mubr.f32.gmra.mrb[0].mxu0 %v689
      %v4471 = vpop.f32.mrb[0].mxu0
      %v4472 = vadd.f32 %v4301, %v4471
      %v4473 = vpop.f32.mrb[0].mxu0
      %v4474 = vadd.f32 %v4305, %v4473
      %4475 = vmatprep.mubr.f32.mxu0 %v697
      %4476 = vmatmul.mubr.f32.gmra.mrb[0].mxu0 %v695
      %v4477 = vpop.f32.mrb[0].mxu0
      %v4478 = vadd.f32 %v4301, %v4477
      %v4479 = vpop.f32.mrb[0].mxu0
      %v4480 = vadd.f32 %v4305, %v4479
      %4481 = vmatprep.mubr.f32.mxu0 %v703
      %4482 = vmatmul.mubr.f32.gmra.mrb[0].mxu0 %v701
      %v4483 = vpop.f32.mrb[0].mxu0
      %v4484 = vadd.f32 %v4301, %v4483
      %v4485 = vpop.f32.mrb[0].mxu0
      %v4486 = vadd.f32 %v4305, %v4485
      %4487 = vdwg.mxu0
      %v4488 = vadd.f32 %v4144, %v4377
      %v4489 = vadd.f32 %v4145, %v4379
      %v4490 = vadd.f32 %v4146, %v4466
      %v4491 = vadd.f32 %v4147, %v4468
      %v4492 = vadd.f32 %v4148, %v4383
      %v4493 = vadd.f32 %v4149, %v4385
      %v4494 = vadd.f32 %v4150, %v4472
      %v4495 = vadd.f32 %v4151, %v4474
      %v4496 = vadd.f32 %v4152, %v4389
      %v4497 = vadd.f32 %v4153, %v4391
      %v4498 = vadd.f32 %v4154, %v4478
      %v4499 = vadd.f32 %v4155, %v4480
      %v4500 = vadd.f32 %v4156, %v4395
      %v4501 = vadd.f32 %v4157, %v4397
      %v4502 = vadd.f32 %v4158, %v4484
      %v4503 = vadd.f32 %v4159, %v4486
      %v4504 = vmax.f32 %v4488, 0.0
      %v4505 = vmax.f32 %v4489, 0.0
      %v4506 = vmax.f32 %v4490, 0.0
      %v4507 = vmax.f32 %v4491, 0.0
      %v4508 = vmax.f32 %v4492, 0.0
      %v4509 = vmax.f32 %v4493, 0.0
      %v4510 = vmax.f32 %v4494, 0.0
      %v4511 = vmax.f32 %v4495, 0.0
      %v4512 = vmax.f32 %v4496, 0.0
      %v4513 = vmax.f32 %v4497, 0.0
      %v4514 = vmax.f32 %v4498, 0.0
      %v4515 = vmax.f32 %v4499, 0.0
      %v4516 = vmax.f32 %v4500, 0.0
      %v4517 = vmax.f32 %v4501, 0.0
      %v4518 = vmax.f32 %v4502, 0.0
      %v4519 = vmax.f32 %v4503, 0.0
      %v4520 = vld [vmem:[%s11] sm:$0xff]
      %v4521 = vld [vmem:[%s11 + $0x8] sm:$0xff]
      %v4522 = vld [vmem:[%s11 + $0x10] sm:$0xff]
      %v4523 = vld [vmem:[%s11 + $0x18] sm:$0xff]
      %v4524 = vld [vmem:[%s11 + $0x20] sm:$0xff]
      %v4525 = vld [vmem:[%s11 + $0x28] sm:$0xff]
      %v4526 = vld [vmem:[%s11 + $0x30] sm:$0xff]
      %v4527 = vld [vmem:[%s11 + $0x38] sm:$0xff]
      %v4528 = vld [vmem:[%s11 + $0x40] sm:$0xff]
      %v4529 = vld [vmem:[%s11 + $0x48] sm:$0xff]
      %v4530 = vld [vmem:[%s11 + $0x50] sm:$0xff]
      %v4531 = vld [vmem:[%s11 + $0x58] sm:$0xff]
      %v4532 = vld [vmem:[%s11 + $0x60] sm:$0xff]
      %v4533 = vld [vmem:[%s11 + $0x68] sm:$0xff]
      %v4534 = vld [vmem:[%s11 + $0x70] sm:$0xff]
      %v4535 = vld [vmem:[%s11 + $0x78] sm:$0xff]
      %v4536 = vld [vmem:[%s11 + $0x80] sm:$0xff]
      %v4537 = vld [vmem:[%s11 + $0x88] sm:$0xff]
      %v4538 = vld [vmem:[%s11 + $0x90] sm:$0xff]
      %v4539 = vld [vmem:[%s11 + $0x98] sm:$0xff]
      %v4540 = vld [vmem:[%s11 + $0xa0] sm:$0xff]
      %v4541 = vld [vmem:[%s11 + $0xa8] sm:$0xff]
      %v4542 = vld [vmem:[%s11 + $0xb0] sm:$0xff]
      %v4543 = vld [vmem:[%s11 + $0xb8] sm:$0xff]
      %v4544 = vld [vmem:[%s11 + $0xc0] sm:$0xff]
      %v4545 = vld [vmem:[%s11 + $0xc8] sm:$0xff]
      %v4546 = vld [vmem:[%s11 + $0xd0] sm:$0xff]
      %v4547 = vld [vmem:[%s11 + $0xd8] sm:$0xff]
      %v4548 = vld [vmem:[%s11 + $0xe0] sm:$0xff]
      %v4549 = vld [vmem:[%s11 + $0xe8] sm:$0xff]
      %v4550 = vld [vmem:[%s11 + $0xf0] sm:$0xff]
      %v4551 = vld [vmem:[%s11 + $0xf8] sm:$0xff]
      %v4552 = vld [vmem:[%s11 + $0x100] sm:$0xff]
      %v4553 = vld [vmem:[%s11 + $0x108] sm:$0xff]
      %v4554 = vld [vmem:[%s11 + $0x110] sm:$0xff]
      %v4555 = vld [vmem:[%s11 + $0x118] sm:$0xff]
      %v4556 = vld [vmem:[%s11 + $0x120] sm:$0xff]
      %v4557 = vld [vmem:[%s11 + $0x128] sm:$0xff]
      %v4558 = vld [vmem:[%s11 + $0x130] sm:$0xff]
      %v4559 = vld [vmem:[%s11 + $0x138] sm:$0xff]
      %v4560 = vld [vmem:[%s11 + $0x140] sm:$0xff]
      %v4561 = vld [vmem:[%s11 + $0x148] sm:$0xff]
      %v4562 = vld [vmem:[%s11 + $0x150] sm:$0xff]
      %v4563 = vld [vmem:[%s11 + $0x158] sm:$0xff]
      %v4564 = vld [vmem:[%s11 + $0x160] sm:$0xff]
      %v4565 = vld [vmem:[%s11 + $0x168] sm:$0xff]
      %v4566 = vld [vmem:[%s11 + $0x170] sm:$0xff]
      %v4567 = vld [vmem:[%s11 + $0x178] sm:$0xff]
      %v4568 = vld [vmem:[%s11 + $0x180] sm:$0xff]
      %v4569 = vld [vmem:[%s11 + $0x188] sm:$0xff]
      %v4570 = vld [vmem:[%s11 + $0x190] sm:$0xff]
      %v4571 = vld [vmem:[%s11 + $0x198] sm:$0xff]
      %v4572 = vld [vmem:[%s11 + $0x1a0] sm:$0xff]
      %v4573 = vld [vmem:[%s11 + $0x1a8] sm:$0xff]
      %v4574 = vld [vmem:[%s11 + $0x1b0] sm:$0xff]
      %v4575 = vld [vmem:[%s11 + $0x1b8] sm:$0xff]
      %v4576 = vld [vmem:[%s11 + $0x1c0] sm:$0xff]
      %v4577 = vld [vmem:[%s11 + $0x1c8] sm:$0xff]
      %v4578 = vld [vmem:[%s11 + $0x1d0] sm:$0xff]
      %v4579 = vld [vmem:[%s11 + $0x1d8] sm:$0xff]
      %v4580 = vld [vmem:[%s11 + $0x1e0] sm:$0xff]
      %v4581 = vld [vmem:[%s11 + $0x1e8] sm:$0xff]
      %v4582 = vld [vmem:[%s11 + $0x1f0] sm:$0xff]
      %v4583 = vld [vmem:[%s11 + $0x1f8] sm:$0xff]
      %v4584 = vld [vmem:[%s11 + $0x200] sm:$0xff]
      %v4585 = vld [vmem:[%s11 + $0x208] sm:$0xff]
      %v4586 = vld [vmem:[%s11 + $0x210] sm:$0xff]
      %v4587 = vld [vmem:[%s11 + $0x218] sm:$0xff]
      %v4588 = vld [vmem:[%s11 + $0x220] sm:$0xff]
      %v4589 = vld [vmem:[%s11 + $0x228] sm:$0xff]
      %v4590 = vld [vmem:[%s11 + $0x230] sm:$0xff]
      %v4591 = vld [vmem:[%s11 + $0x238] sm:$0xff]
      %v4592 = vld [vmem:[%s11 + $0x240] sm:$0xff]
      %v4593 = vld [vmem:[%s11 + $0x248] sm:$0xff]
      %v4594 = vld [vmem:[%s11 + $0x250] sm:$0xff]
      %v4595 = vld [vmem:[%s11 + $0x258] sm:$0xff]
      %v4596 = vld [vmem:[%s11 + $0x260] sm:$0xff]
      %v4597 = vld [vmem:[%s11 + $0x268] sm:$0xff]
      %v4598 = vld [vmem:[%s11 + $0x270] sm:$0xff]
      %v4599 = vld [vmem:[%s11 + $0x278] sm:$0xff]
      %v4600 = vld [vmem:[%s11 + $0x280] sm:$0xff]
      %v4601 = vld [vmem:[%s11 + $0x288] sm:$0xff]
      %v4602 = vld [vmem:[%s11 + $0x290] sm:$0xff]
      %v4603 = vld [vmem:[%s11 + $0x298] sm:$0xff]
      %v4604 = vld [vmem:[%s11 + $0x2a0] sm:$0xff]
      %v4605 = vld [vmem:[%s11 + $0x2a8] sm:$0xff]
      %v4606 = vld [vmem:[%s11 + $0x2b0] sm:$0xff]
      %v4607 = vld [vmem:[%s11 + $0x2b8] sm:$0xff]
      %v4608 = vld [vmem:[%s11 + $0x2c0] sm:$0xff]
      %v4609 = vld [vmem:[%s11 + $0x2c8] sm:$0xff]
      %v4610 = vld [vmem:[%s11 + $0x2d0] sm:$0xff]
      %v4611 = vld [vmem:[%s11 + $0x2d8] sm:$0xff]
      %v4612 = vld [vmem:[%s11 + $0x2e0] sm:$0xff]
      %v4613 = vld [vmem:[%s11 + $0x2e8] sm:$0xff]
      %v4614 = vld [vmem:[%s11 + $0x2f0] sm:$0xff]
      %v4615 = vld [vmem:[%s11 + $0x2f8] sm:$0xff]
      %v4616 = vld [vmem:[%s11 + $0x300] sm:$0xff]
      %v4617 = vld [vmem:[%s11 + $0x308] sm:$0xff]
      %v4618 = vld [vmem:[%s11 + $0x310] sm:$0xff]
      %v4619 = vld [vmem:[%s11 + $0x318] sm:$0xff]
      %v4620 = vld [vmem:[%s11 + $0x320] sm:$0xff]
      %v4621 = vld [vmem:[%s11 + $0x328] sm:$0xff]
      %v4622 = vld [vmem:[%s11 + $0x330] sm:$0xff]
      %v4623 = vld [vmem:[%s11 + $0x338] sm:$0xff]
      %v4624 = vld [vmem:[%s11 + $0x340] sm:$0xff]
      %v4625 = vld [vmem:[%s11 + $0x348] sm:$0xff]
      %v4626 = vld [vmem:[%s11 + $0x350] sm:$0xff]
      %v4627 = vld [vmem:[%s11 + $0x358] sm:$0xff]
      %v4628 = vld [vmem:[%s11 + $0x360] sm:$0xff]
      %v4629 = vld [vmem:[%s11 + $0x368] sm:$0xff]
      %v4630 = vld [vmem:[%s11 + $0x370] sm:$0xff]
      %v4631 = vld [vmem:[%s11 + $0x378] sm:$0xff]
      %v4632 = vld [vmem:[%s11 + $0x380] sm:$0xff]
      %v4633 = vld [vmem:[%s11 + $0x388] sm:$0xff]
      %v4634 = vld [vmem:[%s11 + $0x390] sm:$0xff]
      %v4635 = vld [vmem:[%s11 + $0x398] sm:$0xff]
      %v4636 = vld [vmem:[%s11 + $0x3a0] sm:$0xff]
      %v4637 = vld [vmem:[%s11 + $0x3a8] sm:$0xff]
      %v4638 = vld [vmem:[%s11 + $0x3b0] sm:$0xff]
      %v4639 = vld [vmem:[%s11 + $0x3b8] sm:$0xff]
      %v4640 = vld [vmem:[%s11 + $0x3c0] sm:$0xff]
      %v4641 = vld [vmem:[%s11 + $0x3c8] sm:$0xff]
      %v4642 = vld [vmem:[%s11 + $0x3d0] sm:$0xff]
      %v4643 = vld [vmem:[%s11 + $0x3d8] sm:$0xff]
      %v4644 = vld [vmem:[%s11 + $0x3e0] sm:$0xff]
      %v4645 = vld [vmem:[%s11 + $0x3e8] sm:$0xff]
      %v4646 = vld [vmem:[%s11 + $0x3f0] sm:$0xff]
      %v4647 = vld [vmem:[%s11 + $0x3f8] sm:$0xff]
      %v4648 = vld [vmem:[%s11 + $0x400] sm:$0xff]
      %v4649 = vld [vmem:[%s11 + $0x408] sm:$0xff]
      %v4650 = vld [vmem:[%s11 + $0x410] sm:$0xff]
      %v4651 = vld [vmem:[%s11 + $0x418] sm:$0xff]
      %v4652 = vld [vmem:[%s11 + $0x420] sm:$0xff]
      %v4653 = vld [vmem:[%s11 + $0x428] sm:$0xff]
      %v4654 = vld [vmem:[%s11 + $0x430] sm:$0xff]
      %v4655 = vld [vmem:[%s11 + $0x438] sm:$0xff]
      %v4656 = vld [vmem:[%s11 + $0x440] sm:$0xff]
      %v4657 = vld [vmem:[%s11 + $0x448] sm:$0xff]
      %v4658 = vld [vmem:[%s11 + $0x450] sm:$0xff]
      %v4659 = vld [vmem:[%s11 + $0x458] sm:$0xff]
      %v4660 = vld [vmem:[%s11 + $0x460] sm:$0xff]
      %v4661 = vld [vmem:[%s11 + $0x468] sm:$0xff]
      %v4662 = vld [vmem:[%s11 + $0x470] sm:$0xff]
      %v4663 = vld [vmem:[%s11 + $0x478] sm:$0xff]
      %v4664 = vld [vmem:[%s11 + $0x480] sm:$0xff]
      %v4665 = vld [vmem:[%s11 + $0x488] sm:$0xff]
      %v4666 = vld [vmem:[%s11 + $0x490] sm:$0xff]
      %v4667 = vld [vmem:[%s11 + $0x498] sm:$0xff]
      %v4668 = vld [vmem:[%s11 + $0x4a0] sm:$0xff]
      %v4669 = vld [vmem:[%s11 + $0x4a8] sm:$0xff]
      %v4670 = vld [vmem:[%s11 + $0x4b0] sm:$0xff]
      %v4671 = vld [vmem:[%s11 + $0x4b8] sm:$0xff]
      %v4672 = vld [vmem:[%s11 + $0x4c0] sm:$0xff]
      %v4673 = vld [vmem:[%s11 + $0x4c8] sm:$0xff]
      %v4674 = vld [vmem:[%s11 + $0x4d0] sm:$0xff]
      %v4675 = vld [vmem:[%s11 + $0x4d8] sm:$0xff]
      %v4676 = vld [vmem:[%s11 + $0x4e0] sm:$0xff]
      %v4677 = vld [vmem:[%s11 + $0x4e8] sm:$0xff]
      %v4678 = vld [vmem:[%s11 + $0x4f0] sm:$0xff]
      %v4679 = vld [vmem:[%s11 + $0x4f8] sm:$0xff]
      %v4680 = vld [vmem:[%s11 + $0x500] sm:$0xff]
      %v4681 = vld [vmem:[%s11 + $0x508] sm:$0xff]
      %v4682 = vld [vmem:[%s11 + $0x510] sm:$0xff]
      %v4683 = vld [vmem:[%s11 + $0x518] sm:$0xff]
      %v4684 = vld [vmem:[%s11 + $0x520] sm:$0xff]
      %v4685 = vld [vmem:[%s11 + $0x528] sm:$0xff]
      %v4686 = vld [vmem:[%s11 + $0x530] sm:$0xff]
      %v4687 = vld [vmem:[%s11 + $0x538] sm:$0xff]
      %v4688 = vld [vmem:[%s11 + $0x540] sm:$0xff]
      %v4689 = vld [vmem:[%s11 + $0x548] sm:$0xff]
      %v4690 = vld [vmem:[%s11 + $0x550] sm:$0xff]
      %v4691 = vld [vmem:[%s11 + $0x558] sm:$0xff]
      %v4692 = vld [vmem:[%s11 + $0x560] sm:$0xff]
      %v4693 = vld [vmem:[%s11 + $0x568] sm:$0xff]
      %v4694 = vld [vmem:[%s11 + $0x570] sm:$0xff]
      %v4695 = vld [vmem:[%s11 + $0x578] sm:$0xff]
      %v4696 = vld [vmem:[%s11 + $0x580] sm:$0xff]
      %v4697 = vld [vmem:[%s11 + $0x588] sm:$0xff]
      %v4698 = vld [vmem:[%s11 + $0x590] sm:$0xff]
      %v4699 = vld [vmem:[%s11 + $0x598] sm:$0xff]
      %v4700 = vld [vmem:[%s11 + $0x5a0] sm:$0xff]
      %v4701 = vld [vmem:[%s11 + $0x5a8] sm:$0xff]
      %v4702 = vld [vmem:[%s11 + $0x5b0] sm:$0xff]
      %v4703 = vld [vmem:[%s11 + $0x5b8] sm:$0xff]
      %v4704 = vld [vmem:[%s11 + $0x5c0] sm:$0xff]
      %v4705 = vld [vmem:[%s11 + $0x5c8] sm:$0xff]
      %v4706 = vld [vmem:[%s11 + $0x5d0] sm:$0xff]
      %v4707 = vld [vmem:[%s11 + $0x5d8] sm:$0xff]
      %v4708 = vld [vmem:[%s11 + $0x5e0] sm:$0xff]
      %v4709 = vld [vmem:[%s11 + $0x5e8] sm:$0xff]
      %v4710 = vld [vmem:[%s11 + $0x5f0] sm:$0xff]
      %v4711 = vld [vmem:[%s11 + $0x5f8] sm:$0xff]
      %v4712 = vld [vmem:[%s11 + $0x600] sm:$0xff]
      %v4713 = vld [vmem:[%s11 + $0x608] sm:$0xff]
      %v4714 = vld [vmem:[%s11 + $0x610] sm:$0xff]
      %v4715 = vld [vmem:[%s11 + $0x618] sm:$0xff]
      %v4716 = vld [vmem:[%s11 + $0x620] sm:$0xff]
      %v4717 = vld [vmem:[%s11 + $0x628] sm:$0xff]
      %v4718 = vld [vmem:[%s11 + $0x630] sm:$0xff]
      %v4719 = vld [vmem:[%s11 + $0x638] sm:$0xff]
      %v4720 = vld [vmem:[%s11 + $0x640] sm:$0xff]
      %v4721 = vld [vmem:[%s11 + $0x648] sm:$0xff]
      %v4722 = vld [vmem:[%s11 + $0x650] sm:$0xff]
      %v4723 = vld [vmem:[%s11 + $0x658] sm:$0xff]
      %v4724 = vld [vmem:[%s11 + $0x660] sm:$0xff]
      %v4725 = vld [vmem:[%s11 + $0x668] sm:$0xff]
      %v4726 = vld [vmem:[%s11 + $0x670] sm:$0xff]
      %v4727 = vld [vmem:[%s11 + $0x678] sm:$0xff]
      %v4728 = vld [vmem:[%s11 + $0x680] sm:$0xff]
      %v4729 = vld [vmem:[%s11 + $0x688] sm:$0xff]
      %v4730 = vld [vmem:[%s11 + $0x690] sm:$0xff]
      %v4731 = vld [vmem:[%s11 + $0x698] sm:$0xff]
      %v4732 = vld [vmem:[%s11 + $0x6a0] sm:$0xff]
      %v4733 = vld [vmem:[%s11 + $0x6a8] sm:$0xff]
      %v4734 = vld [vmem:[%s11 + $0x6b0] sm:$0xff]
      %v4735 = vld [vmem:[%s11 + $0x6b8] sm:$0xff]
      %v4736 = vld [vmem:[%s11 + $0x6c0] sm:$0xff]
      %v4737 = vld [vmem:[%s11 + $0x6c8] sm:$0xff]
      %v4738 = vld [vmem:[%s11 + $0x6d0] sm:$0xff]
      %v4739 = vld [vmem:[%s11 + $0x6d8] sm:$0xff]
      %v4740 = vld [vmem:[%s11 + $0x6e0] sm:$0xff]
      %v4741 = vld [vmem:[%s11 + $0x6e8] sm:$0xff]
      %v4742 = vld [vmem:[%s11 + $0x6f0] sm:$0xff]
      %v4743 = vld [vmem:[%s11 + $0x6f8] sm:$0xff]
      %v4744 = vld [vmem:[%s11 + $0x700] sm:$0xff]
      %v4745 = vld [vmem:[%s11 + $0x708] sm:$0xff]
      %v4746 = vld [vmem:[%s11 + $0x710] sm:$0xff]
      %v4747 = vld [vmem:[%s11 + $0x718] sm:$0xff]
      %v4748 = vld [vmem:[%s11 + $0x720] sm:$0xff]
      %v4749 = vld [vmem:[%s11 + $0x728] sm:$0xff]
      %v4750 = vld [vmem:[%s11 + $0x730] sm:$0xff]
      %v4751 = vld [vmem:[%s11 + $0x738] sm:$0xff]
      %v4752 = vld [vmem:[%s11 + $0x740] sm:$0xff]
      %v4753 = vld [vmem:[%s11 + $0x748] sm:$0xff]
      %v4754 = vld [vmem:[%s11 + $0x750] sm:$0xff]
      %v4755 = vld [vmem:[%s11 + $0x758] sm:$0xff]
      %v4756 = vld [vmem:[%s11 + $0x760] sm:$0xff]
      %v4757 = vld [vmem:[%s11 + $0x768] sm:$0xff]
      %v4758 = vld [vmem:[%s11 + $0x770] sm:$0xff]
      %v4759 = vld [vmem:[%s11 + $0x778] sm:$0xff]
      %v4760 = vld [vmem:[%s11 + $0x780] sm:$0xff]
      %v4761 = vld [vmem:[%s11 + $0x788] sm:$0xff]
      %v4762 = vld [vmem:[%s11 + $0x790] sm:$0xff]
      %v4763 = vld [vmem:[%s11 + $0x798] sm:$0xff]
      %v4764 = vld [vmem:[%s11 + $0x7a0] sm:$0xff]
      %v4765 = vld [vmem:[%s11 + $0x7a8] sm:$0xff]
      %v4766 = vld [vmem:[%s11 + $0x7b0] sm:$0xff]
      %v4767 = vld [vmem:[%s11 + $0x7b8] sm:$0xff]
      %v4768 = vld [vmem:[%s11 + $0x7c0] sm:$0xff]
      %v4769 = vld [vmem:[%s11 + $0x7c8] sm:$0xff]
      %v4770 = vld [vmem:[%s11 + $0x7d0] sm:$0xff]
      %v4771 = vld [vmem:[%s11 + $0x7d8] sm:$0xff]
      %v4772 = vld [vmem:[%s11 + $0x7e0] sm:$0xff]
      %v4773 = vld [vmem:[%s11 + $0x7e8] sm:$0xff]
      %v4774 = vld [vmem:[%s11 + $0x7f0] sm:$0xff]
      %v4775 = vld [vmem:[%s11 + $0x7f8] sm:$0xff]
      %v4776 = vld [vmem:[%s11 + $0x800] sm:$0xff]
      %v4777 = vld [vmem:[%s11 + $0x808] sm:$0xff]
      %v4778 = vld [vmem:[%s11 + $0x810] sm:$0xff]
      %v4779 = vld [vmem:[%s11 + $0x818] sm:$0xff]
      %v4780 = vld [vmem:[%s11 + $0x820] sm:$0xff]
      %v4781 = vld [vmem:[%s11 + $0x828] sm:$0xff]
      %v4782 = vld [vmem:[%s11 + $0x830] sm:$0xff]
      %v4783 = vld [vmem:[%s11 + $0x838] sm:$0xff]
      %v4784 = vld [vmem:[%s11 + $0x840] sm:$0xff]
      %v4785 = vld [vmem:[%s11 + $0x848] sm:$0xff]
      %v4786 = vld [vmem:[%s11 + $0x850] sm:$0xff]
      %v4787 = vld [vmem:[%s11 + $0x858] sm:$0xff]
      %v4788 = vld [vmem:[%s11 + $0x860] sm:$0xff]
      %v4789 = vld [vmem:[%s11 + $0x868] sm:$0xff]
      %v4790 = vld [vmem:[%s11 + $0x870] sm:$0xff]
      %v4791 = vld [vmem:[%s11 + $0x878] sm:$0xff]
      %v4792 = vld [vmem:[%s11 + $0x880] sm:$0xff]
      %v4793 = vld [vmem:[%s11 + $0x888] sm:$0xff]
      %v4794 = vld [vmem:[%s11 + $0x890] sm:$0xff]
      %v4795 = vld [vmem:[%s11 + $0x898] sm:$0xff]
      %v4796 = vld [vmem:[%s11 + $0x8a0] sm:$0xff]
      %v4797 = vld [vmem:[%s11 + $0x8a8] sm:$0xff]
      %v4798 = vld [vmem:[%s11 + $0x8b0] sm:$0xff]
      %v4799 = vld [vmem:[%s11 + $0x8b8] sm:$0xff]
      %v4800 = vld [vmem:[%s11 + $0x8c0] sm:$0xff]
      %v4801 = vld [vmem:[%s11 + $0x8c8] sm:$0xff]
      %v4802 = vld [vmem:[%s11 + $0x8d0] sm:$0xff]
      %v4803 = vld [vmem:[%s11 + $0x8d8] sm:$0xff]
      %v4804 = vld [vmem:[%s11 + $0x8e0] sm:$0xff]
      %v4805 = vld [vmem:[%s11 + $0x8e8] sm:$0xff]
      %v4806 = vld [vmem:[%s11 + $0x8f0] sm:$0xff]
      %v4807 = vld [vmem:[%s11 + $0x8f8] sm:$0xff]
      %v4808 = vld [vmem:[%s11 + $0x900] sm:$0xff]
      %v4809 = vld [vmem:[%s11 + $0x908] sm:$0xff]
      %v4810 = vld [vmem:[%s11 + $0x910] sm:$0xff]
      %v4811 = vld [vmem:[%s11 + $0x918] sm:$0xff]
      %v4812 = vld [vmem:[%s11 + $0x920] sm:$0xff]
      %v4813 = vld [vmem:[%s11 + $0x928] sm:$0xff]
      %v4814 = vld [vmem:[%s11 + $0x930] sm:$0xff]
      %v4815 = vld [vmem:[%s11 + $0x938] sm:$0xff]
      %v4816 = vld [vmem:[%s11 + $0x940] sm:$0xff]
      %v4817 = vld [vmem:[%s11 + $0x948] sm:$0xff]
      %v4818 = vld [vmem:[%s11 + $0x950] sm:$0xff]
      %v4819 = vld [vmem:[%s11 + $0x958] sm:$0xff]
      %v4820 = vld [vmem:[%s11 + $0x960] sm:$0xff]
      %v4821 = vld [vmem:[%s11 + $0x968] sm:$0xff]
      %v4822 = vld [vmem:[%s11 + $0x970] sm:$0xff]
      %v4823 = vld [vmem:[%s11 + $0x978] sm:$0xff]
      %v4824 = vld [vmem:[%s11 + $0x980] sm:$0xff]
      %v4825 = vld [vmem:[%s11 + $0x988] sm:$0xff]
      %v4826 = vld [vmem:[%s11 + $0x990] sm:$0xff]
      %v4827 = vld [vmem:[%s11 + $0x998] sm:$0xff]
      %v4828 = vld [vmem:[%s11 + $0x9a0] sm:$0xff]
      %v4829 = vld [vmem:[%s11 + $0x9a8] sm:$0xff]
      %v4830 = vld [vmem:[%s11 + $0x9b0] sm:$0xff]
      %v4831 = vld [vmem:[%s11 + $0x9b8] sm:$0xff]
      %v4832 = vld [vmem:[%s11 + $0x9c0] sm:$0xff]
      %v4833 = vld [vmem:[%s11 + $0x9c8] sm:$0xff]
      %v4834 = vld [vmem:[%s11 + $0x9d0] sm:$0xff]
      %v4835 = vld [vmem:[%s11 + $0x9d8] sm:$0xff]
      %v4836 = vld [vmem:[%s11 + $0x9e0] sm:$0xff]
      %v4837 = vld [vmem:[%s11 + $0x9e8] sm:$0xff]
      %v4838 = vld [vmem:[%s11 + $0x9f0] sm:$0xff]
      %v4839 = vld [vmem:[%s11 + $0x9f8] sm:$0xff]
      %v4840 = vld [vmem:[%s11 + $0xa00] sm:$0xff]
      %v4841 = vld [vmem:[%s11 + $0xa08] sm:$0xff]
      %v4842 = vld [vmem:[%s11 + $0xa10] sm:$0xff]
      %v4843 = vld [vmem:[%s11 + $0xa18] sm:$0xff]
      %v4844 = vld [vmem:[%s11 + $0xa20] sm:$0xff]
      %v4845 = vld [vmem:[%s11 + $0xa28] sm:$0xff]
      %v4846 = vld [vmem:[%s11 + $0xa30] sm:$0xff]
      %v4847 = vld [vmem:[%s11 + $0xa38] sm:$0xff]
      %v4848 = vld [vmem:[%s11 + $0xa40] sm:$0xff]
      %v4849 = vld [vmem:[%s11 + $0xa48] sm:$0xff]
      %v4850 = vld [vmem:[%s11 + $0xa50] sm:$0xff]
      %v4851 = vld [vmem:[%s11 + $0xa58] sm:$0xff]
      %v4852 = vld [vmem:[%s11 + $0xa60] sm:$0xff]
      %v4853 = vld [vmem:[%s11 + $0xa68] sm:$0xff]
      %v4854 = vld [vmem:[%s11 + $0xa70] sm:$0xff]
      %v4855 = vld [vmem:[%s11 + $0xa78] sm:$0xff]
      %v4856 = vld [vmem:[%s11 + $0xa80] sm:$0xff]
      %v4857 = vld [vmem:[%s11 + $0xa88] sm:$0xff]
      %v4858 = vld [vmem:[%s11 + $0xa90] sm:$0xff]
      %v4859 = vld [vmem:[%s11 + $0xa98] sm:$0xff]
      %v4860 = vld [vmem:[%s11 + $0xaa0] sm:$0xff]
      %v4861 = vld [vmem:[%s11 + $0xaa8] sm:$0xff]
      %v4862 = vld [vmem:[%s11 + $0xab0] sm:$0xff]
      %v4863 = vld [vmem:[%s11 + $0xab8] sm:$0xff]
      %v4864 = vld [vmem:[%s11 + $0xac0] sm:$0xff]
      %v4865 = vld [vmem:[%s11 + $0xac8] sm:$0xff]
      %v4866 = vld [vmem:[%s11 + $0xad0] sm:$0xff]
      %v4867 = vld [vmem:[%s11 + $0xad8] sm:$0xff]
      %v4868 = vld [vmem:[%s11 + $0xae0] sm:$0xff]
      %v4869 = vld [vmem:[%s11 + $0xae8] sm:$0xff]
      %v4870 = vld [vmem:[%s11 + $0xaf0] sm:$0xff]
      %v4871 = vld [vmem:[%s11 + $0xaf8] sm:$0xff]
      %v4872 = vld [vmem:[%s11 + $0xb00] sm:$0xff]
      %v4873 = vld [vmem:[%s11 + $0xb08] sm:$0xff]
      %v4874 = vld [vmem:[%s11 + $0xb10] sm:$0xff]
      %v4875 = vld [vmem:[%s11 + $0xb18] sm:$0xff]
      %v4876 = vld [vmem:[%s11 + $0xb20] sm:$0xff]
      %v4877 = vld [vmem:[%s11 + $0xb28] sm:$0xff]
      %v4878 = vld [vmem:[%s11 + $0xb30] sm:$0xff]
      %v4879 = vld [vmem:[%s11 + $0xb38] sm:$0xff]
      %v4880 = vld [vmem:[%s11 + $0xb40] sm:$0xff]
      %v4881 = vld [vmem:[%s11 + $0xb48] sm:$0xff]
      %v4882 = vld [vmem:[%s11 + $0xb50] sm:$0xff]
      %v4883 = vld [vmem:[%s11 + $0xb58] sm:$0xff]
      %v4884 = vld [vmem:[%s11 + $0xb60] sm:$0xff]
      %v4885 = vld [vmem:[%s11 + $0xb68] sm:$0xff]
      %v4886 = vld [vmem:[%s11 + $0xb70] sm:$0xff]
      %v4887 = vld [vmem:[%s11 + $0xb78] sm:$0xff]
      %v4888 = vld [vmem:[%s11 + $0xb80] sm:$0xff]
      %v4889 = vld [vmem:[%s11 + $0xb88] sm:$0xff]
      %v4890 = vld [vmem:[%s11 + $0xb90] sm:$0xff]
      %v4891 = vld [vmem:[%s11 + $0xb98] sm:$0xff]
      %v4892 = vld [vmem:[%s11 + $0xba0] sm:$0xff]
      %v4893 = vld [vmem:[%s11 + $0xba8] sm:$0xff]
      %v4894 = vld [vmem:[%s11 + $0xbb0] sm:$0xff]
      %v4895 = vld [vmem:[%s11 + $0xbb8] sm:$0xff]
      %v4896 = vld [vmem:[%s11 + $0xbc0] sm:$0xff]
      %v4897 = vld [vmem:[%s11 + $0xbc8] sm:$0xff]
      %v4898 = vld [vmem:[%s11 + $0xbd0] sm:$0xff]
      %v4899 = vld [vmem:[%s11 + $0xbd8] sm:$0xff]
      %v4900 = vld [vmem:[%s11 + $0xbe0] sm:$0xff]
      %v4901 = vld [vmem:[%s11 + $0xbe8] sm:$0xff]
      %v4902 = vld [vmem:[%s11 + $0xbf0] sm:$0xff]
      %v4903 = vld [vmem:[%s11 + $0xbf8] sm:$0xff]
      %v4904 = vld [vmem:[%s11 + $0xc00] sm:$0xff]
      %v4905 = vld [vmem:[%s11 + $0xc08] sm:$0xff]
      %v4906 = vld [vmem:[%s11 + $0xc10] sm:$0xff]
      %v4907 = vld [vmem:[%s11 + $0xc18] sm:$0xff]
      %v4908 = vld [vmem:[%s11 + $0xc20] sm:$0xff]
      %v4909 = vld [vmem:[%s11 + $0xc28] sm:$0xff]
      %v4910 = vld [vmem:[%s11 + $0xc30] sm:$0xff]
      %v4911 = vld [vmem:[%s11 + $0xc38] sm:$0xff]
      %v4912 = vld [vmem:[%s11 + $0xc40] sm:$0xff]
      %v4913 = vld [vmem:[%s11 + $0xc48] sm:$0xff]
      %v4914 = vld [vmem:[%s11 + $0xc50] sm:$0xff]
      %v4915 = vld [vmem:[%s11 + $0xc58] sm:$0xff]
      %v4916 = vld [vmem:[%s11 + $0xc60] sm:$0xff]
      %v4917 = vld [vmem:[%s11 + $0xc68] sm:$0xff]
      %v4918 = vld [vmem:[%s11 + $0xc70] sm:$0xff]
      %v4919 = vld [vmem:[%s11 + $0xc78] sm:$0xff]
      %v4920 = vld [vmem:[%s11 + $0xc80] sm:$0xff]
      %v4921 = vld [vmem:[%s11 + $0xc88] sm:$0xff]
      %v4922 = vld [vmem:[%s11 + $0xc90] sm:$0xff]
      %v4923 = vld [vmem:[%s11 + $0xc98] sm:$0xff]
      %v4924 = vld [vmem:[%s11 + $0xca0] sm:$0xff]
      %v4925 = vld [vmem:[%s11 + $0xca8] sm:$0xff]
      %v4926 = vld [vmem:[%s11 + $0xcb0] sm:$0xff]
      %v4927 = vld [vmem:[%s11 + $0xcb8] sm:$0xff]
      %v4928 = vld [vmem:[%s11 + $0xcc0] sm:$0xff]
      %v4929 = vld [vmem:[%s11 + $0xcc8] sm:$0xff]
      %v4930 = vld [vmem:[%s11 + $0xcd0] sm:$0xff]
      %v4931 = vld [vmem:[%s11 + $0xcd8] sm:$0xff]
      %v4932 = vld [vmem:[%s11 + $0xce0] sm:$0xff]
      %v4933 = vld [vmem:[%s11 + $0xce8] sm:$0xff]
      %v4934 = vld [vmem:[%s11 + $0xcf0] sm:$0xff]
      %v4935 = vld [vmem:[%s11 + $0xcf8] sm:$0xff]
      %v4936 = vld [vmem:[%s11 + $0xd00] sm:$0xff]
      %v4937 = vld [vmem:[%s11 + $0xd08] sm:$0xff]
      %v4938 = vld [vmem:[%s11 + $0xd10] sm:$0xff]
      %v4939 = vld [vmem:[%s11 + $0xd18] sm:$0xff]
      %v4940 = vld [vmem:[%s11 + $0xd20] sm:$0xff]
      %v4941 = vld [vmem:[%s11 + $0xd28] sm:$0xff]
      %v4942 = vld [vmem:[%s11 + $0xd30] sm:$0xff]
      %v4943 = vld [vmem:[%s11 + $0xd38] sm:$0xff]
      %v4944 = vld [vmem:[%s11 + $0xd40] sm:$0xff]
      %v4945 = vld [vmem:[%s11 + $0xd48] sm:$0xff]
      %v4946 = vld [vmem:[%s11 + $0xd50] sm:$0xff]
      %v4947 = vld [vmem:[%s11 + $0xd58] sm:$0xff]
      %v4948 = vld [vmem:[%s11 + $0xd60] sm:$0xff]
      %v4949 = vld [vmem:[%s11 + $0xd68] sm:$0xff]
      %v4950 = vld [vmem:[%s11 + $0xd70] sm:$0xff]
      %v4951 = vld [vmem:[%s11 + $0xd78] sm:$0xff]
      %v4952 = vld [vmem:[%s11 + $0xd80] sm:$0xff]
      %v4953 = vld [vmem:[%s11 + $0xd88] sm:$0xff]
      %v4954 = vld [vmem:[%s11 + $0xd90] sm:$0xff]
      %v4955 = vld [vmem:[%s11 + $0xd98] sm:$0xff]
      %v4956 = vld [vmem:[%s11 + $0xda0] sm:$0xff]
      %v4957 = vld [vmem:[%s11 + $0xda8] sm:$0xff]
      %v4958 = vld [vmem:[%s11 + $0xdb0] sm:$0xff]
      %v4959 = vld [vmem:[%s11 + $0xdb8] sm:$0xff]
      %v4960 = vld [vmem:[%s11 + $0xdc0] sm:$0xff]
      %v4961 = vld [vmem:[%s11 + $0xdc8] sm:$0xff]
      %v4962 = vld [vmem:[%s11 + $0xdd0] sm:$0xff]
      %v4963 = vld [vmem:[%s11 + $0xdd8] sm:$0xff]
      %v4964 = vld [vmem:[%s11 + $0xde0] sm:$0xff]
      %v4965 = vld [vmem:[%s11 + $0xde8] sm:$0xff]
      %v4966 = vld [vmem:[%s11 + $0xdf0] sm:$0xff]
      %v4967 = vld [vmem:[%s11 + $0xdf8] sm:$0xff]
      %v4968 = vld [vmem:[%s11 + $0xe00] sm:$0xff]
      %v4969 = vld [vmem:[%s11 + $0xe08] sm:$0xff]
      %v4970 = vld [vmem:[%s11 + $0xe10] sm:$0xff]
      %v4971 = vld [vmem:[%s11 + $0xe18] sm:$0xff]
      %v4972 = vld [vmem:[%s11 + $0xe20] sm:$0xff]
      %v4973 = vld [vmem:[%s11 + $0xe28] sm:$0xff]
      %v4974 = vld [vmem:[%s11 + $0xe30] sm:$0xff]
      %v4975 = vld [vmem:[%s11 + $0xe38] sm:$0xff]
      %v4976 = vld [vmem:[%s11 + $0xe40] sm:$0xff]
      %v4977 = vld [vmem:[%s11 + $0xe48] sm:$0xff]
      %v4978 = vld [vmem:[%s11 + $0xe50] sm:$0xff]
      %v4979 = vld [vmem:[%s11 + $0xe58] sm:$0xff]
      %v4980 = vld [vmem:[%s11 + $0xe60] sm:$0xff]
      %v4981 = vld [vmem:[%s11 + $0xe68] sm:$0xff]
      %v4982 = vld [vmem:[%s11 + $0xe70] sm:$0xff]
      %v4983 = vld [vmem:[%s11 + $0xe78] sm:$0xff]
      %v4984 = vld [vmem:[%s11 + $0xe80] sm:$0xff]
      %v4985 = vld [vmem:[%s11 + $0xe88] sm:$0xff]
      %v4986 = vld [vmem:[%s11 + $0xe90] sm:$0xff]
      %v4987 = vld [vmem:[%s11 + $0xe98] sm:$0xff]
      %v4988 = vld [vmem:[%s11 + $0xea0] sm:$0xff]
      %v4989 = vld [vmem:[%s11 + $0xea8] sm:$0xff]
      %v4990 = vld [vmem:[%s11 + $0xeb0] sm:$0xff]
      %v4991 = vld [vmem:[%s11 + $0xeb8] sm:$0xff]
      %v4992 = vld [vmem:[%s11 + $0xec0] sm:$0xff]
      %v4993 = vld [vmem:[%s11 + $0xec8] sm:$0xff]
      %v4994 = vld [vmem:[%s11 + $0xed0] sm:$0xff]
      %v4995 = vld [vmem:[%s11 + $0xed8] sm:$0xff]
      %v4996 = vld [vmem:[%s11 + $0xee0] sm:$0xff]
      %v4997 = vld [vmem:[%s11 + $0xee8] sm:$0xff]
      %v4998 = vld [vmem:[%s11 + $0xef0] sm:$0xff]
      %v4999 = vld [vmem:[%s11 + $0xef8] sm:$0xff]
      %v5000 = vld [vmem:[%s11 + $0xf00] sm:$0xff]
      %v5001 = vld [vmem:[%s11 + $0xf08] sm:$0xff]
      %v5002 = vld [vmem:[%s11 + $0xf10] sm:$0xff]
      %v5003 = vld [vmem:[%s11 + $0xf18] sm:$0xff]
      %v5004 = vld [vmem:[%s11 + $0xf20] sm:$0xff]
      %v5005 = vld [vmem:[%s11 + $0xf28] sm:$0xff]
      %v5006 = vld [vmem:[%s11 + $0xf30] sm:$0xff]
      %v5007 = vld [vmem:[%s11 + $0xf38] sm:$0xff]
      %v5008 = vld [vmem:[%s11 + $0xf40] sm:$0xff]
      %v5009 = vld [vmem:[%s11 + $0xf48] sm:$0xff]
      %v5010 = vld [vmem:[%s11 + $0xf50] sm:$0xff]
      %v5011 = vld [vmem:[%s11 + $0xf58] sm:$0xff]
      %v5012 = vld [vmem:[%s11 + $0xf60] sm:$0xff]
      %v5013 = vld [vmem:[%s11 + $0xf68] sm:$0xff]
      %v5014 = vld [vmem:[%s11 + $0xf70] sm:$0xff]
      %v5015 = vld [vmem:[%s11 + $0xf78] sm:$0xff]
      %v5016 = vld [vmem:[%s11 + $0xf80] sm:$0xff]
      %v5017 = vld [vmem:[%s11 + $0xf88] sm:$0xff]
      %v5018 = vld [vmem:[%s11 + $0xf90] sm:$0xff]
      %v5019 = vld [vmem:[%s11 + $0xf98] sm:$0xff]
      %v5020 = vld [vmem:[%s11 + $0xfa0] sm:$0xff]
      %v5021 = vld [vmem:[%s11 + $0xfa8] sm:$0xff]
      %v5022 = vld [vmem:[%s11 + $0xfb0] sm:$0xff]
      %v5023 = vld [vmem:[%s11 + $0xfb8] sm:$0xff]
      %v5024 = vld [vmem:[%s11 + $0xfc0] sm:$0xff]
      %v5025 = vld [vmem:[%s11 + $0xfc8] sm:$0xff]
      %v5026 = vld [vmem:[%s11 + $0xfd0] sm:$0xff]
      %v5027 = vld [vmem:[%s11 + $0xfd8] sm:$0xff]
      %v5028 = vld [vmem:[%s11 + $0xfe0] sm:$0xff]
      %v5029 = vld [vmem:[%s11 + $0xfe8] sm:$0xff]
      %v5030 = vld [vmem:[%s11 + $0xff0] sm:$0xff]
      %v5031 = vld [vmem:[%s11 + $0xff8] sm:$0xff]
      %v5032 = vld [vmem:[%s13] sm:$0xff]
      %v5034 = vlaneseq
      %v5035 = vshrl.u32 %v5034, 7
      %v5036 = vsub.s32 0, %v5035
      %v5037 = vrot.slane %v5032, %v5036
      %v5038 = vlaneseq
      %v5039 = vshrl.u32 %v5038, 7
      %v5040 = vsub.s32 1, %v5039
      %v5041 = vrot.slane %v5032, %v5040
      %v5042 = vlaneseq
      %v5043 = vshrl.u32 %v5042, 7
      %v5044 = vsub.s32 2, %v5043
      %v5045 = vrot.slane %v5032, %v5044
      %v5046 = vlaneseq
      %v5047 = vshrl.u32 %v5046, 7
      %v5048 = vsub.s32 3, %v5047
      %v5049 = vrot.slane %v5032, %v5048
      %v5050 = vlaneseq
      %v5051 = vshrl.u32 %v5050, 7
      %v5052 = vsub.s32 4, %v5051
      %v5053 = vrot.slane %v5032, %v5052
      %v5054 = vlaneseq
      %v5055 = vshrl.u32 %v5054, 7
      %v5056 = vsub.s32 5, %v5055
      %v5057 = vrot.slane %v5032, %v5056
      %v5058 = vlaneseq
      %v5059 = vshrl.u32 %v5058, 7
      %v5060 = vsub.s32 6, %v5059
      %v5061 = vrot.slane %v5032, %v5060
      %v5062 = vlaneseq
      %v5063 = vshrl.u32 %v5062, 7
      %v5064 = vsub.s32 7, %v5063
      %v5065 = vrot.slane %v5032, %v5064
      %5074 = vmatprep.subr.mxu0 %v4521
      %5075 = vmatpush1.msra.mxu0 %v4520
      %5076 = vmatprep.subr.mxu0 %v4529
      %5077 = vmatpush1.msra.mxu0 %v4528
      %5078 = vmatprep.subr.mxu0 %v4537
      %5079 = vmatpush1.msra.mxu0 %v4536
      %5080 = vmatprep.subr.mxu0 %v4545
      %5081 = vmatpush1.msra.mxu0 %v4544
      %5082 = vmatprep.subr.mxu0 %v4553
      %5083 = vmatpush1.msra.mxu0 %v4552
      %5084 = vmatprep.subr.mxu0 %v4561
      %5085 = vmatpush1.msra.mxu0 %v4560
      %5086 = vmatprep.subr.mxu0 %v4569
      %5087 = vmatpush1.msra.mxu0 %v4568
      %5088 = vmatprep.subr.mxu0 %v4577
      %5089 = vmatpush1.msra.mxu0 %v4576
      %5090 = vmatprep.subr.mxu0 %v4585
      %5091 = vmatpush1.msra.mxu0 %v4584
      %5092 = vmatprep.subr.mxu0 %v4593
      %5093 = vmatpush1.msra.mxu0 %v4592
      %5094 = vmatprep.subr.mxu0 %v4601
      %5095 = vmatpush1.msra.mxu0 %v4600
      %5096 = vmatprep.subr.mxu0 %v4609
      %5097 = vmatpush1.msra.mxu0 %v4608
      %5098 = vmatprep.subr.mxu0 %v4617
      %5099 = vmatpush1.msra.mxu0 %v4616
      %5100 = vmatprep.subr.mxu0 %v4625
      %5101 = vmatpush1.msra.mxu0 %v4624
      %5102 = vmatprep.subr.mxu0 %v4633
      %5103 = vmatpush1.msra.mxu0 %v4632
      %5104 = vmatprep.subr.mxu0 %v4641
      %5105 = vmatpush1.msra.mxu0 %v4640
      %5106 = vmatprep.subr.mxu0 %v4649
      %5107 = vmatpush1.msra.mxu0 %v4648
      %5108 = vmatprep.subr.mxu0 %v4657
      %5109 = vmatpush1.msra.mxu0 %v4656
      %5110 = vmatprep.subr.mxu0 %v4665
      %5111 = vmatpush1.msra.mxu0 %v4664
      %5112 = vmatprep.subr.mxu0 %v4673
      %5113 = vmatpush1.msra.mxu0 %v4672
      %5114 = vmatprep.subr.mxu0 %v4681
      %5115 = vmatpush1.msra.mxu0 %v4680
      %5116 = vmatprep.subr.mxu0 %v4689
      %5117 = vmatpush1.msra.mxu0 %v4688
      %5118 = vmatprep.subr.mxu0 %v4697
      %5119 = vmatpush1.msra.mxu0 %v4696
      %5120 = vmatprep.subr.mxu0 %v4705
      %5121 = vmatpush1.msra.mxu0 %v4704
      %5122 = vmatprep.subr.mxu0 %v4713
      %5123 = vmatpush1.msra.mxu0 %v4712
      %5124 = vmatprep.subr.mxu0 %v4721
      %5125 = vmatpush1.msra.mxu0 %v4720
      %5126 = vmatprep.subr.mxu0 %v4729
      %5127 = vmatpush1.msra.mxu0 %v4728
      %5128 = vmatprep.subr.mxu0 %v4737
      %5129 = vmatpush1.msra.mxu0 %v4736
      %5130 = vmatprep.subr.mxu0 %v4745
      %5131 = vmatpush1.msra.mxu0 %v4744
      %5132 = vmatprep.subr.mxu0 %v4753
      %5133 = vmatpush1.msra.mxu0 %v4752
      %5134 = vmatprep.subr.mxu0 %v4761
      %5135 = vmatpush1.msra.mxu0 %v4760
      %5136 = vmatprep.subr.mxu0 %v4769
      %5137 = vmatpush1.msra.mxu0 %v4768
      %5138 = vmatprep.mubr.f32.mxu0 %v4505
      %5139 = vmatmul.mubr.f32.gmra.mrb[0].mxu0 %v4504
      %v5140 = vpop.f32.mrb[0].mxu0
      %v5141 = vadd.f32 %v5037, %v5140
      %v5142 = vpop.f32.mrb[0].mxu0
      %v5143 = vadd.f32 %v5041, %v5142
      %5144 = vmatprep.mubr.f32.mxu0 %v4509
      %5145 = vmatmul.mubr.f32.gmra.mrb[0].mxu0 %v4508
      %v5146 = vpop.f32.mrb[0].mxu0
      %v5147 = vadd.f32 %v5037, %v5146
      %v5148 = vpop.f32.mrb[0].mxu0
      %v5149 = vadd.f32 %v5041, %v5148
      %5150 = vmatprep.mubr.f32.mxu0 %v4513
      %5151 = vmatmul.mubr.f32.gmra.mrb[0].mxu0 %v4512
      %v5152 = vpop.f32.mrb[0].mxu0
      %v5153 = vadd.f32 %v5037, %v5152
      %v5154 = vpop.f32.mrb[0].mxu0
      %v5155 = vadd.f32 %v5041, %v5154
      %5156 = vmatprep.mubr.f32.mxu0 %v4517
      %5157 = vmatmul.mubr.f32.gmra.mrb[0].mxu0 %v4516
      %v5158 = vpop.f32.mrb[0].mxu0
      %v5159 = vadd.f32 %v5037, %v5158
      %v5160 = vpop.f32.mrb[0].mxu0
      %v5161 = vadd.f32 %v5041, %v5160
      %5162 = vdwg.mxu0
      %5163 = vmatprep.subr.mxu0 %v4777
      %5164 = vmatpush1.msra.mxu0 %v4776
      %5165 = vmatprep.subr.mxu0 %v4785
      %5166 = vmatpush1.msra.mxu0 %v4784
      %5167 = vmatprep.subr.mxu0 %v4793
      %5168 = vmatpush1.msra.mxu0 %v4792
      %5169 = vmatprep.subr.mxu0 %v4801
      %5170 = vmatpush1.msra.mxu0 %v4800
      %5171 = vmatprep.subr.mxu0 %v4809
      %5172 = vmatpush1.msra.mxu0 %v4808
      %5173 = vmatprep.subr.mxu0 %v4817
      %5174 = vmatpush1.msra.mxu0 %v4816
      %5175 = vmatprep.subr.mxu0 %v4825
      %5176 = vmatpush1.msra.mxu0 %v4824
      %5177 = vmatprep.subr.mxu0 %v4833
      %5178 = vmatpush1.msra.mxu0 %v4832
      %5179 = vmatprep.subr.mxu0 %v4841
      %5180 = vmatpush1.msra.mxu0 %v4840
      %5181 = vmatprep.subr.mxu0 %v4849
      %5182 = vmatpush1.msra.mxu0 %v4848
      %5183 = vmatprep.subr.mxu0 %v4857
      %5184 = vmatpush1.msra.mxu0 %v4856
      %5185 = vmatprep.subr.mxu0 %v4865
      %5186 = vmatpush1.msra.mxu0 %v4864
      %5187 = vmatprep.subr.mxu0 %v4873
      %5188 = vmatpush1.msra.mxu0 %v4872
      %5189 = vmatprep.subr.mxu0 %v4881
      %5190 = vmatpush1.msra.mxu0 %v4880
      %5191 = vmatprep.subr.mxu0 %v4889
      %5192 = vmatpush1.msra.mxu0 %v4888
      %5193 = vmatprep.subr.mxu0 %v4897
      %5194 = vmatpush1.msra.mxu0 %v4896
      %5195 = vmatprep.subr.mxu0 %v4905
      %5196 = vmatpush1.msra.mxu0 %v4904
      %5197 = vmatprep.subr.mxu0 %v4913
      %5198 = vmatpush1.msra.mxu0 %v4912
      %5199 = vmatprep.subr.mxu0 %v4921
      %5200 = vmatpush1.msra.mxu0 %v4920
      %5201 = vmatprep.subr.mxu0 %v4929
      %5202 = vmatpush1.msra.mxu0 %v4928
      %5203 = vmatprep.subr.mxu0 %v4937
      %5204 = vmatpush1.msra.mxu0 %v4936
      %5205 = vmatprep.subr.mxu0 %v4945
      %5206 = vmatpush1.msra.mxu0 %v4944
      %5207 = vmatprep.subr.mxu0 %v4953
      %5208 = vmatpush1.msra.mxu0 %v4952
      %5209 = vmatprep.subr.mxu0 %v4961
      %5210 = vmatpush1.msra.mxu0 %v4960
      %5211 = vmatprep.subr.mxu0 %v4969
      %5212 = vmatpush1.msra.mxu0 %v4968
      %5213 = vmatprep.subr.mxu0 %v4977
      %5214 = vmatpush1.msra.mxu0 %v4976
      %5215 = vmatprep.subr.mxu0 %v4985
      %5216 = vmatpush1.msra.mxu0 %v4984
      %5217 = vmatprep.subr.mxu0 %v4993
      %5218 = vmatpush1.msra.mxu0 %v4992
      %5219 = vmatprep.subr.mxu0 %v5001
      %5220 = vmatpush1.msra.mxu0 %v5000
      %5221 = vmatprep.subr.mxu0 %v5009
      %5222 = vmatpush1.msra.mxu0 %v5008
      %5223 = vmatprep.subr.mxu0 %v5017
      %5224 = vmatpush1.msra.mxu0 %v5016
      %5225 = vmatprep.subr.mxu0 %v5025
      %5226 = vmatpush1.msra.mxu0 %v5024
      %5227 = vmatprep.mubr.f32.mxu0 %v4507
      %5228 = vmatmul.mubr.f32.gmra.mrb[0].mxu0 %v4506
      %v5229 = vpop.f32.mrb[0].mxu0
      %v5230 = vadd.f32 %v5141, %v5229
      %v5231 = vpop.f32.mrb[0].mxu0
      %v5232 = vadd.f32 %v5143, %v5231
      %5233 = vmatprep.mubr.f32.mxu0 %v4511
      %5234 = vmatmul.mubr.f32.gmra.mrb[0].mxu0 %v4510
      %v5235 = vpop.f32.mrb[0].mxu0
      %v5236 = vadd.f32 %v5147, %v5235
      %v5237 = vpop.f32.mrb[0].mxu0
      %v5238 = vadd.f32 %v5149, %v5237
      %5239 = vmatprep.mubr.f32.mxu0 %v4515
      %5240 = vmatmul.mubr.f32.gmra.mrb[0].mxu0 %v4514
      %v5241 = vpop.f32.mrb[0].mxu0
      %v5242 = vadd.f32 %v5153, %v5241
      %v5243 = vpop.f32.mrb[0].mxu0
      %v5244 = vadd.f32 %v5155, %v5243
      %5245 = vmatprep.mubr.f32.mxu0 %v4519
      %5246 = vmatmul.mubr.f32.gmra.mrb[0].mxu0 %v4518
      %v5247 = vpop.f32.mrb[0].mxu0
      %v5248 = vadd.f32 %v5159, %v5247
      %v5249 = vpop.f32.mrb[0].mxu0
      %v5250 = vadd.f32 %v5161, %v5249
      %5251 = vdwg.mxu0
      %5252 = vmatprep.subr.mxu0 %v4523
      %5253 = vmatpush1.msra.mxu0 %v4522
      %5254 = vmatprep.subr.mxu0 %v4531
      %5255 = vmatpush1.msra.mxu0 %v4530
      %5256 = vmatprep.subr.mxu0 %v4539
      %5257 = vmatpush1.msra.mxu0 %v4538
      %5258 = vmatprep.subr.mxu0 %v4547
      %5259 = vmatpush1.msra.mxu0 %v4546
      %5260 = vmatprep.subr.mxu0 %v4555
      %5261 = vmatpush1.msra.mxu0 %v4554
      %5262 = vmatprep.subr.mxu0 %v4563
      %5263 = vmatpush1.msra.mxu0 %v4562
      %5264 = vmatprep.subr.mxu0 %v4571
      %5265 = vmatpush1.msra.mxu0 %v4570
      %5266 = vmatprep.subr.mxu0 %v4579
      %5267 = vmatpush1.msra.mxu0 %v4578
      %5268 = vmatprep.subr.mxu0 %v4587
      %5269 = vmatpush1.msra.mxu0 %v4586
      %5270 = vmatprep.subr.mxu0 %v4595
      %5271 = vmatpush1.msra.mxu0 %v4594
      %5272 = vmatprep.subr.mxu0 %v4603
      %5273 = vmatpush1.msra.mxu0 %v4602
      %5274 = vmatprep.subr.mxu0 %v4611
      %5275 = vmatpush1.msra.mxu0 %v4610
      %5276 = vmatprep.subr.mxu0 %v4619
      %5277 = vmatpush1.msra.mxu0 %v4618
      %5278 = vmatprep.subr.mxu0 %v4627
      %5279 = vmatpush1.msra.mxu0 %v4626
      %5280 = vmatprep.subr.mxu0 %v4635
      %5281 = vmatpush1.msra.mxu0 %v4634
      %5282 = vmatprep.subr.mxu0 %v4643
      %5283 = vmatpush1.msra.mxu0 %v4642
      %5284 = vmatprep.subr.mxu0 %v4651
      %5285 = vmatpush1.msra.mxu0 %v4650
      %5286 = vmatprep.subr.mxu0 %v4659
      %5287 = vmatpush1.msra.mxu0 %v4658
      %5288 = vmatprep.subr.mxu0 %v4667
      %5289 = vmatpush1.msra.mxu0 %v4666
      %5290 = vmatprep.subr.mxu0 %v4675
      %5291 = vmatpush1.msra.mxu0 %v4674
      %5292 = vmatprep.subr.mxu0 %v4683
      %5293 = vmatpush1.msra.mxu0 %v4682
      %5294 = vmatprep.subr.mxu0 %v4691
      %5295 = vmatpush1.msra.mxu0 %v4690
      %5296 = vmatprep.subr.mxu0 %v4699
      %5297 = vmatpush1.msra.mxu0 %v4698
      %5298 = vmatprep.subr.mxu0 %v4707
      %5299 = vmatpush1.msra.mxu0 %v4706
      %5300 = vmatprep.subr.mxu0 %v4715
      %5301 = vmatpush1.msra.mxu0 %v4714
      %5302 = vmatprep.subr.mxu0 %v4723
      %5303 = vmatpush1.msra.mxu0 %v4722
      %5304 = vmatprep.subr.mxu0 %v4731
      %5305 = vmatpush1.msra.mxu0 %v4730
      %5306 = vmatprep.subr.mxu0 %v4739
      %5307 = vmatpush1.msra.mxu0 %v4738
      %5308 = vmatprep.subr.mxu0 %v4747
      %5309 = vmatpush1.msra.mxu0 %v4746
      %5310 = vmatprep.subr.mxu0 %v4755
      %5311 = vmatpush1.msra.mxu0 %v4754
      %5312 = vmatprep.subr.mxu0 %v4763
      %5313 = vmatpush1.msra.mxu0 %v4762
      %5314 = vmatprep.subr.mxu0 %v4771
      %5315 = vmatpush1.msra.mxu0 %v4770
      %5316 = vmatprep.mubr.f32.mxu0 %v4505
      %5317 = vmatmul.mubr.f32.gmra.mrb[0].mxu0 %v4504
      %v5318 = vpop.f32.mrb[0].mxu0
      %v5319 = vadd.f32 %v5045, %v5318
      %v5320 = vpop.f32.mrb[0].mxu0
      %v5321 = vadd.f32 %v5049, %v5320
      %5322 = vmatprep.mubr.f32.mxu0 %v4509
      %5323 = vmatmul.mubr.f32.gmra.mrb[0].mxu0 %v4508
      %v5324 = vpop.f32.mrb[0].mxu0
      %v5325 = vadd.f32 %v5045, %v5324
      %v5326 = vpop.f32.mrb[0].mxu0
      %v5327 = vadd.f32 %v5049, %v5326
      %5328 = vmatprep.mubr.f32.mxu0 %v4513
      %5329 = vmatmul.mubr.f32.gmra.mrb[0].mxu0 %v4512
      %v5330 = vpop.f32.mrb[0].mxu0
      %v5331 = vadd.f32 %v5045, %v5330
      %v5332 = vpop.f32.mrb[0].mxu0
      %v5333 = vadd.f32 %v5049, %v5332
      %5334 = vmatprep.mubr.f32.mxu0 %v4517
      %5335 = vmatmul.mubr.f32.gmra.mrb[0].mxu0 %v4516
      %v5336 = vpop.f32.mrb[0].mxu0
      %v5337 = vadd.f32 %v5045, %v5336
      %v5338 = vpop.f32.mrb[0].mxu0
      %v5339 = vadd.f32 %v5049, %v5338
      %5340 = vdwg.mxu0
      %5341 = vmatprep.subr.mxu0 %v4779
      %5342 = vmatpush1.msra.mxu0 %v4778
      %5343 = vmatprep.subr.mxu0 %v4787
      %5344 = vmatpush1.msra.mxu0 %v4786
      %5345 = vmatprep.subr.mxu0 %v4795
      %5346 = vmatpush1.msra.mxu0 %v4794
      %5347 = vmatprep.subr.mxu0 %v4803
      %5348 = vmatpush1.msra.mxu0 %v4802
      %5349 = vmatprep.subr.mxu0 %v4811
      %5350 = vmatpush1.msra.mxu0 %v4810
      %5351 = vmatprep.subr.mxu0 %v4819
      %5352 = vmatpush1.msra.mxu0 %v4818
      %5353 = vmatprep.subr.mxu0 %v4827
      %5354 = vmatpush1.msra.mxu0 %v4826
      %5355 = vmatprep.subr.mxu0 %v4835
      %5356 = vmatpush1.msra.mxu0 %v4834
      %5357 = vmatprep.subr.mxu0 %v4843
      %5358 = vmatpush1.msra.mxu0 %v4842
      %5359 = vmatprep.subr.mxu0 %v4851
      %5360 = vmatpush1.msra.mxu0 %v4850
      %5361 = vmatprep.subr.mxu0 %v4859
      %5362 = vmatpush1.msra.mxu0 %v4858
      %5363 = vmatprep.subr.mxu0 %v4867
      %5364 = vmatpush1.msra.mxu0 %v4866
      %5365 = vmatprep.subr.mxu0 %v4875
      %5366 = vmatpush1.msra.mxu0 %v4874
      %5367 = vmatprep.subr.mxu0 %v4883
      %5368 = vmatpush1.msra.mxu0 %v4882
      %5369 = vmatprep.subr.mxu0 %v4891
      %5370 = vmatpush1.msra.mxu0 %v4890
      %5371 = vmatprep.subr.mxu0 %v4899
      %5372 = vmatpush1.msra.mxu0 %v4898
      %5373 = vmatprep.subr.mxu0 %v4907
      %5374 = vmatpush1.msra.mxu0 %v4906
      %5375 = vmatprep.subr.mxu0 %v4915
      %5376 = vmatpush1.msra.mxu0 %v4914
      %5377 = vmatprep.subr.mxu0 %v4923
      %5378 = vmatpush1.msra.mxu0 %v4922
      %5379 = vmatprep.subr.mxu0 %v4931
      %5380 = vmatpush1.msra.mxu0 %v4930
      %5381 = vmatprep.subr.mxu0 %v4939
      %5382 = vmatpush1.msra.mxu0 %v4938
      %5383 = vmatprep.subr.mxu0 %v4947
      %5384 = vmatpush1.msra.mxu0 %v4946
      %5385 = vmatprep.subr.mxu0 %v4955
      %5386 = vmatpush1.msra.mxu0 %v4954
      %5387 = vmatprep.subr.mxu0 %v4963
      %5388 = vmatpush1.msra.mxu0 %v4962
      %5389 = vmatprep.subr.mxu0 %v4971
      %5390 = vmatpush1.msra.mxu0 %v4970
      %5391 = vmatprep.subr.mxu0 %v4979
      %5392 = vmatpush1.msra.mxu0 %v4978
      %5393 = vmatprep.subr.mxu0 %v4987
      %5394 = vmatpush1.msra.mxu0 %v4986
      %5395 = vmatprep.subr.mxu0 %v4995
      %5396 = vmatpush1.msra.mxu0 %v4994
      %5397 = vmatprep.subr.mxu0 %v5003
      %5398 = vmatpush1.msra.mxu0 %v5002
      %5399 = vmatprep.subr.mxu0 %v5011
      %5400 = vmatpush1.msra.mxu0 %v5010
      %5401 = vmatprep.subr.mxu0 %v5019
      %5402 = vmatpush1.msra.mxu0 %v5018
      %5403 = vmatprep.subr.mxu0 %v5027
      %5404 = vmatpush1.msra.mxu0 %v5026
      %5405 = vmatprep.mubr.f32.mxu0 %v4507
      %5406 = vmatmul.mubr.f32.gmra.mrb[0].mxu0 %v4506
      %v5407 = vpop.f32.mrb[0].mxu0
      %v5408 = vadd.f32 %v5319, %v5407
      %v5409 = vpop.f32.mrb[0].mxu0
      %v5410 = vadd.f32 %v5321, %v5409
      %5411 = vmatprep.mubr.f32.mxu0 %v4511
      %5412 = vmatmul.mubr.f32.gmra.mrb[0].mxu0 %v4510
      %v5413 = vpop.f32.mrb[0].mxu0
      %v5414 = vadd.f32 %v5325, %v5413
      %v5415 = vpop.f32.mrb[0].mxu0
      %v5416 = vadd.f32 %v5327, %v5415
      %5417 = vmatprep.mubr.f32.mxu0 %v4515
      %5418 = vmatmul.mubr.f32.gmra.mrb[0].mxu0 %v4514
      %v5419 = vpop.f32.mrb[0].mxu0
      %v5420 = vadd.f32 %v5331, %v5419
      %v5421 = vpop.f32.mrb[0].mxu0
      %v5422 = vadd.f32 %v5333, %v5421
      %5423 = vmatprep.mubr.f32.mxu0 %v4519
      %5424 = vmatmul.mubr.f32.gmra.mrb[0].mxu0 %v4518
      %v5425 = vpop.f32.mrb[0].mxu0
      %v5426 = vadd.f32 %v5337, %v5425
      %v5427 = vpop.f32.mrb[0].mxu0
      %v5428 = vadd.f32 %v5339, %v5427
      %5429 = vdwg.mxu0
      %5430 = vmatprep.subr.mxu0 %v4525
      %5431 = vmatpush1.msra.mxu0 %v4524
      %5432 = vmatprep.subr.mxu0 %v4533
      %5433 = vmatpush1.msra.mxu0 %v4532
      %5434 = vmatprep.subr.mxu0 %v4541
      %5435 = vmatpush1.msra.mxu0 %v4540
      %5436 = vmatprep.subr.mxu0 %v4549
      %5437 = vmatpush1.msra.mxu0 %v4548
      %5438 = vmatprep.subr.mxu0 %v4557
      %5439 = vmatpush1.msra.mxu0 %v4556
      %5440 = vmatprep.subr.mxu0 %v4565
      %5441 = vmatpush1.msra.mxu0 %v4564
      %5442 = vmatprep.subr.mxu0 %v4573
      %5443 = vmatpush1.msra.mxu0 %v4572
      %5444 = vmatprep.subr.mxu0 %v4581
      %5445 = vmatpush1.msra.mxu0 %v4580
      %5446 = vmatprep.subr.mxu0 %v4589
      %5447 = vmatpush1.msra.mxu0 %v4588
      %5448 = vmatprep.subr.mxu0 %v4597
      %5449 = vmatpush1.msra.mxu0 %v4596
      %5450 = vmatprep.subr.mxu0 %v4605
      %5451 = vmatpush1.msra.mxu0 %v4604
      %5452 = vmatprep.subr.mxu0 %v4613
      %5453 = vmatpush1.msra.mxu0 %v4612
      %5454 = vmatprep.subr.mxu0 %v4621
      %5455 = vmatpush1.msra.mxu0 %v4620
      %5456 = vmatprep.subr.mxu0 %v4629
      %5457 = vmatpush1.msra.mxu0 %v4628
      %5458 = vmatprep.subr.mxu0 %v4637
      %5459 = vmatpush1.msra.mxu0 %v4636
      %5460 = vmatprep.subr.mxu0 %v4645
      %5461 = vmatpush1.msra.mxu0 %v4644
      %5462 = vmatprep.subr.mxu0 %v4653
      %5463 = vmatpush1.msra.mxu0 %v4652
      %5464 = vmatprep.subr.mxu0 %v4661
      %5465 = vmatpush1.msra.mxu0 %v4660
      %5466 = vmatprep.subr.mxu0 %v4669
      %5467 = vmatpush1.msra.mxu0 %v4668
      %5468 = vmatprep.subr.mxu0 %v4677
      %5469 = vmatpush1.msra.mxu0 %v4676
      %5470 = vmatprep.subr.mxu0 %v4685
      %5471 = vmatpush1.msra.mxu0 %v4684
      %5472 = vmatprep.subr.mxu0 %v4693
      %5473 = vmatpush1.msra.mxu0 %v4692
      %5474 = vmatprep.subr.mxu0 %v4701
      %5475 = vmatpush1.msra.mxu0 %v4700
      %5476 = vmatprep.subr.mxu0 %v4709
      %5477 = vmatpush1.msra.mxu0 %v4708
      %5478 = vmatprep.subr.mxu0 %v4717
      %5479 = vmatpush1.msra.mxu0 %v4716
      %5480 = vmatprep.subr.mxu0 %v4725
      %5481 = vmatpush1.msra.mxu0 %v4724
      %5482 = vmatprep.subr.mxu0 %v4733
      %5483 = vmatpush1.msra.mxu0 %v4732
      %5484 = vmatprep.subr.mxu0 %v4741
      %5485 = vmatpush1.msra.mxu0 %v4740
      %5486 = vmatprep.subr.mxu0 %v4749
      %5487 = vmatpush1.msra.mxu0 %v4748
      %5488 = vmatprep.subr.mxu0 %v4757
      %5489 = vmatpush1.msra.mxu0 %v4756
      %5490 = vmatprep.subr.mxu0 %v4765
      %5491 = vmatpush1.msra.mxu0 %v4764
      %5492 = vmatprep.subr.mxu0 %v4773
      %5493 = vmatpush1.msra.mxu0 %v4772
      %5494 = vmatprep.mubr.f32.mxu0 %v4505
      %5495 = vmatmul.mubr.f32.gmra.mrb[0].mxu0 %v4504
      %v5496 = vpop.f32.mrb[0].mxu0
      %v5497 = vadd.f32 %v5053, %v5496
      %v5498 = vpop.f32.mrb[0].mxu0
      %v5499 = vadd.f32 %v5057, %v5498
      %5500 = vmatprep.mubr.f32.mxu0 %v4509
      %5501 = vmatmul.mubr.f32.gmra.mrb[0].mxu0 %v4508
      %v5502 = vpop.f32.mrb[0].mxu0
      %v5503 = vadd.f32 %v5053, %v5502
      %v5504 = vpop.f32.mrb[0].mxu0
      %v5505 = vadd.f32 %v5057, %v5504
      %5506 = vmatprep.mubr.f32.mxu0 %v4513
      %5507 = vmatmul.mubr.f32.gmra.mrb[0].mxu0 %v4512
      %v5508 = vpop.f32.mrb[0].mxu0
      %v5509 = vadd.f32 %v5053, %v5508
      %v5510 = vpop.f32.mrb[0].mxu0
      %v5511 = vadd.f32 %v5057, %v5510
      %5512 = vmatprep.mubr.f32.mxu0 %v4517
      %5513 = vmatmul.mubr.f32.gmra.mrb[0].mxu0 %v4516
      %v5514 = vpop.f32.mrb[0].mxu0
      %v5515 = vadd.f32 %v5053, %v5514
      %v5516 = vpop.f32.mrb[0].mxu0
      %v5517 = vadd.f32 %v5057, %v5516
      %5518 = vdwg.mxu0
      %5519 = vmatprep.subr.mxu0 %v4781
      %5520 = vmatpush1.msra.mxu0 %v4780
      %5521 = vmatprep.subr.mxu0 %v4789
      %5522 = vmatpush1.msra.mxu0 %v4788
      %5523 = vmatprep.subr.mxu0 %v4797
      %5524 = vmatpush1.msra.mxu0 %v4796
      %5525 = vmatprep.subr.mxu0 %v4805
      %5526 = vmatpush1.msra.mxu0 %v4804
      %5527 = vmatprep.subr.mxu0 %v4813
      %5528 = vmatpush1.msra.mxu0 %v4812
      %5529 = vmatprep.subr.mxu0 %v4821
      %5530 = vmatpush1.msra.mxu0 %v4820
      %5531 = vmatprep.subr.mxu0 %v4829
      %5532 = vmatpush1.msra.mxu0 %v4828
      %5533 = vmatprep.subr.mxu0 %v4837
      %5534 = vmatpush1.msra.mxu0 %v4836
      %5535 = vmatprep.subr.mxu0 %v4845
      %5536 = vmatpush1.msra.mxu0 %v4844
      %5537 = vmatprep.subr.mxu0 %v4853
      %5538 = vmatpush1.msra.mxu0 %v4852
      %5539 = vmatprep.subr.mxu0 %v4861
      %5540 = vmatpush1.msra.mxu0 %v4860
      %5541 = vmatprep.subr.mxu0 %v4869
      %5542 = vmatpush1.msra.mxu0 %v4868
      %5543 = vmatprep.subr.mxu0 %v4877
      %5544 = vmatpush1.msra.mxu0 %v4876
      %5545 = vmatprep.subr.mxu0 %v4885
      %5546 = vmatpush1.msra.mxu0 %v4884
      %5547 = vmatprep.subr.mxu0 %v4893
      %5548 = vmatpush1.msra.mxu0 %v4892
      %5549 = vmatprep.subr.mxu0 %v4901
      %5550 = vmatpush1.msra.mxu0 %v4900
      %5551 = vmatprep.subr.mxu0 %v4909
      %5552 = vmatpush1.msra.mxu0 %v4908
      %5553 = vmatprep.subr.mxu0 %v4917
      %5554 = vmatpush1.msra.mxu0 %v4916
      %5555 = vmatprep.subr.mxu0 %v4925
      %5556 = vmatpush1.msra.mxu0 %v4924
      %5557 = vmatprep.subr.mxu0 %v4933
      %5558 = vmatpush1.msra.mxu0 %v4932
      %5559 = vmatprep.subr.mxu0 %v4941
      %5560 = vmatpush1.msra.mxu0 %v4940
      %5561 = vmatprep.subr.mxu0 %v4949
      %5562 = vmatpush1.msra.mxu0 %v4948
      %5563 = vmatprep.subr.mxu0 %v4957
      %5564 = vmatpush1.msra.mxu0 %v4956
      %5565 = vmatprep.subr.mxu0 %v4965
      %5566 = vmatpush1.msra.mxu0 %v4964
      %5567 = vmatprep.subr.mxu0 %v4973
      %5568 = vmatpush1.msra.mxu0 %v4972
      %5569 = vmatprep.subr.mxu0 %v4981
      %5570 = vmatpush1.msra.mxu0 %v4980
      %5571 = vmatprep.subr.mxu0 %v4989
      %5572 = vmatpush1.msra.mxu0 %v4988
      %5573 = vmatprep.subr.mxu0 %v4997
      %5574 = vmatpush1.msra.mxu0 %v4996
      %5575 = vmatprep.subr.mxu0 %v5005
      %5576 = vmatpush1.msra.mxu0 %v5004
      %5577 = vmatprep.subr.mxu0 %v5013
      %5578 = vmatpush1.msra.mxu0 %v5012
      %5579 = vmatprep.subr.mxu0 %v5021
      %5580 = vmatpush1.msra.mxu0 %v5020
      %5581 = vmatprep.subr.mxu0 %v5029
      %5582 = vmatpush1.msra.mxu0 %v5028
      %5583 = vmatprep.mubr.f32.mxu0 %v4507
      %5584 = vmatmul.mubr.f32.gmra.mrb[0].mxu0 %v4506
      %v5585 = vpop.f32.mrb[0].mxu0
      %v5586 = vadd.f32 %v5497, %v5585
      %v5587 = vpop.f32.mrb[0].mxu0
      %v5588 = vadd.f32 %v5499, %v5587
      %5589 = vmatprep.mubr.f32.mxu0 %v4511
      %5590 = vmatmul.mubr.f32.gmra.mrb[0].mxu0 %v4510
      %v5591 = vpop.f32.mrb[0].mxu0
      %v5592 = vadd.f32 %v5503, %v5591
      %v5593 = vpop.f32.mrb[0].mxu0
      %v5594 = vadd.f32 %v5505, %v5593
      %5595 = vmatprep.mubr.f32.mxu0 %v4515
      %5596 = vmatmul.mubr.f32.gmra.mrb[0].mxu0 %v4514
      %v5597 = vpop.f32.mrb[0].mxu0
      %v5598 = vadd.f32 %v5509, %v5597
      %v5599 = vpop.f32.mrb[0].mxu0
      %v5600 = vadd.f32 %v5511, %v5599
      %5601 = vmatprep.mubr.f32.mxu0 %v4519
      %5602 = vmatmul.mubr.f32.gmra.mrb[0].mxu0 %v4518
      %v5603 = vpop.f32.mrb[0].mxu0
      %v5604 = vadd.f32 %v5515, %v5603
      %v5605 = vpop.f32.mrb[0].mxu0
      %v5606 = vadd.f32 %v5517, %v5605
      %5607 = vdwg.mxu0
      %5608 = vmatprep.subr.mxu0 %v4527
      %5609 = vmatpush1.msra.mxu0 %v4526
      %5610 = vmatprep.subr.mxu0 %v4535
      %5611 = vmatpush1.msra.mxu0 %v4534
      %5612 = vmatprep.subr.mxu0 %v4543
      %5613 = vmatpush1.msra.mxu0 %v4542
      %5614 = vmatprep.subr.mxu0 %v4551
      %5615 = vmatpush1.msra.mxu0 %v4550
      %5616 = vmatprep.subr.mxu0 %v4559
      %5617 = vmatpush1.msra.mxu0 %v4558
      %5618 = vmatprep.subr.mxu0 %v4567
      %5619 = vmatpush1.msra.mxu0 %v4566
      %5620 = vmatprep.subr.mxu0 %v4575
      %5621 = vmatpush1.msra.mxu0 %v4574
      %5622 = vmatprep.subr.mxu0 %v4583
      %5623 = vmatpush1.msra.mxu0 %v4582
      %5624 = vmatprep.subr.mxu0 %v4591
      %5625 = vmatpush1.msra.mxu0 %v4590
      %5626 = vmatprep.subr.mxu0 %v4599
      %5627 = vmatpush1.msra.mxu0 %v4598
      %5628 = vmatprep.subr.mxu0 %v4607
      %5629 = vmatpush1.msra.mxu0 %v4606
      %5630 = vmatprep.subr.mxu0 %v4615
      %5631 = vmatpush1.msra.mxu0 %v4614
      %5632 = vmatprep.subr.mxu0 %v4623
      %5633 = vmatpush1.msra.mxu0 %v4622
      %5634 = vmatprep.subr.mxu0 %v4631
      %5635 = vmatpush1.msra.mxu0 %v4630
      %5636 = vmatprep.subr.mxu0 %v4639
      %5637 = vmatpush1.msra.mxu0 %v4638
      %5638 = vmatprep.subr.mxu0 %v4647
      %5639 = vmatpush1.msra.mxu0 %v4646
      %5640 = vmatprep.subr.mxu0 %v4655
      %5641 = vmatpush1.msra.mxu0 %v4654
      %5642 = vmatprep.subr.mxu0 %v4663
      %5643 = vmatpush1.msra.mxu0 %v4662
      %5644 = vmatprep.subr.mxu0 %v4671
      %5645 = vmatpush1.msra.mxu0 %v4670
      %5646 = vmatprep.subr.mxu0 %v4679
      %5647 = vmatpush1.msra.mxu0 %v4678
      %5648 = vmatprep.subr.mxu0 %v4687
      %5649 = vmatpush1.msra.mxu0 %v4686
      %5650 = vmatprep.subr.mxu0 %v4695
      %5651 = vmatpush1.msra.mxu0 %v4694
      %5652 = vmatprep.subr.mxu0 %v4703
      %5653 = vmatpush1.msra.mxu0 %v4702
      %5654 = vmatprep.subr.mxu0 %v4711
      %5655 = vmatpush1.msra.mxu0 %v4710
      %5656 = vmatprep.subr.mxu0 %v4719
      %5657 = vmatpush1.msra.mxu0 %v4718
      %5658 = vmatprep.subr.mxu0 %v4727
      %5659 = vmatpush1.msra.mxu0 %v4726
      %5660 = vmatprep.subr.mxu0 %v4735
      %5661 = vmatpush1.msra.mxu0 %v4734
      %5662 = vmatprep.subr.mxu0 %v4743
      %5663 = vmatpush1.msra.mxu0 %v4742
      %5664 = vmatprep.subr.mxu0 %v4751
      %5665 = vmatpush1.msra.mxu0 %v4750
      %5666 = vmatprep.subr.mxu0 %v4759
      %5667 = vmatpush1.msra.mxu0 %v4758
      %5668 = vmatprep.subr.mxu0 %v4767
      %5669 = vmatpush1.msra.mxu0 %v4766
      %5670 = vmatprep.subr.mxu0 %v4775
      %5671 = vmatpush1.msra.mxu0 %v4774
      %5672 = vmatprep.mubr.f32.mxu0 %v4505
      %5673 = vmatmul.mubr.f32.gmra.mrb[0].mxu0 %v4504
      %v5674 = vpop.f32.mrb[0].mxu0
      %v5675 = vadd.f32 %v5061, %v5674
      %v5676 = vpop.f32.mrb[0].mxu0
      %v5677 = vadd.f32 %v5065, %v5676
      %5678 = vmatprep.mubr.f32.mxu0 %v4509
      %5679 = vmatmul.mubr.f32.gmra.mrb[0].mxu0 %v4508
      %v5680 = vpop.f32.mrb[0].mxu0
      %v5681 = vadd.f32 %v5061, %v5680
      %v5682 = vpop.f32.mrb[0].mxu0
      %v5683 = vadd.f32 %v5065, %v5682
      %5684 = vmatprep.mubr.f32.mxu0 %v4513
      %5685 = vmatmul.mubr.f32.gmra.mrb[0].mxu0 %v4512
      %v5686 = vpop.f32.mrb[0].mxu0
      %v5687 = vadd.f32 %v5061, %v5686
      %v5688 = vpop.f32.mrb[0].mxu0
      %v5689 = vadd.f32 %v5065, %v5688
      %5690 = vmatprep.mubr.f32.mxu0 %v4517
      %5691 = vmatmul.mubr.f32.gmra.mrb[0].mxu0 %v4516
      %v5692 = vpop.f32.mrb[0].mxu0
      %v5693 = vadd.f32 %v5061, %v5692
      %v5694 = vpop.f32.mrb[0].mxu0
      %v5695 = vadd.f32 %v5065, %v5694
      %5696 = vdwg.mxu0
      %5697 = vmatprep.subr.mxu0 %v4783
      %5698 = vmatpush1.msra.mxu0 %v4782
      %5699 = vmatprep.subr.mxu0 %v4791
      %5700 = vmatpush1.msra.mxu0 %v4790
      %5701 = vmatprep.subr.mxu0 %v4799
      %5702 = vmatpush1.msra.mxu0 %v4798
      %5703 = vmatprep.subr.mxu0 %v4807
      %5704 = vmatpush1.msra.mxu0 %v4806
      %5705 = vmatprep.subr.mxu0 %v4815
      %5706 = vmatpush1.msra.mxu0 %v4814
      %5707 = vmatprep.subr.mxu0 %v4823
      %5708 = vmatpush1.msra.mxu0 %v4822
      %5709 = vmatprep.subr.mxu0 %v4831
      %5710 = vmatpush1.msra.mxu0 %v4830
      %5711 = vmatprep.subr.mxu0 %v4839
      %5712 = vmatpush1.msra.mxu0 %v4838
      %5713 = vmatprep.subr.mxu0 %v4847
      %5714 = vmatpush1.msra.mxu0 %v4846
      %5715 = vmatprep.subr.mxu0 %v4855
      %5716 = vmatpush1.msra.mxu0 %v4854
      %5717 = vmatprep.subr.mxu0 %v4863
      %5718 = vmatpush1.msra.mxu0 %v4862
      %5719 = vmatprep.subr.mxu0 %v4871
      %5720 = vmatpush1.msra.mxu0 %v4870
      %5721 = vmatprep.subr.mxu0 %v4879
      %5722 = vmatpush1.msra.mxu0 %v4878
      %5723 = vmatprep.subr.mxu0 %v4887
      %5724 = vmatpush1.msra.mxu0 %v4886
      %5725 = vmatprep.subr.mxu0 %v4895
      %5726 = vmatpush1.msra.mxu0 %v4894
      %5727 = vmatprep.subr.mxu0 %v4903
      %5728 = vmatpush1.msra.mxu0 %v4902
      %5729 = vmatprep.subr.mxu0 %v4911
      %5730 = vmatpush1.msra.mxu0 %v4910
      %5731 = vmatprep.subr.mxu0 %v4919
      %5732 = vmatpush1.msra.mxu0 %v4918
      %5733 = vmatprep.subr.mxu0 %v4927
      %5734 = vmatpush1.msra.mxu0 %v4926
      %5735 = vmatprep.subr.mxu0 %v4935
      %5736 = vmatpush1.msra.mxu0 %v4934
      %5737 = vmatprep.subr.mxu0 %v4943
      %5738 = vmatpush1.msra.mxu0 %v4942
      %5739 = vmatprep.subr.mxu0 %v4951
      %5740 = vmatpush1.msra.mxu0 %v4950
      %5741 = vmatprep.subr.mxu0 %v4959
      %5742 = vmatpush1.msra.mxu0 %v4958
      %5743 = vmatprep.subr.mxu0 %v4967
      %5744 = vmatpush1.msra.mxu0 %v4966
      %5745 = vmatprep.subr.mxu0 %v4975
      %5746 = vmatpush1.msra.mxu0 %v4974
      %5747 = vmatprep.subr.mxu0 %v4983
      %5748 = vmatpush1.msra.mxu0 %v4982
      %5749 = vmatprep.subr.mxu0 %v4991
      %5750 = vmatpush1.msra.mxu0 %v4990
      %5751 = vmatprep.subr.mxu0 %v4999
      %5752 = vmatpush1.msra.mxu0 %v4998
      %5753 = vmatprep.subr.mxu0 %v5007
      %5754 = vmatpush1.msra.mxu0 %v5006
      %5755 = vmatprep.subr.mxu0 %v5015
      %5756 = vmatpush1.msra.mxu0 %v5014
      %5757 = vmatprep.subr.mxu0 %v5023
      %5758 = vmatpush1.msra.mxu0 %v5022
      %5759 = vmatprep.subr.mxu0 %v5031
      %5760 = vmatpush1.msra.mxu0 %v5030
      %5761 = vmatprep.mubr.f32.mxu0 %v4507
      %5762 = vmatmul.mubr.f32.gmra.mrb[0].mxu0 %v4506
      %v5763 = vpop.f32.mrb[0].mxu0
      %v5764 = vadd.f32 %v5675, %v5763
      %v5765 = vpop.f32.mrb[0].mxu0
      %v5766 = vadd.f32 %v5677, %v5765
      %5767 = vmatprep.mubr.f32.mxu0 %v4511
      %5768 = vmatmul.mubr.f32.gmra.mrb[0].mxu0 %v4510
      %v5769 = vpop.f32.mrb[0].mxu0
      %v5770 = vadd.f32 %v5681, %v5769
      %v5771 = vpop.f32.mrb[0].mxu0
      %v5772 = vadd.f32 %v5683, %v5771
      %5773 = vmatprep.mubr.f32.mxu0 %v4515
      %5774 = vmatmul.mubr.f32.gmra.mrb[0].mxu0 %v4514
      %v5775 = vpop.f32.mrb[0].mxu0
      %v5776 = vadd.f32 %v5687, %v5775
      %v5777 = vpop.f32.mrb[0].mxu0
      %v5778 = vadd.f32 %v5689, %v5777
      %5779 = vmatprep.mubr.f32.mxu0 %v4519
      %5780 = vmatmul.mubr.f32.gmra.mrb[0].mxu0 %v4518
      %v5781 = vpop.f32.mrb[0].mxu0
      %v5782 = vadd.f32 %v5693, %v5781
      %v5783 = vpop.f32.mrb[0].mxu0
      %v5784 = vadd.f32 %v5695, %v5783
      %5785 = vdwg.mxu0
      %5786 = vst [vmem:[%s467] sm:$0xff] %v5230
      %5787 = vst [vmem:[%s467 + $0x8] sm:$0xff] %v5232
      %5788 = vst [vmem:[%s467 + $0x10] sm:$0xff] %v5408
      %5789 = vst [vmem:[%s467 + $0x18] sm:$0xff] %v5410
      %5790 = vst [vmem:[%s467 + $0x20] sm:$0xff] %v5586
      %5791 = vst [vmem:[%s467 + $0x28] sm:$0xff] %v5588
      %5792 = vst [vmem:[%s467 + $0x30] sm:$0xff] %v5764
      %5793 = vst [vmem:[%s467 + $0x38] sm:$0xff] %v5766
      %5794 = vst [vmem:[%s467 + $0x40] sm:$0xff] %v5236
      %5795 = vst [vmem:[%s467 + $0x48] sm:$0xff] %v5238
      %5796 = vst [vmem:[%s467 + $0x50] sm:$0xff] %v5414
      %5797 = vst [vmem:[%s467 + $0x58] sm:$0xff] %v5416
      %5798 = vst [vmem:[%s467 + $0x60] sm:$0xff] %v5592
      %5799 = vst [vmem:[%s467 + $0x68] sm:$0xff] %v5594
      %5800 = vst [vmem:[%s467 + $0x70] sm:$0xff] %v5770
      %5801 = vst [vmem:[%s467 + $0x78] sm:$0xff] %v5772
      %5802 = vst [vmem:[%s467 + $0x80] sm:$0xff] %v5242
      %5803 = vst [vmem:[%s467 + $0x88] sm:$0xff] %v5244
      %5804 = vst [vmem:[%s467 + $0x90] sm:$0xff] %v5420
      %5805 = vst [vmem:[%s467 + $0x98] sm:$0xff] %v5422
      %5806 = vst [vmem:[%s467 + $0xa0] sm:$0xff] %v5598
      %5807 = vst [vmem:[%s467 + $0xa8] sm:$0xff] %v5600
      %5808 = vst [vmem:[%s467 + $0xb0] sm:$0xff] %v5776
      %5809 = vst [vmem:[%s467 + $0xb8] sm:$0xff] %v5778
      %5810 = vst [vmem:[%s467 + $0xc0] sm:$0xff] %v5248
      %5811 = vst [vmem:[%s467 + $0xc8] sm:$0xff] %v5250
      %5812 = vst [vmem:[%s467 + $0xd0] sm:$0xff] %v5426
      %5813 = vst [vmem:[%s467 + $0xd8] sm:$0xff] %v5428
      %5814 = vst [vmem:[%s467 + $0xe0] sm:$0xff] %v5604
      %5815 = vst [vmem:[%s467 + $0xe8] sm:$0xff] %v5606
      %5816 = vst [vmem:[%s467 + $0xf0] sm:$0xff] %v5782
      %5817 = vst [vmem:[%s467 + $0xf8] sm:$0xff] %v5784
      %v5818 = vld [vmem:[%s12] sm:$0xff]
      %v5819 = vld [vmem:[%s12 + $0x8] sm:$0xff]
      %v5820 = vld [vmem:[%s12 + $0x10] sm:$0xff]
      %v5821 = vld [vmem:[%s12 + $0x18] sm:$0xff]
      %v5822 = vld [vmem:[%s12 + $0x20] sm:$0xff]
      %v5823 = vld [vmem:[%s12 + $0x28] sm:$0xff]
      %v5824 = vld [vmem:[%s12 + $0x30] sm:$0xff]
      %v5825 = vld [vmem:[%s12 + $0x38] sm:$0xff]
      %v5826 = vld [vmem:[%s12 + $0x40] sm:$0xff]
      %v5827 = vld [vmem:[%s12 + $0x48] sm:$0xff]
      %v5828 = vld [vmem:[%s12 + $0x50] sm:$0xff]
      %v5829 = vld [vmem:[%s12 + $0x58] sm:$0xff]
      %v5830 = vld [vmem:[%s12 + $0x60] sm:$0xff]
      %v5831 = vld [vmem:[%s12 + $0x68] sm:$0xff]
      %v5832 = vld [vmem:[%s12 + $0x70] sm:$0xff]
      %v5833 = vld [vmem:[%s12 + $0x78] sm:$0xff]
      %v5834 = vld [vmem:[%s12 + $0x80] sm:$0xff]
      %v5835 = vld [vmem:[%s12 + $0x88] sm:$0xff]
      %v5836 = vld [vmem:[%s12 + $0x90] sm:$0xff]
      %v5837 = vld [vmem:[%s12 + $0x98] sm:$0xff]
      %v5838 = vld [vmem:[%s12 + $0xa0] sm:$0xff]
      %v5839 = vld [vmem:[%s12 + $0xa8] sm:$0xff]
      %v5840 = vld [vmem:[%s12 + $0xb0] sm:$0xff]
      %v5841 = vld [vmem:[%s12 + $0xb8] sm:$0xff]
      %v5842 = vld [vmem:[%s12 + $0xc0] sm:$0xff]
      %v5843 = vld [vmem:[%s12 + $0xc8] sm:$0xff]
      %v5844 = vld [vmem:[%s12 + $0xd0] sm:$0xff]
      %v5845 = vld [vmem:[%s12 + $0xd8] sm:$0xff]
      %v5846 = vld [vmem:[%s12 + $0xe0] sm:$0xff]
      %v5847 = vld [vmem:[%s12 + $0xe8] sm:$0xff]
      %v5848 = vld [vmem:[%s12 + $0xf0] sm:$0xff]
      %v5849 = vld [vmem:[%s12 + $0xf8] sm:$0xff]
      %v5850 = vld [vmem:[%s12 + $0x100] sm:$0xff]
      %v5851 = vld [vmem:[%s12 + $0x108] sm:$0xff]
      %v5852 = vld [vmem:[%s12 + $0x110] sm:$0xff]
      %v5853 = vld [vmem:[%s12 + $0x118] sm:$0xff]
      %v5854 = vld [vmem:[%s12 + $0x120] sm:$0xff]
      %v5855 = vld [vmem:[%s12 + $0x128] sm:$0xff]
      %v5856 = vld [vmem:[%s12 + $0x130] sm:$0xff]
      %v5857 = vld [vmem:[%s12 + $0x138] sm:$0xff]
      %v5858 = vld [vmem:[%s12 + $0x140] sm:$0xff]
      %v5859 = vld [vmem:[%s12 + $0x148] sm:$0xff]
      %v5860 = vld [vmem:[%s12 + $0x150] sm:$0xff]
      %v5861 = vld [vmem:[%s12 + $0x158] sm:$0xff]
      %v5862 = vld [vmem:[%s12 + $0x160] sm:$0xff]
      %v5863 = vld [vmem:[%s12 + $0x168] sm:$0xff]
      %v5864 = vld [vmem:[%s12 + $0x170] sm:$0xff]
      %v5865 = vld [vmem:[%s12 + $0x178] sm:$0xff]
      %v5866 = vld [vmem:[%s12 + $0x180] sm:$0xff]
      %v5867 = vld [vmem:[%s12 + $0x188] sm:$0xff]
      %v5868 = vld [vmem:[%s12 + $0x190] sm:$0xff]
      %v5869 = vld [vmem:[%s12 + $0x198] sm:$0xff]
      %v5870 = vld [vmem:[%s12 + $0x1a0] sm:$0xff]
      %v5871 = vld [vmem:[%s12 + $0x1a8] sm:$0xff]
      %v5872 = vld [vmem:[%s12 + $0x1b0] sm:$0xff]
      %v5873 = vld [vmem:[%s12 + $0x1b8] sm:$0xff]
      %v5874 = vld [vmem:[%s12 + $0x1c0] sm:$0xff]
      %v5875 = vld [vmem:[%s12 + $0x1c8] sm:$0xff]
      %v5876 = vld [vmem:[%s12 + $0x1d0] sm:$0xff]
      %v5877 = vld [vmem:[%s12 + $0x1d8] sm:$0xff]
      %v5878 = vld [vmem:[%s12 + $0x1e0] sm:$0xff]
      %v5879 = vld [vmem:[%s12 + $0x1e8] sm:$0xff]
      %v5880 = vld [vmem:[%s12 + $0x1f0] sm:$0xff]
      %v5881 = vld [vmem:[%s12 + $0x1f8] sm:$0xff]
      %v5882 = vld [vmem:[%s12 + $0x200] sm:$0xff]
      %v5883 = vld [vmem:[%s12 + $0x208] sm:$0xff]
      %v5884 = vld [vmem:[%s12 + $0x210] sm:$0xff]
      %v5885 = vld [vmem:[%s12 + $0x218] sm:$0xff]
      %v5886 = vld [vmem:[%s12 + $0x220] sm:$0xff]
      %v5887 = vld [vmem:[%s12 + $0x228] sm:$0xff]
      %v5888 = vld [vmem:[%s12 + $0x230] sm:$0xff]
      %v5889 = vld [vmem:[%s12 + $0x238] sm:$0xff]
      %v5890 = vld [vmem:[%s12 + $0x240] sm:$0xff]
      %v5891 = vld [vmem:[%s12 + $0x248] sm:$0xff]
      %v5892 = vld [vmem:[%s12 + $0x250] sm:$0xff]
      %v5893 = vld [vmem:[%s12 + $0x258] sm:$0xff]
      %v5894 = vld [vmem:[%s12 + $0x260] sm:$0xff]
      %v5895 = vld [vmem:[%s12 + $0x268] sm:$0xff]
      %v5896 = vld [vmem:[%s12 + $0x270] sm:$0xff]
      %v5897 = vld [vmem:[%s12 + $0x278] sm:$0xff]
      %v5898 = vld [vmem:[%s12 + $0x280] sm:$0xff]
      %v5899 = vld [vmem:[%s12 + $0x288] sm:$0xff]
      %v5900 = vld [vmem:[%s12 + $0x290] sm:$0xff]
      %v5901 = vld [vmem:[%s12 + $0x298] sm:$0xff]
      %v5902 = vld [vmem:[%s12 + $0x2a0] sm:$0xff]
      %v5903 = vld [vmem:[%s12 + $0x2a8] sm:$0xff]
      %v5904 = vld [vmem:[%s12 + $0x2b0] sm:$0xff]
      %v5905 = vld [vmem:[%s12 + $0x2b8] sm:$0xff]
      %v5906 = vld [vmem:[%s12 + $0x2c0] sm:$0xff]
      %v5907 = vld [vmem:[%s12 + $0x2c8] sm:$0xff]
      %v5908 = vld [vmem:[%s12 + $0x2d0] sm:$0xff]
      %v5909 = vld [vmem:[%s12 + $0x2d8] sm:$0xff]
      %v5910 = vld [vmem:[%s12 + $0x2e0] sm:$0xff]
      %v5911 = vld [vmem:[%s12 + $0x2e8] sm:$0xff]
      %v5912 = vld [vmem:[%s12 + $0x2f0] sm:$0xff]
      %v5913 = vld [vmem:[%s12 + $0x2f8] sm:$0xff]
      %v5914 = vld [vmem:[%s12 + $0x300] sm:$0xff]
      %v5915 = vld [vmem:[%s12 + $0x308] sm:$0xff]
      %v5916 = vld [vmem:[%s12 + $0x310] sm:$0xff]
      %v5917 = vld [vmem:[%s12 + $0x318] sm:$0xff]
      %v5918 = vld [vmem:[%s12 + $0x320] sm:$0xff]
      %v5919 = vld [vmem:[%s12 + $0x328] sm:$0xff]
      %v5920 = vld [vmem:[%s12 + $0x330] sm:$0xff]
      %v5921 = vld [vmem:[%s12 + $0x338] sm:$0xff]
      %v5922 = vld [vmem:[%s12 + $0x340] sm:$0xff]
      %v5923 = vld [vmem:[%s12 + $0x348] sm:$0xff]
      %v5924 = vld [vmem:[%s12 + $0x350] sm:$0xff]
      %v5925 = vld [vmem:[%s12 + $0x358] sm:$0xff]
      %v5926 = vld [vmem:[%s12 + $0x360] sm:$0xff]
      %v5927 = vld [vmem:[%s12 + $0x368] sm:$0xff]
      %v5928 = vld [vmem:[%s12 + $0x370] sm:$0xff]
      %v5929 = vld [vmem:[%s12 + $0x378] sm:$0xff]
      %v5930 = vld [vmem:[%s12 + $0x380] sm:$0xff]
      %v5931 = vld [vmem:[%s12 + $0x388] sm:$0xff]
      %v5932 = vld [vmem:[%s12 + $0x390] sm:$0xff]
      %v5933 = vld [vmem:[%s12 + $0x398] sm:$0xff]
      %v5934 = vld [vmem:[%s12 + $0x3a0] sm:$0xff]
      %v5935 = vld [vmem:[%s12 + $0x3a8] sm:$0xff]
      %v5936 = vld [vmem:[%s12 + $0x3b0] sm:$0xff]
      %v5937 = vld [vmem:[%s12 + $0x3b8] sm:$0xff]
      %v5938 = vld [vmem:[%s12 + $0x3c0] sm:$0xff]
      %v5939 = vld [vmem:[%s12 + $0x3c8] sm:$0xff]
      %v5940 = vld [vmem:[%s12 + $0x3d0] sm:$0xff]
      %v5941 = vld [vmem:[%s12 + $0x3d8] sm:$0xff]
      %v5942 = vld [vmem:[%s12 + $0x3e0] sm:$0xff]
      %v5943 = vld [vmem:[%s12 + $0x3e8] sm:$0xff]
      %v5944 = vld [vmem:[%s12 + $0x3f0] sm:$0xff]
      %v5945 = vld [vmem:[%s12 + $0x3f8] sm:$0xff]
      %v5946 = vld [vmem:[%s12 + $0x400] sm:$0xff]
      %v5947 = vld [vmem:[%s12 + $0x408] sm:$0xff]
      %v5948 = vld [vmem:[%s12 + $0x410] sm:$0xff]
      %v5949 = vld [vmem:[%s12 + $0x418] sm:$0xff]
      %v5950 = vld [vmem:[%s12 + $0x420] sm:$0xff]
      %v5951 = vld [vmem:[%s12 + $0x428] sm:$0xff]
      %v5952 = vld [vmem:[%s12 + $0x430] sm:$0xff]
      %v5953 = vld [vmem:[%s12 + $0x438] sm:$0xff]
      %v5954 = vld [vmem:[%s12 + $0x440] sm:$0xff]
      %v5955 = vld [vmem:[%s12 + $0x448] sm:$0xff]
      %v5956 = vld [vmem:[%s12 + $0x450] sm:$0xff]
      %v5957 = vld [vmem:[%s12 + $0x458] sm:$0xff]
      %v5958 = vld [vmem:[%s12 + $0x460] sm:$0xff]
      %v5959 = vld [vmem:[%s12 + $0x468] sm:$0xff]
      %v5960 = vld [vmem:[%s12 + $0x470] sm:$0xff]
      %v5961 = vld [vmem:[%s12 + $0x478] sm:$0xff]
      %v5962 = vld [vmem:[%s12 + $0x480] sm:$0xff]
      %v5963 = vld [vmem:[%s12 + $0x488] sm:$0xff]
      %v5964 = vld [vmem:[%s12 + $0x490] sm:$0xff]
      %v5965 = vld [vmem:[%s12 + $0x498] sm:$0xff]
      %v5966 = vld [vmem:[%s12 + $0x4a0] sm:$0xff]
      %v5967 = vld [vmem:[%s12 + $0x4a8] sm:$0xff]
      %v5968 = vld [vmem:[%s12 + $0x4b0] sm:$0xff]
      %v5969 = vld [vmem:[%s12 + $0x4b8] sm:$0xff]
      %v5970 = vld [vmem:[%s12 + $0x4c0] sm:$0xff]
      %v5971 = vld [vmem:[%s12 + $0x4c8] sm:$0xff]
      %v5972 = vld [vmem:[%s12 + $0x4d0] sm:$0xff]
      %v5973 = vld [vmem:[%s12 + $0x4d8] sm:$0xff]
      %v5974 = vld [vmem:[%s12 + $0x4e0] sm:$0xff]
      %v5975 = vld [vmem:[%s12 + $0x4e8] sm:$0xff]
      %v5976 = vld [vmem:[%s12 + $0x4f0] sm:$0xff]
      %v5977 = vld [vmem:[%s12 + $0x4f8] sm:$0xff]
      %v5978 = vld [vmem:[%s12 + $0x500] sm:$0xff]
      %v5979 = vld [vmem:[%s12 + $0x508] sm:$0xff]
      %v5980 = vld [vmem:[%s12 + $0x510] sm:$0xff]
      %v5981 = vld [vmem:[%s12 + $0x518] sm:$0xff]
      %v5982 = vld [vmem:[%s12 + $0x520] sm:$0xff]
      %v5983 = vld [vmem:[%s12 + $0x528] sm:$0xff]
      %v5984 = vld [vmem:[%s12 + $0x530] sm:$0xff]
      %v5985 = vld [vmem:[%s12 + $0x538] sm:$0xff]
      %v5986 = vld [vmem:[%s12 + $0x540] sm:$0xff]
      %v5987 = vld [vmem:[%s12 + $0x548] sm:$0xff]
      %v5988 = vld [vmem:[%s12 + $0x550] sm:$0xff]
      %v5989 = vld [vmem:[%s12 + $0x558] sm:$0xff]
      %v5990 = vld [vmem:[%s12 + $0x560] sm:$0xff]
      %v5991 = vld [vmem:[%s12 + $0x568] sm:$0xff]
      %v5992 = vld [vmem:[%s12 + $0x570] sm:$0xff]
      %v5993 = vld [vmem:[%s12 + $0x578] sm:$0xff]
      %v5994 = vld [vmem:[%s12 + $0x580] sm:$0xff]
      %v5995 = vld [vmem:[%s12 + $0x588] sm:$0xff]
      %v5996 = vld [vmem:[%s12 + $0x590] sm:$0xff]
      %v5997 = vld [vmem:[%s12 + $0x598] sm:$0xff]
      %v5998 = vld [vmem:[%s12 + $0x5a0] sm:$0xff]
      %v5999 = vld [vmem:[%s12 + $0x5a8] sm:$0xff]
      %v6000 = vld [vmem:[%s12 + $0x5b0] sm:$0xff]
      %v6001 = vld [vmem:[%s12 + $0x5b8] sm:$0xff]
      %v6002 = vld [vmem:[%s12 + $0x5c0] sm:$0xff]
      %v6003 = vld [vmem:[%s12 + $0x5c8] sm:$0xff]
      %v6004 = vld [vmem:[%s12 + $0x5d0] sm:$0xff]
      %v6005 = vld [vmem:[%s12 + $0x5d8] sm:$0xff]
      %v6006 = vld [vmem:[%s12 + $0x5e0] sm:$0xff]
      %v6007 = vld [vmem:[%s12 + $0x5e8] sm:$0xff]
      %v6008 = vld [vmem:[%s12 + $0x5f0] sm:$0xff]
      %v6009 = vld [vmem:[%s12 + $0x5f8] sm:$0xff]
      %v6010 = vld [vmem:[%s12 + $0x600] sm:$0xff]
      %v6011 = vld [vmem:[%s12 + $0x608] sm:$0xff]
      %v6012 = vld [vmem:[%s12 + $0x610] sm:$0xff]
      %v6013 = vld [vmem:[%s12 + $0x618] sm:$0xff]
      %v6014 = vld [vmem:[%s12 + $0x620] sm:$0xff]
      %v6015 = vld [vmem:[%s12 + $0x628] sm:$0xff]
      %v6016 = vld [vmem:[%s12 + $0x630] sm:$0xff]
      %v6017 = vld [vmem:[%s12 + $0x638] sm:$0xff]
      %v6018 = vld [vmem:[%s12 + $0x640] sm:$0xff]
      %v6019 = vld [vmem:[%s12 + $0x648] sm:$0xff]
      %v6020 = vld [vmem:[%s12 + $0x650] sm:$0xff]
      %v6021 = vld [vmem:[%s12 + $0x658] sm:$0xff]
      %v6022 = vld [vmem:[%s12 + $0x660] sm:$0xff]
      %v6023 = vld [vmem:[%s12 + $0x668] sm:$0xff]
      %v6024 = vld [vmem:[%s12 + $0x670] sm:$0xff]
      %v6025 = vld [vmem:[%s12 + $0x678] sm:$0xff]
      %v6026 = vld [vmem:[%s12 + $0x680] sm:$0xff]
      %v6027 = vld [vmem:[%s12 + $0x688] sm:$0xff]
      %v6028 = vld [vmem:[%s12 + $0x690] sm:$0xff]
      %v6029 = vld [vmem:[%s12 + $0x698] sm:$0xff]
      %v6030 = vld [vmem:[%s12 + $0x6a0] sm:$0xff]
      %v6031 = vld [vmem:[%s12 + $0x6a8] sm:$0xff]
      %v6032 = vld [vmem:[%s12 + $0x6b0] sm:$0xff]
      %v6033 = vld [vmem:[%s12 + $0x6b8] sm:$0xff]
      %v6034 = vld [vmem:[%s12 + $0x6c0] sm:$0xff]
      %v6035 = vld [vmem:[%s12 + $0x6c8] sm:$0xff]
      %v6036 = vld [vmem:[%s12 + $0x6d0] sm:$0xff]
      %v6037 = vld [vmem:[%s12 + $0x6d8] sm:$0xff]
      %v6038 = vld [vmem:[%s12 + $0x6e0] sm:$0xff]
      %v6039 = vld [vmem:[%s12 + $0x6e8] sm:$0xff]
      %v6040 = vld [vmem:[%s12 + $0x6f0] sm:$0xff]
      %v6041 = vld [vmem:[%s12 + $0x6f8] sm:$0xff]
      %v6042 = vld [vmem:[%s12 + $0x700] sm:$0xff]
      %v6043 = vld [vmem:[%s12 + $0x708] sm:$0xff]
      %v6044 = vld [vmem:[%s12 + $0x710] sm:$0xff]
      %v6045 = vld [vmem:[%s12 + $0x718] sm:$0xff]
      %v6046 = vld [vmem:[%s12 + $0x720] sm:$0xff]
      %v6047 = vld [vmem:[%s12 + $0x728] sm:$0xff]
      %v6048 = vld [vmem:[%s12 + $0x730] sm:$0xff]
      %v6049 = vld [vmem:[%s12 + $0x738] sm:$0xff]
      %v6050 = vld [vmem:[%s12 + $0x740] sm:$0xff]
      %v6051 = vld [vmem:[%s12 + $0x748] sm:$0xff]
      %v6052 = vld [vmem:[%s12 + $0x750] sm:$0xff]
      %v6053 = vld [vmem:[%s12 + $0x758] sm:$0xff]
      %v6054 = vld [vmem:[%s12 + $0x760] sm:$0xff]
      %v6055 = vld [vmem:[%s12 + $0x768] sm:$0xff]
      %v6056 = vld [vmem:[%s12 + $0x770] sm:$0xff]
      %v6057 = vld [vmem:[%s12 + $0x778] sm:$0xff]
      %v6058 = vld [vmem:[%s12 + $0x780] sm:$0xff]
      %v6059 = vld [vmem:[%s12 + $0x788] sm:$0xff]
      %v6060 = vld [vmem:[%s12 + $0x790] sm:$0xff]
      %v6061 = vld [vmem:[%s12 + $0x798] sm:$0xff]
      %v6062 = vld [vmem:[%s12 + $0x7a0] sm:$0xff]
      %v6063 = vld [vmem:[%s12 + $0x7a8] sm:$0xff]
      %v6064 = vld [vmem:[%s12 + $0x7b0] sm:$0xff]
      %v6065 = vld [vmem:[%s12 + $0x7b8] sm:$0xff]
      %v6066 = vld [vmem:[%s12 + $0x7c0] sm:$0xff]
      %v6067 = vld [vmem:[%s12 + $0x7c8] sm:$0xff]
      %v6068 = vld [vmem:[%s12 + $0x7d0] sm:$0xff]
      %v6069 = vld [vmem:[%s12 + $0x7d8] sm:$0xff]
      %v6070 = vld [vmem:[%s12 + $0x7e0] sm:$0xff]
      %v6071 = vld [vmem:[%s12 + $0x7e8] sm:$0xff]
      %v6072 = vld [vmem:[%s12 + $0x7f0] sm:$0xff]
      %v6073 = vld [vmem:[%s12 + $0x7f8] sm:$0xff]
      %v6074 = vld [vmem:[%s12 + $0x800] sm:$0xff]
      %v6075 = vld [vmem:[%s12 + $0x808] sm:$0xff]
      %v6076 = vld [vmem:[%s12 + $0x810] sm:$0xff]
      %v6077 = vld [vmem:[%s12 + $0x818] sm:$0xff]
      %v6078 = vld [vmem:[%s12 + $0x820] sm:$0xff]
      %v6079 = vld [vmem:[%s12 + $0x828] sm:$0xff]
      %v6080 = vld [vmem:[%s12 + $0x830] sm:$0xff]
      %v6081 = vld [vmem:[%s12 + $0x838] sm:$0xff]
      %v6082 = vld [vmem:[%s12 + $0x840] sm:$0xff]
      %v6083 = vld [vmem:[%s12 + $0x848] sm:$0xff]
      %v6084 = vld [vmem:[%s12 + $0x850] sm:$0xff]
      %v6085 = vld [vmem:[%s12 + $0x858] sm:$0xff]
      %v6086 = vld [vmem:[%s12 + $0x860] sm:$0xff]
      %v6087 = vld [vmem:[%s12 + $0x868] sm:$0xff]
      %v6088 = vld [vmem:[%s12 + $0x870] sm:$0xff]
      %v6089 = vld [vmem:[%s12 + $0x878] sm:$0xff]
      %v6090 = vld [vmem:[%s12 + $0x880] sm:$0xff]
      %v6091 = vld [vmem:[%s12 + $0x888] sm:$0xff]
      %v6092 = vld [vmem:[%s12 + $0x890] sm:$0xff]
      %v6093 = vld [vmem:[%s12 + $0x898] sm:$0xff]
      %v6094 = vld [vmem:[%s12 + $0x8a0] sm:$0xff]
      %v6095 = vld [vmem:[%s12 + $0x8a8] sm:$0xff]
      %v6096 = vld [vmem:[%s12 + $0x8b0] sm:$0xff]
      %v6097 = vld [vmem:[%s12 + $0x8b8] sm:$0xff]
      %v6098 = vld [vmem:[%s12 + $0x8c0] sm:$0xff]
      %v6099 = vld [vmem:[%s12 + $0x8c8] sm:$0xff]
      %v6100 = vld [vmem:[%s12 + $0x8d0] sm:$0xff]
      %v6101 = vld [vmem:[%s12 + $0x8d8] sm:$0xff]
      %v6102 = vld [vmem:[%s12 + $0x8e0] sm:$0xff]
      %v6103 = vld [vmem:[%s12 + $0x8e8] sm:$0xff]
      %v6104 = vld [vmem:[%s12 + $0x8f0] sm:$0xff]
      %v6105 = vld [vmem:[%s12 + $0x8f8] sm:$0xff]
      %v6106 = vld [vmem:[%s12 + $0x900] sm:$0xff]
      %v6107 = vld [vmem:[%s12 + $0x908] sm:$0xff]
      %v6108 = vld [vmem:[%s12 + $0x910] sm:$0xff]
      %v6109 = vld [vmem:[%s12 + $0x918] sm:$0xff]
      %v6110 = vld [vmem:[%s12 + $0x920] sm:$0xff]
      %v6111 = vld [vmem:[%s12 + $0x928] sm:$0xff]
      %v6112 = vld [vmem:[%s12 + $0x930] sm:$0xff]
      %v6113 = vld [vmem:[%s12 + $0x938] sm:$0xff]
      %v6114 = vld [vmem:[%s12 + $0x940] sm:$0xff]
      %v6115 = vld [vmem:[%s12 + $0x948] sm:$0xff]
      %v6116 = vld [vmem:[%s12 + $0x950] sm:$0xff]
      %v6117 = vld [vmem:[%s12 + $0x958] sm:$0xff]
      %v6118 = vld [vmem:[%s12 + $0x960] sm:$0xff]
      %v6119 = vld [vmem:[%s12 + $0x968] sm:$0xff]
      %v6120 = vld [vmem:[%s12 + $0x970] sm:$0xff]
      %v6121 = vld [vmem:[%s12 + $0x978] sm:$0xff]
      %v6122 = vld [vmem:[%s12 + $0x980] sm:$0xff]
      %v6123 = vld [vmem:[%s12 + $0x988] sm:$0xff]
      %v6124 = vld [vmem:[%s12 + $0x990] sm:$0xff]
      %v6125 = vld [vmem:[%s12 + $0x998] sm:$0xff]
      %v6126 = vld [vmem:[%s12 + $0x9a0] sm:$0xff]
      %v6127 = vld [vmem:[%s12 + $0x9a8] sm:$0xff]
      %v6128 = vld [vmem:[%s12 + $0x9b0] sm:$0xff]
      %v6129 = vld [vmem:[%s12 + $0x9b8] sm:$0xff]
      %v6130 = vld [vmem:[%s12 + $0x9c0] sm:$0xff]
      %v6131 = vld [vmem:[%s12 + $0x9c8] sm:$0xff]
      %v6132 = vld [vmem:[%s12 + $0x9d0] sm:$0xff]
      %v6133 = vld [vmem:[%s12 + $0x9d8] sm:$0xff]
      %v6134 = vld [vmem:[%s12 + $0x9e0] sm:$0xff]
      %v6135 = vld [vmem:[%s12 + $0x9e8] sm:$0xff]
      %v6136 = vld [vmem:[%s12 + $0x9f0] sm:$0xff]
      %v6137 = vld [vmem:[%s12 + $0x9f8] sm:$0xff]
      %v6138 = vld [vmem:[%s12 + $0xa00] sm:$0xff]
      %v6139 = vld [vmem:[%s12 + $0xa08] sm:$0xff]
      %v6140 = vld [vmem:[%s12 + $0xa10] sm:$0xff]
      %v6141 = vld [vmem:[%s12 + $0xa18] sm:$0xff]
      %v6142 = vld [vmem:[%s12 + $0xa20] sm:$0xff]
      %v6143 = vld [vmem:[%s12 + $0xa28] sm:$0xff]
      %v6144 = vld [vmem:[%s12 + $0xa30] sm:$0xff]
      %v6145 = vld [vmem:[%s12 + $0xa38] sm:$0xff]
      %v6146 = vld [vmem:[%s12 + $0xa40] sm:$0xff]
      %v6147 = vld [vmem:[%s12 + $0xa48] sm:$0xff]
      %v6148 = vld [vmem:[%s12 + $0xa50] sm:$0xff]
      %v6149 = vld [vmem:[%s12 + $0xa58] sm:$0xff]
      %v6150 = vld [vmem:[%s12 + $0xa60] sm:$0xff]
      %v6151 = vld [vmem:[%s12 + $0xa68] sm:$0xff]
      %v6152 = vld [vmem:[%s12 + $0xa70] sm:$0xff]
      %v6153 = vld [vmem:[%s12 + $0xa78] sm:$0xff]
      %v6154 = vld [vmem:[%s12 + $0xa80] sm:$0xff]
      %v6155 = vld [vmem:[%s12 + $0xa88] sm:$0xff]
      %v6156 = vld [vmem:[%s12 + $0xa90] sm:$0xff]
      %v6157 = vld [vmem:[%s12 + $0xa98] sm:$0xff]
      %v6158 = vld [vmem:[%s12 + $0xaa0] sm:$0xff]
      %v6159 = vld [vmem:[%s12 + $0xaa8] sm:$0xff]
      %v6160 = vld [vmem:[%s12 + $0xab0] sm:$0xff]
      %v6161 = vld [vmem:[%s12 + $0xab8] sm:$0xff]
      %v6162 = vld [vmem:[%s12 + $0xac0] sm:$0xff]
      %v6163 = vld [vmem:[%s12 + $0xac8] sm:$0xff]
      %v6164 = vld [vmem:[%s12 + $0xad0] sm:$0xff]
      %v6165 = vld [vmem:[%s12 + $0xad8] sm:$0xff]
      %v6166 = vld [vmem:[%s12 + $0xae0] sm:$0xff]
      %v6167 = vld [vmem:[%s12 + $0xae8] sm:$0xff]
      %v6168 = vld [vmem:[%s12 + $0xaf0] sm:$0xff]
      %v6169 = vld [vmem:[%s12 + $0xaf8] sm:$0xff]
      %v6170 = vld [vmem:[%s12 + $0xb00] sm:$0xff]
      %v6171 = vld [vmem:[%s12 + $0xb08] sm:$0xff]
      %v6172 = vld [vmem:[%s12 + $0xb10] sm:$0xff]
      %v6173 = vld [vmem:[%s12 + $0xb18] sm:$0xff]
      %v6174 = vld [vmem:[%s12 + $0xb20] sm:$0xff]
      %v6175 = vld [vmem:[%s12 + $0xb28] sm:$0xff]
      %v6176 = vld [vmem:[%s12 + $0xb30] sm:$0xff]
      %v6177 = vld [vmem:[%s12 + $0xb38] sm:$0xff]
      %v6178 = vld [vmem:[%s12 + $0xb40] sm:$0xff]
      %v6179 = vld [vmem:[%s12 + $0xb48] sm:$0xff]
      %v6180 = vld [vmem:[%s12 + $0xb50] sm:$0xff]
      %v6181 = vld [vmem:[%s12 + $0xb58] sm:$0xff]
      %v6182 = vld [vmem:[%s12 + $0xb60] sm:$0xff]
      %v6183 = vld [vmem:[%s12 + $0xb68] sm:$0xff]
      %v6184 = vld [vmem:[%s12 + $0xb70] sm:$0xff]
      %v6185 = vld [vmem:[%s12 + $0xb78] sm:$0xff]
      %v6186 = vld [vmem:[%s12 + $0xb80] sm:$0xff]
      %v6187 = vld [vmem:[%s12 + $0xb88] sm:$0xff]
      %v6188 = vld [vmem:[%s12 + $0xb90] sm:$0xff]
      %v6189 = vld [vmem:[%s12 + $0xb98] sm:$0xff]
      %v6190 = vld [vmem:[%s12 + $0xba0] sm:$0xff]
      %v6191 = vld [vmem:[%s12 + $0xba8] sm:$0xff]
      %v6192 = vld [vmem:[%s12 + $0xbb0] sm:$0xff]
      %v6193 = vld [vmem:[%s12 + $0xbb8] sm:$0xff]
      %v6194 = vld [vmem:[%s12 + $0xbc0] sm:$0xff]
      %v6195 = vld [vmem:[%s12 + $0xbc8] sm:$0xff]
      %v6196 = vld [vmem:[%s12 + $0xbd0] sm:$0xff]
      %v6197 = vld [vmem:[%s12 + $0xbd8] sm:$0xff]
      %v6198 = vld [vmem:[%s12 + $0xbe0] sm:$0xff]
      %v6199 = vld [vmem:[%s12 + $0xbe8] sm:$0xff]
      %v6200 = vld [vmem:[%s12 + $0xbf0] sm:$0xff]
      %v6201 = vld [vmem:[%s12 + $0xbf8] sm:$0xff]
      %v6202 = vld [vmem:[%s12 + $0xc00] sm:$0xff]
      %v6203 = vld [vmem:[%s12 + $0xc08] sm:$0xff]
      %v6204 = vld [vmem:[%s12 + $0xc10] sm:$0xff]
      %v6205 = vld [vmem:[%s12 + $0xc18] sm:$0xff]
      %v6206 = vld [vmem:[%s12 + $0xc20] sm:$0xff]
      %v6207 = vld [vmem:[%s12 + $0xc28] sm:$0xff]
      %v6208 = vld [vmem:[%s12 + $0xc30] sm:$0xff]
      %v6209 = vld [vmem:[%s12 + $0xc38] sm:$0xff]
      %v6210 = vld [vmem:[%s12 + $0xc40] sm:$0xff]
      %v6211 = vld [vmem:[%s12 + $0xc48] sm:$0xff]
      %v6212 = vld [vmem:[%s12 + $0xc50] sm:$0xff]
      %v6213 = vld [vmem:[%s12 + $0xc58] sm:$0xff]
      %v6214 = vld [vmem:[%s12 + $0xc60] sm:$0xff]
      %v6215 = vld [vmem:[%s12 + $0xc68] sm:$0xff]
      %v6216 = vld [vmem:[%s12 + $0xc70] sm:$0xff]
      %v6217 = vld [vmem:[%s12 + $0xc78] sm:$0xff]
      %v6218 = vld [vmem:[%s12 + $0xc80] sm:$0xff]
      %v6219 = vld [vmem:[%s12 + $0xc88] sm:$0xff]
      %v6220 = vld [vmem:[%s12 + $0xc90] sm:$0xff]
      %v6221 = vld [vmem:[%s12 + $0xc98] sm:$0xff]
      %v6222 = vld [vmem:[%s12 + $0xca0] sm:$0xff]
      %v6223 = vld [vmem:[%s12 + $0xca8] sm:$0xff]
      %v6224 = vld [vmem:[%s12 + $0xcb0] sm:$0xff]
      %v6225 = vld [vmem:[%s12 + $0xcb8] sm:$0xff]
      %v6226 = vld [vmem:[%s12 + $0xcc0] sm:$0xff]
      %v6227 = vld [vmem:[%s12 + $0xcc8] sm:$0xff]
      %v6228 = vld [vmem:[%s12 + $0xcd0] sm:$0xff]
      %v6229 = vld [vmem:[%s12 + $0xcd8] sm:$0xff]
      %v6230 = vld [vmem:[%s12 + $0xce0] sm:$0xff]
      %v6231 = vld [vmem:[%s12 + $0xce8] sm:$0xff]
      %v6232 = vld [vmem:[%s12 + $0xcf0] sm:$0xff]
      %v6233 = vld [vmem:[%s12 + $0xcf8] sm:$0xff]
      %v6234 = vld [vmem:[%s12 + $0xd00] sm:$0xff]
      %v6235 = vld [vmem:[%s12 + $0xd08] sm:$0xff]
      %v6236 = vld [vmem:[%s12 + $0xd10] sm:$0xff]
      %v6237 = vld [vmem:[%s12 + $0xd18] sm:$0xff]
      %v6238 = vld [vmem:[%s12 + $0xd20] sm:$0xff]
      %v6239 = vld [vmem:[%s12 + $0xd28] sm:$0xff]
      %v6240 = vld [vmem:[%s12 + $0xd30] sm:$0xff]
      %v6241 = vld [vmem:[%s12 + $0xd38] sm:$0xff]
      %v6242 = vld [vmem:[%s12 + $0xd40] sm:$0xff]
      %v6243 = vld [vmem:[%s12 + $0xd48] sm:$0xff]
      %v6244 = vld [vmem:[%s12 + $0xd50] sm:$0xff]
      %v6245 = vld [vmem:[%s12 + $0xd58] sm:$0xff]
      %v6246 = vld [vmem:[%s12 + $0xd60] sm:$0xff]
      %v6247 = vld [vmem:[%s12 + $0xd68] sm:$0xff]
      %v6248 = vld [vmem:[%s12 + $0xd70] sm:$0xff]
      %v6249 = vld [vmem:[%s12 + $0xd78] sm:$0xff]
      %v6250 = vld [vmem:[%s12 + $0xd80] sm:$0xff]
      %v6251 = vld [vmem:[%s12 + $0xd88] sm:$0xff]
      %v6252 = vld [vmem:[%s12 + $0xd90] sm:$0xff]
      %v6253 = vld [vmem:[%s12 + $0xd98] sm:$0xff]
      %v6254 = vld [vmem:[%s12 + $0xda0] sm:$0xff]
      %v6255 = vld [vmem:[%s12 + $0xda8] sm:$0xff]
      %v6256 = vld [vmem:[%s12 + $0xdb0] sm:$0xff]
      %v6257 = vld [vmem:[%s12 + $0xdb8] sm:$0xff]
      %v6258 = vld [vmem:[%s12 + $0xdc0] sm:$0xff]
      %v6259 = vld [vmem:[%s12 + $0xdc8] sm:$0xff]
      %v6260 = vld [vmem:[%s12 + $0xdd0] sm:$0xff]
      %v6261 = vld [vmem:[%s12 + $0xdd8] sm:$0xff]
      %v6262 = vld [vmem:[%s12 + $0xde0] sm:$0xff]
      %v6263 = vld [vmem:[%s12 + $0xde8] sm:$0xff]
      %v6264 = vld [vmem:[%s12 + $0xdf0] sm:$0xff]
      %v6265 = vld [vmem:[%s12 + $0xdf8] sm:$0xff]
      %v6266 = vld [vmem:[%s12 + $0xe00] sm:$0xff]
      %v6267 = vld [vmem:[%s12 + $0xe08] sm:$0xff]
      %v6268 = vld [vmem:[%s12 + $0xe10] sm:$0xff]
      %v6269 = vld [vmem:[%s12 + $0xe18] sm:$0xff]
      %v6270 = vld [vmem:[%s12 + $0xe20] sm:$0xff]
      %v6271 = vld [vmem:[%s12 + $0xe28] sm:$0xff]
      %v6272 = vld [vmem:[%s12 + $0xe30] sm:$0xff]
      %v6273 = vld [vmem:[%s12 + $0xe38] sm:$0xff]
      %v6274 = vld [vmem:[%s12 + $0xe40] sm:$0xff]
      %v6275 = vld [vmem:[%s12 + $0xe48] sm:$0xff]
      %v6276 = vld [vmem:[%s12 + $0xe50] sm:$0xff]
      %v6277 = vld [vmem:[%s12 + $0xe58] sm:$0xff]
      %v6278 = vld [vmem:[%s12 + $0xe60] sm:$0xff]
      %v6279 = vld [vmem:[%s12 + $0xe68] sm:$0xff]
      %v6280 = vld [vmem:[%s12 + $0xe70] sm:$0xff]
      %v6281 = vld [vmem:[%s12 + $0xe78] sm:$0xff]
      %v6282 = vld [vmem:[%s12 + $0xe80] sm:$0xff]
      %v6283 = vld [vmem:[%s12 + $0xe88] sm:$0xff]
      %v6284 = vld [vmem:[%s12 + $0xe90] sm:$0xff]
      %v6285 = vld [vmem:[%s12 + $0xe98] sm:$0xff]
      %v6286 = vld [vmem:[%s12 + $0xea0] sm:$0xff]
      %v6287 = vld [vmem:[%s12 + $0xea8] sm:$0xff]
      %v6288 = vld [vmem:[%s12 + $0xeb0] sm:$0xff]
      %v6289 = vld [vmem:[%s12 + $0xeb8] sm:$0xff]
      %v6290 = vld [vmem:[%s12 + $0xec0] sm:$0xff]
      %v6291 = vld [vmem:[%s12 + $0xec8] sm:$0xff]
      %v6292 = vld [vmem:[%s12 + $0xed0] sm:$0xff]
      %v6293 = vld [vmem:[%s12 + $0xed8] sm:$0xff]
      %v6294 = vld [vmem:[%s12 + $0xee0] sm:$0xff]
      %v6295 = vld [vmem:[%s12 + $0xee8] sm:$0xff]
      %v6296 = vld [vmem:[%s12 + $0xef0] sm:$0xff]
      %v6297 = vld [vmem:[%s12 + $0xef8] sm:$0xff]
      %v6298 = vld [vmem:[%s12 + $0xf00] sm:$0xff]
      %v6299 = vld [vmem:[%s12 + $0xf08] sm:$0xff]
      %v6300 = vld [vmem:[%s12 + $0xf10] sm:$0xff]
      %v6301 = vld [vmem:[%s12 + $0xf18] sm:$0xff]
      %v6302 = vld [vmem:[%s12 + $0xf20] sm:$0xff]
      %v6303 = vld [vmem:[%s12 + $0xf28] sm:$0xff]
      %v6304 = vld [vmem:[%s12 + $0xf30] sm:$0xff]
      %v6305 = vld [vmem:[%s12 + $0xf38] sm:$0xff]
      %v6306 = vld [vmem:[%s12 + $0xf40] sm:$0xff]
      %v6307 = vld [vmem:[%s12 + $0xf48] sm:$0xff]
      %v6308 = vld [vmem:[%s12 + $0xf50] sm:$0xff]
      %v6309 = vld [vmem:[%s12 + $0xf58] sm:$0xff]
      %v6310 = vld [vmem:[%s12 + $0xf60] sm:$0xff]
      %v6311 = vld [vmem:[%s12 + $0xf68] sm:$0xff]
      %v6312 = vld [vmem:[%s12 + $0xf70] sm:$0xff]
      %v6313 = vld [vmem:[%s12 + $0xf78] sm:$0xff]
      %v6314 = vld [vmem:[%s12 + $0xf80] sm:$0xff]
      %v6315 = vld [vmem:[%s12 + $0xf88] sm:$0xff]
      %v6316 = vld [vmem:[%s12 + $0xf90] sm:$0xff]
      %v6317 = vld [vmem:[%s12 + $0xf98] sm:$0xff]
      %v6318 = vld [vmem:[%s12 + $0xfa0] sm:$0xff]
      %v6319 = vld [vmem:[%s12 + $0xfa8] sm:$0xff]
      %v6320 = vld [vmem:[%s12 + $0xfb0] sm:$0xff]
      %v6321 = vld [vmem:[%s12 + $0xfb8] sm:$0xff]
      %v6322 = vld [vmem:[%s12 + $0xfc0] sm:$0xff]
      %v6323 = vld [vmem:[%s12 + $0xfc8] sm:$0xff]
      %v6324 = vld [vmem:[%s12 + $0xfd0] sm:$0xff]
      %v6325 = vld [vmem:[%s12 + $0xfd8] sm:$0xff]
      %v6326 = vld [vmem:[%s12 + $0xfe0] sm:$0xff]
      %v6327 = vld [vmem:[%s12 + $0xfe8] sm:$0xff]
      %v6328 = vld [vmem:[%s12 + $0xff0] sm:$0xff]
      %v6329 = vld [vmem:[%s12 + $0xff8] sm:$0xff]
      %v6330 = vld [vmem:[%s13] sm:$0xff]
      %v6332 = vlaneseq
      %v6333 = vshrl.u32 %v6332, 7
      %v6334 = vsub.s32 0, %v6333
      %v6335 = vrot.slane %v6330, %v6334
      %v6336 = vlaneseq
      %v6337 = vshrl.u32 %v6336, 7
      %v6338 = vsub.s32 1, %v6337
      %v6339 = vrot.slane %v6330, %v6338
      %v6340 = vlaneseq
      %v6341 = vshrl.u32 %v6340, 7
      %v6342 = vsub.s32 2, %v6341
      %v6343 = vrot.slane %v6330, %v6342
      %v6344 = vlaneseq
      %v6345 = vshrl.u32 %v6344, 7
      %v6346 = vsub.s32 3, %v6345
      %v6347 = vrot.slane %v6330, %v6346
      %v6348 = vlaneseq
      %v6349 = vshrl.u32 %v6348, 7
      %v6350 = vsub.s32 4, %v6349
      %v6351 = vrot.slane %v6330, %v6350
      %v6352 = vlaneseq
      %v6353 = vshrl.u32 %v6352, 7
      %v6354 = vsub.s32 5, %v6353
      %v6355 = vrot.slane %v6330, %v6354
      %v6356 = vlaneseq
      %v6357 = vshrl.u32 %v6356, 7
      %v6358 = vsub.s32 6, %v6357
      %v6359 = vrot.slane %v6330, %v6358
      %v6360 = vlaneseq
      %v6361 = vshrl.u32 %v6360, 7
      %v6362 = vsub.s32 7, %v6361
      %v6363 = vrot.slane %v6330, %v6362
      %6372 = vmatprep.subr.mxu0 %v5819
      %6373 = vmatpush1.msra.mxu0 %v5818
      %6374 = vmatprep.subr.mxu0 %v5827
      %6375 = vmatpush1.msra.mxu0 %v5826
      %6376 = vmatprep.subr.mxu0 %v5835
      %6377 = vmatpush1.msra.mxu0 %v5834
      %6378 = vmatprep.subr.mxu0 %v5843
      %6379 = vmatpush1.msra.mxu0 %v5842
      %6380 = vmatprep.subr.mxu0 %v5851
      %6381 = vmatpush1.msra.mxu0 %v5850
      %6382 = vmatprep.subr.mxu0 %v5859
      %6383 = vmatpush1.msra.mxu0 %v5858
      %6384 = vmatprep.subr.mxu0 %v5867
      %6385 = vmatpush1.msra.mxu0 %v5866
      %6386 = vmatprep.subr.mxu0 %v5875
      %6387 = vmatpush1.msra.mxu0 %v5874
      %6388 = vmatprep.subr.mxu0 %v5883
      %6389 = vmatpush1.msra.mxu0 %v5882
      %6390 = vmatprep.subr.mxu0 %v5891
      %6391 = vmatpush1.msra.mxu0 %v5890
      %6392 = vmatprep.subr.mxu0 %v5899
      %6393 = vmatpush1.msra.mxu0 %v5898
      %6394 = vmatprep.subr.mxu0 %v5907
      %6395 = vmatpush1.msra.mxu0 %v5906
      %6396 = vmatprep.subr.mxu0 %v5915
      %6397 = vmatpush1.msra.mxu0 %v5914
      %6398 = vmatprep.subr.mxu0 %v5923
      %6399 = vmatpush1.msra.mxu0 %v5922
      %6400 = vmatprep.subr.mxu0 %v5931
      %6401 = vmatpush1.msra.mxu0 %v5930
      %6402 = vmatprep.subr.mxu0 %v5939
      %6403 = vmatpush1.msra.mxu0 %v5938
      %6404 = vmatprep.subr.mxu0 %v5947
      %6405 = vmatpush1.msra.mxu0 %v5946
      %6406 = vmatprep.subr.mxu0 %v5955
      %6407 = vmatpush1.msra.mxu0 %v5954
      %6408 = vmatprep.subr.mxu0 %v5963
      %6409 = vmatpush1.msra.mxu0 %v5962
      %6410 = vmatprep.subr.mxu0 %v5971
      %6411 = vmatpush1.msra.mxu0 %v5970
      %6412 = vmatprep.subr.mxu0 %v5979
      %6413 = vmatpush1.msra.mxu0 %v5978
      %6414 = vmatprep.subr.mxu0 %v5987
      %6415 = vmatpush1.msra.mxu0 %v5986
      %6416 = vmatprep.subr.mxu0 %v5995
      %6417 = vmatpush1.msra.mxu0 %v5994
      %6418 = vmatprep.subr.mxu0 %v6003
      %6419 = vmatpush1.msra.mxu0 %v6002
      %6420 = vmatprep.subr.mxu0 %v6011
      %6421 = vmatpush1.msra.mxu0 %v6010
      %6422 = vmatprep.subr.mxu0 %v6019
      %6423 = vmatpush1.msra.mxu0 %v6018
      %6424 = vmatprep.subr.mxu0 %v6027
      %6425 = vmatpush1.msra.mxu0 %v6026
      %6426 = vmatprep.subr.mxu0 %v6035
      %6427 = vmatpush1.msra.mxu0 %v6034
      %6428 = vmatprep.subr.mxu0 %v6043
      %6429 = vmatpush1.msra.mxu0 %v6042
      %6430 = vmatprep.subr.mxu0 %v6051
      %6431 = vmatpush1.msra.mxu0 %v6050
      %6432 = vmatprep.subr.mxu0 %v6059
      %6433 = vmatpush1.msra.mxu0 %v6058
      %6434 = vmatprep.subr.mxu0 %v6067
      %6435 = vmatpush1.msra.mxu0 %v6066
      %6436 = vmatprep.mubr.f32.mxu0 %v4505
      %6437 = vmatmul.mubr.f32.gmra.mrb[0].mxu0 %v4504
      %v6438 = vpop.f32.mrb[0].mxu0
      %v6439 = vadd.f32 %v6335, %v6438
      %v6440 = vpop.f32.mrb[0].mxu0
      %v6441 = vadd.f32 %v6339, %v6440
      %6442 = vmatprep.mubr.f32.mxu0 %v4509
      %6443 = vmatmul.mubr.f32.gmra.mrb[0].mxu0 %v4508
      %v6444 = vpop.f32.mrb[0].mxu0
      %v6445 = vadd.f32 %v6335, %v6444
      %v6446 = vpop.f32.mrb[0].mxu0
      %v6447 = vadd.f32 %v6339, %v6446
      %6448 = vmatprep.mubr.f32.mxu0 %v4513
      %6449 = vmatmul.mubr.f32.gmra.mrb[0].mxu0 %v4512
      %v6450 = vpop.f32.mrb[0].mxu0
      %v6451 = vadd.f32 %v6335, %v6450
      %v6452 = vpop.f32.mrb[0].mxu0
      %v6453 = vadd.f32 %v6339, %v6452
      %6454 = vmatprep.mubr.f32.mxu0 %v4517
      %6455 = vmatmul.mubr.f32.gmra.mrb[0].mxu0 %v4516
      %v6456 = vpop.f32.mrb[0].mxu0
      %v6457 = vadd.f32 %v6335, %v6456
      %v6458 = vpop.f32.mrb[0].mxu0
      %v6459 = vadd.f32 %v6339, %v6458
      %6460 = vdwg.mxu0
      %6461 = vmatprep.subr.mxu0 %v6075
      %6462 = vmatpush1.msra.mxu0 %v6074
      %6463 = vmatprep.subr.mxu0 %v6083
      %6464 = vmatpush1.msra.mxu0 %v6082
      %6465 = vmatprep.subr.mxu0 %v6091
      %6466 = vmatpush1.msra.mxu0 %v6090
      %6467 = vmatprep.subr.mxu0 %v6099
      %6468 = vmatpush1.msra.mxu0 %v6098
      %6469 = vmatprep.subr.mxu0 %v6107
      %6470 = vmatpush1.msra.mxu0 %v6106
      %6471 = vmatprep.subr.mxu0 %v6115
      %6472 = vmatpush1.msra.mxu0 %v6114
      %6473 = vmatprep.subr.mxu0 %v6123
      %6474 = vmatpush1.msra.mxu0 %v6122
      %6475 = vmatprep.subr.mxu0 %v6131
      %6476 = vmatpush1.msra.mxu0 %v6130
      %6477 = vmatprep.subr.mxu0 %v6139
      %6478 = vmatpush1.msra.mxu0 %v6138
      %6479 = vmatprep.subr.mxu0 %v6147
      %6480 = vmatpush1.msra.mxu0 %v6146
      %6481 = vmatprep.subr.mxu0 %v6155
      %6482 = vmatpush1.msra.mxu0 %v6154
      %6483 = vmatprep.subr.mxu0 %v6163
      %6484 = vmatpush1.msra.mxu0 %v6162
      %6485 = vmatprep.subr.mxu0 %v6171
      %6486 = vmatpush1.msra.mxu0 %v6170
      %6487 = vmatprep.subr.mxu0 %v6179
      %6488 = vmatpush1.msra.mxu0 %v6178
      %6489 = vmatprep.subr.mxu0 %v6187
      %6490 = vmatpush1.msra.mxu0 %v6186
      %6491 = vmatprep.subr.mxu0 %v6195
      %6492 = vmatpush1.msra.mxu0 %v6194
      %6493 = vmatprep.subr.mxu0 %v6203
      %6494 = vmatpush1.msra.mxu0 %v6202
      %6495 = vmatprep.subr.mxu0 %v6211
      %6496 = vmatpush1.msra.mxu0 %v6210
      %6497 = vmatprep.subr.mxu0 %v6219
      %6498 = vmatpush1.msra.mxu0 %v6218
      %6499 = vmatprep.subr.mxu0 %v6227
      %6500 = vmatpush1.msra.mxu0 %v6226
      %6501 = vmatprep.subr.mxu0 %v6235
      %6502 = vmatpush1.msra.mxu0 %v6234
      %6503 = vmatprep.subr.mxu0 %v6243
      %6504 = vmatpush1.msra.mxu0 %v6242
      %6505 = vmatprep.subr.mxu0 %v6251
      %6506 = vmatpush1.msra.mxu0 %v6250
      %6507 = vmatprep.subr.mxu0 %v6259
      %6508 = vmatpush1.msra.mxu0 %v6258
      %6509 = vmatprep.subr.mxu0 %v6267
      %6510 = vmatpush1.msra.mxu0 %v6266
      %6511 = vmatprep.subr.mxu0 %v6275
      %6512 = vmatpush1.msra.mxu0 %v6274
      %6513 = vmatprep.subr.mxu0 %v6283
      %6514 = vmatpush1.msra.mxu0 %v6282
      %6515 = vmatprep.subr.mxu0 %v6291
      %6516 = vmatpush1.msra.mxu0 %v6290
      %6517 = vmatprep.subr.mxu0 %v6299
      %6518 = vmatpush1.msra.mxu0 %v6298
      %6519 = vmatprep.subr.mxu0 %v6307
      %6520 = vmatpush1.msra.mxu0 %v6306
      %6521 = vmatprep.subr.mxu0 %v6315
      %6522 = vmatpush1.msra.mxu0 %v6314
      %6523 = vmatprep.subr.mxu0 %v6323
      %6524 = vmatpush1.msra.mxu0 %v6322
      %6525 = vmatprep.mubr.f32.mxu0 %v4507
      %6526 = vmatmul.mubr.f32.gmra.mrb[0].mxu0 %v4506
      %v6527 = vpop.f32.mrb[0].mxu0
      %v6528 = vadd.f32 %v6439, %v6527
      %v6529 = vpop.f32.mrb[0].mxu0
      %v6530 = vadd.f32 %v6441, %v6529
      %6531 = vmatprep.mubr.f32.mxu0 %v4511
      %6532 = vmatmul.mubr.f32.gmra.mrb[0].mxu0 %v4510
      %v6533 = vpop.f32.mrb[0].mxu0
      %v6534 = vadd.f32 %v6445, %v6533
      %v6535 = vpop.f32.mrb[0].mxu0
      %v6536 = vadd.f32 %v6447, %v6535
      %6537 = vmatprep.mubr.f32.mxu0 %v4515
      %6538 = vmatmul.mubr.f32.gmra.mrb[0].mxu0 %v4514
      %v6539 = vpop.f32.mrb[0].mxu0
      %v6540 = vadd.f32 %v6451, %v6539
      %v6541 = vpop.f32.mrb[0].mxu0
      %v6542 = vadd.f32 %v6453, %v6541
      %6543 = vmatprep.mubr.f32.mxu0 %v4519
      %6544 = vmatmul.mubr.f32.gmra.mrb[0].mxu0 %v4518
      %v6545 = vpop.f32.mrb[0].mxu0
      %v6546 = vadd.f32 %v6457, %v6545
      %v6547 = vpop.f32.mrb[0].mxu0
      %v6548 = vadd.f32 %v6459, %v6547
      %6549 = vdwg.mxu0
      %6550 = vmatprep.subr.mxu0 %v5821
      %6551 = vmatpush1.msra.mxu0 %v5820
      %6552 = vmatprep.subr.mxu0 %v5829
      %6553 = vmatpush1.msra.mxu0 %v5828
      %6554 = vmatprep.subr.mxu0 %v5837
      %6555 = vmatpush1.msra.mxu0 %v5836
      %6556 = vmatprep.subr.mxu0 %v5845
      %6557 = vmatpush1.msra.mxu0 %v5844
      %6558 = vmatprep.subr.mxu0 %v5853
      %6559 = vmatpush1.msra.mxu0 %v5852
      %6560 = vmatprep.subr.mxu0 %v5861
      %6561 = vmatpush1.msra.mxu0 %v5860
      %6562 = vmatprep.subr.mxu0 %v5869
      %6563 = vmatpush1.msra.mxu0 %v5868
      %6564 = vmatprep.subr.mxu0 %v5877
      %6565 = vmatpush1.msra.mxu0 %v5876
      %6566 = vmatprep.subr.mxu0 %v5885
      %6567 = vmatpush1.msra.mxu0 %v5884
      %6568 = vmatprep.subr.mxu0 %v5893
      %6569 = vmatpush1.msra.mxu0 %v5892
      %6570 = vmatprep.subr.mxu0 %v5901
      %6571 = vmatpush1.msra.mxu0 %v5900
      %6572 = vmatprep.subr.mxu0 %v5909
      %6573 = vmatpush1.msra.mxu0 %v5908
      %6574 = vmatprep.subr.mxu0 %v5917
      %6575 = vmatpush1.msra.mxu0 %v5916
      %6576 = vmatprep.subr.mxu0 %v5925
      %6577 = vmatpush1.msra.mxu0 %v5924
      %6578 = vmatprep.subr.mxu0 %v5933
      %6579 = vmatpush1.msra.mxu0 %v5932
      %6580 = vmatprep.subr.mxu0 %v5941
      %6581 = vmatpush1.msra.mxu0 %v5940
      %6582 = vmatprep.subr.mxu0 %v5949
      %6583 = vmatpush1.msra.mxu0 %v5948
      %6584 = vmatprep.subr.mxu0 %v5957
      %6585 = vmatpush1.msra.mxu0 %v5956
      %6586 = vmatprep.subr.mxu0 %v5965
      %6587 = vmatpush1.msra.mxu0 %v5964
      %6588 = vmatprep.subr.mxu0 %v5973
      %6589 = vmatpush1.msra.mxu0 %v5972
      %6590 = vmatprep.subr.mxu0 %v5981
      %6591 = vmatpush1.msra.mxu0 %v5980
      %6592 = vmatprep.subr.mxu0 %v5989
      %6593 = vmatpush1.msra.mxu0 %v5988
      %6594 = vmatprep.subr.mxu0 %v5997
      %6595 = vmatpush1.msra.mxu0 %v5996
      %6596 = vmatprep.subr.mxu0 %v6005
      %6597 = vmatpush1.msra.mxu0 %v6004
      %6598 = vmatprep.subr.mxu0 %v6013
      %6599 = vmatpush1.msra.mxu0 %v6012
      %6600 = vmatprep.subr.mxu0 %v6021
      %6601 = vmatpush1.msra.mxu0 %v6020
      %6602 = vmatprep.subr.mxu0 %v6029
      %6603 = vmatpush1.msra.mxu0 %v6028
      %6604 = vmatprep.subr.mxu0 %v6037
      %6605 = vmatpush1.msra.mxu0 %v6036
      %6606 = vmatprep.subr.mxu0 %v6045
      %6607 = vmatpush1.msra.mxu0 %v6044
      %6608 = vmatprep.subr.mxu0 %v6053
      %6609 = vmatpush1.msra.mxu0 %v6052
      %6610 = vmatprep.subr.mxu0 %v6061
      %6611 = vmatpush1.msra.mxu0 %v6060
      %6612 = vmatprep.subr.mxu0 %v6069
      %6613 = vmatpush1.msra.mxu0 %v6068
      %6614 = vmatprep.mubr.f32.mxu0 %v4505
      %6615 = vmatmul.mubr.f32.gmra.mrb[0].mxu0 %v4504
      %v6616 = vpop.f32.mrb[0].mxu0
      %v6617 = vadd.f32 %v6343, %v6616
      %v6618 = vpop.f32.mrb[0].mxu0
      %v6619 = vadd.f32 %v6347, %v6618
      %6620 = vmatprep.mubr.f32.mxu0 %v4509
      %6621 = vmatmul.mubr.f32.gmra.mrb[0].mxu0 %v4508
      %v6622 = vpop.f32.mrb[0].mxu0
      %v6623 = vadd.f32 %v6343, %v6622
      %v6624 = vpop.f32.mrb[0].mxu0
      %v6625 = vadd.f32 %v6347, %v6624
      %6626 = vmatprep.mubr.f32.mxu0 %v4513
      %6627 = vmatmul.mubr.f32.gmra.mrb[0].mxu0 %v4512
      %v6628 = vpop.f32.mrb[0].mxu0
      %v6629 = vadd.f32 %v6343, %v6628
      %v6630 = vpop.f32.mrb[0].mxu0
      %v6631 = vadd.f32 %v6347, %v6630
      %6632 = vmatprep.mubr.f32.mxu0 %v4517
      %6633 = vmatmul.mubr.f32.gmra.mrb[0].mxu0 %v4516
      %v6634 = vpop.f32.mrb[0].mxu0
      %v6635 = vadd.f32 %v6343, %v6634
      %v6636 = vpop.f32.mrb[0].mxu0
      %v6637 = vadd.f32 %v6347, %v6636
      %6638 = vdwg.mxu0
      %6639 = vmatprep.subr.mxu0 %v6077
      %6640 = vmatpush1.msra.mxu0 %v6076
      %6641 = vmatprep.subr.mxu0 %v6085
      %6642 = vmatpush1.msra.mxu0 %v6084
      %6643 = vmatprep.subr.mxu0 %v6093
      %6644 = vmatpush1.msra.mxu0 %v6092
      %6645 = vmatprep.subr.mxu0 %v6101
      %6646 = vmatpush1.msra.mxu0 %v6100
      %6647 = vmatprep.subr.mxu0 %v6109
      %6648 = vmatpush1.msra.mxu0 %v6108
      %6649 = vmatprep.subr.mxu0 %v6117
      %6650 = vmatpush1.msra.mxu0 %v6116
      %6651 = vmatprep.subr.mxu0 %v6125
      %6652 = vmatpush1.msra.mxu0 %v6124
      %6653 = vmatprep.subr.mxu0 %v6133
      %6654 = vmatpush1.msra.mxu0 %v6132
      %6655 = vmatprep.subr.mxu0 %v6141
      %6656 = vmatpush1.msra.mxu0 %v6140
      %6657 = vmatprep.subr.mxu0 %v6149
      %6658 = vmatpush1.msra.mxu0 %v6148
      %6659 = vmatprep.subr.mxu0 %v6157
      %6660 = vmatpush1.msra.mxu0 %v6156
      %6661 = vmatprep.subr.mxu0 %v6165
      %6662 = vmatpush1.msra.mxu0 %v6164
      %6663 = vmatprep.subr.mxu0 %v6173
      %6664 = vmatpush1.msra.mxu0 %v6172
      %6665 = vmatprep.subr.mxu0 %v6181
      %6666 = vmatpush1.msra.mxu0 %v6180
      %6667 = vmatprep.subr.mxu0 %v6189
      %6668 = vmatpush1.msra.mxu0 %v6188
      %6669 = vmatprep.subr.mxu0 %v6197
      %6670 = vmatpush1.msra.mxu0 %v6196
      %6671 = vmatprep.subr.mxu0 %v6205
      %6672 = vmatpush1.msra.mxu0 %v6204
      %6673 = vmatprep.subr.mxu0 %v6213
      %6674 = vmatpush1.msra.mxu0 %v6212
      %6675 = vmatprep.subr.mxu0 %v6221
      %6676 = vmatpush1.msra.mxu0 %v6220
      %6677 = vmatprep.subr.mxu0 %v6229
      %6678 = vmatpush1.msra.mxu0 %v6228
      %6679 = vmatprep.subr.mxu0 %v6237
      %6680 = vmatpush1.msra.mxu0 %v6236
      %6681 = vmatprep.subr.mxu0 %v6245
      %6682 = vmatpush1.msra.mxu0 %v6244
      %6683 = vmatprep.subr.mxu0 %v6253
      %6684 = vmatpush1.msra.mxu0 %v6252
      %6685 = vmatprep.subr.mxu0 %v6261
      %6686 = vmatpush1.msra.mxu0 %v6260
      %6687 = vmatprep.subr.mxu0 %v6269
      %6688 = vmatpush1.msra.mxu0 %v6268
      %6689 = vmatprep.subr.mxu0 %v6277
      %6690 = vmatpush1.msra.mxu0 %v6276
      %6691 = vmatprep.subr.mxu0 %v6285
      %6692 = vmatpush1.msra.mxu0 %v6284
      %6693 = vmatprep.subr.mxu0 %v6293
      %6694 = vmatpush1.msra.mxu0 %v6292
      %6695 = vmatprep.subr.mxu0 %v6301
      %6696 = vmatpush1.msra.mxu0 %v6300
      %6697 = vmatprep.subr.mxu0 %v6309
      %6698 = vmatpush1.msra.mxu0 %v6308
      %6699 = vmatprep.subr.mxu0 %v6317
      %6700 = vmatpush1.msra.mxu0 %v6316
      %6701 = vmatprep.subr.mxu0 %v6325
      %6702 = vmatpush1.msra.mxu0 %v6324
      %6703 = vmatprep.mubr.f32.mxu0 %v4507
      %6704 = vmatmul.mubr.f32.gmra.mrb[0].mxu0 %v4506
      %v6705 = vpop.f32.mrb[0].mxu0
      %v6706 = vadd.f32 %v6617, %v6705
      %v6707 = vpop.f32.mrb[0].mxu0
      %v6708 = vadd.f32 %v6619, %v6707
      %6709 = vmatprep.mubr.f32.mxu0 %v4511
      %6710 = vmatmul.mubr.f32.gmra.mrb[0].mxu0 %v4510
      %v6711 = vpop.f32.mrb[0].mxu0
      %v6712 = vadd.f32 %v6623, %v6711
      %v6713 = vpop.f32.mrb[0].mxu0
      %v6714 = vadd.f32 %v6625, %v6713
      %6715 = vmatprep.mubr.f32.mxu0 %v4515
      %6716 = vmatmul.mubr.f32.gmra.mrb[0].mxu0 %v4514
      %v6717 = vpop.f32.mrb[0].mxu0
      %v6718 = vadd.f32 %v6629, %v6717
      %v6719 = vpop.f32.mrb[0].mxu0
      %v6720 = vadd.f32 %v6631, %v6719
      %6721 = vmatprep.mubr.f32.mxu0 %v4519
      %6722 = vmatmul.mubr.f32.gmra.mrb[0].mxu0 %v4518
      %v6723 = vpop.f32.mrb[0].mxu0
      %v6724 = vadd.f32 %v6635, %v6723
      %v6725 = vpop.f32.mrb[0].mxu0
      %v6726 = vadd.f32 %v6637, %v6725
      %6727 = vdwg.mxu0
      %6728 = vmatprep.subr.mxu0 %v5823
      %6729 = vmatpush1.msra.mxu0 %v5822
      %6730 = vmatprep.subr.mxu0 %v5831
      %6731 = vmatpush1.msra.mxu0 %v5830
      %6732 = vmatprep.subr.mxu0 %v5839
      %6733 = vmatpush1.msra.mxu0 %v5838
      %6734 = vmatprep.subr.mxu0 %v5847
      %6735 = vmatpush1.msra.mxu0 %v5846
      %6736 = vmatprep.subr.mxu0 %v5855
      %6737 = vmatpush1.msra.mxu0 %v5854
      %6738 = vmatprep.subr.mxu0 %v5863
      %6739 = vmatpush1.msra.mxu0 %v5862
      %6740 = vmatprep.subr.mxu0 %v5871
      %6741 = vmatpush1.msra.mxu0 %v5870
      %6742 = vmatprep.subr.mxu0 %v5879
      %6743 = vmatpush1.msra.mxu0 %v5878
      %6744 = vmatprep.subr.mxu0 %v5887
      %6745 = vmatpush1.msra.mxu0 %v5886
      %6746 = vmatprep.subr.mxu0 %v5895
      %6747 = vmatpush1.msra.mxu0 %v5894
      %6748 = vmatprep.subr.mxu0 %v5903
      %6749 = vmatpush1.msra.mxu0 %v5902
      %6750 = vmatprep.subr.mxu0 %v5911
      %6751 = vmatpush1.msra.mxu0 %v5910
      %6752 = vmatprep.subr.mxu0 %v5919
      %6753 = vmatpush1.msra.mxu0 %v5918
      %6754 = vmatprep.subr.mxu0 %v5927
      %6755 = vmatpush1.msra.mxu0 %v5926
      %6756 = vmatprep.subr.mxu0 %v5935
      %6757 = vmatpush1.msra.mxu0 %v5934
      %6758 = vmatprep.subr.mxu0 %v5943
      %6759 = vmatpush1.msra.mxu0 %v5942
      %6760 = vmatprep.subr.mxu0 %v5951
      %6761 = vmatpush1.msra.mxu0 %v5950
      %6762 = vmatprep.subr.mxu0 %v5959
      %6763 = vmatpush1.msra.mxu0 %v5958
      %6764 = vmatprep.subr.mxu0 %v5967
      %6765 = vmatpush1.msra.mxu0 %v5966
      %6766 = vmatprep.subr.mxu0 %v5975
      %6767 = vmatpush1.msra.mxu0 %v5974
      %6768 = vmatprep.subr.mxu0 %v5983
      %6769 = vmatpush1.msra.mxu0 %v5982
      %6770 = vmatprep.subr.mxu0 %v5991
      %6771 = vmatpush1.msra.mxu0 %v5990
      %6772 = vmatprep.subr.mxu0 %v5999
      %6773 = vmatpush1.msra.mxu0 %v5998
      %6774 = vmatprep.subr.mxu0 %v6007
      %6775 = vmatpush1.msra.mxu0 %v6006
      %6776 = vmatprep.subr.mxu0 %v6015
      %6777 = vmatpush1.msra.mxu0 %v6014
      %6778 = vmatprep.subr.mxu0 %v6023
      %6779 = vmatpush1.msra.mxu0 %v6022
      %6780 = vmatprep.subr.mxu0 %v6031
      %6781 = vmatpush1.msra.mxu0 %v6030
      %6782 = vmatprep.subr.mxu0 %v6039
      %6783 = vmatpush1.msra.mxu0 %v6038
      %6784 = vmatprep.subr.mxu0 %v6047
      %6785 = vmatpush1.msra.mxu0 %v6046
      %6786 = vmatprep.subr.mxu0 %v6055
      %6787 = vmatpush1.msra.mxu0 %v6054
      %6788 = vmatprep.subr.mxu0 %v6063
      %6789 = vmatpush1.msra.mxu0 %v6062
      %6790 = vmatprep.subr.mxu0 %v6071
      %6791 = vmatpush1.msra.mxu0 %v6070
      %6792 = vmatprep.mubr.f32.mxu0 %v4505
      %6793 = vmatmul.mubr.f32.gmra.mrb[0].mxu0 %v4504
      %v6794 = vpop.f32.mrb[0].mxu0
      %v6795 = vadd.f32 %v6351, %v6794
      %v6796 = vpop.f32.mrb[0].mxu0
      %v6797 = vadd.f32 %v6355, %v6796
      %6798 = vmatprep.mubr.f32.mxu0 %v4509
      %6799 = vmatmul.mubr.f32.gmra.mrb[0].mxu0 %v4508
      %v6800 = vpop.f32.mrb[0].mxu0
      %v6801 = vadd.f32 %v6351, %v6800
      %v6802 = vpop.f32.mrb[0].mxu0
      %v6803 = vadd.f32 %v6355, %v6802
      %6804 = vmatprep.mubr.f32.mxu0 %v4513
      %6805 = vmatmul.mubr.f32.gmra.mrb[0].mxu0 %v4512
      %v6806 = vpop.f32.mrb[0].mxu0
      %v6807 = vadd.f32 %v6351, %v6806
      %v6808 = vpop.f32.mrb[0].mxu0
      %v6809 = vadd.f32 %v6355, %v6808
      %6810 = vmatprep.mubr.f32.mxu0 %v4517
      %6811 = vmatmul.mubr.f32.gmra.mrb[0].mxu0 %v4516
      %v6812 = vpop.f32.mrb[0].mxu0
      %v6813 = vadd.f32 %v6351, %v6812
      %v6814 = vpop.f32.mrb[0].mxu0
      %v6815 = vadd.f32 %v6355, %v6814
      %6816 = vdwg.mxu0
      %6817 = vmatprep.subr.mxu0 %v6079
      %6818 = vmatpush1.msra.mxu0 %v6078
      %6819 = vmatprep.subr.mxu0 %v6087
      %6820 = vmatpush1.msra.mxu0 %v6086
      %6821 = vmatprep.subr.mxu0 %v6095
      %6822 = vmatpush1.msra.mxu0 %v6094
      %6823 = vmatprep.subr.mxu0 %v6103
      %6824 = vmatpush1.msra.mxu0 %v6102
      %6825 = vmatprep.subr.mxu0 %v6111
      %6826 = vmatpush1.msra.mxu0 %v6110
      %6827 = vmatprep.subr.mxu0 %v6119
      %6828 = vmatpush1.msra.mxu0 %v6118
      %6829 = vmatprep.subr.mxu0 %v6127
      %6830 = vmatpush1.msra.mxu0 %v6126
      %6831 = vmatprep.subr.mxu0 %v6135
      %6832 = vmatpush1.msra.mxu0 %v6134
      %6833 = vmatprep.subr.mxu0 %v6143
      %6834 = vmatpush1.msra.mxu0 %v6142
      %6835 = vmatprep.subr.mxu0 %v6151
      %6836 = vmatpush1.msra.mxu0 %v6150
      %6837 = vmatprep.subr.mxu0 %v6159
      %6838 = vmatpush1.msra.mxu0 %v6158
      %6839 = vmatprep.subr.mxu0 %v6167
      %6840 = vmatpush1.msra.mxu0 %v6166
      %6841 = vmatprep.subr.mxu0 %v6175
      %6842 = vmatpush1.msra.mxu0 %v6174
      %6843 = vmatprep.subr.mxu0 %v6183
      %6844 = vmatpush1.msra.mxu0 %v6182
      %6845 = vmatprep.subr.mxu0 %v6191
      %6846 = vmatpush1.msra.mxu0 %v6190
      %6847 = vmatprep.subr.mxu0 %v6199
      %6848 = vmatpush1.msra.mxu0 %v6198
      %6849 = vmatprep.subr.mxu0 %v6207
      %6850 = vmatpush1.msra.mxu0 %v6206
      %6851 = vmatprep.subr.mxu0 %v6215
      %6852 = vmatpush1.msra.mxu0 %v6214
      %6853 = vmatprep.subr.mxu0 %v6223
      %6854 = vmatpush1.msra.mxu0 %v6222
      %6855 = vmatprep.subr.mxu0 %v6231
      %6856 = vmatpush1.msra.mxu0 %v6230
      %6857 = vmatprep.subr.mxu0 %v6239
      %6858 = vmatpush1.msra.mxu0 %v6238
      %6859 = vmatprep.subr.mxu0 %v6247
      %6860 = vmatpush1.msra.mxu0 %v6246
      %6861 = vmatprep.subr.mxu0 %v6255
      %6862 = vmatpush1.msra.mxu0 %v6254
      %6863 = vmatprep.subr.mxu0 %v6263
      %6864 = vmatpush1.msra.mxu0 %v6262
      %6865 = vmatprep.subr.mxu0 %v6271
      %6866 = vmatpush1.msra.mxu0 %v6270
      %6867 = vmatprep.subr.mxu0 %v6279
      %6868 = vmatpush1.msra.mxu0 %v6278
      %6869 = vmatprep.subr.mxu0 %v6287
      %6870 = vmatpush1.msra.mxu0 %v6286
      %6871 = vmatprep.subr.mxu0 %v6295
      %6872 = vmatpush1.msra.mxu0 %v6294
      %6873 = vmatprep.subr.mxu0 %v6303
      %6874 = vmatpush1.msra.mxu0 %v6302
      %6875 = vmatprep.subr.mxu0 %v6311
      %6876 = vmatpush1.msra.mxu0 %v6310
      %6877 = vmatprep.subr.mxu0 %v6319
      %6878 = vmatpush1.msra.mxu0 %v6318
      %6879 = vmatprep.subr.mxu0 %v6327
      %6880 = vmatpush1.msra.mxu0 %v6326
      %6881 = vmatprep.mubr.f32.mxu0 %v4507
      %6882 = vmatmul.mubr.f32.gmra.mrb[0].mxu0 %v4506
      %v6883 = vpop.f32.mrb[0].mxu0
      %v6884 = vadd.f32 %v6795, %v6883
      %v6885 = vpop.f32.mrb[0].mxu0
      %v6886 = vadd.f32 %v6797, %v6885
      %6887 = vmatprep.mubr.f32.mxu0 %v4511
      %6888 = vmatmul.mubr.f32.gmra.mrb[0].mxu0 %v4510
      %v6889 = vpop.f32.mrb[0].mxu0
      %v6890 = vadd.f32 %v6801, %v6889
      %v6891 = vpop.f32.mrb[0].mxu0
      %v6892 = vadd.f32 %v6803, %v6891
      %6893 = vmatprep.mubr.f32.mxu0 %v4515
      %6894 = vmatmul.mubr.f32.gmra.mrb[0].mxu0 %v4514
      %v6895 = vpop.f32.mrb[0].mxu0
      %v6896 = vadd.f32 %v6807, %v6895
      %v6897 = vpop.f32.mrb[0].mxu0
      %v6898 = vadd.f32 %v6809, %v6897
      %6899 = vmatprep.mubr.f32.mxu0 %v4519
      %6900 = vmatmul.mubr.f32.gmra.mrb[0].mxu0 %v4518
      %v6901 = vpop.f32.mrb[0].mxu0
      %v6902 = vadd.f32 %v6813, %v6901
      %v6903 = vpop.f32.mrb[0].mxu0
      %v6904 = vadd.f32 %v6815, %v6903
      %6905 = vdwg.mxu0
      %6906 = vmatprep.subr.mxu0 %v5825
      %6907 = vmatpush1.msra.mxu0 %v5824
      %6908 = vmatprep.subr.mxu0 %v5833
      %6909 = vmatpush1.msra.mxu0 %v5832
      %6910 = vmatprep.subr.mxu0 %v5841
      %6911 = vmatpush1.msra.mxu0 %v5840
      %6912 = vmatprep.subr.mxu0 %v5849
      %6913 = vmatpush1.msra.mxu0 %v5848
      %6914 = vmatprep.subr.mxu0 %v5857
      %6915 = vmatpush1.msra.mxu0 %v5856
      %6916 = vmatprep.subr.mxu0 %v5865
      %6917 = vmatpush1.msra.mxu0 %v5864
      %6918 = vmatprep.subr.mxu0 %v5873
      %6919 = vmatpush1.msra.mxu0 %v5872
      %6920 = vmatprep.subr.mxu0 %v5881
      %6921 = vmatpush1.msra.mxu0 %v5880
      %6922 = vmatprep.subr.mxu0 %v5889
      %6923 = vmatpush1.msra.mxu0 %v5888
      %6924 = vmatprep.subr.mxu0 %v5897
      %6925 = vmatpush1.msra.mxu0 %v5896
      %6926 = vmatprep.subr.mxu0 %v5905
      %6927 = vmatpush1.msra.mxu0 %v5904
      %6928 = vmatprep.subr.mxu0 %v5913
      %6929 = vmatpush1.msra.mxu0 %v5912
      %6930 = vmatprep.subr.mxu0 %v5921
      %6931 = vmatpush1.msra.mxu0 %v5920
      %6932 = vmatprep.subr.mxu0 %v5929
      %6933 = vmatpush1.msra.mxu0 %v5928
      %6934 = vmatprep.subr.mxu0 %v5937
      %6935 = vmatpush1.msra.mxu0 %v5936
      %6936 = vmatprep.subr.mxu0 %v5945
      %6937 = vmatpush1.msra.mxu0 %v5944
      %6938 = vmatprep.subr.mxu0 %v5953
      %6939 = vmatpush1.msra.mxu0 %v5952
      %6940 = vmatprep.subr.mxu0 %v5961
      %6941 = vmatpush1.msra.mxu0 %v5960
      %6942 = vmatprep.subr.mxu0 %v5969
      %6943 = vmatpush1.msra.mxu0 %v5968
      %6944 = vmatprep.subr.mxu0 %v5977
      %6945 = vmatpush1.msra.mxu0 %v5976
      %6946 = vmatprep.subr.mxu0 %v5985
      %6947 = vmatpush1.msra.mxu0 %v5984
      %6948 = vmatprep.subr.mxu0 %v5993
      %6949 = vmatpush1.msra.mxu0 %v5992
      %6950 = vmatprep.subr.mxu0 %v6001
      %6951 = vmatpush1.msra.mxu0 %v6000
      %6952 = vmatprep.subr.mxu0 %v6009
      %6953 = vmatpush1.msra.mxu0 %v6008
      %6954 = vmatprep.subr.mxu0 %v6017
      %6955 = vmatpush1.msra.mxu0 %v6016
      %6956 = vmatprep.subr.mxu0 %v6025
      %6957 = vmatpush1.msra.mxu0 %v6024
      %6958 = vmatprep.subr.mxu0 %v6033
      %6959 = vmatpush1.msra.mxu0 %v6032
      %6960 = vmatprep.subr.mxu0 %v6041
      %6961 = vmatpush1.msra.mxu0 %v6040
      %6962 = vmatprep.subr.mxu0 %v6049
      %6963 = vmatpush1.msra.mxu0 %v6048
      %6964 = vmatprep.subr.mxu0 %v6057
      %6965 = vmatpush1.msra.mxu0 %v6056
      %6966 = vmatprep.subr.mxu0 %v6065
      %6967 = vmatpush1.msra.mxu0 %v6064
      %6968 = vmatprep.subr.mxu0 %v6073
      %6969 = vmatpush1.msra.mxu0 %v6072
      %6970 = vmatprep.mubr.f32.mxu0 %v4505
      %6971 = vmatmul.mubr.f32.gmra.mrb[0].mxu0 %v4504
      %v6972 = vpop.f32.mrb[0].mxu0
      %v6973 = vadd.f32 %v6359, %v6972
      %v6974 = vpop.f32.mrb[0].mxu0
      %v6975 = vadd.f32 %v6363, %v6974
      %6976 = vmatprep.mubr.f32.mxu0 %v4509
      %6977 = vmatmul.mubr.f32.gmra.mrb[0].mxu0 %v4508
      %v6978 = vpop.f32.mrb[0].mxu0
      %v6979 = vadd.f32 %v6359, %v6978
      %v6980 = vpop.f32.mrb[0].mxu0
      %v6981 = vadd.f32 %v6363, %v6980
      %6982 = vmatprep.mubr.f32.mxu0 %v4513
      %6983 = vmatmul.mubr.f32.gmra.mrb[0].mxu0 %v4512
      %v6984 = vpop.f32.mrb[0].mxu0
      %v6985 = vadd.f32 %v6359, %v6984
      %v6986 = vpop.f32.mrb[0].mxu0
      %v6987 = vadd.f32 %v6363, %v6986
      %6988 = vmatprep.mubr.f32.mxu0 %v4517
      %6989 = vmatmul.mubr.f32.gmra.mrb[0].mxu0 %v4516
      %v6990 = vpop.f32.mrb[0].mxu0
      %v6991 = vadd.f32 %v6359, %v6990
      %v6992 = vpop.f32.mrb[0].mxu0
      %v6993 = vadd.f32 %v6363, %v6992
      %6994 = vdwg.mxu0
      %6995 = vmatprep.subr.mxu0 %v6081
      %6996 = vmatpush1.msra.mxu0 %v6080
      %6997 = vmatprep.subr.mxu0 %v6089
      %6998 = vmatpush1.msra.mxu0 %v6088
      %6999 = vmatprep.subr.mxu0 %v6097
      %7000 = vmatpush1.msra.mxu0 %v6096
      %7001 = vmatprep.subr.mxu0 %v6105
      %7002 = vmatpush1.msra.mxu0 %v6104
      %7003 = vmatprep.subr.mxu0 %v6113
      %7004 = vmatpush1.msra.mxu0 %v6112
      %7005 = vmatprep.subr.mxu0 %v6121
      %7006 = vmatpush1.msra.mxu0 %v6120
      %7007 = vmatprep.subr.mxu0 %v6129
      %7008 = vmatpush1.msra.mxu0 %v6128
      %7009 = vmatprep.subr.mxu0 %v6137
      %7010 = vmatpush1.msra.mxu0 %v6136
      %7011 = vmatprep.subr.mxu0 %v6145
      %7012 = vmatpush1.msra.mxu0 %v6144
      %7013 = vmatprep.subr.mxu0 %v6153
      %7014 = vmatpush1.msra.mxu0 %v6152
      %7015 = vmatprep.subr.mxu0 %v6161
      %7016 = vmatpush1.msra.mxu0 %v6160
      %7017 = vmatprep.subr.mxu0 %v6169
      %7018 = vmatpush1.msra.mxu0 %v6168
      %7019 = vmatprep.subr.mxu0 %v6177
      %7020 = vmatpush1.msra.mxu0 %v6176
      %7021 = vmatprep.subr.mxu0 %v6185
      %7022 = vmatpush1.msra.mxu0 %v6184
      %7023 = vmatprep.subr.mxu0 %v6193
      %7024 = vmatpush1.msra.mxu0 %v6192
      %7025 = vmatprep.subr.mxu0 %v6201
      %7026 = vmatpush1.msra.mxu0 %v6200
      %7027 = vmatprep.subr.mxu0 %v6209
      %7028 = vmatpush1.msra.mxu0 %v6208
      %7029 = vmatprep.subr.mxu0 %v6217
      %7030 = vmatpush1.msra.mxu0 %v6216
      %7031 = vmatprep.subr.mxu0 %v6225
      %7032 = vmatpush1.msra.mxu0 %v6224
      %7033 = vmatprep.subr.mxu0 %v6233
      %7034 = vmatpush1.msra.mxu0 %v6232
      %7035 = vmatprep.subr.mxu0 %v6241
      %7036 = vmatpush1.msra.mxu0 %v6240
      %7037 = vmatprep.subr.mxu0 %v6249
      %7038 = vmatpush1.msra.mxu0 %v6248
      %7039 = vmatprep.subr.mxu0 %v6257
      %7040 = vmatpush1.msra.mxu0 %v6256
      %7041 = vmatprep.subr.mxu0 %v6265
      %7042 = vmatpush1.msra.mxu0 %v6264
      %7043 = vmatprep.subr.mxu0 %v6273
      %7044 = vmatpush1.msra.mxu0 %v6272
      %7045 = vmatprep.subr.mxu0 %v6281
      %7046 = vmatpush1.msra.mxu0 %v6280
      %7047 = vmatprep.subr.mxu0 %v6289
      %7048 = vmatpush1.msra.mxu0 %v6288
      %7049 = vmatprep.subr.mxu0 %v6297
      %7050 = vmatpush1.msra.mxu0 %v6296
      %7051 = vmatprep.subr.mxu0 %v6305
      %7052 = vmatpush1.msra.mxu0 %v6304
      %7053 = vmatprep.subr.mxu0 %v6313
      %7054 = vmatpush1.msra.mxu0 %v6312
      %7055 = vmatprep.subr.mxu0 %v6321
      %7056 = vmatpush1.msra.mxu0 %v6320
      %7057 = vmatprep.subr.mxu0 %v6329
      %7058 = vmatpush1.msra.mxu0 %v6328
      %7059 = vmatprep.mubr.f32.mxu0 %v4507
      %7060 = vmatmul.mubr.f32.gmra.mrb[0].mxu0 %v4506
      %v7061 = vpop.f32.mrb[0].mxu0
      %v7062 = vadd.f32 %v6973, %v7061
      %v7063 = vpop.f32.mrb[0].mxu0
      %v7064 = vadd.f32 %v6975, %v7063
      %7065 = vmatprep.mubr.f32.mxu0 %v4511
      %7066 = vmatmul.mubr.f32.gmra.mrb[0].mxu0 %v4510
      %v7067 = vpop.f32.mrb[0].mxu0
      %v7068 = vadd.f32 %v6979, %v7067
      %v7069 = vpop.f32.mrb[0].mxu0
      %v7070 = vadd.f32 %v6981, %v7069
      %7071 = vmatprep.mubr.f32.mxu0 %v4515
      %7072 = vmatmul.mubr.f32.gmra.mrb[0].mxu0 %v4514
      %v7073 = vpop.f32.mrb[0].mxu0
      %v7074 = vadd.f32 %v6985, %v7073
      %v7075 = vpop.f32.mrb[0].mxu0
      %v7076 = vadd.f32 %v6987, %v7075
      %7077 = vmatprep.mubr.f32.mxu0 %v4519
      %7078 = vmatmul.mubr.f32.gmra.mrb[0].mxu0 %v4518
      %v7079 = vpop.f32.mrb[0].mxu0
      %v7080 = vadd.f32 %v6991, %v7079
      %v7081 = vpop.f32.mrb[0].mxu0
      %v7082 = vadd.f32 %v6993, %v7081
      %7083 = vdwg.mxu0
      %s7084 = scalar_lea.vmem %s467, 256
      %7085 = vst [vmem:[%s7084] sm:$0xff] %v6528
      %7086 = vst [vmem:[%s7084 + $0x8] sm:$0xff] %v6530
      %7087 = vst [vmem:[%s7084 + $0x10] sm:$0xff] %v6706
      %7088 = vst [vmem:[%s7084 + $0x18] sm:$0xff] %v6708
      %7089 = vst [vmem:[%s7084 + $0x20] sm:$0xff] %v6884
      %7090 = vst [vmem:[%s7084 + $0x28] sm:$0xff] %v6886
      %7091 = vst [vmem:[%s7084 + $0x30] sm:$0xff] %v7062
      %7092 = vst [vmem:[%s7084 + $0x38] sm:$0xff] %v7064
      %7093 = vst [vmem:[%s7084 + $0x40] sm:$0xff] %v6534
      %7094 = vst [vmem:[%s7084 + $0x48] sm:$0xff] %v6536
      %7095 = vst [vmem:[%s7084 + $0x50] sm:$0xff] %v6712
      %7096 = vst [vmem:[%s7084 + $0x58] sm:$0xff] %v6714
      %7097 = vst [vmem:[%s7084 + $0x60] sm:$0xff] %v6890
      %7098 = vst [vmem:[%s7084 + $0x68] sm:$0xff] %v6892
      %7099 = vst [vmem:[%s7084 + $0x70] sm:$0xff] %v7068
      %7100 = vst [vmem:[%s7084 + $0x78] sm:$0xff] %v7070
      %7101 = vst [vmem:[%s7084 + $0x80] sm:$0xff] %v6540
      %7102 = vst [vmem:[%s7084 + $0x88] sm:$0xff] %v6542
      %7103 = vst [vmem:[%s7084 + $0x90] sm:$0xff] %v6718
      %7104 = vst [vmem:[%s7084 + $0x98] sm:$0xff] %v6720
      %7105 = vst [vmem:[%s7084 + $0xa0] sm:$0xff] %v6896
      %7106 = vst [vmem:[%s7084 + $0xa8] sm:$0xff] %v6898
      %7107 = vst [vmem:[%s7084 + $0xb0] sm:$0xff] %v7074
      %7108 = vst [vmem:[%s7084 + $0xb8] sm:$0xff] %v7076
      %7109 = vst [vmem:[%s7084 + $0xc0] sm:$0xff] %v6546
      %7110 = vst [vmem:[%s7084 + $0xc8] sm:$0xff] %v6548
      %7111 = vst [vmem:[%s7084 + $0xd0] sm:$0xff] %v6724
      %7112 = vst [vmem:[%s7084 + $0xd8] sm:$0xff] %v6726
      %7113 = vst [vmem:[%s7084 + $0xe0] sm:$0xff] %v6902
      %7114 = vst [vmem:[%s7084 + $0xe8] sm:$0xff] %v6904
      %7115 = vst [vmem:[%s7084 + $0xf0] sm:$0xff] %v7080
      %7116 = vst [vmem:[%s7084 + $0xf8] sm:$0xff] %v7082
      %p7117 = scmp.lt.s32.totalorder %s25, 1
      %s7118 = scalar_select %p7117, %s25, 1
      %s7119 = smul.addr %s7118, 64
      %s7120 = smul.addr %s7119, 8
      %s7121 = scalar_lea.vmem %s14, %s7120
      // Predicated region
      $region77: #{unet_decoder_forward.3} parent=75 // pred_check
        %p7122 = pneg %p342
      $region78: #{unet_decoder_forward.3} parent=75 // pred_check_branch
        %7124 = sbr.rel (%p7122) target = $region80
      $region79: #{unet_decoder_forward.3} parent=75 // pred_region
        _
      $region80: #{unet_decoder_forward.3} parent=75 // pred_fallthru
        _
    $region76: #{unet_decoder_forward.3} parent=5 // pred_fallthru
      _
    %p7125 = scmp.le.s32.totalorder 2, %s20
    // Predicated region
    $region81: #{unet_decoder_forward.3} parent=5 // pred_check
      %p7126 = pneg %p7125
    $region82: #{unet_decoder_forward.3} parent=5 // pred_check_branch
      %7128 = sbr.rel (%p7126) target = $region84
    $region83: #{unet_decoder_forward.3} parent=5 // pred_region
      %s7129 = ssub.s32 %s20, 2
      // Predicated region
      $region85: #{unet_decoder_forward.3} parent=83 // pred_check
        %p7130 = pneg %p348
      $region86: #{unet_decoder_forward.3} parent=83 // pred_check_branch
        %7132 = sbr.rel (%p7130) target = $region88
      $region87: #{unet_decoder_forward.3} parent=83 // pred_region
        %p7133 = scmp.lt.s32.totalorder %s26, 1
        %s7134 = scalar_select %p7133, %s26, 1
        %s7135 = smul.addr %s7134, 64
        %s7136 = smul.addr %s7135, 8
        %s7137 = scalar_lea.vmem %s14, %s7136
      $region88: #{unet_decoder_forward.3} parent=83 // pred_fallthru
        _
    $region84: #{unet_decoder_forward.3} parent=5 // pred_fallthru
      _
  $region6: #{unet_decoder_forward.3} parent=0 // loop_footer
    %s24 = sadd.s32 1, %s20
  $region7: #{unet_decoder_forward.3} parent=0 // loop_footer_branch
    %19 = sbr.rel target = $region3
  $region8: #{unet_decoder_forward.3} parent=0 // loop_exit
    _

</llo_original>
